<compile_context>
chip_gen: v5e
topology: v5e:2x2
jax: 0.10.0
libtpu: 0.0.40
codegen_flags: <defaults>
</compile_context>

<pallas_src>
import numpy as np
import jax
import jax.numpy as jnp
from jax.experimental import pallas as pl
from jax.experimental.pallas import tpu as pltpu


# ----------------------------------------------------------------------------
# Fused kernel: one grid step == one image; everything stays in VMEM/vregs.
# ----------------------------------------------------------------------------
def _fused_nature_kernel(xs_ref, w1_ref, b1_ref, s1_ref,
                         w2_ref, b2_ref, s2_ref,
                         w3_ref, b3_ref, s3_ref, out_ref):
    f32 = jnp.float32
    x = xs_ref[0]                                            # (256, C*16)

    # conv1: 8x8 stride-4 == 2x2 stride-1 on the space-to-depth input.
    acc = jnp.zeros((s1_ref.shape[1], w1_ref.shape[2]), f32)  # (225, O1)
    for k in range(s1_ref.shape[0]):                          # 4 offsets
        g = jnp.dot(s1_ref[k], x, preferred_element_type=f32)            # (225, C16)
        acc = acc + jnp.dot(g, w1_ref[k], preferred_element_type=f32)    # (225, O1)
    a1 = jnp.maximum(acc + b1_ref[...], 0.0)                  # (225, O1)

    # conv2: 4x4 stride-2.
    acc = jnp.zeros((s2_ref.shape[1], w2_ref.shape[2]), f32)  # (36, O2)
    for k in range(s2_ref.shape[0]):                          # 16 offsets
        g = jnp.dot(s2_ref[k], a1, preferred_element_type=f32)           # (36, O1)
        acc = acc + jnp.dot(g, w2_ref[k], preferred_element_type=f32)    # (36, O2)
    a2 = jnp.maximum(acc + b2_ref[...], 0.0)                  # (36, O2)

    # conv3: 3x3 stride-1.
    acc = jnp.zeros((s3_ref.shape[1], w3_ref.shape[2]), f32)  # (16, O3)
    for k in range(s3_ref.shape[0]):                          # 9 offsets
        g = jnp.dot(s3_ref[k], a2, preferred_element_type=f32)           # (16, O2)
        acc = acc + jnp.dot(g, w3_ref[k], preferred_element_type=f32)    # (16, O3)
    out_ref[0] = jnp.maximum(acc + b3_ref[...], 0.0)          # (16, O3) lane-dense


# ----------------------------------------------------------------------------
# One-time (hoisted) layout prep: selection matrices + rearranged weights.
# ----------------------------------------------------------------------------
def _sel_matrices(in_h, in_w, ksize, stride):
    """One-hot gather matrices (k*k, out_positions, in_positions)."""
    out_h = (in_h - ksize) // stride + 1
    out_w = (in_w - ksize) // stride + 1
    s = np.zeros((ksize * ksize, out_h * out_w, in_h * in_w), np.float32)
    for i in range(ksize):
        for j in range(ksize):
            for pr in range(out_h):
                for pc in range(out_w):
                    src = (stride * pr + i) * in_w + (stride * pc + j)
                    s[i * ksize + j, pr * out_w + pc, src] = 1.0
    return jnp.asarray(s)


def prepare_params(params):
    """Rearrange PyTorch-layout weights once, outside the per-call path."""
    w1, w2, w3 = params["w1"], params["w2"], params["w3"]
    o1, c = w1.shape[:2]
    o2, o3 = w2.shape[0], w3.shape[0]
    # conv1 weights for the space-to-depth input:
    #   w1r[o, c*16 + 4a + b, i, j] = w1[o, c, 4i + a, 4j + b]
    w1r = w1.reshape(o1, c, 2, 4, 2, 4).transpose(0, 1, 3, 5, 2, 4)
    w1r = w1r.reshape(o1, c * 16, 2, 2)
    w1t = w1r.transpose(2, 3, 1, 0).reshape(4, c * 16, o1)       # (k, C16, O1)
    w2t = w2.transpose(2, 3, 1, 0).reshape(16, w2.shape[1], o2)  # (k, O1, O2)
    w3t = w3.transpose(2, 3, 1, 0).reshape(9, w3.shape[1], o3)   # (k, O2, O3)
    return dict(
        w1=w1t, b1=params["b1"].reshape(1, o1),
        w2=w2t, b2=params["b2"].reshape(1, o2),
        w3=w3t, b3=params["b3"].reshape(1, o3),
        s1=_sel_matrices(16, 16, 2, 1),    # (4, 225, 256)
        s2=_sel_matrices(15, 15, 4, 2),    # (16, 36, 225)
        s3=_sel_matrices(6, 6, 3, 1),      # (9, 16, 36)
    )


def _space_to_depth4(x):
    """(N, C, H, W) -> (N, H/4*W/4, C*16); channel index = c*16 + 4a + b."""
    n, c, h, w = x.shape
    x = x.reshape(n, c, h // 4, 4, w // 4, 4)
    x = x.transpose(0, 2, 4, 1, 3, 5)          # (N, H/4, W/4, C, 4, 4)
    return x.reshape(n, (h // 4) * (w // 4), c * 16)


# ----------------------------------------------------------------------------
# Forward: NatureEncoder(in_channels, groups) + nn.Flatten()
# ----------------------------------------------------------------------------
def nature_encoder_fused(prep, x):
    x = x.reshape((-1,) + x.shape[-3:])        # x.view(prod(lead), C, H, W)
    n, c, h, w = x.shape
    assert h == 64 and w == 64, "output_dim = 1024*groups implies 64x64 input"
    xs = _space_to_depth4(x.astype(jnp.float32))       # (N, 256, C*16)

    s0 = (h // 4) * (w // 4)
    c16 = prep["w1"].shape[1]
    o3 = prep["w3"].shape[2]

    out = pl.pallas_call(
        _fused_nature_kernel,
        out_shape=jax.ShapeDtypeStruct((n, 16, o3), jnp.float32),
        grid=(n,),
        in_specs=[
            pl.BlockSpec((1, s0, c16), lambda i: (i, 0, 0)),   # per-image input
            pl.BlockSpec(prep["w1"].shape, lambda i: (0, 0, 0)),
            pl.BlockSpec(prep["b1"].shape, lambda i: (0, 0)),
            pl.BlockSpec(prep["s1"].shape, lambda i: (0, 0, 0)),
            pl.BlockSpec(prep["w2"].shape, lambda i: (0, 0, 0)),
            pl.BlockSpec(prep["b2"].shape, lambda i: (0, 0)),
            pl.BlockSpec(prep["s2"].shape, lambda i: (0, 0, 0)),
            pl.BlockSpec(prep["w3"].shape, lambda i: (0, 0, 0)),
            pl.BlockSpec(prep["b3"].shape, lambda i: (0, 0)),
            pl.BlockSpec(prep["s3"].shape, lambda i: (0, 0, 0)),
        ],
        out_specs=pl.BlockSpec((1, 16, o3), lambda i: (i, 0, 0)),
        compiler_params=pltpu.CompilerParams(
            dimension_semantics=("parallel",),
            vmem_limit_bytes=40 * 1024 * 1024),
    )(xs, prep["w1"], prep["b1"], prep["s1"],
      prep["w2"], prep["b2"], prep["s2"],
      prep["w3"], prep["b3"], prep["s3"])

    # (N, 16, 64g) position-major -> PyTorch NCHW flatten order (N, 64g*4*4).
    return jnp.transpose(out, (0, 2, 1)).reshape(n, o3 * 16)


# ----------------------------------------------------------------------------
# Params + pure-JAX reference for the correctness check
# ----------------------------------------------------------------------------
def init_params(key, in_channels, groups):
    # Deterministic synthetic init (module uses orthogonal_init; any
    # deterministic init is fine for this synthetic kernel check).
    k1, k2, k3, k4, k5, k6 = jax.random.split(key, 6)
    c1, c2 = 32 * groups, 64 * groups
    s = 0.05
    return {
        "w1": s * jax.random.normal(k1, (c1, in_channels, 8, 8), jnp.float32),
        "b1": 0.01 * jax.random.normal(k4, (c1,), jnp.float32),
        "w2": s * jax.random.normal(k2, (c2, c1, 4, 4), jnp.float32),
        "b2": 0.01 * jax.random.normal(k5, (c2,), jnp.float32),
        "w3": s * jax.random.normal(k3, (c2, c2, 3, 3), jnp.float32),
        "b3": 0.01 * jax.random.normal(k6, (c2,), jnp.float32),
    }


def _ref_forward(params, x):
    def conv(x, w, b, s):
        y = jax.lax.conv_general_dilated(
            x, w, (s, s), "VALID",
            dimension_numbers=("NCHW", "OIHW", "NCHW"))
        return jax.nn.relu(y + b[None, :, None, None])

    x = x.reshape((-1,) + x.shape[-3:])
    x = conv(x, params["w1"], params["b1"], 4)
    x = conv(x, params["w2"], params["b2"], 2)
    x = conv(x, params["w3"], params["b3"], 1)
    return x.reshape(x.shape[0], -1)


if __name__ == "__main__":
    key = jax.random.PRNGKey(0)
    kp, kx = jax.random.split(key)

    # NatureFuseLSTMSeparateEncoder builds its visual base as
    # NatureEncoder(in_channels=C, groups=C); 64x64 input -> output_dim 1024*C.
    in_channels = 4
    groups = in_channels
    batch = 2

    params = init_params(kp, in_channels, groups)
    prep = prepare_params(params)                      # hoisted, one-time prep

    x = jax.random.normal(kx, (batch, in_channels, 64, 64), jnp.float32)

    fwd = jax.jit(nature_encoder_fused)
    out = jax.block_until_ready(fwd(prep, x))
    assert out.shape == (batch, 1024 * groups), out.shape

    ref = jax.block_until_ready(_ref_forward(params, x))
    err = float(jnp.max(jnp.abs(out - ref)))
    assert jnp.allclose(out, ref, atol=5e-4, rtol=5e-4), err

    print("KERNEL_OK")
</pallas_src>

<mosaic_0001>
module attributes {stable_mosaic.version = 11 : i64} {
  func.func @_fused_nature_kernel(%arg0: i32, %arg1: memref<1x256x64xf32, #tpu.memory_space<vmem>>, %arg2: memref<4x64x128xf32, #tpu.memory_space<vmem>>, %arg3: memref<1x128xf32, #tpu.memory_space<vmem>>, %arg4: memref<4x225x256xf32, #tpu.memory_space<vmem>>, %arg5: memref<16x128x256xf32, #tpu.memory_space<vmem>>, %arg6: memref<1x256xf32, #tpu.memory_space<vmem>>, %arg7: memref<16x36x225xf32, #tpu.memory_space<vmem>>, %arg8: memref<9x256x256xf32, #tpu.memory_space<vmem>>, %arg9: memref<1x256xf32, #tpu.memory_space<vmem>>, %arg10: memref<9x16x36xf32, #tpu.memory_space<vmem>>, %arg11: memref<1x16x256xf32, #tpu.memory_space<vmem>>) attributes {dimension_semantics = [#tpu.dimension_semantics<parallel>], iteration_bounds = array<i64: 2>, scalar_prefetch = 0 : i64, scratch_operands = 0 : i64, tpu.core_type = #tpu.core_type<tc>, window_params = [{transform_indices = @transform_0, window_bounds = array<i64: 1, 256, 64>}, {pipeline_mode = #tpu.pipeline_mode<synchronous>, transform_indices = @transform_1, window_bounds = array<i64: 4, 64, 128>}, {pipeline_mode = #tpu.pipeline_mode<synchronous>, transform_indices = @transform_2, window_bounds = array<i64: 1, 128>}, {pipeline_mode = #tpu.pipeline_mode<synchronous>, transform_indices = @transform_3, window_bounds = array<i64: 4, 225, 256>}, {pipeline_mode = #tpu.pipeline_mode<synchronous>, transform_indices = @transform_4, window_bounds = array<i64: 16, 128, 256>}, {pipeline_mode = #tpu.pipeline_mode<synchronous>, transform_indices = @transform_5, window_bounds = array<i64: 1, 256>}, {pipeline_mode = #tpu.pipeline_mode<synchronous>, transform_indices = @transform_6, window_bounds = array<i64: 16, 36, 225>}, {pipeline_mode = #tpu.pipeline_mode<synchronous>, transform_indices = @transform_7, window_bounds = array<i64: 9, 256, 256>}, {pipeline_mode = #tpu.pipeline_mode<synchronous>, transform_indices = @transform_8, window_bounds = array<i64: 1, 256>}, {pipeline_mode = #tpu.pipeline_mode<synchronous>, transform_indices = @transform_9, window_bounds = array<i64: 9, 16, 36>}, {transform_indices = @transform_10, window_bounds = array<i64: 1, 16, 256>}]} {
    %c0 = arith.constant 0 : index
    %c0_0 = arith.constant 0 : index
    %c0_1 = arith.constant 0 : index
    %0 = vector.load %arg1[%c0, %c0_0, %c0_1] : memref<1x256x64xf32, #tpu.memory_space<vmem>>, vector<1x256x64xf32>
    %1 = vector.shape_cast %0 : vector<1x256x64xf32> to vector<256x64xf32>
    %cst = arith.constant 0.000000e+00 : f32
    %2 = vector.broadcast %cst : f32 to vector<225x128xf32>
    %c0_2 = arith.constant 0 : index
    %c0_3 = arith.constant 0 : index
    %c0_4 = arith.constant 0 : index
    %3 = vector.load %arg4[%c0_2, %c0_3, %c0_4] : memref<4x225x256xf32, #tpu.memory_space<vmem>>, vector<1x225x256xf32>
    %4 = vector.shape_cast %3 : vector<1x225x256xf32> to vector<225x256xf32>
    %cst_5 = arith.constant dense<0.000000e+00> : vector<225x64xf32>
    %5 = tpu.matmul %4, %1, %cst_5 {dimension_numbers = #tpu.dot_dimension_numbers<[1], [0], [0], [1], [0, 0, 1, 1], [], []>} : vector<225x256xf32>, vector<256x64xf32>, vector<225x64xf32> -> vector<225x64xf32>
    %c0_6 = arith.constant 0 : index
    %c0_7 = arith.constant 0 : index
    %c0_8 = arith.constant 0 : index
    %6 = vector.load %arg2[%c0_6, %c0_7, %c0_8] : memref<4x64x128xf32, #tpu.memory_space<vmem>>, vector<1x64x128xf32>
    %7 = vector.shape_cast %6 : vector<1x64x128xf32> to vector<64x128xf32>
    %cst_9 = arith.constant dense<0.000000e+00> : vector<225x128xf32>
    %8 = tpu.matmul %5, %7, %cst_9 {dimension_numbers = #tpu.dot_dimension_numbers<[1], [0], [0], [1], [0, 0, 1, 1], [], []>} : vector<225x64xf32>, vector<64x128xf32>, vector<225x128xf32> -> vector<225x128xf32>
    %9 = arith.addf %2, %8 : vector<225x128xf32>
    %c1 = arith.constant 1 : index
    %c0_10 = arith.constant 0 : index
    %c0_11 = arith.constant 0 : index
    %10 = vector.load %arg4[%c1, %c0_10, %c0_11] : memref<4x225x256xf32, #tpu.memory_space<vmem>>, vector<1x225x256xf32>
    %11 = vector.shape_cast %10 : vector<1x225x256xf32> to vector<225x256xf32>
    %cst_12 = arith.constant dense<0.000000e+00> : vector<225x64xf32>
    %12 = tpu.matmul %11, %1, %cst_12 {dimension_numbers = #tpu.dot_dimension_numbers<[1], [0], [0], [1], [0, 0, 1, 1], [], []>} : vector<225x256xf32>, vector<256x64xf32>, vector<225x64xf32> -> vector<225x64xf32>
    %c1_13 = arith.constant 1 : index
    %c0_14 = arith.constant 0 : index
    %c0_15 = arith.constant 0 : index
    %13 = vector.load %arg2[%c1_13, %c0_14, %c0_15] : memref<4x64x128xf32, #tpu.memory_space<vmem>>, vector<1x64x128xf32>
    %14 = vector.shape_cast %13 : vector<1x64x128xf32> to vector<64x128xf32>
    %cst_16 = arith.constant dense<0.000000e+00> : vector<225x128xf32>
    %15 = tpu.matmul %12, %14, %cst_16 {dimension_numbers = #tpu.dot_dimension_numbers<[1], [0], [0], [1], [0, 0, 1, 1], [], []>} : vector<225x64xf32>, vector<64x128xf32>, vector<225x128xf32> -> vector<225x128xf32>
    %16 = arith.addf %9, %15 : vector<225x128xf32>
    %c2 = arith.constant 2 : index
    %c0_17 = arith.constant 0 : index
    %c0_18 = arith.constant 0 : index
    %17 = vector.load %arg4[%c2, %c0_17, %c0_18] : memref<4x225x256xf32, #tpu.memory_space<vmem>>, vector<1x225x256xf32>
    %18 = vector.shape_cast %17 : vector<1x225x256xf32> to vector<225x256xf32>
    %cst_19 = arith.constant dense<0.000000e+00> : vector<225x64xf32>
    %19 = tpu.matmul %18, %1, %cst_19 {dimension_numbers = #tpu.dot_dimension_numbers<[1], [0], [0], [1], [0, 0, 1, 1], [], []>} : vector<225x256xf32>, vector<256x64xf32>, vector<225x64xf32> -> vector<225x64xf32>
    %c2_20 = arith.constant 2 : index
    %c0_21 = arith.constant 0 : index
    %c0_22 = arith.constant 0 : index
    %20 = vector.load %arg2[%c2_20, %c0_21, %c0_22] : memref<4x64x128xf32, #tpu.memory_space<vmem>>, vector<1x64x128xf32>
    %21 = vector.shape_cast %20 : vector<1x64x128xf32> to vector<64x128xf32>
    %cst_23 = arith.constant dense<0.000000e+00> : vector<225x128xf32>
    %22 = tpu.matmul %19, %21, %cst_23 {dimension_numbers = #tpu.dot_dimension_numbers<[1], [0], [0], [1], [0, 0, 1, 1], [], []>} : vector<225x64xf32>, vector<64x128xf32>, vector<225x128xf32> -> vector<225x128xf32>
    %23 = arith.addf %16, %22 : vector<225x128xf32>
    %c3 = arith.constant 3 : index
    %c0_24 = arith.constant 0 : index
    %c0_25 = arith.constant 0 : index
    %24 = vector.load %arg4[%c3, %c0_24, %c0_25] : memref<4x225x256xf32, #tpu.memory_space<vmem>>, vector<1x225x256xf32>
    %25 = vector.shape_cast %24 : vector<1x225x256xf32> to vector<225x256xf32>
    %cst_26 = arith.constant dense<0.000000e+00> : vector<225x64xf32>
    %26 = tpu.matmul %25, %1, %cst_26 {dimension_numbers = #tpu.dot_dimension_numbers<[1], [0], [0], [1], [0, 0, 1, 1], [], []>} : vector<225x256xf32>, vector<256x64xf32>, vector<225x64xf32> -> vector<225x64xf32>
    %c3_27 = arith.constant 3 : index
    %c0_28 = arith.constant 0 : index
    %c0_29 = arith.constant 0 : index
    %27 = vector.load %arg2[%c3_27, %c0_28, %c0_29] : memref<4x64x128xf32, #tpu.memory_space<vmem>>, vector<1x64x128xf32>
    %28 = vector.shape_cast %27 : vector<1x64x128xf32> to vector<64x128xf32>
    %cst_30 = arith.constant dense<0.000000e+00> : vector<225x128xf32>
    %29 = tpu.matmul %26, %28, %cst_30 {dimension_numbers = #tpu.dot_dimension_numbers<[1], [0], [0], [1], [0, 0, 1, 1], [], []>} : vector<225x64xf32>, vector<64x128xf32>, vector<225x128xf32> -> vector<225x128xf32>
    %30 = arith.addf %23, %29 : vector<225x128xf32>
    %c0_31 = arith.constant 0 : index
    %c0_32 = arith.constant 0 : index
    %31 = vector.load %arg3[%c0_31, %c0_32] : memref<1x128xf32, #tpu.memory_space<vmem>>, vector<1x128xf32>
    %32 = vector.broadcast %31 : vector<1x128xf32> to vector<225x128xf32>
    %33 = arith.addf %30, %32 : vector<225x128xf32>
    %cst_33 = arith.constant 0.000000e+00 : f32
    %34 = vector.broadcast %cst_33 : f32 to vector<225x128xf32>
    %35 = arith.maximumf %33, %34 : vector<225x128xf32>
    %cst_34 = arith.constant 0.000000e+00 : f32
    %36 = vector.broadcast %cst_34 : f32 to vector<36x256xf32>
    %c0_35 = arith.constant 0 : index
    %c0_36 = arith.constant 0 : index
    %c0_37 = arith.constant 0 : index
    %37 = vector.load %arg7[%c0_35, %c0_36, %c0_37] : memref<16x36x225xf32, #tpu.memory_space<vmem>>, vector<1x36x225xf32>
    %38 = vector.shape_cast %37 : vector<1x36x225xf32> to vector<36x225xf32>
    %cst_38 = arith.constant dense<0.000000e+00> : vector<36x128xf32>
    %39 = tpu.matmul %38, %35, %cst_38 {dimension_numbers = #tpu.dot_dimension_numbers<[1], [0], [0], [1], [0, 0, 1, 1], [], []>} : vector<36x225xf32>, vector<225x128xf32>, vector<36x128xf32> -> vector<36x128xf32>
    %c0_39 = arith.constant 0 : index
    %c0_40 = arith.constant 0 : index
    %c0_41 = arith.constant 0 : index
    %40 = vector.load %arg5[%c0_39, %c0_40, %c0_41] : memref<16x128x256xf32, #tpu.memory_space<vmem>>, vector<1x128x256xf32>
    %41 = vector.shape_cast %40 : vector<1x128x256xf32> to vector<128x256xf32>
    %cst_42 = arith.constant dense<0.000000e+00> : vector<36x256xf32>
    %42 = tpu.matmul %39, %41, %cst_42 {dimension_numbers = #tpu.dot_dimension_numbers<[1], [0], [0], [1], [0, 0, 1, 1], [], []>} : vector<36x128xf32>, vector<128x256xf32>, vector<36x256xf32> -> vector<36x256xf32>
    %43 = arith.addf %36, %42 : vector<36x256xf32>
    %c1_43 = arith.constant 1 : index
    %c0_44 = arith.constant 0 : index
    %c0_45 = arith.constant 0 : index
    %44 = vector.load %arg7[%c1_43, %c0_44, %c0_45] : memref<16x36x225xf32, #tpu.memory_space<vmem>>, vector<1x36x225xf32>
    %45 = vector.shape_cast %44 : vector<1x36x225xf32> to vector<36x225xf32>
    %cst_46 = arith.constant dense<0.000000e+00> : vector<36x128xf32>
    %46 = tpu.matmul %45, %35, %cst_46 {dimension_numbers = #tpu.dot_dimension_numbers<[1], [0], [0], [1], [0, 0, 1, 1], [], []>} : vector<36x225xf32>, vector<225x128xf32>, vector<36x128xf32> -> vector<36x128xf32>
    %c1_47 = arith.constant 1 : index
    %c0_48 = arith.constant 0 : index
    %c0_49 = arith.constant 0 : index
    %47 = vector.load %arg5[%c1_47, %c0_48, %c0_49] : memref<16x128x256xf32, #tpu.memory_space<vmem>>, vector<1x128x256xf32>
    %48 = vector.shape_cast %47 : vector<1x128x256xf32> to vector<128x256xf32>
    %cst_50 = arith.constant dense<0.000000e+00> : vector<36x256xf32>
    %49 = tpu.matmul %46, %48, %cst_50 {dimension_numbers = #tpu.dot_dimension_numbers<[1], [0], [0], [1], [0, 0, 1, 1], [], []>} : vector<36x128xf32>, vector<128x256xf32>, vector<36x256xf32> -> vector<36x256xf32>
    %50 = arith.addf %43, %49 : vector<36x256xf32>
    %c2_51 = arith.constant 2 : index
    %c0_52 = arith.constant 0 : index
    %c0_53 = arith.constant 0 : index
    %51 = vector.load %arg7[%c2_51, %c0_52, %c0_53] : memref<16x36x225xf32, #tpu.memory_space<vmem>>, vector<1x36x225xf32>
    %52 = vector.shape_cast %51 : vector<1x36x225xf32> to vector<36x225xf32>
    %cst_54 = arith.constant dense<0.000000e+00> : vector<36x128xf32>
    %53 = tpu.matmul %52, %35, %cst_54 {dimension_numbers = #tpu.dot_dimension_numbers<[1], [0], [0], [1], [0, 0, 1, 1], [], []>} : vector<36x225xf32>, vector<225x128xf32>, vector<36x128xf32> -> vector<36x128xf32>
    %c2_55 = arith.constant 2 : index
    %c0_56 = arith.constant 0 : index
    %c0_57 = arith.constant 0 : index
    %54 = vector.load %arg5[%c2_55, %c0_56, %c0_57] : memref<16x128x256xf32, #tpu.memory_space<vmem>>, vector<1x128x256xf32>
    %55 = vector.shape_cast %54 : vector<1x128x256xf32> to vector<128x256xf32>
    %cst_58 = arith.constant dense<0.000000e+00> : vector<36x256xf32>
    %56 = tpu.matmul %53, %55, %cst_58 {dimension_numbers = #tpu.dot_dimension_numbers<[1], [0], [0], [1], [0, 0, 1, 1], [], []>} : vector<36x128xf32>, vector<128x256xf32>, vector<36x256xf32> -> vector<36x256xf32>
    %57 = arith.addf %50, %56 : vector<36x256xf32>
    %c3_59 = arith.constant 3 : index
    %c0_60 = arith.constant 0 : index
    %c0_61 = arith.constant 0 : index
    %58 = vector.load %arg7[%c3_59, %c0_60, %c0_61] : memref<16x36x225xf32, #tpu.memory_space<vmem>>, vector<1x36x225xf32>
    %59 = vector.shape_cast %58 : vector<1x36x225xf32> to vector<36x225xf32>
    %cst_62 = arith.constant dense<0.000000e+00> : vector<36x128xf32>
    %60 = tpu.matmul %59, %35, %cst_62 {dimension_numbers = #tpu.dot_dimension_numbers<[1], [0], [0], [1], [0, 0, 1, 1], [], []>} : vector<36x225xf32>, vector<225x128xf32>, vector<36x128xf32> -> vector<36x128xf32>
    %c3_63 = arith.constant 3 : index
    %c0_64 = arith.constant 0 : index
    %c0_65 = arith.constant 0 : index
    %61 = vector.load %arg5[%c3_63, %c0_64, %c0_65] : memref<16x128x256xf32, #tpu.memory_space<vmem>>, vector<1x128x256xf32>
    %62 = vector.shape_cast %61 : vector<1x128x256xf32> to vector<128x256xf32>
    %cst_66 = arith.constant dense<0.000000e+00> : vector<36x256xf32>
    %63 = tpu.matmul %60, %62, %cst_66 {dimension_numbers = #tpu.dot_dimension_numbers<[1], [0], [0], [1], [0, 0, 1, 1], [], []>} : vector<36x128xf32>, vector<128x256xf32>, vector<36x256xf32> -> vector<36x256xf32>
    %64 = arith.addf %57, %63 : vector<36x256xf32>
    %c4 = arith.constant 4 : index
    %c0_67 = arith.constant 0 : index
    %c0_68 = arith.constant 0 : index
    %65 = vector.load %arg7[%c4, %c0_67, %c0_68] : memref<16x36x225xf32, #tpu.memory_space<vmem>>, vector<1x36x225xf32>
    %66 = vector.shape_cast %65 : vector<1x36x225xf32> to vector<36x225xf32>
    %cst_69 = arith.constant dense<0.000000e+00> : vector<36x128xf32>
    %67 = tpu.matmul %66, %35, %cst_69 {dimension_numbers = #tpu.dot_dimension_numbers<[1], [0], [0], [1], [0, 0, 1, 1], [], []>} : vector<36x225xf32>, vector<225x128xf32>, vector<36x128xf32> -> vector<36x128xf32>
    %c4_70 = arith.constant 4 : index
    %c0_71 = arith.constant 0 : index
    %c0_72 = arith.constant 0 : index
    %68 = vector.load %arg5[%c4_70, %c0_71, %c0_72] : memref<16x128x256xf32, #tpu.memory_space<vmem>>, vector<1x128x256xf32>
    %69 = vector.shape_cast %68 : vector<1x128x256xf32> to vector<128x256xf32>
    %cst_73 = arith.constant dense<0.000000e+00> : vector<36x256xf32>
    %70 = tpu.matmul %67, %69, %cst_73 {dimension_numbers = #tpu.dot_dimension_numbers<[1], [0], [0], [1], [0, 0, 1, 1], [], []>} : vector<36x128xf32>, vector<128x256xf32>, vector<36x256xf32> -> vector<36x256xf32>
    %71 = arith.addf %64, %70 : vector<36x256xf32>
    %c5 = arith.constant 5 : index
    %c0_74 = arith.constant 0 : index
    %c0_75 = arith.constant 0 : index
    %72 = vector.load %arg7[%c5, %c0_74, %c0_75] : memref<16x36x225xf32, #tpu.memory_space<vmem>>, vector<1x36x225xf32>
    %73 = vector.shape_cast %72 : vector<1x36x225xf32> to vector<36x225xf32>
    %cst_76 = arith.constant dense<0.000000e+00> : vector<36x128xf32>
    %74 = tpu.matmul %73, %35, %cst_76 {dimension_numbers = #tpu.dot_dimension_numbers<[1], [0], [0], [1], [0, 0, 1, 1], [], []>} : vector<36x225xf32>, vector<225x128xf32>, vector<36x128xf32> -> vector<36x128xf32>
    %c5_77 = arith.constant 5 : index
    %c0_78 = arith.constant 0 : index
    %c0_79 = arith.constant 0 : index
    %75 = vector.load %arg5[%c5_77, %c0_78, %c0_79] : memref<16x128x256xf32, #tpu.memory_space<vmem>>, vector<1x128x256xf32>
    %76 = vector.shape_cast %75 : vector<1x128x256xf32> to vector<128x256xf32>
    %cst_80 = arith.constant dense<0.000000e+00> : vector<36x256xf32>
    %77 = tpu.matmul %74, %76, %cst_80 {dimension_numbers = #tpu.dot_dimension_numbers<[1], [0], [0], [1], [0, 0, 1, 1], [], []>} : vector<36x128xf32>, vector<128x256xf32>, vector<36x256xf32> -> vector<36x256xf32>
    %78 = arith.addf %71, %77 : vector<36x256xf32>
    %c6 = arith.constant 6 : index
    %c0_81 = arith.constant 0 : index
    %c0_82 = arith.constant 0 : index
    %79 = vector.load %arg7[%c6, %c0_81, %c0_82] : memref<16x36x225xf32, #tpu.memory_space<vmem>>, vector<1x36x225xf32>
    %80 = vector.shape_cast %79 : vector<1x36x225xf32> to vector<36x225xf32>
    %cst_83 = arith.constant dense<0.000000e+00> : vector<36x128xf32>
    %81 = tpu.matmul %80, %35, %cst_83 {dimension_numbers = #tpu.dot_dimension_numbers<[1], [0], [0], [1], [0, 0, 1, 1], [], []>} : vector<36x225xf32>, vector<225x128xf32>, vector<36x128xf32> -> vector<36x128xf32>
    %c6_84 = arith.constant 6 : index
    %c0_85 = arith.constant 0 : index
    %c0_86 = arith.constant 0 : index
    %82 = vector.load %arg5[%c6_84, %c0_85, %c0_86] : memref<16x128x256xf32, #tpu.memory_space<vmem>>, vector<1x128x256xf32>
    %83 = vector.shape_cast %82 : vector<1x128x256xf32> to vector<128x256xf32>
    %cst_87 = arith.constant dense<0.000000e+00> : vector<36x256xf32>
    %84 = tpu.matmul %81, %83, %cst_87 {dimension_numbers = #tpu.dot_dimension_numbers<[1], [0], [0], [1], [0, 0, 1, 1], [], []>} : vector<36x128xf32>, vector<128x256xf32>, vector<36x256xf32> -> vector<36x256xf32>
    %85 = arith.addf %78, %84 : vector<36x256xf32>
    %c7 = arith.constant 7 : index
    %c0_88 = arith.constant 0 : index
    %c0_89 = arith.constant 0 : index
    %86 = vector.load %arg7[%c7, %c0_88, %c0_89] : memref<16x36x225xf32, #tpu.memory_space<vmem>>, vector<1x36x225xf32>
    %87 = vector.shape_cast %86 : vector<1x36x225xf32> to vector<36x225xf32>
    %cst_90 = arith.constant dense<0.000000e+00> : vector<36x128xf32>
    %88 = tpu.matmul %87, %35, %cst_90 {dimension_numbers = #tpu.dot_dimension_numbers<[1], [0], [0], [1], [0, 0, 1, 1], [], []>} : vector<36x225xf32>, vector<225x128xf32>, vector<36x128xf32> -> vector<36x128xf32>
    %c7_91 = arith.constant 7 : index
    %c0_92 = arith.constant 0 : index
    %c0_93 = arith.constant 0 : index
    %89 = vector.load %arg5[%c7_91, %c0_92, %c0_93] : memref<16x128x256xf32, #tpu.memory_space<vmem>>, vector<1x128x256xf32>
    %90 = vector.shape_cast %89 : vector<1x128x256xf32> to vector<128x256xf32>
    %cst_94 = arith.constant dense<0.000000e+00> : vector<36x256xf32>
    %91 = tpu.matmul %88, %90, %cst_94 {dimension_numbers = #tpu.dot_dimension_numbers<[1], [0], [0], [1], [0, 0, 1, 1], [], []>} : vector<36x128xf32>, vector<128x256xf32>, vector<36x256xf32> -> vector<36x256xf32>
    %92 = arith.addf %85, %91 : vector<36x256xf32>
    %c8 = arith.constant 8 : index
    %c0_95 = arith.constant 0 : index
    %c0_96 = arith.constant 0 : index
    %93 = vector.load %arg7[%c8, %c0_95, %c0_96] : memref<16x36x225xf32, #tpu.memory_space<vmem>>, vector<1x36x225xf32>
    %94 = vector.shape_cast %93 : vector<1x36x225xf32> to vector<36x225xf32>
    %cst_97 = arith.constant dense<0.000000e+00> : vector<36x128xf32>
    %95 = tpu.matmul %94, %35, %cst_97 {dimension_numbers = #tpu.dot_dimension_numbers<[1], [0], [0], [1], [0, 0, 1, 1], [], []>} : vector<36x225xf32>, vector<225x128xf32>, vector<36x128xf32> -> vector<36x128xf32>
    %c8_98 = arith.constant 8 : index
    %c0_99 = arith.constant 0 : index
    %c0_100 = arith.constant 0 : index
    %96 = vector.load %arg5[%c8_98, %c0_99, %c0_100] : memref<16x128x256xf32, #tpu.memory_space<vmem>>, vector<1x128x256xf32>
    %97 = vector.shape_cast %96 : vector<1x128x256xf32> to vector<128x256xf32>
    %cst_101 = arith.constant dense<0.000000e+00> : vector<36x256xf32>
    %98 = tpu.matmul %95, %97, %cst_101 {dimension_numbers = #tpu.dot_dimension_numbers<[1], [0], [0], [1], [0, 0, 1, 1], [], []>} : vector<36x128xf32>, vector<128x256xf32>, vector<36x256xf32> -> vector<36x256xf32>
    %99 = arith.addf %92, %98 : vector<36x256xf32>
    %c9 = arith.constant 9 : index
    %c0_102 = arith.constant 0 : index
    %c0_103 = arith.constant 0 : index
    %100 = vector.load %arg7[%c9, %c0_102, %c0_103] : memref<16x36x225xf32, #tpu.memory_space<vmem>>, vector<1x36x225xf32>
    %101 = vector.shape_cast %100 : vector<1x36x225xf32> to vector<36x225xf32>
    %cst_104 = arith.constant dense<0.000000e+00> : vector<36x128xf32>
    %102 = tpu.matmul %101, %35, %cst_104 {dimension_numbers = #tpu.dot_dimension_numbers<[1], [0], [0], [1], [0, 0, 1, 1], [], []>} : vector<36x225xf32>, vector<225x128xf32>, vector<36x128xf32> -> vector<36x128xf32>
    %c9_105 = arith.constant 9 : index
    %c0_106 = arith.constant 0 : index
    %c0_107 = arith.constant 0 : index
    %103 = vector.load %arg5[%c9_105, %c0_106, %c0_107] : memref<16x128x256xf32, #tpu.memory_space<vmem>>, vector<1x128x256xf32>
    %104 = vector.shape_cast %103 : vector<1x128x256xf32> to vector<128x256xf32>
    %cst_108 = arith.constant dense<0.000000e+00> : vector<36x256xf32>
    %105 = tpu.matmul %102, %104, %cst_108 {dimension_numbers = #tpu.dot_dimension_numbers<[1], [0], [0], [1], [0, 0, 1, 1], [], []>} : vector<36x128xf32>, vector<128x256xf32>, vector<36x256xf32> -> vector<36x256xf32>
    %106 = arith.addf %99, %105 : vector<36x256xf32>
    %c10 = arith.constant 10 : index
    %c0_109 = arith.constant 0 : index
    %c0_110 = arith.constant 0 : index
    %107 = vector.load %arg7[%c10, %c0_109, %c0_110] : memref<16x36x225xf32, #tpu.memory_space<vmem>>, vector<1x36x225xf32>
    %108 = vector.shape_cast %107 : vector<1x36x225xf32> to vector<36x225xf32>
    %cst_111 = arith.constant dense<0.000000e+00> : vector<36x128xf32>
    %109 = tpu.matmul %108, %35, %cst_111 {dimension_numbers = #tpu.dot_dimension_numbers<[1], [0], [0], [1], [0, 0, 1, 1], [], []>} : vector<36x225xf32>, vector<225x128xf32>, vector<36x128xf32> -> vector<36x128xf32>
    %c10_112 = arith.constant 10 : index
    %c0_113 = arith.constant 0 : index
    %c0_114 = arith.constant 0 : index
    %110 = vector.load %arg5[%c10_112, %c0_113, %c0_114] : memref<16x128x256xf32, #tpu.memory_space<vmem>>, vector<1x128x256xf32>
    %111 = vector.shape_cast %110 : vector<1x128x256xf32> to vector<128x256xf32>
    %cst_115 = arith.constant dense<0.000000e+00> : vector<36x256xf32>
    %112 = tpu.matmul %109, %111, %cst_115 {dimension_numbers = #tpu.dot_dimension_numbers<[1], [0], [0], [1], [0, 0, 1, 1], [], []>} : vector<36x128xf32>, vector<128x256xf32>, vector<36x256xf32> -> vector<36x256xf32>
    %113 = arith.addf %106, %112 : vector<36x256xf32>
    %c11 = arith.constant 11 : index
    %c0_116 = arith.constant 0 : index
    %c0_117 = arith.constant 0 : index
    %114 = vector.load %arg7[%c11, %c0_116, %c0_117] : memref<16x36x225xf32, #tpu.memory_space<vmem>>, vector<1x36x225xf32>
    %115 = vector.shape_cast %114 : vector<1x36x225xf32> to vector<36x225xf32>
    %cst_118 = arith.constant dense<0.000000e+00> : vector<36x128xf32>
    %116 = tpu.matmul %115, %35, %cst_118 {dimension_numbers = #tpu.dot_dimension_numbers<[1], [0], [0], [1], [0, 0, 1, 1], [], []>} : vector<36x225xf32>, vector<225x128xf32>, vector<36x128xf32> -> vector<36x128xf32>
    %c11_119 = arith.constant 11 : index
    %c0_120 = arith.constant 0 : index
    %c0_121 = arith.constant 0 : index
    %117 = vector.load %arg5[%c11_119, %c0_120, %c0_121] : memref<16x128x256xf32, #tpu.memory_space<vmem>>, vector<1x128x256xf32>
    %118 = vector.shape_cast %117 : vector<1x128x256xf32> to vector<128x256xf32>
    %cst_122 = arith.constant dense<0.000000e+00> : vector<36x256xf32>
    %119 = tpu.matmul %116, %118, %cst_122 {dimension_numbers = #tpu.dot_dimension_numbers<[1], [0], [0], [1], [0, 0, 1, 1], [], []>} : vector<36x128xf32>, vector<128x256xf32>, vector<36x256xf32> -> vector<36x256xf32>
    %120 = arith.addf %113, %119 : vector<36x256xf32>
    %c12 = arith.constant 12 : index
    %c0_123 = arith.constant 0 : index
    %c0_124 = arith.constant 0 : index
    %121 = vector.load %arg7[%c12, %c0_123, %c0_124] : memref<16x36x225xf32, #tpu.memory_space<vmem>>, vector<1x36x225xf32>
    %122 = vector.shape_cast %121 : vector<1x36x225xf32> to vector<36x225xf32>
    %cst_125 = arith.constant dense<0.000000e+00> : vector<36x128xf32>
    %123 = tpu.matmul %122, %35, %cst_125 {dimension_numbers = #tpu.dot_dimension_numbers<[1], [0], [0], [1], [0, 0, 1, 1], [], []>} : vector<36x225xf32>, vector<225x128xf32>, vector<36x128xf32> -> vector<36x128xf32>
    %c12_126 = arith.constant 12 : index
    %c0_127 = arith.constant 0 : index
    %c0_128 = arith.constant 0 : index
    %124 = vector.load %arg5[%c12_126, %c0_127, %c0_128] : memref<16x128x256xf32, #tpu.memory_space<vmem>>, vector<1x128x256xf32>
    %125 = vector.shape_cast %124 : vector<1x128x256xf32> to vector<128x256xf32>
    %cst_129 = arith.constant dense<0.000000e+00> : vector<36x256xf32>
    %126 = tpu.matmul %123, %125, %cst_129 {dimension_numbers = #tpu.dot_dimension_numbers<[1], [0], [0], [1], [0, 0, 1, 1], [], []>} : vector<36x128xf32>, vector<128x256xf32>, vector<36x256xf32> -> vector<36x256xf32>
    %127 = arith.addf %120, %126 : vector<36x256xf32>
    %c13 = arith.constant 13 : index
    %c0_130 = arith.constant 0 : index
    %c0_131 = arith.constant 0 : index
    %128 = vector.load %arg7[%c13, %c0_130, %c0_131] : memref<16x36x225xf32, #tpu.memory_space<vmem>>, vector<1x36x225xf32>
    %129 = vector.shape_cast %128 : vector<1x36x225xf32> to vector<36x225xf32>
    %cst_132 = arith.constant dense<0.000000e+00> : vector<36x128xf32>
    %130 = tpu.matmul %129, %35, %cst_132 {dimension_numbers = #tpu.dot_dimension_numbers<[1], [0], [0], [1], [0, 0, 1, 1], [], []>} : vector<36x225xf32>, vector<225x128xf32>, vector<36x128xf32> -> vector<36x128xf32>
    %c13_133 = arith.constant 13 : index
    %c0_134 = arith.constant 0 : index
    %c0_135 = arith.constant 0 : index
    %131 = vector.load %arg5[%c13_133, %c0_134, %c0_135] : memref<16x128x256xf32, #tpu.memory_space<vmem>>, vector<1x128x256xf32>
    %132 = vector.shape_cast %131 : vector<1x128x256xf32> to vector<128x256xf32>
    %cst_136 = arith.constant dense<0.000000e+00> : vector<36x256xf32>
    %133 = tpu.matmul %130, %132, %cst_136 {dimension_numbers = #tpu.dot_dimension_numbers<[1], [0], [0], [1], [0, 0, 1, 1], [], []>} : vector<36x128xf32>, vector<128x256xf32>, vector<36x256xf32> -> vector<36x256xf32>
    %134 = arith.addf %127, %133 : vector<36x256xf32>
    %c14 = arith.constant 14 : index
    %c0_137 = arith.constant 0 : index
    %c0_138 = arith.constant 0 : index
    %135 = vector.load %arg7[%c14, %c0_137, %c0_138] : memref<16x36x225xf32, #tpu.memory_space<vmem>>, vector<1x36x225xf32>
    %136 = vector.shape_cast %135 : vector<1x36x225xf32> to vector<36x225xf32>
    %cst_139 = arith.constant dense<0.000000e+00> : vector<36x128xf32>
    %137 = tpu.matmul %136, %35, %cst_139 {dimension_numbers = #tpu.dot_dimension_numbers<[1], [0], [0], [1], [0, 0, 1, 1], [], []>} : vector<36x225xf32>, vector<225x128xf32>, vector<36x128xf32> -> vector<36x128xf32>
    %c14_140 = arith.constant 14 : index
    %c0_141 = arith.constant 0 : index
    %c0_142 = arith.constant 0 : index
    %138 = vector.load %arg5[%c14_140, %c0_141, %c0_142] : memref<16x128x256xf32, #tpu.memory_space<vmem>>, vector<1x128x256xf32>
    %139 = vector.shape_cast %138 : vector<1x128x256xf32> to vector<128x256xf32>
    %cst_143 = arith.constant dense<0.000000e+00> : vector<36x256xf32>
    %140 = tpu.matmul %137, %139, %cst_143 {dimension_numbers = #tpu.dot_dimension_numbers<[1], [0], [0], [1], [0, 0, 1, 1], [], []>} : vector<36x128xf32>, vector<128x256xf32>, vector<36x256xf32> -> vector<36x256xf32>
    %141 = arith.addf %134, %140 : vector<36x256xf32>
    %c15 = arith.constant 15 : index
    %c0_144 = arith.constant 0 : index
    %c0_145 = arith.constant 0 : index
    %142 = vector.load %arg7[%c15, %c0_144, %c0_145] : memref<16x36x225xf32, #tpu.memory_space<vmem>>, vector<1x36x225xf32>
    %143 = vector.shape_cast %142 : vector<1x36x225xf32> to vector<36x225xf32>
    %cst_146 = arith.constant dense<0.000000e+00> : vector<36x128xf32>
    %144 = tpu.matmul %143, %35, %cst_146 {dimension_numbers = #tpu.dot_dimension_numbers<[1], [0], [0], [1], [0, 0, 1, 1], [], []>} : vector<36x225xf32>, vector<225x128xf32>, vector<36x128xf32> -> vector<36x128xf32>
    %c15_147 = arith.constant 15 : index
    %c0_148 = arith.constant 0 : index
    %c0_149 = arith.constant 0 : index
    %145 = vector.load %arg5[%c15_147, %c0_148, %c0_149] : memref<16x128x256xf32, #tpu.memory_space<vmem>>, vector<1x128x256xf32>
    %146 = vector.shape_cast %145 : vector<1x128x256xf32> to vector<128x256xf32>
    %cst_150 = arith.constant dense<0.000000e+00> : vector<36x256xf32>
    %147 = tpu.matmul %144, %146, %cst_150 {dimension_numbers = #tpu.dot_dimension_numbers<[1], [0], [0], [1], [0, 0, 1, 1], [], []>} : vector<36x128xf32>, vector<128x256xf32>, vector<36x256xf32> -> vector<36x256xf32>
    %148 = arith.addf %141, %147 : vector<36x256xf32>
    %c0_151 = arith.constant 0 : index
    %c0_152 = arith.constant 0 : index
    %149 = vector.load %arg6[%c0_151, %c0_152] : memref<1x256xf32, #tpu.memory_space<vmem>>, vector<1x256xf32>
    %150 = vector.broadcast %149 : vector<1x256xf32> to vector<36x256xf32>
    %151 = arith.addf %148, %150 : vector<36x256xf32>
    %cst_153 = arith.constant 0.000000e+00 : f32
    %152 = vector.broadcast %cst_153 : f32 to vector<36x256xf32>
    %153 = arith.maximumf %151, %152 : vector<36x256xf32>
    %cst_154 = arith.constant 0.000000e+00 : f32
    %154 = vector.broadcast %cst_154 : f32 to vector<16x256xf32>
    %c0_155 = arith.constant 0 : index
    %c0_156 = arith.constant 0 : index
    %c0_157 = arith.constant 0 : index
    %155 = vector.load %arg10[%c0_155, %c0_156, %c0_157] : memref<9x16x36xf32, #tpu.memory_space<vmem>>, vector<1x16x36xf32>
    %156 = vector.shape_cast %155 : vector<1x16x36xf32> to vector<16x36xf32>
    %cst_158 = arith.constant dense<0.000000e+00> : vector<16x256xf32>
    %157 = tpu.matmul %156, %153, %cst_158 {dimension_numbers = #tpu.dot_dimension_numbers<[1], [0], [0], [1], [0, 0, 1, 1], [], []>} : vector<16x36xf32>, vector<36x256xf32>, vector<16x256xf32> -> vector<16x256xf32>
    %c0_159 = arith.constant 0 : index
    %c0_160 = arith.constant 0 : index
    %c0_161 = arith.constant 0 : index
    %158 = vector.load %arg8[%c0_159, %c0_160, %c0_161] : memref<9x256x256xf32, #tpu.memory_space<vmem>>, vector<1x256x256xf32>
    %159 = vector.shape_cast %158 : vector<1x256x256xf32> to vector<256x256xf32>
    %cst_162 = arith.constant dense<0.000000e+00> : vector<16x256xf32>
    %160 = tpu.matmul %157, %159, %cst_162 {dimension_numbers = #tpu.dot_dimension_numbers<[1], [0], [0], [1], [0, 0, 1, 1], [], []>} : vector<16x256xf32>, vector<256x256xf32>, vector<16x256xf32> -> vector<16x256xf32>
    %161 = arith.addf %154, %160 : vector<16x256xf32>
    %c1_163 = arith.constant 1 : index
    %c0_164 = arith.constant 0 : index
    %c0_165 = arith.constant 0 : index
    %162 = vector.load %arg10[%c1_163, %c0_164, %c0_165] : memref<9x16x36xf32, #tpu.memory_space<vmem>>, vector<1x16x36xf32>
    %163 = vector.shape_cast %162 : vector<1x16x36xf32> to vector<16x36xf32>
    %cst_166 = arith.constant dense<0.000000e+00> : vector<16x256xf32>
    %164 = tpu.matmul %163, %153, %cst_166 {dimension_numbers = #tpu.dot_dimension_numbers<[1], [0], [0], [1], [0, 0, 1, 1], [], []>} : vector<16x36xf32>, vector<36x256xf32>, vector<16x256xf32> -> vector<16x256xf32>
    %c1_167 = arith.constant 1 : index
    %c0_168 = arith.constant 0 : index
    %c0_169 = arith.constant 0 : index
    %165 = vector.load %arg8[%c1_167, %c0_168, %c0_169] : memref<9x256x256xf32, #tpu.memory_space<vmem>>, vector<1x256x256xf32>
    %166 = vector.shape_cast %165 : vector<1x256x256xf32> to vector<256x256xf32>
    %cst_170 = arith.constant dense<0.000000e+00> : vector<16x256xf32>
    %167 = tpu.matmul %164, %166, %cst_170 {dimension_numbers = #tpu.dot_dimension_numbers<[1], [0], [0], [1], [0, 0, 1, 1], [], []>} : vector<16x256xf32>, vector<256x256xf32>, vector<16x256xf32> -> vector<16x256xf32>
    %168 = arith.addf %161, %167 : vector<16x256xf32>
    %c2_171 = arith.constant 2 : index
    %c0_172 = arith.constant 0 : index
    %c0_173 = arith.constant 0 : index
    %169 = vector.load %arg10[%c2_171, %c0_172, %c0_173] : memref<9x16x36xf32, #tpu.memory_space<vmem>>, vector<1x16x36xf32>
    %170 = vector.shape_cast %169 : vector<1x16x36xf32> to vector<16x36xf32>
    %cst_174 = arith.constant dense<0.000000e+00> : vector<16x256xf32>
    %171 = tpu.matmul %170, %153, %cst_174 {dimension_numbers = #tpu.dot_dimension_numbers<[1], [0], [0], [1], [0, 0, 1, 1], [], []>} : vector<16x36xf32>, vector<36x256xf32>, vector<16x256xf32> -> vector<16x256xf32>
    %c2_175 = arith.constant 2 : index
    %c0_176 = arith.constant 0 : index
    %c0_177 = arith.constant 0 : index
    %172 = vector.load %arg8[%c2_175, %c0_176, %c0_177] : memref<9x256x256xf32, #tpu.memory_space<vmem>>, vector<1x256x256xf32>
    %173 = vector.shape_cast %172 : vector<1x256x256xf32> to vector<256x256xf32>
    %cst_178 = arith.constant dense<0.000000e+00> : vector<16x256xf32>
    %174 = tpu.matmul %171, %173, %cst_178 {dimension_numbers = #tpu.dot_dimension_numbers<[1], [0], [0], [1], [0, 0, 1, 1], [], []>} : vector<16x256xf32>, vector<256x256xf32>, vector<16x256xf32> -> vector<16x256xf32>
    %175 = arith.addf %168, %174 : vector<16x256xf32>
    %c3_179 = arith.constant 3 : index
    %c0_180 = arith.constant 0 : index
    %c0_181 = arith.constant 0 : index
    %176 = vector.load %arg10[%c3_179, %c0_180, %c0_181] : memref<9x16x36xf32, #tpu.memory_space<vmem>>, vector<1x16x36xf32>
    %177 = vector.shape_cast %176 : vector<1x16x36xf32> to vector<16x36xf32>
    %cst_182 = arith.constant dense<0.000000e+00> : vector<16x256xf32>
    %178 = tpu.matmul %177, %153, %cst_182 {dimension_numbers = #tpu.dot_dimension_numbers<[1], [0], [0], [1], [0, 0, 1, 1], [], []>} : vector<16x36xf32>, vector<36x256xf32>, vector<16x256xf32> -> vector<16x256xf32>
    %c3_183 = arith.constant 3 : index
    %c0_184 = arith.constant 0 : index
    %c0_185 = arith.constant 0 : index
    %179 = vector.load %arg8[%c3_183, %c0_184, %c0_185] : memref<9x256x256xf32, #tpu.memory_space<vmem>>, vector<1x256x256xf32>
    %180 = vector.shape_cast %179 : vector<1x256x256xf32> to vector<256x256xf32>
    %cst_186 = arith.constant dense<0.000000e+00> : vector<16x256xf32>
    %181 = tpu.matmul %178, %180, %cst_186 {dimension_numbers = #tpu.dot_dimension_numbers<[1], [0], [0], [1], [0, 0, 1, 1], [], []>} : vector<16x256xf32>, vector<256x256xf32>, vector<16x256xf32> -> vector<16x256xf32>
    %182 = arith.addf %175, %181 : vector<16x256xf32>
    %c4_187 = arith.constant 4 : index
    %c0_188 = arith.constant 0 : index
    %c0_189 = arith.constant 0 : index
    %183 = vector.load %arg10[%c4_187, %c0_188, %c0_189] : memref<9x16x36xf32, #tpu.memory_space<vmem>>, vector<1x16x36xf32>
    %184 = vector.shape_cast %183 : vector<1x16x36xf32> to vector<16x36xf32>
    %cst_190 = arith.constant dense<0.000000e+00> : vector<16x256xf32>
    %185 = tpu.matmul %184, %153, %cst_190 {dimension_numbers = #tpu.dot_dimension_numbers<[1], [0], [0], [1], [0, 0, 1, 1], [], []>} : vector<16x36xf32>, vector<36x256xf32>, vector<16x256xf32> -> vector<16x256xf32>
    %c4_191 = arith.constant 4 : index
    %c0_192 = arith.constant 0 : index
    %c0_193 = arith.constant 0 : index
    %186 = vector.load %arg8[%c4_191, %c0_192, %c0_193] : memref<9x256x256xf32, #tpu.memory_space<vmem>>, vector<1x256x256xf32>
    %187 = vector.shape_cast %186 : vector<1x256x256xf32> to vector<256x256xf32>
    %cst_194 = arith.constant dense<0.000000e+00> : vector<16x256xf32>
    %188 = tpu.matmul %185, %187, %cst_194 {dimension_numbers = #tpu.dot_dimension_numbers<[1], [0], [0], [1], [0, 0, 1, 1], [], []>} : vector<16x256xf32>, vector<256x256xf32>, vector<16x256xf32> -> vector<16x256xf32>
    %189 = arith.addf %182, %188 : vector<16x256xf32>
    %c5_195 = arith.constant 5 : index
    %c0_196 = arith.constant 0 : index
    %c0_197 = arith.constant 0 : index
    %190 = vector.load %arg10[%c5_195, %c0_196, %c0_197] : memref<9x16x36xf32, #tpu.memory_space<vmem>>, vector<1x16x36xf32>
    %191 = vector.shape_cast %190 : vector<1x16x36xf32> to vector<16x36xf32>
    %cst_198 = arith.constant dense<0.000000e+00> : vector<16x256xf32>
    %192 = tpu.matmul %191, %153, %cst_198 {dimension_numbers = #tpu.dot_dimension_numbers<[1], [0], [0], [1], [0, 0, 1, 1], [], []>} : vector<16x36xf32>, vector<36x256xf32>, vector<16x256xf32> -> vector<16x256xf32>
    %c5_199 = arith.constant 5 : index
    %c0_200 = arith.constant 0 : index
    %c0_201 = arith.constant 0 : index
    %193 = vector.load %arg8[%c5_199, %c0_200, %c0_201] : memref<9x256x256xf32, #tpu.memory_space<vmem>>, vector<1x256x256xf32>
    %194 = vector.shape_cast %193 : vector<1x256x256xf32> to vector<256x256xf32>
    %cst_202 = arith.constant dense<0.000000e+00> : vector<16x256xf32>
    %195 = tpu.matmul %192, %194, %cst_202 {dimension_numbers = #tpu.dot_dimension_numbers<[1], [0], [0], [1], [0, 0, 1, 1], [], []>} : vector<16x256xf32>, vector<256x256xf32>, vector<16x256xf32> -> vector<16x256xf32>
    %196 = arith.addf %189, %195 : vector<16x256xf32>
    %c6_203 = arith.constant 6 : index
    %c0_204 = arith.constant 0 : index
    %c0_205 = arith.constant 0 : index
    %197 = vector.load %arg10[%c6_203, %c0_204, %c0_205] : memref<9x16x36xf32, #tpu.memory_space<vmem>>, vector<1x16x36xf32>
    %198 = vector.shape_cast %197 : vector<1x16x36xf32> to vector<16x36xf32>
    %cst_206 = arith.constant dense<0.000000e+00> : vector<16x256xf32>
    %199 = tpu.matmul %198, %153, %cst_206 {dimension_numbers = #tpu.dot_dimension_numbers<[1], [0], [0], [1], [0, 0, 1, 1], [], []>} : vector<16x36xf32>, vector<36x256xf32>, vector<16x256xf32> -> vector<16x256xf32>
    %c6_207 = arith.constant 6 : index
    %c0_208 = arith.constant 0 : index
    %c0_209 = arith.constant 0 : index
    %200 = vector.load %arg8[%c6_207, %c0_208, %c0_209] : memref<9x256x256xf32, #tpu.memory_space<vmem>>, vector<1x256x256xf32>
    %201 = vector.shape_cast %200 : vector<1x256x256xf32> to vector<256x256xf32>
    %cst_210 = arith.constant dense<0.000000e+00> : vector<16x256xf32>
    %202 = tpu.matmul %199, %201, %cst_210 {dimension_numbers = #tpu.dot_dimension_numbers<[1], [0], [0], [1], [0, 0, 1, 1], [], []>} : vector<16x256xf32>, vector<256x256xf32>, vector<16x256xf32> -> vector<16x256xf32>
    %203 = arith.addf %196, %202 : vector<16x256xf32>
    %c7_211 = arith.constant 7 : index
    %c0_212 = arith.constant 0 : index
    %c0_213 = arith.constant 0 : index
    %204 = vector.load %arg10[%c7_211, %c0_212, %c0_213] : memref<9x16x36xf32, #tpu.memory_space<vmem>>, vector<1x16x36xf32>
    %205 = vector.shape_cast %204 : vector<1x16x36xf32> to vector<16x36xf32>
    %cst_214 = arith.constant dense<0.000000e+00> : vector<16x256xf32>
    %206 = tpu.matmul %205, %153, %cst_214 {dimension_numbers = #tpu.dot_dimension_numbers<[1], [0], [0], [1], [0, 0, 1, 1], [], []>} : vector<16x36xf32>, vector<36x256xf32>, vector<16x256xf32> -> vector<16x256xf32>
    %c7_215 = arith.constant 7 : index
    %c0_216 = arith.constant 0 : index
    %c0_217 = arith.constant 0 : index
    %207 = vector.load %arg8[%c7_215, %c0_216, %c0_217] : memref<9x256x256xf32, #tpu.memory_space<vmem>>, vector<1x256x256xf32>
    %208 = vector.shape_cast %207 : vector<1x256x256xf32> to vector<256x256xf32>
    %cst_218 = arith.constant dense<0.000000e+00> : vector<16x256xf32>
    %209 = tpu.matmul %206, %208, %cst_218 {dimension_numbers = #tpu.dot_dimension_numbers<[1], [0], [0], [1], [0, 0, 1, 1], [], []>} : vector<16x256xf32>, vector<256x256xf32>, vector<16x256xf32> -> vector<16x256xf32>
    %210 = arith.addf %203, %209 : vector<16x256xf32>
    %c8_219 = arith.constant 8 : index
    %c0_220 = arith.constant 0 : index
    %c0_221 = arith.constant 0 : index
    %211 = vector.load %arg10[%c8_219, %c0_220, %c0_221] : memref<9x16x36xf32, #tpu.memory_space<vmem>>, vector<1x16x36xf32>
    %212 = vector.shape_cast %211 : vector<1x16x36xf32> to vector<16x36xf32>
    %cst_222 = arith.constant dense<0.000000e+00> : vector<16x256xf32>
    %213 = tpu.matmul %212, %153, %cst_222 {dimension_numbers = #tpu.dot_dimension_numbers<[1], [0], [0], [1], [0, 0, 1, 1], [], []>} : vector<16x36xf32>, vector<36x256xf32>, vector<16x256xf32> -> vector<16x256xf32>
    %c8_223 = arith.constant 8 : index
    %c0_224 = arith.constant 0 : index
    %c0_225 = arith.constant 0 : index
    %214 = vector.load %arg8[%c8_223, %c0_224, %c0_225] : memref<9x256x256xf32, #tpu.memory_space<vmem>>, vector<1x256x256xf32>
    %215 = vector.shape_cast %214 : vector<1x256x256xf32> to vector<256x256xf32>
    %cst_226 = arith.constant dense<0.000000e+00> : vector<16x256xf32>
    %216 = tpu.matmul %213, %215, %cst_226 {dimension_numbers = #tpu.dot_dimension_numbers<[1], [0], [0], [1], [0, 0, 1, 1], [], []>} : vector<16x256xf32>, vector<256x256xf32>, vector<16x256xf32> -> vector<16x256xf32>
    %217 = arith.addf %210, %216 : vector<16x256xf32>
    %c0_227 = arith.constant 0 : index
    %c0_228 = arith.constant 0 : index
    %218 = vector.load %arg9[%c0_227, %c0_228] : memref<1x256xf32, #tpu.memory_space<vmem>>, vector<1x256xf32>
    %219 = vector.broadcast %218 : vector<1x256xf32> to vector<16x256xf32>
    %220 = arith.addf %217, %219 : vector<16x256xf32>
    %cst_229 = arith.constant 0.000000e+00 : f32
    %221 = vector.broadcast %cst_229 : f32 to vector<16x256xf32>
    %222 = arith.maximumf %220, %221 : vector<16x256xf32>
    %c0_230 = arith.constant 0 : index
    %c0_231 = arith.constant 0 : index
    %c0_232 = arith.constant 0 : index
    %223 = vector.load %arg11[%c0_230, %c0_231, %c0_232] : memref<1x16x256xf32, #tpu.memory_space<vmem>>, vector<1x16x256xf32>
    %224 = vector.shape_cast %223 : vector<1x16x256xf32> to vector<16x256xf32>
    %225 = vector.shape_cast %222 : vector<16x256xf32> to vector<1x16x256xf32>
    tpu.vector_store %arg11[%c0_230, %c0_231, %c0_232], %225 {strides = array<i32>} : memref<1x16x256xf32, #tpu.memory_space<vmem>>, vector<1x16x256xf32>,
    return
  }
  func.func @transform_0(%arg0: i32) -> (i32, i32, i32) {
    %c0_i32 = arith.constant 0 : i32
    %c0_i32_0 = arith.constant 0 : i32
    %c0_i32_1 = arith.constant 0 : i32
    return %arg0, %c0_i32, %c0_i32_0 : i32, i32, i32
  }
  func.func @transform_1(%arg0: i32) -> (i32, i32, i32) {
    %c0_i32 = arith.constant 0 : i32
    %c0_i32_0 = arith.constant 0 : i32
    %c0_i32_1 = arith.constant 0 : i32
    %c0_i32_2 = arith.constant 0 : i32
    return %c0_i32, %c0_i32_0, %c0_i32_1 : i32, i32, i32
  }
  func.func @transform_2(%arg0: i32) -> (i32, i32) {
    %c0_i32 = arith.constant 0 : i32
    %c0_i32_0 = arith.constant 0 : i32
    %c0_i32_1 = arith.constant 0 : i32
    return %c0_i32, %c0_i32_0 : i32, i32
  }
  func.func @transform_3(%arg0: i32) -> (i32, i32, i32) {
    %c0_i32 = arith.constant 0 : i32
    %c0_i32_0 = arith.constant 0 : i32
    %c0_i32_1 = arith.constant 0 : i32
    %c0_i32_2 = arith.constant 0 : i32
    return %c0_i32, %c0_i32_0, %c0_i32_1 : i32, i32, i32
  }
  func.func @transform_4(%arg0: i32) -> (i32, i32, i32) {
    %c0_i32 = arith.constant 0 : i32
    %c0_i32_0 = arith.constant 0 : i32
    %c0_i32_1 = arith.constant 0 : i32
    %c0_i32_2 = arith.constant 0 : i32
    return %c0_i32, %c0_i32_0, %c0_i32_1 : i32, i32, i32
  }
  func.func @transform_5(%arg0: i32) -> (i32, i32) {
    %c0_i32 = arith.constant 0 : i32
    %c0_i32_0 = arith.constant 0 : i32
    %c0_i32_1 = arith.constant 0 : i32
    return %c0_i32, %c0_i32_0 : i32, i32
  }
  func.func @transform_6(%arg0: i32) -> (i32, i32, i32) {
    %c0_i32 = arith.constant 0 : i32
    %c0_i32_0 = arith.constant 0 : i32
    %c0_i32_1 = arith.constant 0 : i32
    %c0_i32_2 = arith.constant 0 : i32
    return %c0_i32, %c0_i32_0, %c0_i32_1 : i32, i32, i32
  }
  func.func @transform_7(%arg0: i32) -> (i32, i32, i32) {
    %c0_i32 = arith.constant 0 : i32
    %c0_i32_0 = arith.constant 0 : i32
    %c0_i32_1 = arith.constant 0 : i32
    %c0_i32_2 = arith.constant 0 : i32
    return %c0_i32, %c0_i32_0, %c0_i32_1 : i32, i32, i32
  }
  func.func @transform_8(%arg0: i32) -> (i32, i32) {
    %c0_i32 = arith.constant 0 : i32
    %c0_i32_0 = arith.constant 0 : i32
    %c0_i32_1 = arith.constant 0 : i32
    return %c0_i32, %c0_i32_0 : i32, i32
  }
  func.func @transform_9(%arg0: i32) -> (i32, i32, i32) {
    %c0_i32 = arith.constant 0 : i32
    %c0_i32_0 = arith.constant 0 : i32
    %c0_i32_1 = arith.constant 0 : i32
    %c0_i32_2 = arith.constant 0 : i32
    return %c0_i32, %c0_i32_0, %c0_i32_1 : i32, i32, i32
  }
  func.func @transform_10(%arg0: i32) -> (i32, i32, i32) {
    %c0_i32 = arith.constant 0 : i32
    %c0_i32_0 = arith.constant 0 : i32
    %c0_i32_1 = arith.constant 0 : i32
    return %arg0, %c0_i32, %c0_i32_0 : i32, i32, i32
  }
}

</mosaic_0001>

<llo_original>
// kernel: nature_encoder_fused.1
$region0: #{nature_encoder_fused.1}
  #allocation0 [shape = 'u32[]', space=smem, size = 0x4, offset = 0x4, fixed_abs, tag = 'smem constant byte address 0x4 - core index']
  #allocation1 [shape = 'u32[72,128]{1,0:T(1,128)}', space=vmem, size = 0x9000, scoped, tag = 'internal scratch']
  %s0 = inlined_call_operand.vmem [shape: f32[2,256,64], index: 0, kind: input, shape index: {}]
  %s1 = inlined_call_operand.vmem [shape: f32[4,64,128], index: 1, kind: input, shape index: {}]
  %s2 = inlined_call_operand.vmem [shape: f32[1,128], index: 2, kind: input, shape index: {}]
  %s3 = inlined_call_operand.vmem [shape: f32[4,225,256], index: 3, kind: input, shape index: {}]
  %s4 = inlined_call_operand.vmem [shape: f32[16,128,256], index: 4, kind: input, shape index: {}]
  %s5 = inlined_call_operand.vmem [shape: f32[1,256], index: 5, kind: input, shape index: {}]
  %s6 = inlined_call_operand.vmem [shape: f32[16,36,225], index: 6, kind: input, shape index: {}]
  %s7 = inlined_call_operand.vmem [shape: f32[9,256,256], index: 7, kind: input, shape index: {}]
  %s8 = inlined_call_operand.vmem [shape: f32[1,256], index: 8, kind: input, shape index: {}]
  %s9 = inlined_call_operand.vmem [shape: f32[9,16,36], index: 9, kind: input, shape index: {}]
  %s10 = inlined_call_operand.vmem [shape: f32[2,16,256], index: 10, kind: output, shape index: {}]
  %s11 = sld [smem:[#allocation0]]
  $region73: #{nature_encoder_fused.1} parent=0
    _
  %s13 = ssub.s32 1, %s11
  %s14 = scalar_select 0, %s13, %s11
  loop: start=0, step=1, limit=4
  $region2: #{nature_encoder_fused.1} parent=0 // loop_pre_header
    _
  $region3: #{nature_encoder_fused.1} parent=0 // loop_header
    %s16 = sphi 0, %s20
    %p17 = scmp.ge.s32.totalorder %s16, 4
    %s26 = sphi 0, %s28
    %s29 = sphi 0, %s26
    %s30 = sphi 0, %s29
    %s46 = sphi 0, %s30
    %s50 = sphi 0, %s50
    %s52 = sphi 0, %s50
    %s53 = sphi 0, %s52
    %s67 = sphi 0, %s53
    %s71 = sphi 0, %s71
    %s73 = sphi 0, %s71
    %s74 = sphi 0, %s73
    %s88 = sphi 0, %s74
    %s92 = sphi 0, %s92
    %s94 = sphi 0, %s92
    %s95 = sphi 0, %s94
    %s109 = sphi 0, %s95
    %s113 = sphi 0, %s113
    %s115 = sphi 0, %s113
    %s116 = sphi 0, %s115
    %s130 = sphi 0, %s116
    %s134 = sphi 0, %s134
    %s136 = sphi 0, %s134
    %s137 = sphi 0, %s136
    %s151 = sphi 0, %s137
    %s155 = sphi 0, %s155
    %s157 = sphi 0, %s155
    %s158 = sphi 0, %s157
    %s172 = sphi 0, %s158
    %s176 = sphi 0, %s176
    %s178 = sphi 0, %s176
    %s179 = sphi 0, %s178
    %s193 = sphi 0, %s179
    %s197 = sphi 0, %s197
    %s199 = sphi 0, %s197
    %s200 = sphi 0, %s199
    %s214 = sphi 0, %s200
    %s218 = sphi 0, %s218
    %s220 = sphi 0, %s218
    %s221 = sphi 0, %s220
    %s235 = sphi 0, %s221
    %s241 = sphi 0, %s243
    %s244 = sphi 0, %s241
    %s245 = sphi 0, %s244
    %s261 = sphi 0, %s245
  $region4: #{nature_encoder_fused.1} parent=0 // loop_header_branch
    %19 = sbr.rel (%p17) target = $region8
  $region5: #{nature_encoder_fused.1} parent=0 // loop_body
    %s21 = ssub.s32 %s16, 1
    %s22 = ssub.s32 %s16, 2
    %s23 = sadd.s32 %s16, 1
    %s24 = ssub.s32 %s16, %s23
    %p25 = scmp.eq.s32.totalorder %s24, 0
    %s27 = sadd.s32 %s26, 1
    %s28 = scalar_select %p25, %s26, %s27
    %p31 = pneg %p25
    %p32 = scmp.eq.s32.totalorder %s16, 1
    %p33 = por %p31, %p32
    %p34 = scmp.ne.s32.totalorder %s26, %s29
    %p35 = scmp.eq.s32.totalorder %s16, 0
    %p36 = por %p34, %p35
    %p37 = scmp.ne.s32.totalorder %s26, %s29
    %p38 = scmp.eq.s32.totalorder %s21, 1
    %p39 = por %p37, %p38
    %p40 = scmp.ne.s32.totalorder %s29, %s30
    %p41 = scmp.eq.s32.totalorder %s21, 0
    %p42 = por %p40, %p41
    %p43 = scmp.ne.s32.totalorder %s29, %s30
    %p44 = scmp.eq.s32.totalorder %s22, 1
    %p45 = por %p43, %p44
    %p47 = scmp.ne.s32.totalorder %s30, %s46
    %p48 = scmp.eq.s32.totalorder %s22, 0
    %p49 = por %p47, %p48
    %s51 = sadd.s32 %s50, 1
    %p54 = scmp.eq.s32.totalorder %s16, 1
    %p55 = scmp.ne.s32.totalorder %s50, %s52
    %p56 = scmp.eq.s32.totalorder %s16, 0
    %p57 = por %p55, %p56
    %p58 = scmp.ne.s32.totalorder %s50, %s52
    %p59 = scmp.eq.s32.totalorder %s21, 1
    %p60 = por %p58, %p59
    %p61 = scmp.ne.s32.totalorder %s52, %s53
    %p62 = scmp.eq.s32.totalorder %s21, 0
    %p63 = por %p61, %p62
    %p64 = scmp.ne.s32.totalorder %s52, %s53
    %p65 = scmp.eq.s32.totalorder %s22, 1
    %p66 = por %p64, %p65
    %p68 = scmp.ne.s32.totalorder %s53, %s67
    %p69 = scmp.eq.s32.totalorder %s22, 0
    %p70 = por %p68, %p69
    %s72 = sadd.s32 %s71, 1
    %p75 = scmp.eq.s32.totalorder %s16, 1
    %p76 = scmp.ne.s32.totalorder %s71, %s73
    %p77 = scmp.eq.s32.totalorder %s16, 0
    %p78 = por %p76, %p77
    %p79 = scmp.ne.s32.totalorder %s71, %s73
    %p80 = scmp.eq.s32.totalorder %s21, 1
    %p81 = por %p79, %p80
    %p82 = scmp.ne.s32.totalorder %s73, %s74
    %p83 = scmp.eq.s32.totalorder %s21, 0
    %p84 = por %p82, %p83
    %p85 = scmp.ne.s32.totalorder %s73, %s74
    %p86 = scmp.eq.s32.totalorder %s22, 1
    %p87 = por %p85, %p86
    %p89 = scmp.ne.s32.totalorder %s74, %s88
    %p90 = scmp.eq.s32.totalorder %s22, 0
    %p91 = por %p89, %p90
    %s93 = sadd.s32 %s92, 1
    %p96 = scmp.eq.s32.totalorder %s16, 1
    %p97 = scmp.ne.s32.totalorder %s92, %s94
    %p98 = scmp.eq.s32.totalorder %s16, 0
    %p99 = por %p97, %p98
    %p100 = scmp.ne.s32.totalorder %s92, %s94
    %p101 = scmp.eq.s32.totalorder %s21, 1
    %p102 = por %p100, %p101
    %p103 = scmp.ne.s32.totalorder %s94, %s95
    %p104 = scmp.eq.s32.totalorder %s21, 0
    %p105 = por %p103, %p104
    %p106 = scmp.ne.s32.totalorder %s94, %s95
    %p107 = scmp.eq.s32.totalorder %s22, 1
    %p108 = por %p106, %p107
    %p110 = scmp.ne.s32.totalorder %s95, %s109
    %p111 = scmp.eq.s32.totalorder %s22, 0
    %p112 = por %p110, %p111
    %s114 = sadd.s32 %s113, 1
    %p117 = scmp.eq.s32.totalorder %s16, 1
    %p118 = scmp.ne.s32.totalorder %s113, %s115
    %p119 = scmp.eq.s32.totalorder %s16, 0
    %p120 = por %p118, %p119
    %p121 = scmp.ne.s32.totalorder %s113, %s115
    %p122 = scmp.eq.s32.totalorder %s21, 1
    %p123 = por %p121, %p122
    %p124 = scmp.ne.s32.totalorder %s115, %s116
    %p125 = scmp.eq.s32.totalorder %s21, 0
    %p126 = por %p124, %p125
    %p127 = scmp.ne.s32.totalorder %s115, %s116
    %p128 = scmp.eq.s32.totalorder %s22, 1
    %p129 = por %p127, %p128
    %p131 = scmp.ne.s32.totalorder %s116, %s130
    %p132 = scmp.eq.s32.totalorder %s22, 0
    %p133 = por %p131, %p132
    %s135 = sadd.s32 %s134, 1
    %p138 = scmp.eq.s32.totalorder %s16, 1
    %p139 = scmp.ne.s32.totalorder %s134, %s136
    %p140 = scmp.eq.s32.totalorder %s16, 0
    %p141 = por %p139, %p140
    %p142 = scmp.ne.s32.totalorder %s134, %s136
    %p143 = scmp.eq.s32.totalorder %s21, 1
    %p144 = por %p142, %p143
    %p145 = scmp.ne.s32.totalorder %s136, %s137
    %p146 = scmp.eq.s32.totalorder %s21, 0
    %p147 = por %p145, %p146
    %p148 = scmp.ne.s32.totalorder %s136, %s137
    %p149 = scmp.eq.s32.totalorder %s22, 1
    %p150 = por %p148, %p149
    %p152 = scmp.ne.s32.totalorder %s137, %s151
    %p153 = scmp.eq.s32.totalorder %s22, 0
    %p154 = por %p152, %p153
    %s156 = sadd.s32 %s155, 1
    %p159 = scmp.eq.s32.totalorder %s16, 1
    %p160 = scmp.ne.s32.totalorder %s155, %s157
    %p161 = scmp.eq.s32.totalorder %s16, 0
    %p162 = por %p160, %p161
    %p163 = scmp.ne.s32.totalorder %s155, %s157
    %p164 = scmp.eq.s32.totalorder %s21, 1
    %p165 = por %p163, %p164
    %p166 = scmp.ne.s32.totalorder %s157, %s158
    %p167 = scmp.eq.s32.totalorder %s21, 0
    %p168 = por %p166, %p167
    %p169 = scmp.ne.s32.totalorder %s157, %s158
    %p170 = scmp.eq.s32.totalorder %s22, 1
    %p171 = por %p169, %p170
    %p173 = scmp.ne.s32.totalorder %s158, %s172
    %p174 = scmp.eq.s32.totalorder %s22, 0
    %p175 = por %p173, %p174
    %s177 = sadd.s32 %s176, 1
    %p180 = scmp.eq.s32.totalorder %s16, 1
    %p181 = scmp.ne.s32.totalorder %s176, %s178
    %p182 = scmp.eq.s32.totalorder %s16, 0
    %p183 = por %p181, %p182
    %p184 = scmp.ne.s32.totalorder %s176, %s178
    %p185 = scmp.eq.s32.totalorder %s21, 1
    %p186 = por %p184, %p185
    %p187 = scmp.ne.s32.totalorder %s178, %s179
    %p188 = scmp.eq.s32.totalorder %s21, 0
    %p189 = por %p187, %p188
    %p190 = scmp.ne.s32.totalorder %s178, %s179
    %p191 = scmp.eq.s32.totalorder %s22, 1
    %p192 = por %p190, %p191
    %p194 = scmp.ne.s32.totalorder %s179, %s193
    %p195 = scmp.eq.s32.totalorder %s22, 0
    %p196 = por %p194, %p195
    %s198 = sadd.s32 %s197, 1
    %p201 = scmp.eq.s32.totalorder %s16, 1
    %p202 = scmp.ne.s32.totalorder %s197, %s199
    %p203 = scmp.eq.s32.totalorder %s16, 0
    %p204 = por %p202, %p203
    %p205 = scmp.ne.s32.totalorder %s197, %s199
    %p206 = scmp.eq.s32.totalorder %s21, 1
    %p207 = por %p205, %p206
    %p208 = scmp.ne.s32.totalorder %s199, %s200
    %p209 = scmp.eq.s32.totalorder %s21, 0
    %p210 = por %p208, %p209
    %p211 = scmp.ne.s32.totalorder %s199, %s200
    %p212 = scmp.eq.s32.totalorder %s22, 1
    %p213 = por %p211, %p212
    %p215 = scmp.ne.s32.totalorder %s200, %s214
    %p216 = scmp.eq.s32.totalorder %s22, 0
    %p217 = por %p215, %p216
    %s219 = sadd.s32 %s218, 1
    %p222 = scmp.eq.s32.totalorder %s16, 1
    %p223 = scmp.ne.s32.totalorder %s218, %s220
    %p224 = scmp.eq.s32.totalorder %s16, 0
    %p225 = por %p223, %p224
    %p226 = scmp.ne.s32.totalorder %s218, %s220
    %p227 = scmp.eq.s32.totalorder %s21, 1
    %p228 = por %p226, %p227
    %p229 = scmp.ne.s32.totalorder %s220, %s221
    %p230 = scmp.eq.s32.totalorder %s21, 0
    %p231 = por %p229, %p230
    %p232 = scmp.ne.s32.totalorder %s220, %s221
    %p233 = scmp.eq.s32.totalorder %s22, 1
    %p234 = por %p232, %p233
    %p236 = scmp.ne.s32.totalorder %s221, %s235
    %p237 = scmp.eq.s32.totalorder %s22, 0
    %p238 = por %p236, %p237
    %s239 = ssub.s32 %s16, %s23
    %p240 = scmp.eq.s32.totalorder %s239, 0
    %s242 = sadd.s32 %s241, 1
    %s243 = scalar_select %p240, %s241, %s242
    %p246 = pneg %p240
    %p247 = scmp.eq.s32.totalorder %s16, 1
    %p248 = por %p246, %p247
    %p249 = scmp.ne.s32.totalorder %s241, %s244
    %p250 = scmp.eq.s32.totalorder %s16, 0
    %p251 = por %p249, %p250
    %p252 = scmp.ne.s32.totalorder %s241, %s244
    %p253 = scmp.eq.s32.totalorder %s21, 1
    %p254 = por %p252, %p253
    %p255 = scmp.ne.s32.totalorder %s244, %s245
    %p256 = scmp.eq.s32.totalorder %s21, 0
    %p257 = por %p255, %p256
    %p258 = scmp.ne.s32.totalorder %s244, %s245
    %p259 = scmp.eq.s32.totalorder %s22, 1
    %p260 = por %p258, %p259
    %p262 = scmp.ne.s32.totalorder %s245, %s261
    %p263 = scmp.eq.s32.totalorder %s22, 0
    %p264 = por %p262, %p263
    %p265 = scmp.le.s32.totalorder 1, %s16
    %p266 = scmp.lt.s32.totalorder %s16, 3
    %p267 = pnand %p265, %p266
    %p268 = pneg %p267
    // Predicated region
    $region9: #{nature_encoder_fused.1} parent=5 // pred_check
      _
    $region10: #{nature_encoder_fused.1} parent=5 // pred_check_branch
      %270 = sbr.rel (%p267) target = $region12
    $region11: #{nature_encoder_fused.1} parent=5 // pred_region
      %s271 = ssub.s32 %s16, 1
      // Predicated region
      $region13: #{nature_encoder_fused.1} parent=11 // pred_check
        %p272 = pneg %p63
      $region14: #{nature_encoder_fused.1} parent=11 // pred_check_branch
        %274 = sbr.rel (%p272) target = $region16
      $region15: #{nature_encoder_fused.1} parent=11 // pred_region
        _
      $region16: #{nature_encoder_fused.1} parent=11 // pred_fallthru
        _
      // Predicated region
      $region17: #{nature_encoder_fused.1} parent=11 // pred_check
        %p275 = pneg %p84
      $region18: #{nature_encoder_fused.1} parent=11 // pred_check_branch
        %277 = sbr.rel (%p275) target = $region20
      $region19: #{nature_encoder_fused.1} parent=11 // pred_region
        _
      $region20: #{nature_encoder_fused.1} parent=11 // pred_fallthru
        _
      // Predicated region
      $region21: #{nature_encoder_fused.1} parent=11 // pred_check
        %p278 = pneg %p105
      $region22: #{nature_encoder_fused.1} parent=11 // pred_check_branch
        %280 = sbr.rel (%p278) target = $region24
      $region23: #{nature_encoder_fused.1} parent=11 // pred_region
        _
      $region24: #{nature_encoder_fused.1} parent=11 // pred_fallthru
        _
      // Predicated region
      $region25: #{nature_encoder_fused.1} parent=11 // pred_check
        %p281 = pneg %p126
      $region26: #{nature_encoder_fused.1} parent=11 // pred_check_branch
        %283 = sbr.rel (%p281) target = $region28
      $region27: #{nature_encoder_fused.1} parent=11 // pred_region
        _
      $region28: #{nature_encoder_fused.1} parent=11 // pred_fallthru
        _
      // Predicated region
      $region29: #{nature_encoder_fused.1} parent=11 // pred_check
        %p284 = pneg %p147
      $region30: #{nature_encoder_fused.1} parent=11 // pred_check_branch
        %286 = sbr.rel (%p284) target = $region32
      $region31: #{nature_encoder_fused.1} parent=11 // pred_region
        _
      $region32: #{nature_encoder_fused.1} parent=11 // pred_fallthru
        _
      // Predicated region
      $region33: #{nature_encoder_fused.1} parent=11 // pred_check
        %p287 = pneg %p168
      $region34: #{nature_encoder_fused.1} parent=11 // pred_check_branch
        %289 = sbr.rel (%p287) target = $region36
      $region35: #{nature_encoder_fused.1} parent=11 // pred_region
        _
      $region36: #{nature_encoder_fused.1} parent=11 // pred_fallthru
        _
      // Predicated region
      $region37: #{nature_encoder_fused.1} parent=11 // pred_check
        %p290 = pneg %p189
      $region38: #{nature_encoder_fused.1} parent=11 // pred_check_branch
        %292 = sbr.rel (%p290) target = $region40
      $region39: #{nature_encoder_fused.1} parent=11 // pred_region
        _
      $region40: #{nature_encoder_fused.1} parent=11 // pred_fallthru
        _
      // Predicated region
      $region41: #{nature_encoder_fused.1} parent=11 // pred_check
        %p293 = pneg %p210
      $region42: #{nature_encoder_fused.1} parent=11 // pred_check_branch
        %295 = sbr.rel (%p293) target = $region44
      $region43: #{nature_encoder_fused.1} parent=11 // pred_region
        _
      $region44: #{nature_encoder_fused.1} parent=11 // pred_fallthru
        _
      // Predicated region
      $region45: #{nature_encoder_fused.1} parent=11 // pred_check
        %p296 = pneg %p231
      $region46: #{nature_encoder_fused.1} parent=11 // pred_check_branch
        %298 = sbr.rel (%p296) target = $region48
      $region47: #{nature_encoder_fused.1} parent=11 // pred_region
        _
      $region48: #{nature_encoder_fused.1} parent=11 // pred_fallthru
        _
    $region12: #{nature_encoder_fused.1} parent=5 // pred_fallthru
      _
    %p299 = scmp.lt.s32.totalorder %s16, 2
    // Predicated region
    $region49: #{nature_encoder_fused.1} parent=5 // pred_check
      %p300 = pneg %p299
    $region50: #{nature_encoder_fused.1} parent=5 // pred_check_branch
      %302 = sbr.rel (%p300) target = $region52
    $region51: #{nature_encoder_fused.1} parent=5 // pred_region
      // Predicated region
      $region53: #{nature_encoder_fused.1} parent=51 // pred_check
        %p303 = pneg %p36
      $region54: #{nature_encoder_fused.1} parent=51 // pred_check_branch
        %305 = sbr.rel (%p303) target = $region56
      $region55: #{nature_encoder_fused.1} parent=51 // pred_region
        %p306 = scmp.lt.s32.totalorder %s16, 1
        %s307 = scalar_select %p306, %s16, 1
        %s308 = smul.addr %s307, 32
        %s309 = smul.addr %s308, 8
        %s310 = scalar_lea.vmem %s0, %s309
      $region56: #{nature_encoder_fused.1} parent=51 // pred_fallthru
        _
    $region52: #{nature_encoder_fused.1} parent=5 // pred_fallthru
      _
    %p311 = scmp.le.s32.totalorder 1, %s16
    %p312 = scmp.lt.s32.totalorder %s16, 3
    %p313 = pnand %p311, %p312
    %p314 = pneg %p313
    // Predicated region
    $region57: #{nature_encoder_fused.1} parent=5 // pred_check
      _
    $region58: #{nature_encoder_fused.1} parent=5 // pred_check_branch
      %316 = sbr.rel (%p313) target = $region60
    $region59: #{nature_encoder_fused.1} parent=5 // pred_region
      %s317 = ssub.s32 %s16, 1
      %p318 = scmp.lt.s32.totalorder %s21, 1
      %s319 = scalar_select %p318, %s21, 1
      %s320 = smul.addr %s319, 32
      %s321 = smul.addr %s320, 8
      %s322 = scalar_lea.vmem %s0, %s321
      %p323 = pneg %p42
      %p324 = pneg %p39
      %p325 = pneg %p63
      %p326 = pneg %p60
      %p327 = pneg %p84
      %p328 = pneg %p81
      %p329 = pneg %p105
      %p330 = pneg %p102
      %p331 = pneg %p126
      %p332 = pneg %p123
      %p333 = pneg %p147
      %p334 = pneg %p144
      %p335 = pneg %p168
      %p336 = pneg %p165
      %p337 = pneg %p189
      %p338 = pneg %p186
      %p339 = pneg %p210
      %p340 = pneg %p207
      %p341 = pneg %p231
      %p342 = pneg %p228
      %p343 = pneg %p257
      %p344 = pneg %p254
      %p345 = scmp.lt.s32.totalorder %s21, 1
      %s346 = scalar_select %p345, %s21, 1
      %s347 = smul.addr %s346, 4
      %s348 = smul.addr %s347, 8
      %s349 = scalar_lea.vmem %s10, %s348
      %p350 = scmp.lt.s32.totalorder %s21, 1
      %s351 = scalar_select %p350, %s21, 1
      %s352 = smul.addr %s351, 32
      %s353 = smul.addr %s352, 8
      %s354 = scalar_lea.vmem %s0, %s353
      %p355 = scmp.lt.s32.totalorder %s21, 1
      %s356 = scalar_select %p355, %s21, 1
      %s357 = smul.addr %s356, 4
      %s358 = smul.addr %s357, 8
      %s359 = scalar_lea.vmem %s10, %s358
      %v360 = vld [vmem:[%s354] sm:$0xff]
      %v361 = vld [vmem:[%s354 + $0x8] sm:$0xff]
      %v362 = vld [vmem:[%s354 + $0x10] sm:$0xff]
      %v363 = vld [vmem:[%s354 + $0x18] sm:$0xff]
      %v364 = vld [vmem:[%s354 + $0x20] sm:$0xff]
      %v365 = vld [vmem:[%s354 + $0x28] sm:$0xff]
      %v366 = vld [vmem:[%s354 + $0x30] sm:$0xff]
      %v367 = vld [vmem:[%s354 + $0x38] sm:$0xff]
      %v368 = vld [vmem:[%s354 + $0x40] sm:$0xff]
      %v369 = vld [vmem:[%s354 + $0x48] sm:$0xff]
      %v370 = vld [vmem:[%s354 + $0x50] sm:$0xff]
      %v371 = vld [vmem:[%s354 + $0x58] sm:$0xff]
      %v372 = vld [vmem:[%s354 + $0x60] sm:$0xff]
      %v373 = vld [vmem:[%s354 + $0x68] sm:$0xff]
      %v374 = vld [vmem:[%s354 + $0x70] sm:$0xff]
      %v375 = vld [vmem:[%s354 + $0x78] sm:$0xff]
      %v376 = vld [vmem:[%s354 + $0x80] sm:$0xff]
      %v377 = vld [vmem:[%s354 + $0x88] sm:$0xff]
      %v378 = vld [vmem:[%s354 + $0x90] sm:$0xff]
      %v379 = vld [vmem:[%s354 + $0x98] sm:$0xff]
      %v380 = vld [vmem:[%s354 + $0xa0] sm:$0xff]
      %v381 = vld [vmem:[%s354 + $0xa8] sm:$0xff]
      %v382 = vld [vmem:[%s354 + $0xb0] sm:$0xff]
      %v383 = vld [vmem:[%s354 + $0xb8] sm:$0xff]
      %v384 = vld [vmem:[%s354 + $0xc0] sm:$0xff]
      %v385 = vld [vmem:[%s354 + $0xc8] sm:$0xff]
      %v386 = vld [vmem:[%s354 + $0xd0] sm:$0xff]
      %v387 = vld [vmem:[%s354 + $0xd8] sm:$0xff]
      %v388 = vld [vmem:[%s354 + $0xe0] sm:$0xff]
      %v389 = vld [vmem:[%s354 + $0xe8] sm:$0xff]
      %v390 = vld [vmem:[%s354 + $0xf0] sm:$0xff]
      %v391 = vld [vmem:[%s354 + $0xf8] sm:$0xff]
      %v392 = vld [vmem:[%s3] sm:$0xff]
      %v393 = vld [vmem:[%s3 + $0x8] sm:$0xff]
      %v394 = vld [vmem:[%s3 + $0x10] sm:$0xff]
      %v395 = vld [vmem:[%s3 + $0x18] sm:$0xff]
      %v396 = vld [vmem:[%s3 + $0x20] sm:$0xff]
      %v397 = vld [vmem:[%s3 + $0x28] sm:$0xff]
      %v398 = vld [vmem:[%s3 + $0x30] sm:$0xff]
      %v399 = vld [vmem:[%s3 + $0x38] sm:$0xff]
      %v400 = vld [vmem:[%s3 + $0x40] sm:$0xff]
      %v401 = vld [vmem:[%s3 + $0x48] sm:$0xff]
      %v402 = vld [vmem:[%s3 + $0x50] sm:$0xff]
      %v403 = vld [vmem:[%s3 + $0x58] sm:$0xff]
      %v404 = vld [vmem:[%s3 + $0x60] sm:$0xff]
      %v405 = vld [vmem:[%s3 + $0x68] sm:$0xff]
      %v406 = vld [vmem:[%s3 + $0x70] sm:$0xff]
      %v407 = vld [vmem:[%s3 + $0x78] sm:$0xff]
      %v408 = vld [vmem:[%s3 + $0x80] sm:$0xff]
      %v409 = vld [vmem:[%s3 + $0x88] sm:$0xff]
      %v410 = vld [vmem:[%s3 + $0x90] sm:$0xff]
      %v411 = vld [vmem:[%s3 + $0x98] sm:$0xff]
      %v412 = vld [vmem:[%s3 + $0xa0] sm:$0xff]
      %v413 = vld [vmem:[%s3 + $0xa8] sm:$0xff]
      %v414 = vld [vmem:[%s3 + $0xb0] sm:$0xff]
      %v415 = vld [vmem:[%s3 + $0xb8] sm:$0xff]
      %v416 = vld [vmem:[%s3 + $0xc0] sm:$0xff]
      %v417 = vld [vmem:[%s3 + $0xc8] sm:$0xff]
      %v418 = vld [vmem:[%s3 + $0xd0] sm:$0xff]
      %v419 = vld [vmem:[%s3 + $0xd8] sm:$0xff]
      %v420 = vld [vmem:[%s3 + $0xe0] sm:$0xff]
      %v421 = vld [vmem:[%s3 + $0xe8] sm:$0xff]
      %v422 = vld [vmem:[%s3 + $0xf0] sm:$0xff]
      %v423 = vld [vmem:[%s3 + $0xf8] sm:$0xff]
      %v424 = vld [vmem:[%s3 + $0x100] sm:$0xff]
      %v425 = vld [vmem:[%s3 + $0x108] sm:$0xff]
      %v426 = vld [vmem:[%s3 + $0x110] sm:$0xff]
      %v427 = vld [vmem:[%s3 + $0x118] sm:$0xff]
      %v428 = vld [vmem:[%s3 + $0x120] sm:$0xff]
      %v429 = vld [vmem:[%s3 + $0x128] sm:$0xff]
      %v430 = vld [vmem:[%s3 + $0x130] sm:$0xff]
      %v431 = vld [vmem:[%s3 + $0x138] sm:$0xff]
      %v432 = vld [vmem:[%s3 + $0x140] sm:$0xff]
      %v433 = vld [vmem:[%s3 + $0x148] sm:$0xff]
      %v434 = vld [vmem:[%s3 + $0x150] sm:$0xff]
      %v435 = vld [vmem:[%s3 + $0x158] sm:$0xff]
      %v436 = vld [vmem:[%s3 + $0x160] sm:$0xff]
      %v437 = vld [vmem:[%s3 + $0x168] sm:$0xff]
      %v438 = vld [vmem:[%s3 + $0x170] sm:$0xff]
      %v439 = vld [vmem:[%s3 + $0x178] sm:$0xff]
      %v440 = vld [vmem:[%s3 + $0x180] sm:$0xff]
      %v441 = vld [vmem:[%s3 + $0x188] sm:$0xff]
      %v442 = vld [vmem:[%s3 + $0x190] sm:$0xff]
      %v443 = vld [vmem:[%s3 + $0x198] sm:$0xff]
      %v444 = vld [vmem:[%s3 + $0x1a0] sm:$0xff]
      %v445 = vld [vmem:[%s3 + $0x1a8] sm:$0xff]
      %v446 = vld [vmem:[%s3 + $0x1b0] sm:$0xff]
      %v447 = vld [vmem:[%s3 + $0x1b8] sm:$0xff]
      %v448 = vld [vmem:[%s3 + $0x1c0] sm:$0x1]
      %v449 = vld [vmem:[%s3 + $0x1c8] sm:$0x1]
      %450 = vmatpush.msra.mxu0 %v375
      %451 = vmatpush.msra.mxu0 %v374
      %452 = vmatpush.msra.mxu0 %v373
      %453 = vmatpush.msra.mxu0 %v372
      %454 = vmatpush.msra.mxu0 %v371
      %455 = vmatpush.msra.mxu0 %v370
      %456 = vmatpush.msra.mxu0 %v369
      %457 = vmatpush.msra.mxu0 %v368
      %458 = vmatpush.msra.mxu0 %v367
      %459 = vmatpush.msra.mxu0 %v366
      %460 = vmatpush.msra.mxu0 %v365
      %461 = vmatpush.msra.mxu0 %v364
      %462 = vmatpush.msra.mxu0 %v363
      %463 = vmatpush.msra.mxu0 %v362
      %464 = vmatpush.msra.mxu0 %v361
      %465 = vmatpush.msra.mxu0 %v360
      %466 = vmatmul.f32.gmra.mxu0 %v392
      %v467 = vpop.f32.mrf.mxu0
      %v468 = vadd.f32 0.0, %v467
      %469 = vmatmul.f32.gmra.mxu0 %v394
      %v470 = vpop.f32.mrf.mxu0
      %v471 = vadd.f32 0.0, %v470
      %472 = vmatmul.f32.gmra.mxu0 %v396
      %v473 = vpop.f32.mrf.mxu0
      %v474 = vadd.f32 0.0, %v473
      %475 = vmatmul.f32.gmra.mxu0 %v398
      %v476 = vpop.f32.mrf.mxu0
      %v477 = vadd.f32 0.0, %v476
      %478 = vmatmul.f32.gmra.mxu0 %v400
      %v479 = vpop.f32.mrf.mxu0
      %v480 = vadd.f32 0.0, %v479
      %481 = vmatmul.f32.gmra.mxu0 %v402
      %v482 = vpop.f32.mrf.mxu0
      %v483 = vadd.f32 0.0, %v482
      %484 = vmatmul.f32.gmra.mxu0 %v404
      %v485 = vpop.f32.mrf.mxu0
      %v486 = vadd.f32 0.0, %v485
      %487 = vmatmul.f32.gmra.mxu0 %v406
      %v488 = vpop.f32.mrf.mxu0
      %v489 = vadd.f32 0.0, %v488
      %490 = vmatmul.f32.gmra.mxu0 %v408
      %v491 = vpop.f32.mrf.mxu0
      %v492 = vadd.f32 0.0, %v491
      %493 = vmatmul.f32.gmra.mxu0 %v410
      %v494 = vpop.f32.mrf.mxu0
      %v495 = vadd.f32 0.0, %v494
      %496 = vmatmul.f32.gmra.mxu0 %v412
      %v497 = vpop.f32.mrf.mxu0
      %v498 = vadd.f32 0.0, %v497
      %499 = vmatmul.f32.gmra.mxu0 %v414
      %v500 = vpop.f32.mrf.mxu0
      %v501 = vadd.f32 0.0, %v500
      %502 = vmatmul.f32.gmra.mxu0 %v416
      %v503 = vpop.f32.mrf.mxu0
      %v504 = vadd.f32 0.0, %v503
      %505 = vmatmul.f32.gmra.mxu0 %v418
      %v506 = vpop.f32.mrf.mxu0
      %v507 = vadd.f32 0.0, %v506
      %508 = vmatmul.f32.gmra.mxu0 %v420
      %v509 = vpop.f32.mrf.mxu0
      %v510 = vadd.f32 0.0, %v509
      %511 = vmatmul.f32.gmra.mxu0 %v422
      %v512 = vpop.f32.mrf.mxu0
      %v513 = vadd.f32 0.0, %v512
      %514 = vmatmul.f32.gmra.mxu0 %v424
      %v515 = vpop.f32.mrf.mxu0
      %v516 = vadd.f32 0.0, %v515
      %517 = vmatmul.f32.gmra.mxu0 %v426
      %v518 = vpop.f32.mrf.mxu0
      %v519 = vadd.f32 0.0, %v518
      %520 = vmatmul.f32.gmra.mxu0 %v428
      %v521 = vpop.f32.mrf.mxu0
      %v522 = vadd.f32 0.0, %v521
      %523 = vmatmul.f32.gmra.mxu0 %v430
      %v524 = vpop.f32.mrf.mxu0
      %v525 = vadd.f32 0.0, %v524
      %526 = vmatmul.f32.gmra.mxu0 %v432
      %v527 = vpop.f32.mrf.mxu0
      %v528 = vadd.f32 0.0, %v527
      %529 = vmatmul.f32.gmra.mxu0 %v434
      %v530 = vpop.f32.mrf.mxu0
      %v531 = vadd.f32 0.0, %v530
      %532 = vmatmul.f32.gmra.mxu0 %v436
      %v533 = vpop.f32.mrf.mxu0
      %v534 = vadd.f32 0.0, %v533
      %535 = vmatmul.f32.gmra.mxu0 %v438
      %v536 = vpop.f32.mrf.mxu0
      %v537 = vadd.f32 0.0, %v536
      %538 = vmatmul.f32.gmra.mxu0 %v440
      %v539 = vpop.f32.mrf.mxu0
      %v540 = vadd.f32 0.0, %v539
      %541 = vmatmul.f32.gmra.mxu0 %v442
      %v542 = vpop.f32.mrf.mxu0
      %v543 = vadd.f32 0.0, %v542
      %544 = vmatmul.f32.gmra.mxu0 %v444
      %v545 = vpop.f32.mrf.mxu0
      %v546 = vadd.f32 0.0, %v545
      %547 = vmatmul.f32.gmra.mxu0 %v446
      %v548 = vpop.f32.mrf.mxu0
      %v549 = vadd.f32 0.0, %v548
      %550 = vmatmul.f32.gmra.mxu0 %v448
      %v551 = vpop.f32.mrf.mxu0
      %v552 = vadd.f32 0.0, %v551
      %553 = vdwg.mxu0
      %554 = vmatpush.msra.mxu0 %v391
      %555 = vmatpush.msra.mxu0 %v390
      %556 = vmatpush.msra.mxu0 %v389
      %557 = vmatpush.msra.mxu0 %v388
      %558 = vmatpush.msra.mxu0 %v387
      %559 = vmatpush.msra.mxu0 %v386
      %560 = vmatpush.msra.mxu0 %v385
      %561 = vmatpush.msra.mxu0 %v384
      %562 = vmatpush.msra.mxu0 %v383
      %563 = vmatpush.msra.mxu0 %v382
      %564 = vmatpush.msra.mxu0 %v381
      %565 = vmatpush.msra.mxu0 %v380
      %566 = vmatpush.msra.mxu0 %v379
      %567 = vmatpush.msra.mxu0 %v378
      %568 = vmatpush.msra.mxu0 %v377
      %569 = vmatpush.msra.mxu0 %v376
      %570 = vmatmul.f32.gmra.mxu0 %v393
      %v571 = vpop.f32.mrf.mxu0
      %v572 = vadd.f32 %v468, %v571
      %573 = vmatmul.f32.gmra.mxu0 %v395
      %v574 = vpop.f32.mrf.mxu0
      %v575 = vadd.f32 %v471, %v574
      %576 = vmatmul.f32.gmra.mxu0 %v397
      %v577 = vpop.f32.mrf.mxu0
      %v578 = vadd.f32 %v474, %v577
      %579 = vmatmul.f32.gmra.mxu0 %v399
      %v580 = vpop.f32.mrf.mxu0
      %v581 = vadd.f32 %v477, %v580
      %582 = vmatmul.f32.gmra.mxu0 %v401
      %v583 = vpop.f32.mrf.mxu0
      %v584 = vadd.f32 %v480, %v583
      %585 = vmatmul.f32.gmra.mxu0 %v403
      %v586 = vpop.f32.mrf.mxu0
      %v587 = vadd.f32 %v483, %v586
      %588 = vmatmul.f32.gmra.mxu0 %v405
      %v589 = vpop.f32.mrf.mxu0
      %v590 = vadd.f32 %v486, %v589
      %591 = vmatmul.f32.gmra.mxu0 %v407
      %v592 = vpop.f32.mrf.mxu0
      %v593 = vadd.f32 %v489, %v592
      %594 = vmatmul.f32.gmra.mxu0 %v409
      %v595 = vpop.f32.mrf.mxu0
      %v596 = vadd.f32 %v492, %v595
      %597 = vmatmul.f32.gmra.mxu0 %v411
      %v598 = vpop.f32.mrf.mxu0
      %v599 = vadd.f32 %v495, %v598
      %600 = vmatmul.f32.gmra.mxu0 %v413
      %v601 = vpop.f32.mrf.mxu0
      %v602 = vadd.f32 %v498, %v601
      %603 = vmatmul.f32.gmra.mxu0 %v415
      %v604 = vpop.f32.mrf.mxu0
      %v605 = vadd.f32 %v501, %v604
      %606 = vmatmul.f32.gmra.mxu0 %v417
      %v607 = vpop.f32.mrf.mxu0
      %v608 = vadd.f32 %v504, %v607
      %609 = vmatmul.f32.gmra.mxu0 %v419
      %v610 = vpop.f32.mrf.mxu0
      %v611 = vadd.f32 %v507, %v610
      %612 = vmatmul.f32.gmra.mxu0 %v421
      %v613 = vpop.f32.mrf.mxu0
      %v614 = vadd.f32 %v510, %v613
      %615 = vmatmul.f32.gmra.mxu0 %v423
      %v616 = vpop.f32.mrf.mxu0
      %v617 = vadd.f32 %v513, %v616
      %618 = vmatmul.f32.gmra.mxu0 %v425
      %v619 = vpop.f32.mrf.mxu0
      %v620 = vadd.f32 %v516, %v619
      %621 = vmatmul.f32.gmra.mxu0 %v427
      %v622 = vpop.f32.mrf.mxu0
      %v623 = vadd.f32 %v519, %v622
      %624 = vmatmul.f32.gmra.mxu0 %v429
      %v625 = vpop.f32.mrf.mxu0
      %v626 = vadd.f32 %v522, %v625
      %627 = vmatmul.f32.gmra.mxu0 %v431
      %v628 = vpop.f32.mrf.mxu0
      %v629 = vadd.f32 %v525, %v628
      %630 = vmatmul.f32.gmra.mxu0 %v433
      %v631 = vpop.f32.mrf.mxu0
      %v632 = vadd.f32 %v528, %v631
      %633 = vmatmul.f32.gmra.mxu0 %v435
      %v634 = vpop.f32.mrf.mxu0
      %v635 = vadd.f32 %v531, %v634
      %636 = vmatmul.f32.gmra.mxu0 %v437
      %v637 = vpop.f32.mrf.mxu0
      %v638 = vadd.f32 %v534, %v637
      %639 = vmatmul.f32.gmra.mxu0 %v439
      %v640 = vpop.f32.mrf.mxu0
      %v641 = vadd.f32 %v537, %v640
      %642 = vmatmul.f32.gmra.mxu0 %v441
      %v643 = vpop.f32.mrf.mxu0
      %v644 = vadd.f32 %v540, %v643
      %645 = vmatmul.f32.gmra.mxu0 %v443
      %v646 = vpop.f32.mrf.mxu0
      %v647 = vadd.f32 %v543, %v646
      %648 = vmatmul.f32.gmra.mxu0 %v445
      %v649 = vpop.f32.mrf.mxu0
      %v650 = vadd.f32 %v546, %v649
      %651 = vmatmul.f32.gmra.mxu0 %v447
      %v652 = vpop.f32.mrf.mxu0
      %v653 = vadd.f32 %v549, %v652
      %654 = vmatmul.f32.gmra.mxu0 %v449
      %v655 = vpop.f32.mrf.mxu0
      %v656 = vadd.f32 %v552, %v655
      %657 = vdwg.mxu0
      %v658 = vld [vmem:[%s1] sm:$0xff]
      %v659 = vld [vmem:[%s1 + $0x8] sm:$0xff]
      %v660 = vld [vmem:[%s1 + $0x10] sm:$0xff]
      %v661 = vld [vmem:[%s1 + $0x18] sm:$0xff]
      %v662 = vld [vmem:[%s1 + $0x20] sm:$0xff]
      %v663 = vld [vmem:[%s1 + $0x28] sm:$0xff]
      %v664 = vld [vmem:[%s1 + $0x30] sm:$0xff]
      %v665 = vld [vmem:[%s1 + $0x38] sm:$0xff]
      %s666 = scalar_lea.vmem %s3, 464
      %v667 = vld [vmem:[%s666] sm:$0xff]
      %v668 = vld [vmem:[%s666 + $0x8] sm:$0xff]
      %v669 = vld [vmem:[%s666 + $0x10] sm:$0xff]
      %v670 = vld [vmem:[%s666 + $0x18] sm:$0xff]
      %v671 = vld [vmem:[%s666 + $0x20] sm:$0xff]
      %v672 = vld [vmem:[%s666 + $0x28] sm:$0xff]
      %v673 = vld [vmem:[%s666 + $0x30] sm:$0xff]
      %v674 = vld [vmem:[%s666 + $0x38] sm:$0xff]
      %v675 = vld [vmem:[%s666 + $0x40] sm:$0xff]
      %v676 = vld [vmem:[%s666 + $0x48] sm:$0xff]
      %v677 = vld [vmem:[%s666 + $0x50] sm:$0xff]
      %v678 = vld [vmem:[%s666 + $0x58] sm:$0xff]
      %v679 = vld [vmem:[%s666 + $0x60] sm:$0xff]
      %v680 = vld [vmem:[%s666 + $0x68] sm:$0xff]
      %v681 = vld [vmem:[%s666 + $0x70] sm:$0xff]
      %v682 = vld [vmem:[%s666 + $0x78] sm:$0xff]
      %v683 = vld [vmem:[%s666 + $0x80] sm:$0xff]
      %v684 = vld [vmem:[%s666 + $0x88] sm:$0xff]
      %v685 = vld [vmem:[%s666 + $0x90] sm:$0xff]
      %v686 = vld [vmem:[%s666 + $0x98] sm:$0xff]
      %v687 = vld [vmem:[%s666 + $0xa0] sm:$0xff]
      %v688 = vld [vmem:[%s666 + $0xa8] sm:$0xff]
      %v689 = vld [vmem:[%s666 + $0xb0] sm:$0xff]
      %v690 = vld [vmem:[%s666 + $0xb8] sm:$0xff]
      %v691 = vld [vmem:[%s666 + $0xc0] sm:$0xff]
      %v692 = vld [vmem:[%s666 + $0xc8] sm:$0xff]
      %v693 = vld [vmem:[%s666 + $0xd0] sm:$0xff]
      %v694 = vld [vmem:[%s666 + $0xd8] sm:$0xff]
      %v695 = vld [vmem:[%s666 + $0xe0] sm:$0xff]
      %v696 = vld [vmem:[%s666 + $0xe8] sm:$0xff]
      %v697 = vld [vmem:[%s666 + $0xf0] sm:$0xff]
      %v698 = vld [vmem:[%s666 + $0xf8] sm:$0xff]
      %v699 = vld [vmem:[%s666 + $0x100] sm:$0xff]
      %v700 = vld [vmem:[%s666 + $0x108] sm:$0xff]
      %v701 = vld [vmem:[%s666 + $0x110] sm:$0xff]
      %v702 = vld [vmem:[%s666 + $0x118] sm:$0xff]
      %v703 = vld [vmem:[%s666 + $0x120] sm:$0xff]
      %v704 = vld [vmem:[%s666 + $0x128] sm:$0xff]
      %v705 = vld [vmem:[%s666 + $0x130] sm:$0xff]
      %v706 = vld [vmem:[%s666 + $0x138] sm:$0xff]
      %v707 = vld [vmem:[%s666 + $0x140] sm:$0xff]
      %v708 = vld [vmem:[%s666 + $0x148] sm:$0xff]
      %v709 = vld [vmem:[%s666 + $0x150] sm:$0xff]
      %v710 = vld [vmem:[%s666 + $0x158] sm:$0xff]
      %v711 = vld [vmem:[%s666 + $0x160] sm:$0xff]
      %v712 = vld [vmem:[%s666 + $0x168] sm:$0xff]
      %v713 = vld [vmem:[%s666 + $0x170] sm:$0xff]
      %v714 = vld [vmem:[%s666 + $0x178] sm:$0xff]
      %v715 = vld [vmem:[%s666 + $0x180] sm:$0xff]
      %v716 = vld [vmem:[%s666 + $0x188] sm:$0xff]
      %v717 = vld [vmem:[%s666 + $0x190] sm:$0xff]
      %v718 = vld [vmem:[%s666 + $0x198] sm:$0xff]
      %v719 = vld [vmem:[%s666 + $0x1a0] sm:$0xff]
      %v720 = vld [vmem:[%s666 + $0x1a8] sm:$0xff]
      %v721 = vld [vmem:[%s666 + $0x1b0] sm:$0xff]
      %v722 = vld [vmem:[%s666 + $0x1b8] sm:$0xff]
      %v723 = vld [vmem:[%s666 + $0x1c0] sm:$0x1]
      %v724 = vld [vmem:[%s666 + $0x1c8] sm:$0x1]
      %725 = vmatpush.msra.mxu0 %v375
      %726 = vmatpush.msra.mxu0 %v374
      %727 = vmatpush.msra.mxu0 %v373
      %728 = vmatpush.msra.mxu0 %v372
      %729 = vmatpush.msra.mxu0 %v371
      %730 = vmatpush.msra.mxu0 %v370
      %731 = vmatpush.msra.mxu0 %v369
      %732 = vmatpush.msra.mxu0 %v368
      %733 = vmatpush.msra.mxu0 %v367
      %734 = vmatpush.msra.mxu0 %v366
      %735 = vmatpush.msra.mxu0 %v365
      %736 = vmatpush.msra.mxu0 %v364
      %737 = vmatpush.msra.mxu0 %v363
      %738 = vmatpush.msra.mxu0 %v362
      %739 = vmatpush.msra.mxu0 %v361
      %740 = vmatpush.msra.mxu0 %v360
      %741 = vmatmul.f32.gmra.mxu0 %v667
      %v742 = vpop.f32.mrf.mxu0
      %v743 = vadd.f32 0.0, %v742
      %744 = vmatmul.f32.gmra.mxu0 %v669
      %v745 = vpop.f32.mrf.mxu0
      %v746 = vadd.f32 0.0, %v745
      %747 = vmatmul.f32.gmra.mxu0 %v671
      %v748 = vpop.f32.mrf.mxu0
      %v749 = vadd.f32 0.0, %v748
      %750 = vmatmul.f32.gmra.mxu0 %v673
      %v751 = vpop.f32.mrf.mxu0
      %v752 = vadd.f32 0.0, %v751
      %753 = vmatmul.f32.gmra.mxu0 %v675
      %v754 = vpop.f32.mrf.mxu0
      %v755 = vadd.f32 0.0, %v754
      %756 = vmatmul.f32.gmra.mxu0 %v677
      %v757 = vpop.f32.mrf.mxu0
      %v758 = vadd.f32 0.0, %v757
      %759 = vmatmul.f32.gmra.mxu0 %v679
      %v760 = vpop.f32.mrf.mxu0
      %v761 = vadd.f32 0.0, %v760
      %762 = vmatmul.f32.gmra.mxu0 %v681
      %v763 = vpop.f32.mrf.mxu0
      %v764 = vadd.f32 0.0, %v763
      %765 = vmatmul.f32.gmra.mxu0 %v683
      %v766 = vpop.f32.mrf.mxu0
      %v767 = vadd.f32 0.0, %v766
      %768 = vmatmul.f32.gmra.mxu0 %v685
      %v769 = vpop.f32.mrf.mxu0
      %v770 = vadd.f32 0.0, %v769
      %771 = vmatmul.f32.gmra.mxu0 %v687
      %v772 = vpop.f32.mrf.mxu0
      %v773 = vadd.f32 0.0, %v772
      %774 = vmatmul.f32.gmra.mxu0 %v689
      %v775 = vpop.f32.mrf.mxu0
      %v776 = vadd.f32 0.0, %v775
      %777 = vmatmul.f32.gmra.mxu0 %v691
      %v778 = vpop.f32.mrf.mxu0
      %v779 = vadd.f32 0.0, %v778
      %780 = vmatmul.f32.gmra.mxu0 %v693
      %v781 = vpop.f32.mrf.mxu0
      %v782 = vadd.f32 0.0, %v781
      %783 = vmatmul.f32.gmra.mxu0 %v695
      %v784 = vpop.f32.mrf.mxu0
      %v785 = vadd.f32 0.0, %v784
      %786 = vmatmul.f32.gmra.mxu0 %v697
      %v787 = vpop.f32.mrf.mxu0
      %v788 = vadd.f32 0.0, %v787
      %789 = vmatmul.f32.gmra.mxu0 %v699
      %v790 = vpop.f32.mrf.mxu0
      %v791 = vadd.f32 0.0, %v790
      %792 = vmatmul.f32.gmra.mxu0 %v701
      %v793 = vpop.f32.mrf.mxu0
      %v794 = vadd.f32 0.0, %v793
      %795 = vmatmul.f32.gmra.mxu0 %v703
      %v796 = vpop.f32.mrf.mxu0
      %v797 = vadd.f32 0.0, %v796
      %798 = vmatmul.f32.gmra.mxu0 %v705
      %v799 = vpop.f32.mrf.mxu0
      %v800 = vadd.f32 0.0, %v799
      %801 = vmatmul.f32.gmra.mxu0 %v707
      %v802 = vpop.f32.mrf.mxu0
      %v803 = vadd.f32 0.0, %v802
      %804 = vmatmul.f32.gmra.mxu0 %v709
      %v805 = vpop.f32.mrf.mxu0
      %v806 = vadd.f32 0.0, %v805
      %807 = vmatmul.f32.gmra.mxu0 %v711
      %v808 = vpop.f32.mrf.mxu0
      %v809 = vadd.f32 0.0, %v808
      %810 = vmatmul.f32.gmra.mxu0 %v713
      %v811 = vpop.f32.mrf.mxu0
      %v812 = vadd.f32 0.0, %v811
      %813 = vmatmul.f32.gmra.mxu0 %v715
      %v814 = vpop.f32.mrf.mxu0
      %v815 = vadd.f32 0.0, %v814
      %816 = vmatmul.f32.gmra.mxu0 %v717
      %v817 = vpop.f32.mrf.mxu0
      %v818 = vadd.f32 0.0, %v817
      %819 = vmatmul.f32.gmra.mxu0 %v719
      %v820 = vpop.f32.mrf.mxu0
      %v821 = vadd.f32 0.0, %v820
      %822 = vmatmul.f32.gmra.mxu0 %v721
      %v823 = vpop.f32.mrf.mxu0
      %v824 = vadd.f32 0.0, %v823
      %825 = vmatmul.f32.gmra.mxu0 %v723
      %v826 = vpop.f32.mrf.mxu0
      %v827 = vadd.f32 0.0, %v826
      %828 = vdwg.mxu0
      %829 = vmatpush.msra.mxu0 %v391
      %830 = vmatpush.msra.mxu0 %v390
      %831 = vmatpush.msra.mxu0 %v389
      %832 = vmatpush.msra.mxu0 %v388
      %833 = vmatpush.msra.mxu0 %v387
      %834 = vmatpush.msra.mxu0 %v386
      %835 = vmatpush.msra.mxu0 %v385
      %836 = vmatpush.msra.mxu0 %v384
      %837 = vmatpush.msra.mxu0 %v383
      %838 = vmatpush.msra.mxu0 %v382
      %839 = vmatpush.msra.mxu0 %v381
      %840 = vmatpush.msra.mxu0 %v380
      %841 = vmatpush.msra.mxu0 %v379
      %842 = vmatpush.msra.mxu0 %v378
      %843 = vmatpush.msra.mxu0 %v377
      %844 = vmatpush.msra.mxu0 %v376
      %845 = vmatmul.f32.gmra.mxu0 %v668
      %v846 = vpop.f32.mrf.mxu0
      %v847 = vadd.f32 %v743, %v846
      %848 = vmatmul.f32.gmra.mxu0 %v670
      %v849 = vpop.f32.mrf.mxu0
      %v850 = vadd.f32 %v746, %v849
      %851 = vmatmul.f32.gmra.mxu0 %v672
      %v852 = vpop.f32.mrf.mxu0
      %v853 = vadd.f32 %v749, %v852
      %854 = vmatmul.f32.gmra.mxu0 %v674
      %v855 = vpop.f32.mrf.mxu0
      %v856 = vadd.f32 %v752, %v855
      %857 = vmatmul.f32.gmra.mxu0 %v676
      %v858 = vpop.f32.mrf.mxu0
      %v859 = vadd.f32 %v755, %v858
      %860 = vmatmul.f32.gmra.mxu0 %v678
      %v861 = vpop.f32.mrf.mxu0
      %v862 = vadd.f32 %v758, %v861
      %863 = vmatmul.f32.gmra.mxu0 %v680
      %v864 = vpop.f32.mrf.mxu0
      %v865 = vadd.f32 %v761, %v864
      %866 = vmatmul.f32.gmra.mxu0 %v682
      %v867 = vpop.f32.mrf.mxu0
      %v868 = vadd.f32 %v764, %v867
      %869 = vmatmul.f32.gmra.mxu0 %v684
      %v870 = vpop.f32.mrf.mxu0
      %v871 = vadd.f32 %v767, %v870
      %872 = vmatmul.f32.gmra.mxu0 %v686
      %v873 = vpop.f32.mrf.mxu0
      %v874 = vadd.f32 %v770, %v873
      %875 = vmatmul.f32.gmra.mxu0 %v688
      %v876 = vpop.f32.mrf.mxu0
      %v877 = vadd.f32 %v773, %v876
      %878 = vmatmul.f32.gmra.mxu0 %v690
      %v879 = vpop.f32.mrf.mxu0
      %v880 = vadd.f32 %v776, %v879
      %881 = vmatmul.f32.gmra.mxu0 %v692
      %v882 = vpop.f32.mrf.mxu0
      %v883 = vadd.f32 %v779, %v882
      %884 = vmatmul.f32.gmra.mxu0 %v694
      %v885 = vpop.f32.mrf.mxu0
      %v886 = vadd.f32 %v782, %v885
      %887 = vmatmul.f32.gmra.mxu0 %v696
      %v888 = vpop.f32.mrf.mxu0
      %v889 = vadd.f32 %v785, %v888
      %890 = vmatmul.f32.gmra.mxu0 %v698
      %v891 = vpop.f32.mrf.mxu0
      %v892 = vadd.f32 %v788, %v891
      %893 = vmatmul.f32.gmra.mxu0 %v700
      %v894 = vpop.f32.mrf.mxu0
      %v895 = vadd.f32 %v791, %v894
      %896 = vmatmul.f32.gmra.mxu0 %v702
      %v897 = vpop.f32.mrf.mxu0
      %v898 = vadd.f32 %v794, %v897
      %899 = vmatmul.f32.gmra.mxu0 %v704
      %v900 = vpop.f32.mrf.mxu0
      %v901 = vadd.f32 %v797, %v900
      %902 = vmatmul.f32.gmra.mxu0 %v706
      %v903 = vpop.f32.mrf.mxu0
      %v904 = vadd.f32 %v800, %v903
      %905 = vmatmul.f32.gmra.mxu0 %v708
      %v906 = vpop.f32.mrf.mxu0
      %v907 = vadd.f32 %v803, %v906
      %908 = vmatmul.f32.gmra.mxu0 %v710
      %v909 = vpop.f32.mrf.mxu0
      %v910 = vadd.f32 %v806, %v909
      %911 = vmatmul.f32.gmra.mxu0 %v712
      %v912 = vpop.f32.mrf.mxu0
      %v913 = vadd.f32 %v809, %v912
      %914 = vmatmul.f32.gmra.mxu0 %v714
      %v915 = vpop.f32.mrf.mxu0
      %v916 = vadd.f32 %v812, %v915
      %917 = vmatmul.f32.gmra.mxu0 %v716
      %v918 = vpop.f32.mrf.mxu0
      %v919 = vadd.f32 %v815, %v918
      %920 = vmatmul.f32.gmra.mxu0 %v718
      %v921 = vpop.f32.mrf.mxu0
      %v922 = vadd.f32 %v818, %v921
      %923 = vmatmul.f32.gmra.mxu0 %v720
      %v924 = vpop.f32.mrf.mxu0
      %v925 = vadd.f32 %v821, %v924
      %926 = vmatmul.f32.gmra.mxu0 %v722
      %v927 = vpop.f32.mrf.mxu0
      %v928 = vadd.f32 %v824, %v927
      %929 = vmatmul.f32.gmra.mxu0 %v724
      %v930 = vpop.f32.mrf.mxu0
      %v931 = vadd.f32 %v827, %v930
      %932 = vdwg.mxu0
      %s933 = scalar_lea.vmem %s1, 64
      %v934 = vld [vmem:[%s933] sm:$0xff]
      %v935 = vld [vmem:[%s933 + $0x8] sm:$0xff]
      %v936 = vld [vmem:[%s933 + $0x10] sm:$0xff]
      %v937 = vld [vmem:[%s933 + $0x18] sm:$0xff]
      %v938 = vld [vmem:[%s933 + $0x20] sm:$0xff]
      %v939 = vld [vmem:[%s933 + $0x28] sm:$0xff]
      %v940 = vld [vmem:[%s933 + $0x30] sm:$0xff]
      %v941 = vld [vmem:[%s933 + $0x38] sm:$0xff]
      %vm942 = vcmask 523264
      %v944 = vsel %vm942, %v847, 0
      %v947 = vsel %vm942, %v850, 0
      %v950 = vsel %vm942, %v853, 0
      %v953 = vsel %vm942, %v856, 0
      %v956 = vsel %vm942, %v859, 0
      %v959 = vsel %vm942, %v862, 0
      %v962 = vsel %vm942, %v865, 0
      %v965 = vsel %vm942, %v868, 0
      %v968 = vsel %vm942, %v871, 0
      %v971 = vsel %vm942, %v874, 0
      %v974 = vsel %vm942, %v877, 0
      %v977 = vsel %vm942, %v880, 0
      %v980 = vsel %vm942, %v883, 0
      %v983 = vsel %vm942, %v886, 0
      %v986 = vsel %vm942, %v889, 0
      %v989 = vsel %vm942, %v892, 0
      %v992 = vsel %vm942, %v895, 0
      %v995 = vsel %vm942, %v898, 0
      %v998 = vsel %vm942, %v901, 0
      %v1001 = vsel %vm942, %v904, 0
      %v1004 = vsel %vm942, %v907, 0
      %v1007 = vsel %vm942, %v910, 0
      %v1010 = vsel %vm942, %v913, 0
      %v1013 = vsel %vm942, %v916, 0
      %v1016 = vsel %vm942, %v919, 0
      %v1019 = vsel %vm942, %v922, 0
      %v1022 = vsel %vm942, %v925, 0
      %v1025 = vsel %vm942, %v928, 0
      %v1028 = vsel %vm942, %v931, 0
      %1030 = vmatpush.msra.mxu0 0.0
      %1031 = vmatpush.msra.mxu0 0.0
      %1032 = vmatpush.msra.mxu0 0.0
      %1033 = vmatpush.msra.mxu0 0.0
      %1034 = vmatpush.msra.mxu0 0.0
      %1035 = vmatpush.msra.mxu0 0.0
      %1036 = vmatpush.msra.mxu0 0.0
      %1037 = vmatpush.msra.mxu0 0.0
      %1038 = vmatpush.msra.mxu0 %v941
      %1039 = vmatpush.msra.mxu0 %v940
      %1040 = vmatpush.msra.mxu0 %v939
      %1041 = vmatpush.msra.mxu0 %v938
      %1042 = vmatpush.msra.mxu0 %v937
      %1043 = vmatpush.msra.mxu0 %v936
      %1044 = vmatpush.msra.mxu0 %v935
      %1045 = vmatpush.msra.mxu0 %v934
      %1046 = vmatmul.f32.gmra.mxu0 %v944
      %v1047 = vpop.f32.mrf.mxu0
      %v1048 = vadd.f32 0.0, %v1047
      %1049 = vmatmul.f32.gmra.mxu0 %v947
      %v1050 = vpop.f32.mrf.mxu0
      %v1051 = vadd.f32 0.0, %v1050
      %1052 = vmatmul.f32.gmra.mxu0 %v950
      %v1053 = vpop.f32.mrf.mxu0
      %v1054 = vadd.f32 0.0, %v1053
      %1055 = vmatmul.f32.gmra.mxu0 %v953
      %v1056 = vpop.f32.mrf.mxu0
      %v1057 = vadd.f32 0.0, %v1056
      %1058 = vmatmul.f32.gmra.mxu0 %v956
      %v1059 = vpop.f32.mrf.mxu0
      %v1060 = vadd.f32 0.0, %v1059
      %1061 = vmatmul.f32.gmra.mxu0 %v959
      %v1062 = vpop.f32.mrf.mxu0
      %v1063 = vadd.f32 0.0, %v1062
      %1064 = vmatmul.f32.gmra.mxu0 %v962
      %v1065 = vpop.f32.mrf.mxu0
      %v1066 = vadd.f32 0.0, %v1065
      %1067 = vmatmul.f32.gmra.mxu0 %v965
      %v1068 = vpop.f32.mrf.mxu0
      %v1069 = vadd.f32 0.0, %v1068
      %1070 = vmatmul.f32.gmra.mxu0 %v968
      %v1071 = vpop.f32.mrf.mxu0
      %v1072 = vadd.f32 0.0, %v1071
      %1073 = vmatmul.f32.gmra.mxu0 %v971
      %v1074 = vpop.f32.mrf.mxu0
      %v1075 = vadd.f32 0.0, %v1074
      %1076 = vmatmul.f32.gmra.mxu0 %v974
      %v1077 = vpop.f32.mrf.mxu0
      %v1078 = vadd.f32 0.0, %v1077
      %1079 = vmatmul.f32.gmra.mxu0 %v977
      %v1080 = vpop.f32.mrf.mxu0
      %v1081 = vadd.f32 0.0, %v1080
      %1082 = vmatmul.f32.gmra.mxu0 %v980
      %v1083 = vpop.f32.mrf.mxu0
      %v1084 = vadd.f32 0.0, %v1083
      %1085 = vmatmul.f32.gmra.mxu0 %v983
      %v1086 = vpop.f32.mrf.mxu0
      %v1087 = vadd.f32 0.0, %v1086
      %1088 = vmatmul.f32.gmra.mxu0 %v986
      %v1089 = vpop.f32.mrf.mxu0
      %v1090 = vadd.f32 0.0, %v1089
      %1091 = vmatmul.f32.gmra.mxu0 %v989
      %v1092 = vpop.f32.mrf.mxu0
      %v1093 = vadd.f32 0.0, %v1092
      %1094 = vmatmul.f32.gmra.mxu0 %v992
      %v1095 = vpop.f32.mrf.mxu0
      %v1096 = vadd.f32 0.0, %v1095
      %1097 = vmatmul.f32.gmra.mxu0 %v995
      %v1098 = vpop.f32.mrf.mxu0
      %v1099 = vadd.f32 0.0, %v1098
      %1100 = vmatmul.f32.gmra.mxu0 %v998
      %v1101 = vpop.f32.mrf.mxu0
      %v1102 = vadd.f32 0.0, %v1101
      %1103 = vmatmul.f32.gmra.mxu0 %v1001
      %v1104 = vpop.f32.mrf.mxu0
      %v1105 = vadd.f32 0.0, %v1104
      %1106 = vmatmul.f32.gmra.mxu0 %v1004
      %v1107 = vpop.f32.mrf.mxu0
      %v1108 = vadd.f32 0.0, %v1107
      %1109 = vmatmul.f32.gmra.mxu0 %v1007
      %v1110 = vpop.f32.mrf.mxu0
      %v1111 = vadd.f32 0.0, %v1110
      %1112 = vmatmul.f32.gmra.mxu0 %v1010
      %v1113 = vpop.f32.mrf.mxu0
      %v1114 = vadd.f32 0.0, %v1113
      %1115 = vmatmul.f32.gmra.mxu0 %v1013
      %v1116 = vpop.f32.mrf.mxu0
      %v1117 = vadd.f32 0.0, %v1116
      %1118 = vmatmul.f32.gmra.mxu0 %v1016
      %v1119 = vpop.f32.mrf.mxu0
      %v1120 = vadd.f32 0.0, %v1119
      %1121 = vmatmul.f32.gmra.mxu0 %v1019
      %v1122 = vpop.f32.mrf.mxu0
      %v1123 = vadd.f32 0.0, %v1122
      %1124 = vmatmul.f32.gmra.mxu0 %v1022
      %v1125 = vpop.f32.mrf.mxu0
      %v1126 = vadd.f32 0.0, %v1125
      %1127 = vmatmul.f32.gmra.mxu0 %v1025
      %v1128 = vpop.f32.mrf.mxu0
      %v1129 = vadd.f32 0.0, %v1128
      %1130 = vmatmul.f32.gmra.mxu0 %v1028
      %v1131 = vpop.f32.mrf.mxu0
      %v1132 = vadd.f32 0.0, %v1131
      %1133 = vdwg.mxu0
      %v1135 = vsel %vm942, %v572, 0
      %v1138 = vsel %vm942, %v575, 0
      %v1141 = vsel %vm942, %v578, 0
      %v1144 = vsel %vm942, %v581, 0
      %v1147 = vsel %vm942, %v584, 0
      %v1150 = vsel %vm942, %v587, 0
      %v1153 = vsel %vm942, %v590, 0
      %v1156 = vsel %vm942, %v593, 0
      %v1159 = vsel %vm942, %v596, 0
      %v1162 = vsel %vm942, %v599, 0
      %v1165 = vsel %vm942, %v602, 0
      %v1168 = vsel %vm942, %v605, 0
      %v1171 = vsel %vm942, %v608, 0
      %v1174 = vsel %vm942, %v611, 0
      %v1177 = vsel %vm942, %v614, 0
      %v1180 = vsel %vm942, %v617, 0
      %v1183 = vsel %vm942, %v620, 0
      %v1186 = vsel %vm942, %v623, 0
      %v1189 = vsel %vm942, %v626, 0
      %v1192 = vsel %vm942, %v629, 0
      %v1195 = vsel %vm942, %v632, 0
      %v1198 = vsel %vm942, %v635, 0
      %v1201 = vsel %vm942, %v638, 0
      %v1204 = vsel %vm942, %v641, 0
      %v1207 = vsel %vm942, %v644, 0
      %v1210 = vsel %vm942, %v647, 0
      %v1213 = vsel %vm942, %v650, 0
      %v1216 = vsel %vm942, %v653, 0
      %v1219 = vsel %vm942, %v656, 0
      %1221 = vmatpush.msra.mxu0 0.0
      %1222 = vmatpush.msra.mxu0 0.0
      %1223 = vmatpush.msra.mxu0 0.0
      %1224 = vmatpush.msra.mxu0 0.0
      %1225 = vmatpush.msra.mxu0 0.0
      %1226 = vmatpush.msra.mxu0 0.0
      %1227 = vmatpush.msra.mxu0 0.0
      %1228 = vmatpush.msra.mxu0 0.0
      %1229 = vmatpush.msra.mxu0 %v665
      %1230 = vmatpush.msra.mxu0 %v664
      %1231 = vmatpush.msra.mxu0 %v663
      %1232 = vmatpush.msra.mxu0 %v662
      %1233 = vmatpush.msra.mxu0 %v661
      %1234 = vmatpush.msra.mxu0 %v660
      %1235 = vmatpush.msra.mxu0 %v659
      %1236 = vmatpush.msra.mxu0 %v658
      %1237 = vmatmul.f32.gmra.mxu0 %v1135
      %v1238 = vpop.f32.mrf.mxu0
      %v1239 = vadd.f32 %v1048, %v1238
      %1240 = vmatmul.f32.gmra.mxu0 %v1138
      %v1241 = vpop.f32.mrf.mxu0
      %v1242 = vadd.f32 %v1051, %v1241
      %1243 = vmatmul.f32.gmra.mxu0 %v1141
      %v1244 = vpop.f32.mrf.mxu0
      %v1245 = vadd.f32 %v1054, %v1244
      %1246 = vmatmul.f32.gmra.mxu0 %v1144
      %v1247 = vpop.f32.mrf.mxu0
      %v1248 = vadd.f32 %v1057, %v1247
      %1249 = vmatmul.f32.gmra.mxu0 %v1147
      %v1250 = vpop.f32.mrf.mxu0
      %v1251 = vadd.f32 %v1060, %v1250
      %1252 = vmatmul.f32.gmra.mxu0 %v1150
      %v1253 = vpop.f32.mrf.mxu0
      %v1254 = vadd.f32 %v1063, %v1253
      %1255 = vmatmul.f32.gmra.mxu0 %v1153
      %v1256 = vpop.f32.mrf.mxu0
      %v1257 = vadd.f32 %v1066, %v1256
      %1258 = vmatmul.f32.gmra.mxu0 %v1156
      %v1259 = vpop.f32.mrf.mxu0
      %v1260 = vadd.f32 %v1069, %v1259
      %1261 = vmatmul.f32.gmra.mxu0 %v1159
      %v1262 = vpop.f32.mrf.mxu0
      %v1263 = vadd.f32 %v1072, %v1262
      %1264 = vmatmul.f32.gmra.mxu0 %v1162
      %v1265 = vpop.f32.mrf.mxu0
      %v1266 = vadd.f32 %v1075, %v1265
      %1267 = vmatmul.f32.gmra.mxu0 %v1165
      %v1268 = vpop.f32.mrf.mxu0
      %v1269 = vadd.f32 %v1078, %v1268
      %1270 = vmatmul.f32.gmra.mxu0 %v1168
      %v1271 = vpop.f32.mrf.mxu0
      %v1272 = vadd.f32 %v1081, %v1271
      %1273 = vmatmul.f32.gmra.mxu0 %v1171
      %v1274 = vpop.f32.mrf.mxu0
      %v1275 = vadd.f32 %v1084, %v1274
      %1276 = vmatmul.f32.gmra.mxu0 %v1174
      %v1277 = vpop.f32.mrf.mxu0
      %v1278 = vadd.f32 %v1087, %v1277
      %1279 = vmatmul.f32.gmra.mxu0 %v1177
      %v1280 = vpop.f32.mrf.mxu0
      %v1281 = vadd.f32 %v1090, %v1280
      %1282 = vmatmul.f32.gmra.mxu0 %v1180
      %v1283 = vpop.f32.mrf.mxu0
      %v1284 = vadd.f32 %v1093, %v1283
      %1285 = vmatmul.f32.gmra.mxu0 %v1183
      %v1286 = vpop.f32.mrf.mxu0
      %v1287 = vadd.f32 %v1096, %v1286
      %1288 = vmatmul.f32.gmra.mxu0 %v1186
      %v1289 = vpop.f32.mrf.mxu0
      %v1290 = vadd.f32 %v1099, %v1289
      %1291 = vmatmul.f32.gmra.mxu0 %v1189
      %v1292 = vpop.f32.mrf.mxu0
      %v1293 = vadd.f32 %v1102, %v1292
      %1294 = vmatmul.f32.gmra.mxu0 %v1192
      %v1295 = vpop.f32.mrf.mxu0
      %v1296 = vadd.f32 %v1105, %v1295
      %1297 = vmatmul.f32.gmra.mxu0 %v1195
      %v1298 = vpop.f32.mrf.mxu0
      %v1299 = vadd.f32 %v1108, %v1298
      %1300 = vmatmul.f32.gmra.mxu0 %v1198
      %v1301 = vpop.f32.mrf.mxu0
      %v1302 = vadd.f32 %v1111, %v1301
      %1303 = vmatmul.f32.gmra.mxu0 %v1201
      %v1304 = vpop.f32.mrf.mxu0
      %v1305 = vadd.f32 %v1114, %v1304
      %1306 = vmatmul.f32.gmra.mxu0 %v1204
      %v1307 = vpop.f32.mrf.mxu0
      %v1308 = vadd.f32 %v1117, %v1307
      %1309 = vmatmul.f32.gmra.mxu0 %v1207
      %v1310 = vpop.f32.mrf.mxu0
      %v1311 = vadd.f32 %v1120, %v1310
      %1312 = vmatmul.f32.gmra.mxu0 %v1210
      %v1313 = vpop.f32.mrf.mxu0
      %v1314 = vadd.f32 %v1123, %v1313
      %1315 = vmatmul.f32.gmra.mxu0 %v1213
      %v1316 = vpop.f32.mrf.mxu0
      %v1317 = vadd.f32 %v1126, %v1316
      %1318 = vmatmul.f32.gmra.mxu0 %v1216
      %v1319 = vpop.f32.mrf.mxu0
      %v1320 = vadd.f32 %v1129, %v1319
      %1321 = vmatmul.f32.gmra.mxu0 %v1219
      %v1322 = vpop.f32.mrf.mxu0
      %v1323 = vadd.f32 %v1132, %v1322
      %1324 = vdwg.mxu0
      %s1325 = scalar_lea.vmem %s3, 928
      %v1326 = vld [vmem:[%s1325] sm:$0xff]
      %v1327 = vld [vmem:[%s1325 + $0x8] sm:$0xff]
      %v1328 = vld [vmem:[%s1325 + $0x10] sm:$0xff]
      %v1329 = vld [vmem:[%s1325 + $0x18] sm:$0xff]
      %v1330 = vld [vmem:[%s1325 + $0x20] sm:$0xff]
      %v1331 = vld [vmem:[%s1325 + $0x28] sm:$0xff]
      %v1332 = vld [vmem:[%s1325 + $0x30] sm:$0xff]
      %v1333 = vld [vmem:[%s1325 + $0x38] sm:$0xff]
      %v1334 = vld [vmem:[%s1325 + $0x40] sm:$0xff]
      %v1335 = vld [vmem:[%s1325 + $0x48] sm:$0xff]
      %v1336 = vld [vmem:[%s1325 + $0x50] sm:$0xff]
      %v1337 = vld [vmem:[%s1325 + $0x58] sm:$0xff]
      %v1338 = vld [vmem:[%s1325 + $0x60] sm:$0xff]
      %v1339 = vld [vmem:[%s1325 + $0x68] sm:$0xff]
      %v1340 = vld [vmem:[%s1325 + $0x70] sm:$0xff]
      %v1341 = vld [vmem:[%s1325 + $0x78] sm:$0xff]
      %v1342 = vld [vmem:[%s1325 + $0x80] sm:$0xff]
      %v1343 = vld [vmem:[%s1325 + $0x88] sm:$0xff]
      %v1344 = vld [vmem:[%s1325 + $0x90] sm:$0xff]
      %v1345 = vld [vmem:[%s1325 + $0x98] sm:$0xff]
      %v1346 = vld [vmem:[%s1325 + $0xa0] sm:$0xff]
      %v1347 = vld [vmem:[%s1325 + $0xa8] sm:$0xff]
      %v1348 = vld [vmem:[%s1325 + $0xb0] sm:$0xff]
      %v1349 = vld [vmem:[%s1325 + $0xb8] sm:$0xff]
      %v1350 = vld [vmem:[%s1325 + $0xc0] sm:$0xff]
      %v1351 = vld [vmem:[%s1325 + $0xc8] sm:$0xff]
      %v1352 = vld [vmem:[%s1325 + $0xd0] sm:$0xff]
      %v1353 = vld [vmem:[%s1325 + $0xd8] sm:$0xff]
      %v1354 = vld [vmem:[%s1325 + $0xe0] sm:$0xff]
      %v1355 = vld [vmem:[%s1325 + $0xe8] sm:$0xff]
      %v1356 = vld [vmem:[%s1325 + $0xf0] sm:$0xff]
      %v1357 = vld [vmem:[%s1325 + $0xf8] sm:$0xff]
      %v1358 = vld [vmem:[%s1325 + $0x100] sm:$0xff]
      %v1359 = vld [vmem:[%s1325 + $0x108] sm:$0xff]
      %v1360 = vld [vmem:[%s1325 + $0x110] sm:$0xff]
      %v1361 = vld [vmem:[%s1325 + $0x118] sm:$0xff]
      %v1362 = vld [vmem:[%s1325 + $0x120] sm:$0xff]
      %v1363 = vld [vmem:[%s1325 + $0x128] sm:$0xff]
      %v1364 = vld [vmem:[%s1325 + $0x130] sm:$0xff]
      %v1365 = vld [vmem:[%s1325 + $0x138] sm:$0xff]
      %v1366 = vld [vmem:[%s1325 + $0x140] sm:$0xff]
      %v1367 = vld [vmem:[%s1325 + $0x148] sm:$0xff]
      %v1368 = vld [vmem:[%s1325 + $0x150] sm:$0xff]
      %v1369 = vld [vmem:[%s1325 + $0x158] sm:$0xff]
      %v1370 = vld [vmem:[%s1325 + $0x160] sm:$0xff]
      %v1371 = vld [vmem:[%s1325 + $0x168] sm:$0xff]
      %v1372 = vld [vmem:[%s1325 + $0x170] sm:$0xff]
      %v1373 = vld [vmem:[%s1325 + $0x178] sm:$0xff]
      %v1374 = vld [vmem:[%s1325 + $0x180] sm:$0xff]
      %v1375 = vld [vmem:[%s1325 + $0x188] sm:$0xff]
      %v1376 = vld [vmem:[%s1325 + $0x190] sm:$0xff]
      %v1377 = vld [vmem:[%s1325 + $0x198] sm:$0xff]
      %v1378 = vld [vmem:[%s1325 + $0x1a0] sm:$0xff]
      %v1379 = vld [vmem:[%s1325 + $0x1a8] sm:$0xff]
      %v1380 = vld [vmem:[%s1325 + $0x1b0] sm:$0xff]
      %v1381 = vld [vmem:[%s1325 + $0x1b8] sm:$0xff]
      %v1382 = vld [vmem:[%s1325 + $0x1c0] sm:$0x1]
      %v1383 = vld [vmem:[%s1325 + $0x1c8] sm:$0x1]
      %1384 = vmatpush.msra.mxu0 %v375
      %1385 = vmatpush.msra.mxu0 %v374
      %1386 = vmatpush.msra.mxu0 %v373
      %1387 = vmatpush.msra.mxu0 %v372
      %1388 = vmatpush.msra.mxu0 %v371
      %1389 = vmatpush.msra.mxu0 %v370
      %1390 = vmatpush.msra.mxu0 %v369
      %1391 = vmatpush.msra.mxu0 %v368
      %1392 = vmatpush.msra.mxu0 %v367
      %1393 = vmatpush.msra.mxu0 %v366
      %1394 = vmatpush.msra.mxu0 %v365
      %1395 = vmatpush.msra.mxu0 %v364
      %1396 = vmatpush.msra.mxu0 %v363
      %1397 = vmatpush.msra.mxu0 %v362
      %1398 = vmatpush.msra.mxu0 %v361
      %1399 = vmatpush.msra.mxu0 %v360
      %1400 = vmatmul.f32.gmra.mxu0 %v1326
      %v1401 = vpop.f32.mrf.mxu0
      %v1402 = vadd.f32 0.0, %v1401
      %1403 = vmatmul.f32.gmra.mxu0 %v1328
      %v1404 = vpop.f32.mrf.mxu0
      %v1405 = vadd.f32 0.0, %v1404
      %1406 = vmatmul.f32.gmra.mxu0 %v1330
      %v1407 = vpop.f32.mrf.mxu0
      %v1408 = vadd.f32 0.0, %v1407
      %1409 = vmatmul.f32.gmra.mxu0 %v1332
      %v1410 = vpop.f32.mrf.mxu0
      %v1411 = vadd.f32 0.0, %v1410
      %1412 = vmatmul.f32.gmra.mxu0 %v1334
      %v1413 = vpop.f32.mrf.mxu0
      %v1414 = vadd.f32 0.0, %v1413
      %1415 = vmatmul.f32.gmra.mxu0 %v1336
      %v1416 = vpop.f32.mrf.mxu0
      %v1417 = vadd.f32 0.0, %v1416
      %1418 = vmatmul.f32.gmra.mxu0 %v1338
      %v1419 = vpop.f32.mrf.mxu0
      %v1420 = vadd.f32 0.0, %v1419
      %1421 = vmatmul.f32.gmra.mxu0 %v1340
      %v1422 = vpop.f32.mrf.mxu0
      %v1423 = vadd.f32 0.0, %v1422
      %1424 = vmatmul.f32.gmra.mxu0 %v1342
      %v1425 = vpop.f32.mrf.mxu0
      %v1426 = vadd.f32 0.0, %v1425
      %1427 = vmatmul.f32.gmra.mxu0 %v1344
      %v1428 = vpop.f32.mrf.mxu0
      %v1429 = vadd.f32 0.0, %v1428
      %1430 = vmatmul.f32.gmra.mxu0 %v1346
      %v1431 = vpop.f32.mrf.mxu0
      %v1432 = vadd.f32 0.0, %v1431
      %1433 = vmatmul.f32.gmra.mxu0 %v1348
      %v1434 = vpop.f32.mrf.mxu0
      %v1435 = vadd.f32 0.0, %v1434
      %1436 = vmatmul.f32.gmra.mxu0 %v1350
      %v1437 = vpop.f32.mrf.mxu0
      %v1438 = vadd.f32 0.0, %v1437
      %1439 = vmatmul.f32.gmra.mxu0 %v1352
      %v1440 = vpop.f32.mrf.mxu0
      %v1441 = vadd.f32 0.0, %v1440
      %1442 = vmatmul.f32.gmra.mxu0 %v1354
      %v1443 = vpop.f32.mrf.mxu0
      %v1444 = vadd.f32 0.0, %v1443
      %1445 = vmatmul.f32.gmra.mxu0 %v1356
      %v1446 = vpop.f32.mrf.mxu0
      %v1447 = vadd.f32 0.0, %v1446
      %1448 = vmatmul.f32.gmra.mxu0 %v1358
      %v1449 = vpop.f32.mrf.mxu0
      %v1450 = vadd.f32 0.0, %v1449
      %1451 = vmatmul.f32.gmra.mxu0 %v1360
      %v1452 = vpop.f32.mrf.mxu0
      %v1453 = vadd.f32 0.0, %v1452
      %1454 = vmatmul.f32.gmra.mxu0 %v1362
      %v1455 = vpop.f32.mrf.mxu0
      %v1456 = vadd.f32 0.0, %v1455
      %1457 = vmatmul.f32.gmra.mxu0 %v1364
      %v1458 = vpop.f32.mrf.mxu0
      %v1459 = vadd.f32 0.0, %v1458
      %1460 = vmatmul.f32.gmra.mxu0 %v1366
      %v1461 = vpop.f32.mrf.mxu0
      %v1462 = vadd.f32 0.0, %v1461
      %1463 = vmatmul.f32.gmra.mxu0 %v1368
      %v1464 = vpop.f32.mrf.mxu0
      %v1465 = vadd.f32 0.0, %v1464
      %1466 = vmatmul.f32.gmra.mxu0 %v1370
      %v1467 = vpop.f32.mrf.mxu0
      %v1468 = vadd.f32 0.0, %v1467
      %1469 = vmatmul.f32.gmra.mxu0 %v1372
      %v1470 = vpop.f32.mrf.mxu0
      %v1471 = vadd.f32 0.0, %v1470
      %1472 = vmatmul.f32.gmra.mxu0 %v1374
      %v1473 = vpop.f32.mrf.mxu0
      %v1474 = vadd.f32 0.0, %v1473
      %1475 = vmatmul.f32.gmra.mxu0 %v1376
      %v1476 = vpop.f32.mrf.mxu0
      %v1477 = vadd.f32 0.0, %v1476
      %1478 = vmatmul.f32.gmra.mxu0 %v1378
      %v1479 = vpop.f32.mrf.mxu0
      %v1480 = vadd.f32 0.0, %v1479
      %1481 = vmatmul.f32.gmra.mxu0 %v1380
      %v1482 = vpop.f32.mrf.mxu0
      %v1483 = vadd.f32 0.0, %v1482
      %1484 = vmatmul.f32.gmra.mxu0 %v1382
      %v1485 = vpop.f32.mrf.mxu0
      %v1486 = vadd.f32 0.0, %v1485
      %1487 = vdwg.mxu0
      %1488 = vmatpush.msra.mxu0 %v391
      %1489 = vmatpush.msra.mxu0 %v390
      %1490 = vmatpush.msra.mxu0 %v389
      %1491 = vmatpush.msra.mxu0 %v388
      %1492 = vmatpush.msra.mxu0 %v387
      %1493 = vmatpush.msra.mxu0 %v386
      %1494 = vmatpush.msra.mxu0 %v385
      %1495 = vmatpush.msra.mxu0 %v384
      %1496 = vmatpush.msra.mxu0 %v383
      %1497 = vmatpush.msra.mxu0 %v382
      %1498 = vmatpush.msra.mxu0 %v381
      %1499 = vmatpush.msra.mxu0 %v380
      %1500 = vmatpush.msra.mxu0 %v379
      %1501 = vmatpush.msra.mxu0 %v378
      %1502 = vmatpush.msra.mxu0 %v377
      %1503 = vmatpush.msra.mxu0 %v376
      %1504 = vmatmul.f32.gmra.mxu0 %v1327
      %v1505 = vpop.f32.mrf.mxu0
      %v1506 = vadd.f32 %v1402, %v1505
      %1507 = vmatmul.f32.gmra.mxu0 %v1329
      %v1508 = vpop.f32.mrf.mxu0
      %v1509 = vadd.f32 %v1405, %v1508
      %1510 = vmatmul.f32.gmra.mxu0 %v1331
      %v1511 = vpop.f32.mrf.mxu0
      %v1512 = vadd.f32 %v1408, %v1511
      %1513 = vmatmul.f32.gmra.mxu0 %v1333
      %v1514 = vpop.f32.mrf.mxu0
      %v1515 = vadd.f32 %v1411, %v1514
      %1516 = vmatmul.f32.gmra.mxu0 %v1335
      %v1517 = vpop.f32.mrf.mxu0
      %v1518 = vadd.f32 %v1414, %v1517
      %1519 = vmatmul.f32.gmra.mxu0 %v1337
      %v1520 = vpop.f32.mrf.mxu0
      %v1521 = vadd.f32 %v1417, %v1520
      %1522 = vmatmul.f32.gmra.mxu0 %v1339
      %v1523 = vpop.f32.mrf.mxu0
      %v1524 = vadd.f32 %v1420, %v1523
      %1525 = vmatmul.f32.gmra.mxu0 %v1341
      %v1526 = vpop.f32.mrf.mxu0
      %v1527 = vadd.f32 %v1423, %v1526
      %1528 = vmatmul.f32.gmra.mxu0 %v1343
      %v1529 = vpop.f32.mrf.mxu0
      %v1530 = vadd.f32 %v1426, %v1529
      %1531 = vmatmul.f32.gmra.mxu0 %v1345
      %v1532 = vpop.f32.mrf.mxu0
      %v1533 = vadd.f32 %v1429, %v1532
      %1534 = vmatmul.f32.gmra.mxu0 %v1347
      %v1535 = vpop.f32.mrf.mxu0
      %v1536 = vadd.f32 %v1432, %v1535
      %1537 = vmatmul.f32.gmra.mxu0 %v1349
      %v1538 = vpop.f32.mrf.mxu0
      %v1539 = vadd.f32 %v1435, %v1538
      %1540 = vmatmul.f32.gmra.mxu0 %v1351
      %v1541 = vpop.f32.mrf.mxu0
      %v1542 = vadd.f32 %v1438, %v1541
      %1543 = vmatmul.f32.gmra.mxu0 %v1353
      %v1544 = vpop.f32.mrf.mxu0
      %v1545 = vadd.f32 %v1441, %v1544
      %1546 = vmatmul.f32.gmra.mxu0 %v1355
      %v1547 = vpop.f32.mrf.mxu0
      %v1548 = vadd.f32 %v1444, %v1547
      %1549 = vmatmul.f32.gmra.mxu0 %v1357
      %v1550 = vpop.f32.mrf.mxu0
      %v1551 = vadd.f32 %v1447, %v1550
      %1552 = vmatmul.f32.gmra.mxu0 %v1359
      %v1553 = vpop.f32.mrf.mxu0
      %v1554 = vadd.f32 %v1450, %v1553
      %1555 = vmatmul.f32.gmra.mxu0 %v1361
      %v1556 = vpop.f32.mrf.mxu0
      %v1557 = vadd.f32 %v1453, %v1556
      %1558 = vmatmul.f32.gmra.mxu0 %v1363
      %v1559 = vpop.f32.mrf.mxu0
      %v1560 = vadd.f32 %v1456, %v1559
      %1561 = vmatmul.f32.gmra.mxu0 %v1365
      %v1562 = vpop.f32.mrf.mxu0
      %v1563 = vadd.f32 %v1459, %v1562
      %1564 = vmatmul.f32.gmra.mxu0 %v1367
      %v1565 = vpop.f32.mrf.mxu0
      %v1566 = vadd.f32 %v1462, %v1565
      %1567 = vmatmul.f32.gmra.mxu0 %v1369
      %v1568 = vpop.f32.mrf.mxu0
      %v1569 = vadd.f32 %v1465, %v1568
      %1570 = vmatmul.f32.gmra.mxu0 %v1371
      %v1571 = vpop.f32.mrf.mxu0
      %v1572 = vadd.f32 %v1468, %v1571
      %1573 = vmatmul.f32.gmra.mxu0 %v1373
      %v1574 = vpop.f32.mrf.mxu0
      %v1575 = vadd.f32 %v1471, %v1574
      %1576 = vmatmul.f32.gmra.mxu0 %v1375
      %v1577 = vpop.f32.mrf.mxu0
      %v1578 = vadd.f32 %v1474, %v1577
      %1579 = vmatmul.f32.gmra.mxu0 %v1377
      %v1580 = vpop.f32.mrf.mxu0
      %v1581 = vadd.f32 %v1477, %v1580
      %1582 = vmatmul.f32.gmra.mxu0 %v1379
      %v1583 = vpop.f32.mrf.mxu0
      %v1584 = vadd.f32 %v1480, %v1583
      %1585 = vmatmul.f32.gmra.mxu0 %v1381
      %v1586 = vpop.f32.mrf.mxu0
      %v1587 = vadd.f32 %v1483, %v1586
      %1588 = vmatmul.f32.gmra.mxu0 %v1383
      %v1589 = vpop.f32.mrf.mxu0
      %v1590 = vadd.f32 %v1486, %v1589
      %1591 = vdwg.mxu0
      %s1592 = scalar_lea.vmem %s1, 128
      %v1593 = vld [vmem:[%s1592] sm:$0xff]
      %v1594 = vld [vmem:[%s1592 + $0x8] sm:$0xff]
      %v1595 = vld [vmem:[%s1592 + $0x10] sm:$0xff]
      %v1596 = vld [vmem:[%s1592 + $0x18] sm:$0xff]
      %v1597 = vld [vmem:[%s1592 + $0x20] sm:$0xff]
      %v1598 = vld [vmem:[%s1592 + $0x28] sm:$0xff]
      %v1599 = vld [vmem:[%s1592 + $0x30] sm:$0xff]
      %v1600 = vld [vmem:[%s1592 + $0x38] sm:$0xff]
      %v1602 = vsel %vm942, %v1506, 0
      %v1605 = vsel %vm942, %v1509, 0
      %v1608 = vsel %vm942, %v1512, 0
      %v1611 = vsel %vm942, %v1515, 0
      %v1614 = vsel %vm942, %v1518, 0
      %v1617 = vsel %vm942, %v1521, 0
      %v1620 = vsel %vm942, %v1524, 0
      %v1623 = vsel %vm942, %v1527, 0
      %v1626 = vsel %vm942, %v1530, 0
      %v1629 = vsel %vm942, %v1533, 0
      %v1632 = vsel %vm942, %v1536, 0
      %v1635 = vsel %vm942, %v1539, 0
      %v1638 = vsel %vm942, %v1542, 0
      %v1641 = vsel %vm942, %v1545, 0
      %v1644 = vsel %vm942, %v1548, 0
      %v1647 = vsel %vm942, %v1551, 0
      %v1650 = vsel %vm942, %v1554, 0
      %v1653 = vsel %vm942, %v1557, 0
      %v1656 = vsel %vm942, %v1560, 0
      %v1659 = vsel %vm942, %v1563, 0
      %v1662 = vsel %vm942, %v1566, 0
      %v1665 = vsel %vm942, %v1569, 0
      %v1668 = vsel %vm942, %v1572, 0
      %v1671 = vsel %vm942, %v1575, 0
      %v1674 = vsel %vm942, %v1578, 0
      %v1677 = vsel %vm942, %v1581, 0
      %v1680 = vsel %vm942, %v1584, 0
      %v1683 = vsel %vm942, %v1587, 0
      %v1686 = vsel %vm942, %v1590, 0
      %1688 = vmatpush.msra.mxu0 0.0
      %1689 = vmatpush.msra.mxu0 0.0
      %1690 = vmatpush.msra.mxu0 0.0
      %1691 = vmatpush.msra.mxu0 0.0
      %1692 = vmatpush.msra.mxu0 0.0
      %1693 = vmatpush.msra.mxu0 0.0
      %1694 = vmatpush.msra.mxu0 0.0
      %1695 = vmatpush.msra.mxu0 0.0
      %1696 = vmatpush.msra.mxu0 %v1600
      %1697 = vmatpush.msra.mxu0 %v1599
      %1698 = vmatpush.msra.mxu0 %v1598
      %1699 = vmatpush.msra.mxu0 %v1597
      %1700 = vmatpush.msra.mxu0 %v1596
      %1701 = vmatpush.msra.mxu0 %v1595
      %1702 = vmatpush.msra.mxu0 %v1594
      %1703 = vmatpush.msra.mxu0 %v1593
      %1704 = vmatmul.f32.gmra.mxu0 %v1602
      %v1705 = vpop.f32.mrf.mxu0
      %v1706 = vadd.f32 0.0, %v1705
      %1707 = vmatmul.f32.gmra.mxu0 %v1605
      %v1708 = vpop.f32.mrf.mxu0
      %v1709 = vadd.f32 0.0, %v1708
      %1710 = vmatmul.f32.gmra.mxu0 %v1608
      %v1711 = vpop.f32.mrf.mxu0
      %v1712 = vadd.f32 0.0, %v1711
      %1713 = vmatmul.f32.gmra.mxu0 %v1611
      %v1714 = vpop.f32.mrf.mxu0
      %v1715 = vadd.f32 0.0, %v1714
      %1716 = vmatmul.f32.gmra.mxu0 %v1614
      %v1717 = vpop.f32.mrf.mxu0
      %v1718 = vadd.f32 0.0, %v1717
      %1719 = vmatmul.f32.gmra.mxu0 %v1617
      %v1720 = vpop.f32.mrf.mxu0
      %v1721 = vadd.f32 0.0, %v1720
      %1722 = vmatmul.f32.gmra.mxu0 %v1620
      %v1723 = vpop.f32.mrf.mxu0
      %v1724 = vadd.f32 0.0, %v1723
      %1725 = vmatmul.f32.gmra.mxu0 %v1623
      %v1726 = vpop.f32.mrf.mxu0
      %v1727 = vadd.f32 0.0, %v1726
      %1728 = vmatmul.f32.gmra.mxu0 %v1626
      %v1729 = vpop.f32.mrf.mxu0
      %v1730 = vadd.f32 0.0, %v1729
      %1731 = vmatmul.f32.gmra.mxu0 %v1629
      %v1732 = vpop.f32.mrf.mxu0
      %v1733 = vadd.f32 0.0, %v1732
      %1734 = vmatmul.f32.gmra.mxu0 %v1632
      %v1735 = vpop.f32.mrf.mxu0
      %v1736 = vadd.f32 0.0, %v1735
      %1737 = vmatmul.f32.gmra.mxu0 %v1635
      %v1738 = vpop.f32.mrf.mxu0
      %v1739 = vadd.f32 0.0, %v1738
      %1740 = vmatmul.f32.gmra.mxu0 %v1638
      %v1741 = vpop.f32.mrf.mxu0
      %v1742 = vadd.f32 0.0, %v1741
      %1743 = vmatmul.f32.gmra.mxu0 %v1641
      %v1744 = vpop.f32.mrf.mxu0
      %v1745 = vadd.f32 0.0, %v1744
      %1746 = vmatmul.f32.gmra.mxu0 %v1644
      %v1747 = vpop.f32.mrf.mxu0
      %v1748 = vadd.f32 0.0, %v1747
      %1749 = vmatmul.f32.gmra.mxu0 %v1647
      %v1750 = vpop.f32.mrf.mxu0
      %v1751 = vadd.f32 0.0, %v1750
      %1752 = vmatmul.f32.gmra.mxu0 %v1650
      %v1753 = vpop.f32.mrf.mxu0
      %v1754 = vadd.f32 0.0, %v1753
      %1755 = vmatmul.f32.gmra.mxu0 %v1653
      %v1756 = vpop.f32.mrf.mxu0
      %v1757 = vadd.f32 0.0, %v1756
      %1758 = vmatmul.f32.gmra.mxu0 %v1656
      %v1759 = vpop.f32.mrf.mxu0
      %v1760 = vadd.f32 0.0, %v1759
      %1761 = vmatmul.f32.gmra.mxu0 %v1659
      %v1762 = vpop.f32.mrf.mxu0
      %v1763 = vadd.f32 0.0, %v1762
      %1764 = vmatmul.f32.gmra.mxu0 %v1662
      %v1765 = vpop.f32.mrf.mxu0
      %v1766 = vadd.f32 0.0, %v1765
      %1767 = vmatmul.f32.gmra.mxu0 %v1665
      %v1768 = vpop.f32.mrf.mxu0
      %v1769 = vadd.f32 0.0, %v1768
      %1770 = vmatmul.f32.gmra.mxu0 %v1668
      %v1771 = vpop.f32.mrf.mxu0
      %v1772 = vadd.f32 0.0, %v1771
      %1773 = vmatmul.f32.gmra.mxu0 %v1671
      %v1774 = vpop.f32.mrf.mxu0
      %v1775 = vadd.f32 0.0, %v1774
      %1776 = vmatmul.f32.gmra.mxu0 %v1674
      %v1777 = vpop.f32.mrf.mxu0
      %v1778 = vadd.f32 0.0, %v1777
      %1779 = vmatmul.f32.gmra.mxu0 %v1677
      %v1780 = vpop.f32.mrf.mxu0
      %v1781 = vadd.f32 0.0, %v1780
      %1782 = vmatmul.f32.gmra.mxu0 %v1680
      %v1783 = vpop.f32.mrf.mxu0
      %v1784 = vadd.f32 0.0, %v1783
      %1785 = vmatmul.f32.gmra.mxu0 %v1683
      %v1786 = vpop.f32.mrf.mxu0
      %v1787 = vadd.f32 0.0, %v1786
      %1788 = vmatmul.f32.gmra.mxu0 %v1686
      %v1789 = vpop.f32.mrf.mxu0
      %v1790 = vadd.f32 0.0, %v1789
      %1791 = vdwg.mxu0
      %v1792 = vadd.f32 %v1239, %v1706
      %v1793 = vadd.f32 %v1242, %v1709
      %v1794 = vadd.f32 %v1245, %v1712
      %v1795 = vadd.f32 %v1248, %v1715
      %v1796 = vadd.f32 %v1251, %v1718
      %v1797 = vadd.f32 %v1254, %v1721
      %v1798 = vadd.f32 %v1257, %v1724
      %v1799 = vadd.f32 %v1260, %v1727
      %v1800 = vadd.f32 %v1263, %v1730
      %v1801 = vadd.f32 %v1266, %v1733
      %v1802 = vadd.f32 %v1269, %v1736
      %v1803 = vadd.f32 %v1272, %v1739
      %v1804 = vadd.f32 %v1275, %v1742
      %v1805 = vadd.f32 %v1278, %v1745
      %v1806 = vadd.f32 %v1281, %v1748
      %v1807 = vadd.f32 %v1284, %v1751
      %v1808 = vadd.f32 %v1287, %v1754
      %v1809 = vadd.f32 %v1290, %v1757
      %v1810 = vadd.f32 %v1293, %v1760
      %v1811 = vadd.f32 %v1296, %v1763
      %v1812 = vadd.f32 %v1299, %v1766
      %v1813 = vadd.f32 %v1302, %v1769
      %v1814 = vadd.f32 %v1305, %v1772
      %v1815 = vadd.f32 %v1308, %v1775
      %v1816 = vadd.f32 %v1311, %v1778
      %v1817 = vadd.f32 %v1314, %v1781
      %v1818 = vadd.f32 %v1317, %v1784
      %v1819 = vadd.f32 %v1320, %v1787
      %v1820 = vadd.f32 %v1323, %v1790
      %s1821 = scalar_lea.vmem %s3, 1392
      %v1822 = vld [vmem:[%s1821] sm:$0xff]
      %v1823 = vld [vmem:[%s1821 + $0x8] sm:$0xff]
      %v1824 = vld [vmem:[%s1821 + $0x10] sm:$0xff]
      %v1825 = vld [vmem:[%s1821 + $0x18] sm:$0xff]
      %v1826 = vld [vmem:[%s1821 + $0x20] sm:$0xff]
      %v1827 = vld [vmem:[%s1821 + $0x28] sm:$0xff]
      %v1828 = vld [vmem:[%s1821 + $0x30] sm:$0xff]
      %v1829 = vld [vmem:[%s1821 + $0x38] sm:$0xff]
      %v1830 = vld [vmem:[%s1821 + $0x40] sm:$0xff]
      %v1831 = vld [vmem:[%s1821 + $0x48] sm:$0xff]
      %v1832 = vld [vmem:[%s1821 + $0x50] sm:$0xff]
      %v1833 = vld [vmem:[%s1821 + $0x58] sm:$0xff]
      %v1834 = vld [vmem:[%s1821 + $0x60] sm:$0xff]
      %v1835 = vld [vmem:[%s1821 + $0x68] sm:$0xff]
      %v1836 = vld [vmem:[%s1821 + $0x70] sm:$0xff]
      %v1837 = vld [vmem:[%s1821 + $0x78] sm:$0xff]
      %v1838 = vld [vmem:[%s1821 + $0x80] sm:$0xff]
      %v1839 = vld [vmem:[%s1821 + $0x88] sm:$0xff]
      %v1840 = vld [vmem:[%s1821 + $0x90] sm:$0xff]
      %v1841 = vld [vmem:[%s1821 + $0x98] sm:$0xff]
      %v1842 = vld [vmem:[%s1821 + $0xa0] sm:$0xff]
      %v1843 = vld [vmem:[%s1821 + $0xa8] sm:$0xff]
      %v1844 = vld [vmem:[%s1821 + $0xb0] sm:$0xff]
      %v1845 = vld [vmem:[%s1821 + $0xb8] sm:$0xff]
      %v1846 = vld [vmem:[%s1821 + $0xc0] sm:$0xff]
      %v1847 = vld [vmem:[%s1821 + $0xc8] sm:$0xff]
      %v1848 = vld [vmem:[%s1821 + $0xd0] sm:$0xff]
      %v1849 = vld [vmem:[%s1821 + $0xd8] sm:$0xff]
      %v1850 = vld [vmem:[%s1821 + $0xe0] sm:$0xff]
      %v1851 = vld [vmem:[%s1821 + $0xe8] sm:$0xff]
      %v1852 = vld [vmem:[%s1821 + $0xf0] sm:$0xff]
      %v1853 = vld [vmem:[%s1821 + $0xf8] sm:$0xff]
      %v1854 = vld [vmem:[%s1821 + $0x100] sm:$0xff]
      %v1855 = vld [vmem:[%s1821 + $0x108] sm:$0xff]
      %v1856 = vld [vmem:[%s1821 + $0x110] sm:$0xff]
      %v1857 = vld [vmem:[%s1821 + $0x118] sm:$0xff]
      %v1858 = vld [vmem:[%s1821 + $0x120] sm:$0xff]
      %v1859 = vld [vmem:[%s1821 + $0x128] sm:$0xff]
      %v1860 = vld [vmem:[%s1821 + $0x130] sm:$0xff]
      %v1861 = vld [vmem:[%s1821 + $0x138] sm:$0xff]
      %v1862 = vld [vmem:[%s1821 + $0x140] sm:$0xff]
      %v1863 = vld [vmem:[%s1821 + $0x148] sm:$0xff]
      %v1864 = vld [vmem:[%s1821 + $0x150] sm:$0xff]
      %v1865 = vld [vmem:[%s1821 + $0x158] sm:$0xff]
      %v1866 = vld [vmem:[%s1821 + $0x160] sm:$0xff]
      %v1867 = vld [vmem:[%s1821 + $0x168] sm:$0xff]
      %v1868 = vld [vmem:[%s1821 + $0x170] sm:$0xff]
      %v1869 = vld [vmem:[%s1821 + $0x178] sm:$0xff]
      %v1870 = vld [vmem:[%s1821 + $0x180] sm:$0xff]
      %v1871 = vld [vmem:[%s1821 + $0x188] sm:$0xff]
      %v1872 = vld [vmem:[%s1821 + $0x190] sm:$0xff]
      %v1873 = vld [vmem:[%s1821 + $0x198] sm:$0xff]
      %v1874 = vld [vmem:[%s1821 + $0x1a0] sm:$0xff]
      %v1875 = vld [vmem:[%s1821 + $0x1a8] sm:$0xff]
      %v1876 = vld [vmem:[%s1821 + $0x1b0] sm:$0xff]
      %v1877 = vld [vmem:[%s1821 + $0x1b8] sm:$0xff]
      %v1878 = vld [vmem:[%s1821 + $0x1c0] sm:$0x1]
      %v1879 = vld [vmem:[%s1821 + $0x1c8] sm:$0x1]
      %1880 = vmatpush.msra.mxu0 %v375
      %1881 = vmatpush.msra.mxu0 %v374
      %1882 = vmatpush.msra.mxu0 %v373
      %1883 = vmatpush.msra.mxu0 %v372
      %1884 = vmatpush.msra.mxu0 %v371
      %1885 = vmatpush.msra.mxu0 %v370
      %1886 = vmatpush.msra.mxu0 %v369
      %1887 = vmatpush.msra.mxu0 %v368
      %1888 = vmatpush.msra.mxu0 %v367
      %1889 = vmatpush.msra.mxu0 %v366
      %1890 = vmatpush.msra.mxu0 %v365
      %1891 = vmatpush.msra.mxu0 %v364
      %1892 = vmatpush.msra.mxu0 %v363
      %1893 = vmatpush.msra.mxu0 %v362
      %1894 = vmatpush.msra.mxu0 %v361
      %1895 = vmatpush.msra.mxu0 %v360
      %1896 = vmatmul.f32.gmra.mxu0 %v1822
      %v1897 = vpop.f32.mrf.mxu0
      %v1898 = vadd.f32 0.0, %v1897
      %1899 = vmatmul.f32.gmra.mxu0 %v1824
      %v1900 = vpop.f32.mrf.mxu0
      %v1901 = vadd.f32 0.0, %v1900
      %1902 = vmatmul.f32.gmra.mxu0 %v1826
      %v1903 = vpop.f32.mrf.mxu0
      %v1904 = vadd.f32 0.0, %v1903
      %1905 = vmatmul.f32.gmra.mxu0 %v1828
      %v1906 = vpop.f32.mrf.mxu0
      %v1907 = vadd.f32 0.0, %v1906
      %1908 = vmatmul.f32.gmra.mxu0 %v1830
      %v1909 = vpop.f32.mrf.mxu0
      %v1910 = vadd.f32 0.0, %v1909
      %1911 = vmatmul.f32.gmra.mxu0 %v1832
      %v1912 = vpop.f32.mrf.mxu0
      %v1913 = vadd.f32 0.0, %v1912
      %1914 = vmatmul.f32.gmra.mxu0 %v1834
      %v1915 = vpop.f32.mrf.mxu0
      %v1916 = vadd.f32 0.0, %v1915
      %1917 = vmatmul.f32.gmra.mxu0 %v1836
      %v1918 = vpop.f32.mrf.mxu0
      %v1919 = vadd.f32 0.0, %v1918
      %1920 = vmatmul.f32.gmra.mxu0 %v1838
      %v1921 = vpop.f32.mrf.mxu0
      %v1922 = vadd.f32 0.0, %v1921
      %1923 = vmatmul.f32.gmra.mxu0 %v1840
      %v1924 = vpop.f32.mrf.mxu0
      %v1925 = vadd.f32 0.0, %v1924
      %1926 = vmatmul.f32.gmra.mxu0 %v1842
      %v1927 = vpop.f32.mrf.mxu0
      %v1928 = vadd.f32 0.0, %v1927
      %1929 = vmatmul.f32.gmra.mxu0 %v1844
      %v1930 = vpop.f32.mrf.mxu0
      %v1931 = vadd.f32 0.0, %v1930
      %1932 = vmatmul.f32.gmra.mxu0 %v1846
      %v1933 = vpop.f32.mrf.mxu0
      %v1934 = vadd.f32 0.0, %v1933
      %1935 = vmatmul.f32.gmra.mxu0 %v1848
      %v1936 = vpop.f32.mrf.mxu0
      %v1937 = vadd.f32 0.0, %v1936
      %1938 = vmatmul.f32.gmra.mxu0 %v1850
      %v1939 = vpop.f32.mrf.mxu0
      %v1940 = vadd.f32 0.0, %v1939
      %1941 = vmatmul.f32.gmra.mxu0 %v1852
      %v1942 = vpop.f32.mrf.mxu0
      %v1943 = vadd.f32 0.0, %v1942
      %1944 = vmatmul.f32.gmra.mxu0 %v1854
      %v1945 = vpop.f32.mrf.mxu0
      %v1946 = vadd.f32 0.0, %v1945
      %1947 = vmatmul.f32.gmra.mxu0 %v1856
      %v1948 = vpop.f32.mrf.mxu0
      %v1949 = vadd.f32 0.0, %v1948
      %1950 = vmatmul.f32.gmra.mxu0 %v1858
      %v1951 = vpop.f32.mrf.mxu0
      %v1952 = vadd.f32 0.0, %v1951
      %1953 = vmatmul.f32.gmra.mxu0 %v1860
      %v1954 = vpop.f32.mrf.mxu0
      %v1955 = vadd.f32 0.0, %v1954
      %1956 = vmatmul.f32.gmra.mxu0 %v1862
      %v1957 = vpop.f32.mrf.mxu0
      %v1958 = vadd.f32 0.0, %v1957
      %1959 = vmatmul.f32.gmra.mxu0 %v1864
      %v1960 = vpop.f32.mrf.mxu0
      %v1961 = vadd.f32 0.0, %v1960
      %1962 = vmatmul.f32.gmra.mxu0 %v1866
      %v1963 = vpop.f32.mrf.mxu0
      %v1964 = vadd.f32 0.0, %v1963
      %1965 = vmatmul.f32.gmra.mxu0 %v1868
      %v1966 = vpop.f32.mrf.mxu0
      %v1967 = vadd.f32 0.0, %v1966
      %1968 = vmatmul.f32.gmra.mxu0 %v1870
      %v1969 = vpop.f32.mrf.mxu0
      %v1970 = vadd.f32 0.0, %v1969
      %1971 = vmatmul.f32.gmra.mxu0 %v1872
      %v1972 = vpop.f32.mrf.mxu0
      %v1973 = vadd.f32 0.0, %v1972
      %1974 = vmatmul.f32.gmra.mxu0 %v1874
      %v1975 = vpop.f32.mrf.mxu0
      %v1976 = vadd.f32 0.0, %v1975
      %1977 = vmatmul.f32.gmra.mxu0 %v1876
      %v1978 = vpop.f32.mrf.mxu0
      %v1979 = vadd.f32 0.0, %v1978
      %1980 = vmatmul.f32.gmra.mxu0 %v1878
      %v1981 = vpop.f32.mrf.mxu0
      %v1982 = vadd.f32 0.0, %v1981
      %1983 = vdwg.mxu0
      %1984 = vmatpush.msra.mxu0 %v391
      %1985 = vmatpush.msra.mxu0 %v390
      %1986 = vmatpush.msra.mxu0 %v389
      %1987 = vmatpush.msra.mxu0 %v388
      %1988 = vmatpush.msra.mxu0 %v387
      %1989 = vmatpush.msra.mxu0 %v386
      %1990 = vmatpush.msra.mxu0 %v385
      %1991 = vmatpush.msra.mxu0 %v384
      %1992 = vmatpush.msra.mxu0 %v383
      %1993 = vmatpush.msra.mxu0 %v382
      %1994 = vmatpush.msra.mxu0 %v381
      %1995 = vmatpush.msra.mxu0 %v380
      %1996 = vmatpush.msra.mxu0 %v379
      %1997 = vmatpush.msra.mxu0 %v378
      %1998 = vmatpush.msra.mxu0 %v377
      %1999 = vmatpush.msra.mxu0 %v376
      %2000 = vmatmul.f32.gmra.mxu0 %v1823
      %v2001 = vpop.f32.mrf.mxu0
      %v2002 = vadd.f32 %v1898, %v2001
      %2003 = vmatmul.f32.gmra.mxu0 %v1825
      %v2004 = vpop.f32.mrf.mxu0
      %v2005 = vadd.f32 %v1901, %v2004
      %2006 = vmatmul.f32.gmra.mxu0 %v1827
      %v2007 = vpop.f32.mrf.mxu0
      %v2008 = vadd.f32 %v1904, %v2007
      %2009 = vmatmul.f32.gmra.mxu0 %v1829
      %v2010 = vpop.f32.mrf.mxu0
      %v2011 = vadd.f32 %v1907, %v2010
      %2012 = vmatmul.f32.gmra.mxu0 %v1831
      %v2013 = vpop.f32.mrf.mxu0
      %v2014 = vadd.f32 %v1910, %v2013
      %2015 = vmatmul.f32.gmra.mxu0 %v1833
      %v2016 = vpop.f32.mrf.mxu0
      %v2017 = vadd.f32 %v1913, %v2016
      %2018 = vmatmul.f32.gmra.mxu0 %v1835
      %v2019 = vpop.f32.mrf.mxu0
      %v2020 = vadd.f32 %v1916, %v2019
      %2021 = vmatmul.f32.gmra.mxu0 %v1837
      %v2022 = vpop.f32.mrf.mxu0
      %v2023 = vadd.f32 %v1919, %v2022
      %2024 = vmatmul.f32.gmra.mxu0 %v1839
      %v2025 = vpop.f32.mrf.mxu0
      %v2026 = vadd.f32 %v1922, %v2025
      %2027 = vmatmul.f32.gmra.mxu0 %v1841
      %v2028 = vpop.f32.mrf.mxu0
      %v2029 = vadd.f32 %v1925, %v2028
      %2030 = vmatmul.f32.gmra.mxu0 %v1843
      %v2031 = vpop.f32.mrf.mxu0
      %v2032 = vadd.f32 %v1928, %v2031
      %2033 = vmatmul.f32.gmra.mxu0 %v1845
      %v2034 = vpop.f32.mrf.mxu0
      %v2035 = vadd.f32 %v1931, %v2034
      %2036 = vmatmul.f32.gmra.mxu0 %v1847
      %v2037 = vpop.f32.mrf.mxu0
      %v2038 = vadd.f32 %v1934, %v2037
      %2039 = vmatmul.f32.gmra.mxu0 %v1849
      %v2040 = vpop.f32.mrf.mxu0
      %v2041 = vadd.f32 %v1937, %v2040
      %2042 = vmatmul.f32.gmra.mxu0 %v1851
      %v2043 = vpop.f32.mrf.mxu0
      %v2044 = vadd.f32 %v1940, %v2043
      %2045 = vmatmul.f32.gmra.mxu0 %v1853
      %v2046 = vpop.f32.mrf.mxu0
      %v2047 = vadd.f32 %v1943, %v2046
      %2048 = vmatmul.f32.gmra.mxu0 %v1855
      %v2049 = vpop.f32.mrf.mxu0
      %v2050 = vadd.f32 %v1946, %v2049
      %2051 = vmatmul.f32.gmra.mxu0 %v1857
      %v2052 = vpop.f32.mrf.mxu0
      %v2053 = vadd.f32 %v1949, %v2052
      %2054 = vmatmul.f32.gmra.mxu0 %v1859
      %v2055 = vpop.f32.mrf.mxu0
      %v2056 = vadd.f32 %v1952, %v2055
      %2057 = vmatmul.f32.gmra.mxu0 %v1861
      %v2058 = vpop.f32.mrf.mxu0
      %v2059 = vadd.f32 %v1955, %v2058
      %2060 = vmatmul.f32.gmra.mxu0 %v1863
      %v2061 = vpop.f32.mrf.mxu0
      %v2062 = vadd.f32 %v1958, %v2061
      %2063 = vmatmul.f32.gmra.mxu0 %v1865
      %v2064 = vpop.f32.mrf.mxu0
      %v2065 = vadd.f32 %v1961, %v2064
      %2066 = vmatmul.f32.gmra.mxu0 %v1867
      %v2067 = vpop.f32.mrf.mxu0
      %v2068 = vadd.f32 %v1964, %v2067
      %2069 = vmatmul.f32.gmra.mxu0 %v1869
      %v2070 = vpop.f32.mrf.mxu0
      %v2071 = vadd.f32 %v1967, %v2070
      %2072 = vmatmul.f32.gmra.mxu0 %v1871
      %v2073 = vpop.f32.mrf.mxu0
      %v2074 = vadd.f32 %v1970, %v2073
      %2075 = vmatmul.f32.gmra.mxu0 %v1873
      %v2076 = vpop.f32.mrf.mxu0
      %v2077 = vadd.f32 %v1973, %v2076
      %2078 = vmatmul.f32.gmra.mxu0 %v1875
      %v2079 = vpop.f32.mrf.mxu0
      %v2080 = vadd.f32 %v1976, %v2079
      %2081 = vmatmul.f32.gmra.mxu0 %v1877
      %v2082 = vpop.f32.mrf.mxu0
      %v2083 = vadd.f32 %v1979, %v2082
      %2084 = vmatmul.f32.gmra.mxu0 %v1879
      %v2085 = vpop.f32.mrf.mxu0
      %v2086 = vadd.f32 %v1982, %v2085
      %2087 = vdwg.mxu0
      %s2088 = scalar_lea.vmem %s1, 192
      %v2089 = vld [vmem:[%s2088] sm:$0xff]
      %v2090 = vld [vmem:[%s2088 + $0x8] sm:$0xff]
      %v2091 = vld [vmem:[%s2088 + $0x10] sm:$0xff]
      %v2092 = vld [vmem:[%s2088 + $0x18] sm:$0xff]
      %v2093 = vld [vmem:[%s2088 + $0x20] sm:$0xff]
      %v2094 = vld [vmem:[%s2088 + $0x28] sm:$0xff]
      %v2095 = vld [vmem:[%s2088 + $0x30] sm:$0xff]
      %v2096 = vld [vmem:[%s2088 + $0x38] sm:$0xff]
      %v2098 = vsel %vm942, %v2002, 0
      %v2101 = vsel %vm942, %v2005, 0
      %v2104 = vsel %vm942, %v2008, 0
      %v2107 = vsel %vm942, %v2011, 0
      %v2110 = vsel %vm942, %v2014, 0
      %v2113 = vsel %vm942, %v2017, 0
      %v2116 = vsel %vm942, %v2020, 0
      %v2119 = vsel %vm942, %v2023, 0
      %v2122 = vsel %vm942, %v2026, 0
      %v2125 = vsel %vm942, %v2029, 0
      %v2128 = vsel %vm942, %v2032, 0
      %v2131 = vsel %vm942, %v2035, 0
      %v2134 = vsel %vm942, %v2038, 0
      %v2137 = vsel %vm942, %v2041, 0
      %v2140 = vsel %vm942, %v2044, 0
      %v2143 = vsel %vm942, %v2047, 0
      %v2146 = vsel %vm942, %v2050, 0
      %v2149 = vsel %vm942, %v2053, 0
      %v2152 = vsel %vm942, %v2056, 0
      %v2155 = vsel %vm942, %v2059, 0
      %v2158 = vsel %vm942, %v2062, 0
      %v2161 = vsel %vm942, %v2065, 0
      %v2164 = vsel %vm942, %v2068, 0
      %v2167 = vsel %vm942, %v2071, 0
      %v2170 = vsel %vm942, %v2074, 0
      %v2173 = vsel %vm942, %v2077, 0
      %v2176 = vsel %vm942, %v2080, 0
      %v2179 = vsel %vm942, %v2083, 0
      %v2182 = vsel %vm942, %v2086, 0
      %2184 = vmatpush.msra.mxu0 0.0
      %2185 = vmatpush.msra.mxu0 0.0
      %2186 = vmatpush.msra.mxu0 0.0
      %2187 = vmatpush.msra.mxu0 0.0
      %2188 = vmatpush.msra.mxu0 0.0
      %2189 = vmatpush.msra.mxu0 0.0
      %2190 = vmatpush.msra.mxu0 0.0
      %2191 = vmatpush.msra.mxu0 0.0
      %2192 = vmatpush.msra.mxu0 %v2096
      %2193 = vmatpush.msra.mxu0 %v2095
      %2194 = vmatpush.msra.mxu0 %v2094
      %2195 = vmatpush.msra.mxu0 %v2093
      %2196 = vmatpush.msra.mxu0 %v2092
      %2197 = vmatpush.msra.mxu0 %v2091
      %2198 = vmatpush.msra.mxu0 %v2090
      %2199 = vmatpush.msra.mxu0 %v2089
      %2200 = vmatmul.f32.gmra.mxu0 %v2098
      %v2201 = vpop.f32.mrf.mxu0
      %v2202 = vadd.f32 0.0, %v2201
      %2203 = vmatmul.f32.gmra.mxu0 %v2101
      %v2204 = vpop.f32.mrf.mxu0
      %v2205 = vadd.f32 0.0, %v2204
      %2206 = vmatmul.f32.gmra.mxu0 %v2104
      %v2207 = vpop.f32.mrf.mxu0
      %v2208 = vadd.f32 0.0, %v2207
      %2209 = vmatmul.f32.gmra.mxu0 %v2107
      %v2210 = vpop.f32.mrf.mxu0
      %v2211 = vadd.f32 0.0, %v2210
      %2212 = vmatmul.f32.gmra.mxu0 %v2110
      %v2213 = vpop.f32.mrf.mxu0
      %v2214 = vadd.f32 0.0, %v2213
      %2215 = vmatmul.f32.gmra.mxu0 %v2113
      %v2216 = vpop.f32.mrf.mxu0
      %v2217 = vadd.f32 0.0, %v2216
      %2218 = vmatmul.f32.gmra.mxu0 %v2116
      %v2219 = vpop.f32.mrf.mxu0
      %v2220 = vadd.f32 0.0, %v2219
      %2221 = vmatmul.f32.gmra.mxu0 %v2119
      %v2222 = vpop.f32.mrf.mxu0
      %v2223 = vadd.f32 0.0, %v2222
      %2224 = vmatmul.f32.gmra.mxu0 %v2122
      %v2225 = vpop.f32.mrf.mxu0
      %v2226 = vadd.f32 0.0, %v2225
      %2227 = vmatmul.f32.gmra.mxu0 %v2125
      %v2228 = vpop.f32.mrf.mxu0
      %v2229 = vadd.f32 0.0, %v2228
      %2230 = vmatmul.f32.gmra.mxu0 %v2128
      %v2231 = vpop.f32.mrf.mxu0
      %v2232 = vadd.f32 0.0, %v2231
      %2233 = vmatmul.f32.gmra.mxu0 %v2131
      %v2234 = vpop.f32.mrf.mxu0
      %v2235 = vadd.f32 0.0, %v2234
      %2236 = vmatmul.f32.gmra.mxu0 %v2134
      %v2237 = vpop.f32.mrf.mxu0
      %v2238 = vadd.f32 0.0, %v2237
      %2239 = vmatmul.f32.gmra.mxu0 %v2137
      %v2240 = vpop.f32.mrf.mxu0
      %v2241 = vadd.f32 0.0, %v2240
      %2242 = vmatmul.f32.gmra.mxu0 %v2140
      %v2243 = vpop.f32.mrf.mxu0
      %v2244 = vadd.f32 0.0, %v2243
      %2245 = vmatmul.f32.gmra.mxu0 %v2143
      %v2246 = vpop.f32.mrf.mxu0
      %v2247 = vadd.f32 0.0, %v2246
      %2248 = vmatmul.f32.gmra.mxu0 %v2146
      %v2249 = vpop.f32.mrf.mxu0
      %v2250 = vadd.f32 0.0, %v2249
      %2251 = vmatmul.f32.gmra.mxu0 %v2149
      %v2252 = vpop.f32.mrf.mxu0
      %v2253 = vadd.f32 0.0, %v2252
      %2254 = vmatmul.f32.gmra.mxu0 %v2152
      %v2255 = vpop.f32.mrf.mxu0
      %v2256 = vadd.f32 0.0, %v2255
      %2257 = vmatmul.f32.gmra.mxu0 %v2155
      %v2258 = vpop.f32.mrf.mxu0
      %v2259 = vadd.f32 0.0, %v2258
      %2260 = vmatmul.f32.gmra.mxu0 %v2158
      %v2261 = vpop.f32.mrf.mxu0
      %v2262 = vadd.f32 0.0, %v2261
      %2263 = vmatmul.f32.gmra.mxu0 %v2161
      %v2264 = vpop.f32.mrf.mxu0
      %v2265 = vadd.f32 0.0, %v2264
      %2266 = vmatmul.f32.gmra.mxu0 %v2164
      %v2267 = vpop.f32.mrf.mxu0
      %v2268 = vadd.f32 0.0, %v2267
      %2269 = vmatmul.f32.gmra.mxu0 %v2167
      %v2270 = vpop.f32.mrf.mxu0
      %v2271 = vadd.f32 0.0, %v2270
      %2272 = vmatmul.f32.gmra.mxu0 %v2170
      %v2273 = vpop.f32.mrf.mxu0
      %v2274 = vadd.f32 0.0, %v2273
      %2275 = vmatmul.f32.gmra.mxu0 %v2173
      %v2276 = vpop.f32.mrf.mxu0
      %v2277 = vadd.f32 0.0, %v2276
      %2278 = vmatmul.f32.gmra.mxu0 %v2176
      %v2279 = vpop.f32.mrf.mxu0
      %v2280 = vadd.f32 0.0, %v2279
      %2281 = vmatmul.f32.gmra.mxu0 %v2179
      %v2282 = vpop.f32.mrf.mxu0
      %v2283 = vadd.f32 0.0, %v2282
      %2284 = vmatmul.f32.gmra.mxu0 %v2182
      %v2285 = vpop.f32.mrf.mxu0
      %v2286 = vadd.f32 0.0, %v2285
      %2287 = vdwg.mxu0
      %v2288 = vadd.f32 %v1792, %v2202
      %v2289 = vadd.f32 %v1793, %v2205
      %v2290 = vadd.f32 %v1794, %v2208
      %v2291 = vadd.f32 %v1795, %v2211
      %v2292 = vadd.f32 %v1796, %v2214
      %v2293 = vadd.f32 %v1797, %v2217
      %v2294 = vadd.f32 %v1798, %v2220
      %v2295 = vadd.f32 %v1799, %v2223
      %v2296 = vadd.f32 %v1800, %v2226
      %v2297 = vadd.f32 %v1801, %v2229
      %v2298 = vadd.f32 %v1802, %v2232
      %v2299 = vadd.f32 %v1803, %v2235
      %v2300 = vadd.f32 %v1804, %v2238
      %v2301 = vadd.f32 %v1805, %v2241
      %v2302 = vadd.f32 %v1806, %v2244
      %v2303 = vadd.f32 %v1807, %v2247
      %v2304 = vadd.f32 %v1808, %v2250
      %v2305 = vadd.f32 %v1809, %v2253
      %v2306 = vadd.f32 %v1810, %v2256
      %v2307 = vadd.f32 %v1811, %v2259
      %v2308 = vadd.f32 %v1812, %v2262
      %v2309 = vadd.f32 %v1813, %v2265
      %v2310 = vadd.f32 %v1814, %v2268
      %v2311 = vadd.f32 %v1815, %v2271
      %v2312 = vadd.f32 %v1816, %v2274
      %v2313 = vadd.f32 %v1817, %v2277
      %v2314 = vadd.f32 %v1818, %v2280
      %v2315 = vadd.f32 %v1819, %v2283
      %v2316 = vadd.f32 %v1820, %v2286
      %v2317 = vld [vmem:[%s2] sm:$0x1]
      %v2319 = vperm.slane %v2317, 0
      %v2321 = vadd.f32 %v2288, %v2319
      %v2322 = vadd.f32 %v2289, %v2319
      %v2323 = vadd.f32 %v2290, %v2319
      %v2324 = vadd.f32 %v2291, %v2319
      %v2325 = vadd.f32 %v2292, %v2319
      %v2326 = vadd.f32 %v2293, %v2319
      %v2327 = vadd.f32 %v2294, %v2319
      %v2328 = vadd.f32 %v2295, %v2319
      %v2329 = vadd.f32 %v2296, %v2319
      %v2330 = vadd.f32 %v2297, %v2319
      %v2331 = vadd.f32 %v2298, %v2319
      %v2332 = vadd.f32 %v2299, %v2319
      %v2333 = vadd.f32 %v2300, %v2319
      %v2334 = vadd.f32 %v2301, %v2319
      %v2335 = vadd.f32 %v2302, %v2319
      %v2336 = vadd.f32 %v2303, %v2319
      %v2337 = vadd.f32 %v2304, %v2319
      %v2338 = vadd.f32 %v2305, %v2319
      %v2339 = vadd.f32 %v2306, %v2319
      %v2340 = vadd.f32 %v2307, %v2319
      %v2341 = vadd.f32 %v2308, %v2319
      %v2342 = vadd.f32 %v2309, %v2319
      %v2343 = vadd.f32 %v2310, %v2319
      %v2344 = vadd.f32 %v2311, %v2319
      %v2345 = vadd.f32 %v2312, %v2319
      %v2346 = vadd.f32 %v2313, %v2319
      %v2347 = vadd.f32 %v2314, %v2319
      %v2348 = vadd.f32 %v2315, %v2319
      %v2349 = vadd.f32 %v2316, %v2319
      %v2350 = vmax.f32 %v2321, 0.0
      %v2351 = vmax.f32 %v2322, 0.0
      %v2352 = vmax.f32 %v2323, 0.0
      %v2353 = vmax.f32 %v2324, 0.0
      %v2354 = vmax.f32 %v2325, 0.0
      %v2355 = vmax.f32 %v2326, 0.0
      %v2356 = vmax.f32 %v2327, 0.0
      %v2357 = vmax.f32 %v2328, 0.0
      %v2358 = vmax.f32 %v2329, 0.0
      %v2359 = vmax.f32 %v2330, 0.0
      %v2360 = vmax.f32 %v2331, 0.0
      %v2361 = vmax.f32 %v2332, 0.0
      %v2362 = vmax.f32 %v2333, 0.0
      %v2363 = vmax.f32 %v2334, 0.0
      %v2364 = vmax.f32 %v2335, 0.0
      %v2365 = vmax.f32 %v2336, 0.0
      %v2366 = vmax.f32 %v2337, 0.0
      %v2367 = vmax.f32 %v2338, 0.0
      %v2368 = vmax.f32 %v2339, 0.0
      %v2369 = vmax.f32 %v2340, 0.0
      %v2370 = vmax.f32 %v2341, 0.0
      %v2371 = vmax.f32 %v2342, 0.0
      %v2372 = vmax.f32 %v2343, 0.0
      %v2373 = vmax.f32 %v2344, 0.0
      %v2374 = vmax.f32 %v2345, 0.0
      %v2375 = vmax.f32 %v2346, 0.0
      %v2376 = vmax.f32 %v2347, 0.0
      %v2377 = vmax.f32 %v2348, 0.0
      %v2378 = vmax.f32 %v2349, 0.0
      %v2379 = vld [vmem:[%s6] sm:$0xff]
      %v2380 = vld [vmem:[%s6 + $0x8] sm:$0xff]
      %v2381 = vld [vmem:[%s6 + $0x10] sm:$0xff]
      %v2382 = vld [vmem:[%s6 + $0x18] sm:$0xff]
      %v2383 = vld [vmem:[%s6 + $0x20] sm:$0xff]
      %v2384 = vld [vmem:[%s6 + $0x28] sm:$0xff]
      %v2385 = vld [vmem:[%s6 + $0x30] sm:$0xff]
      %v2386 = vld [vmem:[%s6 + $0x38] sm:$0xff]
      %v2387 = vld [vmem:[%s6 + $0x40] sm:$0xf]
      %v2388 = vld [vmem:[%s6 + $0x48] sm:$0xf]
      %vm2389 = vcmask 793600
      %v2391 = vsel %vm2389, %v2380, 0
      %v2394 = vsel %vm2389, %v2382, 0
      %v2397 = vsel %vm2389, %v2384, 0
      %v2400 = vsel %vm2389, %v2386, 0
      %v2403 = vsel %vm2389, %v2388, 0
      %vm2405 = vcmask 1040384
      %v2407 = vsel %vm2405, %v2378, 0
      %2409 = vmatpush.msra.mxu0 %v2365
      %2410 = vmatpush.msra.mxu0 %v2364
      %2411 = vmatpush.msra.mxu0 %v2363
      %2412 = vmatpush.msra.mxu0 %v2362
      %2413 = vmatpush.msra.mxu0 %v2361
      %2414 = vmatpush.msra.mxu0 %v2360
      %2415 = vmatpush.msra.mxu0 %v2359
      %2416 = vmatpush.msra.mxu0 %v2358
      %2417 = vmatpush.msra.mxu0 %v2357
      %2418 = vmatpush.msra.mxu0 %v2356
      %2419 = vmatpush.msra.mxu0 %v2355
      %2420 = vmatpush.msra.mxu0 %v2354
      %2421 = vmatpush.msra.mxu0 %v2353
      %2422 = vmatpush.msra.mxu0 %v2352
      %2423 = vmatpush.msra.mxu0 %v2351
      %2424 = vmatpush.msra.mxu0 %v2350
      %2425 = vmatmul.f32.gmra.mxu0 %v2379
      %v2426 = vpop.f32.mrf.mxu0
      %v2427 = vadd.f32 0.0, %v2426
      %2428 = vmatmul.f32.gmra.mxu0 %v2381
      %v2429 = vpop.f32.mrf.mxu0
      %v2430 = vadd.f32 0.0, %v2429
      %2431 = vmatmul.f32.gmra.mxu0 %v2383
      %v2432 = vpop.f32.mrf.mxu0
      %v2433 = vadd.f32 0.0, %v2432
      %2434 = vmatmul.f32.gmra.mxu0 %v2385
      %v2435 = vpop.f32.mrf.mxu0
      %v2436 = vadd.f32 0.0, %v2435
      %2437 = vmatmul.f32.gmra.mxu0 %v2387
      %v2438 = vpop.f32.mrf.mxu0
      %v2439 = vadd.f32 0.0, %v2438
      %2440 = vdwg.mxu0
      %2441 = vmatpush.msra.mxu0 0.0
      %2442 = vmatpush.msra.mxu0 0.0
      %2443 = vmatpush.msra.mxu0 0.0
      %2444 = vmatpush.msra.mxu0 %v2407
      %2445 = vmatpush.msra.mxu0 %v2377
      %2446 = vmatpush.msra.mxu0 %v2376
      %2447 = vmatpush.msra.mxu0 %v2375
      %2448 = vmatpush.msra.mxu0 %v2374
      %2449 = vmatpush.msra.mxu0 %v2373
      %2450 = vmatpush.msra.mxu0 %v2372
      %2451 = vmatpush.msra.mxu0 %v2371
      %2452 = vmatpush.msra.mxu0 %v2370
      %2453 = vmatpush.msra.mxu0 %v2369
      %2454 = vmatpush.msra.mxu0 %v2368
      %2455 = vmatpush.msra.mxu0 %v2367
      %2456 = vmatpush.msra.mxu0 %v2366
      %2457 = vmatmul.f32.gmra.mxu0 %v2391
      %v2458 = vpop.f32.mrf.mxu0
      %v2459 = vadd.f32 %v2427, %v2458
      %2460 = vmatmul.f32.gmra.mxu0 %v2394
      %v2461 = vpop.f32.mrf.mxu0
      %v2462 = vadd.f32 %v2430, %v2461
      %2463 = vmatmul.f32.gmra.mxu0 %v2397
      %v2464 = vpop.f32.mrf.mxu0
      %v2465 = vadd.f32 %v2433, %v2464
      %2466 = vmatmul.f32.gmra.mxu0 %v2400
      %v2467 = vpop.f32.mrf.mxu0
      %v2468 = vadd.f32 %v2436, %v2467
      %2469 = vmatmul.f32.gmra.mxu0 %v2403
      %v2470 = vpop.f32.mrf.mxu0
      %v2471 = vadd.f32 %v2439, %v2470
      %2472 = vdwg.mxu0
      %v2473 = vld [vmem:[%s4] sm:$0xff]
      %v2474 = vld [vmem:[%s4 + $0x8] sm:$0xff]
      %v2475 = vld [vmem:[%s4 + $0x10] sm:$0xff]
      %v2476 = vld [vmem:[%s4 + $0x18] sm:$0xff]
      %v2477 = vld [vmem:[%s4 + $0x20] sm:$0xff]
      %v2478 = vld [vmem:[%s4 + $0x28] sm:$0xff]
      %v2479 = vld [vmem:[%s4 + $0x30] sm:$0xff]
      %v2480 = vld [vmem:[%s4 + $0x38] sm:$0xff]
      %v2481 = vld [vmem:[%s4 + $0x40] sm:$0xff]
      %v2482 = vld [vmem:[%s4 + $0x48] sm:$0xff]
      %v2483 = vld [vmem:[%s4 + $0x50] sm:$0xff]
      %v2484 = vld [vmem:[%s4 + $0x58] sm:$0xff]
      %v2485 = vld [vmem:[%s4 + $0x60] sm:$0xff]
      %v2486 = vld [vmem:[%s4 + $0x68] sm:$0xff]
      %v2487 = vld [vmem:[%s4 + $0x70] sm:$0xff]
      %v2488 = vld [vmem:[%s4 + $0x78] sm:$0xff]
      %v2489 = vld [vmem:[%s4 + $0x80] sm:$0xff]
      %v2490 = vld [vmem:[%s4 + $0x88] sm:$0xff]
      %v2491 = vld [vmem:[%s4 + $0x90] sm:$0xff]
      %v2492 = vld [vmem:[%s4 + $0x98] sm:$0xff]
      %v2493 = vld [vmem:[%s4 + $0xa0] sm:$0xff]
      %v2494 = vld [vmem:[%s4 + $0xa8] sm:$0xff]
      %v2495 = vld [vmem:[%s4 + $0xb0] sm:$0xff]
      %v2496 = vld [vmem:[%s4 + $0xb8] sm:$0xff]
      %v2497 = vld [vmem:[%s4 + $0xc0] sm:$0xff]
      %v2498 = vld [vmem:[%s4 + $0xc8] sm:$0xff]
      %v2499 = vld [vmem:[%s4 + $0xd0] sm:$0xff]
      %v2500 = vld [vmem:[%s4 + $0xd8] sm:$0xff]
      %v2501 = vld [vmem:[%s4 + $0xe0] sm:$0xff]
      %v2502 = vld [vmem:[%s4 + $0xe8] sm:$0xff]
      %v2503 = vld [vmem:[%s4 + $0xf0] sm:$0xff]
      %v2504 = vld [vmem:[%s4 + $0xf8] sm:$0xff]
      %s2505 = scalar_lea.vmem %s6, 80
      %v2506 = vld [vmem:[%s2505] sm:$0xff]
      %v2507 = vld [vmem:[%s2505 + $0x8] sm:$0xff]
      %v2508 = vld [vmem:[%s2505 + $0x10] sm:$0xff]
      %v2509 = vld [vmem:[%s2505 + $0x18] sm:$0xff]
      %v2510 = vld [vmem:[%s2505 + $0x20] sm:$0xff]
      %v2511 = vld [vmem:[%s2505 + $0x28] sm:$0xff]
      %v2512 = vld [vmem:[%s2505 + $0x30] sm:$0xff]
      %v2513 = vld [vmem:[%s2505 + $0x38] sm:$0xff]
      %v2514 = vld [vmem:[%s2505 + $0x40] sm:$0xf]
      %v2515 = vld [vmem:[%s2505 + $0x48] sm:$0xf]
      %v2517 = vsel %vm2389, %v2507, 0
      %v2520 = vsel %vm2389, %v2509, 0
      %v2523 = vsel %vm2389, %v2511, 0
      %v2526 = vsel %vm2389, %v2513, 0
      %v2529 = vsel %vm2389, %v2515, 0
      %2531 = vmatpush.msra.mxu0 %v2365
      %2532 = vmatpush.msra.mxu0 %v2364
      %2533 = vmatpush.msra.mxu0 %v2363
      %2534 = vmatpush.msra.mxu0 %v2362
      %2535 = vmatpush.msra.mxu0 %v2361
      %2536 = vmatpush.msra.mxu0 %v2360
      %2537 = vmatpush.msra.mxu0 %v2359
      %2538 = vmatpush.msra.mxu0 %v2358
      %2539 = vmatpush.msra.mxu0 %v2357
      %2540 = vmatpush.msra.mxu0 %v2356
      %2541 = vmatpush.msra.mxu0 %v2355
      %2542 = vmatpush.msra.mxu0 %v2354
      %2543 = vmatpush.msra.mxu0 %v2353
      %2544 = vmatpush.msra.mxu0 %v2352
      %2545 = vmatpush.msra.mxu0 %v2351
      %2546 = vmatpush.msra.mxu0 %v2350
      %2547 = vmatmul.f32.gmra.mxu0 %v2506
      %v2548 = vpop.f32.mrf.mxu0
      %v2549 = vadd.f32 0.0, %v2548
      %2550 = vmatmul.f32.gmra.mxu0 %v2508
      %v2551 = vpop.f32.mrf.mxu0
      %v2552 = vadd.f32 0.0, %v2551
      %2553 = vmatmul.f32.gmra.mxu0 %v2510
      %v2554 = vpop.f32.mrf.mxu0
      %v2555 = vadd.f32 0.0, %v2554
      %2556 = vmatmul.f32.gmra.mxu0 %v2512
      %v2557 = vpop.f32.mrf.mxu0
      %v2558 = vadd.f32 0.0, %v2557
      %2559 = vmatmul.f32.gmra.mxu0 %v2514
      %v2560 = vpop.f32.mrf.mxu0
      %v2561 = vadd.f32 0.0, %v2560
      %2562 = vdwg.mxu0
      %2563 = vmatpush.msra.mxu0 0.0
      %2564 = vmatpush.msra.mxu0 0.0
      %2565 = vmatpush.msra.mxu0 0.0
      %2566 = vmatpush.msra.mxu0 %v2407
      %2567 = vmatpush.msra.mxu0 %v2377
      %2568 = vmatpush.msra.mxu0 %v2376
      %2569 = vmatpush.msra.mxu0 %v2375
      %2570 = vmatpush.msra.mxu0 %v2374
      %2571 = vmatpush.msra.mxu0 %v2373
      %2572 = vmatpush.msra.mxu0 %v2372
      %2573 = vmatpush.msra.mxu0 %v2371
      %2574 = vmatpush.msra.mxu0 %v2370
      %2575 = vmatpush.msra.mxu0 %v2369
      %2576 = vmatpush.msra.mxu0 %v2368
      %2577 = vmatpush.msra.mxu0 %v2367
      %2578 = vmatpush.msra.mxu0 %v2366
      %2579 = vmatmul.f32.gmra.mxu0 %v2517
      %v2580 = vpop.f32.mrf.mxu0
      %v2581 = vadd.f32 %v2549, %v2580
      %2582 = vmatmul.f32.gmra.mxu0 %v2520
      %v2583 = vpop.f32.mrf.mxu0
      %v2584 = vadd.f32 %v2552, %v2583
      %2585 = vmatmul.f32.gmra.mxu0 %v2523
      %v2586 = vpop.f32.mrf.mxu0
      %v2587 = vadd.f32 %v2555, %v2586
      %2588 = vmatmul.f32.gmra.mxu0 %v2526
      %v2589 = vpop.f32.mrf.mxu0
      %v2590 = vadd.f32 %v2558, %v2589
      %2591 = vmatmul.f32.gmra.mxu0 %v2529
      %v2592 = vpop.f32.mrf.mxu0
      %v2593 = vadd.f32 %v2561, %v2592
      %2594 = vdwg.mxu0
      %s2595 = scalar_lea.vmem %s4, 256
      %v2596 = vld [vmem:[%s2595] sm:$0xff]
      %v2597 = vld [vmem:[%s2595 + $0x8] sm:$0xff]
      %v2598 = vld [vmem:[%s2595 + $0x10] sm:$0xff]
      %v2599 = vld [vmem:[%s2595 + $0x18] sm:$0xff]
      %v2600 = vld [vmem:[%s2595 + $0x20] sm:$0xff]
      %v2601 = vld [vmem:[%s2595 + $0x28] sm:$0xff]
      %v2602 = vld [vmem:[%s2595 + $0x30] sm:$0xff]
      %v2603 = vld [vmem:[%s2595 + $0x38] sm:$0xff]
      %v2604 = vld [vmem:[%s2595 + $0x40] sm:$0xff]
      %v2605 = vld [vmem:[%s2595 + $0x48] sm:$0xff]
      %v2606 = vld [vmem:[%s2595 + $0x50] sm:$0xff]
      %v2607 = vld [vmem:[%s2595 + $0x58] sm:$0xff]
      %v2608 = vld [vmem:[%s2595 + $0x60] sm:$0xff]
      %v2609 = vld [vmem:[%s2595 + $0x68] sm:$0xff]
      %v2610 = vld [vmem:[%s2595 + $0x70] sm:$0xff]
      %v2611 = vld [vmem:[%s2595 + $0x78] sm:$0xff]
      %v2612 = vld [vmem:[%s2595 + $0x80] sm:$0xff]
      %v2613 = vld [vmem:[%s2595 + $0x88] sm:$0xff]
      %v2614 = vld [vmem:[%s2595 + $0x90] sm:$0xff]
      %v2615 = vld [vmem:[%s2595 + $0x98] sm:$0xff]
      %v2616 = vld [vmem:[%s2595 + $0xa0] sm:$0xff]
      %v2617 = vld [vmem:[%s2595 + $0xa8] sm:$0xff]
      %v2618 = vld [vmem:[%s2595 + $0xb0] sm:$0xff]
      %v2619 = vld [vmem:[%s2595 + $0xb8] sm:$0xff]
      %v2620 = vld [vmem:[%s2595 + $0xc0] sm:$0xff]
      %v2621 = vld [vmem:[%s2595 + $0xc8] sm:$0xff]
      %v2622 = vld [vmem:[%s2595 + $0xd0] sm:$0xff]
      %v2623 = vld [vmem:[%s2595 + $0xd8] sm:$0xff]
      %v2624 = vld [vmem:[%s2595 + $0xe0] sm:$0xff]
      %v2625 = vld [vmem:[%s2595 + $0xe8] sm:$0xff]
      %v2626 = vld [vmem:[%s2595 + $0xf0] sm:$0xff]
      %v2627 = vld [vmem:[%s2595 + $0xf8] sm:$0xff]
      %2628 = vmatpush.msra.mxu0 %v2626
      %2629 = vmatpush.msra.mxu0 %v2624
      %2630 = vmatpush.msra.mxu0 %v2622
      %2631 = vmatpush.msra.mxu0 %v2620
      %2632 = vmatpush.msra.mxu0 %v2618
      %2633 = vmatpush.msra.mxu0 %v2616
      %2634 = vmatpush.msra.mxu0 %v2614
      %2635 = vmatpush.msra.mxu0 %v2612
      %2636 = vmatpush.msra.mxu0 %v2610
      %2637 = vmatpush.msra.mxu0 %v2608
      %2638 = vmatpush.msra.mxu0 %v2606
      %2639 = vmatpush.msra.mxu0 %v2604
      %2640 = vmatpush.msra.mxu0 %v2602
      %2641 = vmatpush.msra.mxu0 %v2600
      %2642 = vmatpush.msra.mxu0 %v2598
      %2643 = vmatpush.msra.mxu0 %v2596
      %2644 = vmatmul.f32.gmra.mxu0 %v2581
      %v2645 = vpop.f32.mrf.mxu0
      %v2646 = vadd.f32 0.0, %v2645
      %2647 = vmatmul.f32.gmra.mxu0 %v2584
      %v2648 = vpop.f32.mrf.mxu0
      %v2649 = vadd.f32 0.0, %v2648
      %2650 = vmatmul.f32.gmra.mxu0 %v2587
      %v2651 = vpop.f32.mrf.mxu0
      %v2652 = vadd.f32 0.0, %v2651
      %2653 = vmatmul.f32.gmra.mxu0 %v2590
      %v2654 = vpop.f32.mrf.mxu0
      %v2655 = vadd.f32 0.0, %v2654
      %2656 = vmatmul.f32.gmra.mxu0 %v2593
      %v2657 = vpop.f32.mrf.mxu0
      %v2658 = vadd.f32 0.0, %v2657
      %2659 = vdwg.mxu0
      %2660 = vmatpush.msra.mxu0 %v2627
      %2661 = vmatpush.msra.mxu0 %v2625
      %2662 = vmatpush.msra.mxu0 %v2623
      %2663 = vmatpush.msra.mxu0 %v2621
      %2664 = vmatpush.msra.mxu0 %v2619
      %2665 = vmatpush.msra.mxu0 %v2617
      %2666 = vmatpush.msra.mxu0 %v2615
      %2667 = vmatpush.msra.mxu0 %v2613
      %2668 = vmatpush.msra.mxu0 %v2611
      %2669 = vmatpush.msra.mxu0 %v2609
      %2670 = vmatpush.msra.mxu0 %v2607
      %2671 = vmatpush.msra.mxu0 %v2605
      %2672 = vmatpush.msra.mxu0 %v2603
      %2673 = vmatpush.msra.mxu0 %v2601
      %2674 = vmatpush.msra.mxu0 %v2599
      %2675 = vmatpush.msra.mxu0 %v2597
      %2676 = vmatmul.f32.gmra.mxu0 %v2581
      %v2677 = vpop.f32.mrf.mxu0
      %v2678 = vadd.f32 0.0, %v2677
      %2679 = vmatmul.f32.gmra.mxu0 %v2584
      %v2680 = vpop.f32.mrf.mxu0
      %v2681 = vadd.f32 0.0, %v2680
      %2682 = vmatmul.f32.gmra.mxu0 %v2587
      %v2683 = vpop.f32.mrf.mxu0
      %v2684 = vadd.f32 0.0, %v2683
      %2685 = vmatmul.f32.gmra.mxu0 %v2590
      %v2686 = vpop.f32.mrf.mxu0
      %v2687 = vadd.f32 0.0, %v2686
      %2688 = vmatmul.f32.gmra.mxu0 %v2593
      %v2689 = vpop.f32.mrf.mxu0
      %v2690 = vadd.f32 0.0, %v2689
      %2691 = vdwg.mxu0
      %2692 = vmatpush.msra.mxu0 %v2503
      %2693 = vmatpush.msra.mxu0 %v2501
      %2694 = vmatpush.msra.mxu0 %v2499
      %2695 = vmatpush.msra.mxu0 %v2497
      %2696 = vmatpush.msra.mxu0 %v2495
      %2697 = vmatpush.msra.mxu0 %v2493
      %2698 = vmatpush.msra.mxu0 %v2491
      %2699 = vmatpush.msra.mxu0 %v2489
      %2700 = vmatpush.msra.mxu0 %v2487
      %2701 = vmatpush.msra.mxu0 %v2485
      %2702 = vmatpush.msra.mxu0 %v2483
      %2703 = vmatpush.msra.mxu0 %v2481
      %2704 = vmatpush.msra.mxu0 %v2479
      %2705 = vmatpush.msra.mxu0 %v2477
      %2706 = vmatpush.msra.mxu0 %v2475
      %2707 = vmatpush.msra.mxu0 %v2473
      %2708 = vmatmul.f32.gmra.mxu0 %v2459
      %v2709 = vpop.f32.mrf.mxu0
      %v2710 = vadd.f32 %v2646, %v2709
      %2711 = vmatmul.f32.gmra.mxu0 %v2462
      %v2712 = vpop.f32.mrf.mxu0
      %v2713 = vadd.f32 %v2649, %v2712
      %2714 = vmatmul.f32.gmra.mxu0 %v2465
      %v2715 = vpop.f32.mrf.mxu0
      %v2716 = vadd.f32 %v2652, %v2715
      %2717 = vmatmul.f32.gmra.mxu0 %v2468
      %v2718 = vpop.f32.mrf.mxu0
      %v2719 = vadd.f32 %v2655, %v2718
      %2720 = vmatmul.f32.gmra.mxu0 %v2471
      %v2721 = vpop.f32.mrf.mxu0
      %v2722 = vadd.f32 %v2658, %v2721
      %2723 = vdwg.mxu0
      %2724 = vmatpush.msra.mxu0 %v2504
      %2725 = vmatpush.msra.mxu0 %v2502
      %2726 = vmatpush.msra.mxu0 %v2500
      %2727 = vmatpush.msra.mxu0 %v2498
      %2728 = vmatpush.msra.mxu0 %v2496
      %2729 = vmatpush.msra.mxu0 %v2494
      %2730 = vmatpush.msra.mxu0 %v2492
      %2731 = vmatpush.msra.mxu0 %v2490
      %2732 = vmatpush.msra.mxu0 %v2488
      %2733 = vmatpush.msra.mxu0 %v2486
      %2734 = vmatpush.msra.mxu0 %v2484
      %2735 = vmatpush.msra.mxu0 %v2482
      %2736 = vmatpush.msra.mxu0 %v2480
      %2737 = vmatpush.msra.mxu0 %v2478
      %2738 = vmatpush.msra.mxu0 %v2476
      %2739 = vmatpush.msra.mxu0 %v2474
      %2740 = vmatmul.f32.gmra.mxu0 %v2459
      %v2741 = vpop.f32.mrf.mxu0
      %v2742 = vadd.f32 %v2678, %v2741
      %2743 = vmatmul.f32.gmra.mxu0 %v2462
      %v2744 = vpop.f32.mrf.mxu0
      %v2745 = vadd.f32 %v2681, %v2744
      %2746 = vmatmul.f32.gmra.mxu0 %v2465
      %v2747 = vpop.f32.mrf.mxu0
      %v2748 = vadd.f32 %v2684, %v2747
      %2749 = vmatmul.f32.gmra.mxu0 %v2468
      %v2750 = vpop.f32.mrf.mxu0
      %v2751 = vadd.f32 %v2687, %v2750
      %2752 = vmatmul.f32.gmra.mxu0 %v2471
      %v2753 = vpop.f32.mrf.mxu0
      %v2754 = vadd.f32 %v2690, %v2753
      %2755 = vdwg.mxu0
      %s2756 = scalar_lea.vmem %s6, 160
      %v2757 = vld [vmem:[%s2756] sm:$0xff]
      %v2758 = vld [vmem:[%s2756 + $0x8] sm:$0xff]
      %v2759 = vld [vmem:[%s2756 + $0x10] sm:$0xff]
      %v2760 = vld [vmem:[%s2756 + $0x18] sm:$0xff]
      %v2761 = vld [vmem:[%s2756 + $0x20] sm:$0xff]
      %v2762 = vld [vmem:[%s2756 + $0x28] sm:$0xff]
      %v2763 = vld [vmem:[%s2756 + $0x30] sm:$0xff]
      %v2764 = vld [vmem:[%s2756 + $0x38] sm:$0xff]
      %v2765 = vld [vmem:[%s2756 + $0x40] sm:$0xf]
      %v2766 = vld [vmem:[%s2756 + $0x48] sm:$0xf]
      %v2768 = vsel %vm2389, %v2758, 0
      %v2771 = vsel %vm2389, %v2760, 0
      %v2774 = vsel %vm2389, %v2762, 0
      %v2777 = vsel %vm2389, %v2764, 0
      %v2780 = vsel %vm2389, %v2766, 0
      %2782 = vmatpush.msra.mxu0 %v2365
      %2783 = vmatpush.msra.mxu0 %v2364
      %2784 = vmatpush.msra.mxu0 %v2363
      %2785 = vmatpush.msra.mxu0 %v2362
      %2786 = vmatpush.msra.mxu0 %v2361
      %2787 = vmatpush.msra.mxu0 %v2360
      %2788 = vmatpush.msra.mxu0 %v2359
      %2789 = vmatpush.msra.mxu0 %v2358
      %2790 = vmatpush.msra.mxu0 %v2357
      %2791 = vmatpush.msra.mxu0 %v2356
      %2792 = vmatpush.msra.mxu0 %v2355
      %2793 = vmatpush.msra.mxu0 %v2354
      %2794 = vmatpush.msra.mxu0 %v2353
      %2795 = vmatpush.msra.mxu0 %v2352
      %2796 = vmatpush.msra.mxu0 %v2351
      %2797 = vmatpush.msra.mxu0 %v2350
      %2798 = vmatmul.f32.gmra.mxu0 %v2757
      %v2799 = vpop.f32.mrf.mxu0
      %v2800 = vadd.f32 0.0, %v2799
      %2801 = vmatmul.f32.gmra.mxu0 %v2759
      %v2802 = vpop.f32.mrf.mxu0
      %v2803 = vadd.f32 0.0, %v2802
      %2804 = vmatmul.f32.gmra.mxu0 %v2761
      %v2805 = vpop.f32.mrf.mxu0
      %v2806 = vadd.f32 0.0, %v2805
      %2807 = vmatmul.f32.gmra.mxu0 %v2763
      %v2808 = vpop.f32.mrf.mxu0
      %v2809 = vadd.f32 0.0, %v2808
      %2810 = vmatmul.f32.gmra.mxu0 %v2765
      %v2811 = vpop.f32.mrf.mxu0
      %v2812 = vadd.f32 0.0, %v2811
      %2813 = vdwg.mxu0
      %2814 = vmatpush.msra.mxu0 0.0
      %2815 = vmatpush.msra.mxu0 0.0
      %2816 = vmatpush.msra.mxu0 0.0
      %2817 = vmatpush.msra.mxu0 %v2407
      %2818 = vmatpush.msra.mxu0 %v2377
      %2819 = vmatpush.msra.mxu0 %v2376
      %2820 = vmatpush.msra.mxu0 %v2375
      %2821 = vmatpush.msra.mxu0 %v2374
      %2822 = vmatpush.msra.mxu0 %v2373
      %2823 = vmatpush.msra.mxu0 %v2372
      %2824 = vmatpush.msra.mxu0 %v2371
      %2825 = vmatpush.msra.mxu0 %v2370
      %2826 = vmatpush.msra.mxu0 %v2369
      %2827 = vmatpush.msra.mxu0 %v2368
      %2828 = vmatpush.msra.mxu0 %v2367
      %2829 = vmatpush.msra.mxu0 %v2366
      %2830 = vmatmul.f32.gmra.mxu0 %v2768
      %v2831 = vpop.f32.mrf.mxu0
      %v2832 = vadd.f32 %v2800, %v2831
      %2833 = vmatmul.f32.gmra.mxu0 %v2771
      %v2834 = vpop.f32.mrf.mxu0
      %v2835 = vadd.f32 %v2803, %v2834
      %2836 = vmatmul.f32.gmra.mxu0 %v2774
      %v2837 = vpop.f32.mrf.mxu0
      %v2838 = vadd.f32 %v2806, %v2837
      %2839 = vmatmul.f32.gmra.mxu0 %v2777
      %v2840 = vpop.f32.mrf.mxu0
      %v2841 = vadd.f32 %v2809, %v2840
      %2842 = vmatmul.f32.gmra.mxu0 %v2780
      %v2843 = vpop.f32.mrf.mxu0
      %v2844 = vadd.f32 %v2812, %v2843
      %2845 = vdwg.mxu0
      %s2846 = scalar_lea.vmem %s4, 512
      %v2847 = vld [vmem:[%s2846] sm:$0xff]
      %v2848 = vld [vmem:[%s2846 + $0x8] sm:$0xff]
      %v2849 = vld [vmem:[%s2846 + $0x10] sm:$0xff]
      %v2850 = vld [vmem:[%s2846 + $0x18] sm:$0xff]
      %v2851 = vld [vmem:[%s2846 + $0x20] sm:$0xff]
      %v2852 = vld [vmem:[%s2846 + $0x28] sm:$0xff]
      %v2853 = vld [vmem:[%s2846 + $0x30] sm:$0xff]
      %v2854 = vld [vmem:[%s2846 + $0x38] sm:$0xff]
      %v2855 = vld [vmem:[%s2846 + $0x40] sm:$0xff]
      %v2856 = vld [vmem:[%s2846 + $0x48] sm:$0xff]
      %v2857 = vld [vmem:[%s2846 + $0x50] sm:$0xff]
      %v2858 = vld [vmem:[%s2846 + $0x58] sm:$0xff]
      %v2859 = vld [vmem:[%s2846 + $0x60] sm:$0xff]
      %v2860 = vld [vmem:[%s2846 + $0x68] sm:$0xff]
      %v2861 = vld [vmem:[%s2846 + $0x70] sm:$0xff]
      %v2862 = vld [vmem:[%s2846 + $0x78] sm:$0xff]
      %v2863 = vld [vmem:[%s2846 + $0x80] sm:$0xff]
      %v2864 = vld [vmem:[%s2846 + $0x88] sm:$0xff]
      %v2865 = vld [vmem:[%s2846 + $0x90] sm:$0xff]
      %v2866 = vld [vmem:[%s2846 + $0x98] sm:$0xff]
      %v2867 = vld [vmem:[%s2846 + $0xa0] sm:$0xff]
      %v2868 = vld [vmem:[%s2846 + $0xa8] sm:$0xff]
      %v2869 = vld [vmem:[%s2846 + $0xb0] sm:$0xff]
      %v2870 = vld [vmem:[%s2846 + $0xb8] sm:$0xff]
      %v2871 = vld [vmem:[%s2846 + $0xc0] sm:$0xff]
      %v2872 = vld [vmem:[%s2846 + $0xc8] sm:$0xff]
      %v2873 = vld [vmem:[%s2846 + $0xd0] sm:$0xff]
      %v2874 = vld [vmem:[%s2846 + $0xd8] sm:$0xff]
      %v2875 = vld [vmem:[%s2846 + $0xe0] sm:$0xff]
      %v2876 = vld [vmem:[%s2846 + $0xe8] sm:$0xff]
      %v2877 = vld [vmem:[%s2846 + $0xf0] sm:$0xff]
      %v2878 = vld [vmem:[%s2846 + $0xf8] sm:$0xff]
      %2879 = vmatpush.msra.mxu0 %v2877
      %2880 = vmatpush.msra.mxu0 %v2875
      %2881 = vmatpush.msra.mxu0 %v2873
      %2882 = vmatpush.msra.mxu0 %v2871
      %2883 = vmatpush.msra.mxu0 %v2869
      %2884 = vmatpush.msra.mxu0 %v2867
      %2885 = vmatpush.msra.mxu0 %v2865
      %2886 = vmatpush.msra.mxu0 %v2863
      %2887 = vmatpush.msra.mxu0 %v2861
      %2888 = vmatpush.msra.mxu0 %v2859
      %2889 = vmatpush.msra.mxu0 %v2857
      %2890 = vmatpush.msra.mxu0 %v2855
      %2891 = vmatpush.msra.mxu0 %v2853
      %2892 = vmatpush.msra.mxu0 %v2851
      %2893 = vmatpush.msra.mxu0 %v2849
      %2894 = vmatpush.msra.mxu0 %v2847
      %2895 = vmatmul.f32.gmra.mxu0 %v2832
      %v2896 = vpop.f32.mrf.mxu0
      %v2897 = vadd.f32 0.0, %v2896
      %2898 = vmatmul.f32.gmra.mxu0 %v2835
      %v2899 = vpop.f32.mrf.mxu0
      %v2900 = vadd.f32 0.0, %v2899
      %2901 = vmatmul.f32.gmra.mxu0 %v2838
      %v2902 = vpop.f32.mrf.mxu0
      %v2903 = vadd.f32 0.0, %v2902
      %2904 = vmatmul.f32.gmra.mxu0 %v2841
      %v2905 = vpop.f32.mrf.mxu0
      %v2906 = vadd.f32 0.0, %v2905
      %2907 = vmatmul.f32.gmra.mxu0 %v2844
      %v2908 = vpop.f32.mrf.mxu0
      %v2909 = vadd.f32 0.0, %v2908
      %2910 = vdwg.mxu0
      %2911 = vmatpush.msra.mxu0 %v2878
      %2912 = vmatpush.msra.mxu0 %v2876
      %2913 = vmatpush.msra.mxu0 %v2874
      %2914 = vmatpush.msra.mxu0 %v2872
      %2915 = vmatpush.msra.mxu0 %v2870
      %2916 = vmatpush.msra.mxu0 %v2868
      %2917 = vmatpush.msra.mxu0 %v2866
      %2918 = vmatpush.msra.mxu0 %v2864
      %2919 = vmatpush.msra.mxu0 %v2862
      %2920 = vmatpush.msra.mxu0 %v2860
      %2921 = vmatpush.msra.mxu0 %v2858
      %2922 = vmatpush.msra.mxu0 %v2856
      %2923 = vmatpush.msra.mxu0 %v2854
      %2924 = vmatpush.msra.mxu0 %v2852
      %2925 = vmatpush.msra.mxu0 %v2850
      %2926 = vmatpush.msra.mxu0 %v2848
      %2927 = vmatmul.f32.gmra.mxu0 %v2832
      %v2928 = vpop.f32.mrf.mxu0
      %v2929 = vadd.f32 0.0, %v2928
      %2930 = vmatmul.f32.gmra.mxu0 %v2835
      %v2931 = vpop.f32.mrf.mxu0
      %v2932 = vadd.f32 0.0, %v2931
      %2933 = vmatmul.f32.gmra.mxu0 %v2838
      %v2934 = vpop.f32.mrf.mxu0
      %v2935 = vadd.f32 0.0, %v2934
      %2936 = vmatmul.f32.gmra.mxu0 %v2841
      %v2937 = vpop.f32.mrf.mxu0
      %v2938 = vadd.f32 0.0, %v2937
      %2939 = vmatmul.f32.gmra.mxu0 %v2844
      %v2940 = vpop.f32.mrf.mxu0
      %v2941 = vadd.f32 0.0, %v2940
      %2942 = vdwg.mxu0
      %v2943 = vadd.f32 %v2710, %v2897
      %v2944 = vadd.f32 %v2742, %v2929
      %v2945 = vadd.f32 %v2713, %v2900
      %v2946 = vadd.f32 %v2745, %v2932
      %v2947 = vadd.f32 %v2716, %v2903
      %v2948 = vadd.f32 %v2748, %v2935
      %v2949 = vadd.f32 %v2719, %v2906
      %v2950 = vadd.f32 %v2751, %v2938
      %v2951 = vadd.f32 %v2722, %v2909
      %v2952 = vadd.f32 %v2754, %v2941
      %s2953 = scalar_lea.vmem %s6, 240
      %v2954 = vld [vmem:[%s2953] sm:$0xff]
      %v2955 = vld [vmem:[%s2953 + $0x8] sm:$0xff]
      %v2956 = vld [vmem:[%s2953 + $0x10] sm:$0xff]
      %v2957 = vld [vmem:[%s2953 + $0x18] sm:$0xff]
      %v2958 = vld [vmem:[%s2953 + $0x20] sm:$0xff]
      %v2959 = vld [vmem:[%s2953 + $0x28] sm:$0xff]
      %v2960 = vld [vmem:[%s2953 + $0x30] sm:$0xff]
      %v2961 = vld [vmem:[%s2953 + $0x38] sm:$0xff]
      %v2962 = vld [vmem:[%s2953 + $0x40] sm:$0xf]
      %v2963 = vld [vmem:[%s2953 + $0x48] sm:$0xf]
      %v2965 = vsel %vm2389, %v2955, 0
      %v2968 = vsel %vm2389, %v2957, 0
      %v2971 = vsel %vm2389, %v2959, 0
      %v2974 = vsel %vm2389, %v2961, 0
      %v2977 = vsel %vm2389, %v2963, 0
      %2979 = vmatpush.msra.mxu0 %v2365
      %2980 = vmatpush.msra.mxu0 %v2364
      %2981 = vmatpush.msra.mxu0 %v2363
      %2982 = vmatpush.msra.mxu0 %v2362
      %2983 = vmatpush.msra.mxu0 %v2361
      %2984 = vmatpush.msra.mxu0 %v2360
      %2985 = vmatpush.msra.mxu0 %v2359
      %2986 = vmatpush.msra.mxu0 %v2358
      %2987 = vmatpush.msra.mxu0 %v2357
      %2988 = vmatpush.msra.mxu0 %v2356
      %2989 = vmatpush.msra.mxu0 %v2355
      %2990 = vmatpush.msra.mxu0 %v2354
      %2991 = vmatpush.msra.mxu0 %v2353
      %2992 = vmatpush.msra.mxu0 %v2352
      %2993 = vmatpush.msra.mxu0 %v2351
      %2994 = vmatpush.msra.mxu0 %v2350
      %2995 = vmatmul.f32.gmra.mxu0 %v2954
      %v2996 = vpop.f32.mrf.mxu0
      %v2997 = vadd.f32 0.0, %v2996
      %2998 = vmatmul.f32.gmra.mxu0 %v2956
      %v2999 = vpop.f32.mrf.mxu0
      %v3000 = vadd.f32 0.0, %v2999
      %3001 = vmatmul.f32.gmra.mxu0 %v2958
      %v3002 = vpop.f32.mrf.mxu0
      %v3003 = vadd.f32 0.0, %v3002
      %3004 = vmatmul.f32.gmra.mxu0 %v2960
      %v3005 = vpop.f32.mrf.mxu0
      %v3006 = vadd.f32 0.0, %v3005
      %3007 = vmatmul.f32.gmra.mxu0 %v2962
      %v3008 = vpop.f32.mrf.mxu0
      %v3009 = vadd.f32 0.0, %v3008
      %3010 = vdwg.mxu0
      %3011 = vmatpush.msra.mxu0 0.0
      %3012 = vmatpush.msra.mxu0 0.0
      %3013 = vmatpush.msra.mxu0 0.0
      %3014 = vmatpush.msra.mxu0 %v2407
      %3015 = vmatpush.msra.mxu0 %v2377
      %3016 = vmatpush.msra.mxu0 %v2376
      %3017 = vmatpush.msra.mxu0 %v2375
      %3018 = vmatpush.msra.mxu0 %v2374
      %3019 = vmatpush.msra.mxu0 %v2373
      %3020 = vmatpush.msra.mxu0 %v2372
      %3021 = vmatpush.msra.mxu0 %v2371
      %3022 = vmatpush.msra.mxu0 %v2370
      %3023 = vmatpush.msra.mxu0 %v2369
      %3024 = vmatpush.msra.mxu0 %v2368
      %3025 = vmatpush.msra.mxu0 %v2367
      %3026 = vmatpush.msra.mxu0 %v2366
      %3027 = vmatmul.f32.gmra.mxu0 %v2965
      %v3028 = vpop.f32.mrf.mxu0
      %v3029 = vadd.f32 %v2997, %v3028
      %3030 = vmatmul.f32.gmra.mxu0 %v2968
      %v3031 = vpop.f32.mrf.mxu0
      %v3032 = vadd.f32 %v3000, %v3031
      %3033 = vmatmul.f32.gmra.mxu0 %v2971
      %v3034 = vpop.f32.mrf.mxu0
      %v3035 = vadd.f32 %v3003, %v3034
      %3036 = vmatmul.f32.gmra.mxu0 %v2974
      %v3037 = vpop.f32.mrf.mxu0
      %v3038 = vadd.f32 %v3006, %v3037
      %3039 = vmatmul.f32.gmra.mxu0 %v2977
      %v3040 = vpop.f32.mrf.mxu0
      %v3041 = vadd.f32 %v3009, %v3040
      %3042 = vdwg.mxu0
      %s3043 = scalar_lea.vmem %s4, 768
      %v3044 = vld [vmem:[%s3043] sm:$0xff]
      %v3045 = vld [vmem:[%s3043 + $0x8] sm:$0xff]
      %v3046 = vld [vmem:[%s3043 + $0x10] sm:$0xff]
      %v3047 = vld [vmem:[%s3043 + $0x18] sm:$0xff]
      %v3048 = vld [vmem:[%s3043 + $0x20] sm:$0xff]
      %v3049 = vld [vmem:[%s3043 + $0x28] sm:$0xff]
      %v3050 = vld [vmem:[%s3043 + $0x30] sm:$0xff]
      %v3051 = vld [vmem:[%s3043 + $0x38] sm:$0xff]
      %v3052 = vld [vmem:[%s3043 + $0x40] sm:$0xff]
      %v3053 = vld [vmem:[%s3043 + $0x48] sm:$0xff]
      %v3054 = vld [vmem:[%s3043 + $0x50] sm:$0xff]
      %v3055 = vld [vmem:[%s3043 + $0x58] sm:$0xff]
      %v3056 = vld [vmem:[%s3043 + $0x60] sm:$0xff]
      %v3057 = vld [vmem:[%s3043 + $0x68] sm:$0xff]
      %v3058 = vld [vmem:[%s3043 + $0x70] sm:$0xff]
      %v3059 = vld [vmem:[%s3043 + $0x78] sm:$0xff]
      %v3060 = vld [vmem:[%s3043 + $0x80] sm:$0xff]
      %v3061 = vld [vmem:[%s3043 + $0x88] sm:$0xff]
      %v3062 = vld [vmem:[%s3043 + $0x90] sm:$0xff]
      %v3063 = vld [vmem:[%s3043 + $0x98] sm:$0xff]
      %v3064 = vld [vmem:[%s3043 + $0xa0] sm:$0xff]
      %v3065 = vld [vmem:[%s3043 + $0xa8] sm:$0xff]
      %v3066 = vld [vmem:[%s3043 + $0xb0] sm:$0xff]
      %v3067 = vld [vmem:[%s3043 + $0xb8] sm:$0xff]
      %v3068 = vld [vmem:[%s3043 + $0xc0] sm:$0xff]
      %v3069 = vld [vmem:[%s3043 + $0xc8] sm:$0xff]
      %v3070 = vld [vmem:[%s3043 + $0xd0] sm:$0xff]
      %v3071 = vld [vmem:[%s3043 + $0xd8] sm:$0xff]
      %v3072 = vld [vmem:[%s3043 + $0xe0] sm:$0xff]
      %v3073 = vld [vmem:[%s3043 + $0xe8] sm:$0xff]
      %v3074 = vld [vmem:[%s3043 + $0xf0] sm:$0xff]
      %v3075 = vld [vmem:[%s3043 + $0xf8] sm:$0xff]
      %3076 = vmatpush.msra.mxu0 %v3074
      %3077 = vmatpush.msra.mxu0 %v3072
      %3078 = vmatpush.msra.mxu0 %v3070
      %3079 = vmatpush.msra.mxu0 %v3068
      %3080 = vmatpush.msra.mxu0 %v3066
      %3081 = vmatpush.msra.mxu0 %v3064
      %3082 = vmatpush.msra.mxu0 %v3062
      %3083 = vmatpush.msra.mxu0 %v3060
      %3084 = vmatpush.msra.mxu0 %v3058
      %3085 = vmatpush.msra.mxu0 %v3056
      %3086 = vmatpush.msra.mxu0 %v3054
      %3087 = vmatpush.msra.mxu0 %v3052
      %3088 = vmatpush.msra.mxu0 %v3050
      %3089 = vmatpush.msra.mxu0 %v3048
      %3090 = vmatpush.msra.mxu0 %v3046
      %3091 = vmatpush.msra.mxu0 %v3044
      %3092 = vmatmul.f32.gmra.mxu0 %v3029
      %v3093 = vpop.f32.mrf.mxu0
      %v3094 = vadd.f32 0.0, %v3093
      %3095 = vmatmul.f32.gmra.mxu0 %v3032
      %v3096 = vpop.f32.mrf.mxu0
      %v3097 = vadd.f32 0.0, %v3096
      %3098 = vmatmul.f32.gmra.mxu0 %v3035
      %v3099 = vpop.f32.mrf.mxu0
      %v3100 = vadd.f32 0.0, %v3099
      %3101 = vmatmul.f32.gmra.mxu0 %v3038
      %v3102 = vpop.f32.mrf.mxu0
      %v3103 = vadd.f32 0.0, %v3102
      %3104 = vmatmul.f32.gmra.mxu0 %v3041
      %v3105 = vpop.f32.mrf.mxu0
      %v3106 = vadd.f32 0.0, %v3105
      %3107 = vdwg.mxu0
      %3108 = vmatpush.msra.mxu0 %v3075
      %3109 = vmatpush.msra.mxu0 %v3073
      %3110 = vmatpush.msra.mxu0 %v3071
      %3111 = vmatpush.msra.mxu0 %v3069
      %3112 = vmatpush.msra.mxu0 %v3067
      %3113 = vmatpush.msra.mxu0 %v3065
      %3114 = vmatpush.msra.mxu0 %v3063
      %3115 = vmatpush.msra.mxu0 %v3061
      %3116 = vmatpush.msra.mxu0 %v3059
      %3117 = vmatpush.msra.mxu0 %v3057
      %3118 = vmatpush.msra.mxu0 %v3055
      %3119 = vmatpush.msra.mxu0 %v3053
      %3120 = vmatpush.msra.mxu0 %v3051
      %3121 = vmatpush.msra.mxu0 %v3049
      %3122 = vmatpush.msra.mxu0 %v3047
      %3123 = vmatpush.msra.mxu0 %v3045
      %3124 = vmatmul.f32.gmra.mxu0 %v3029
      %v3125 = vpop.f32.mrf.mxu0
      %v3126 = vadd.f32 0.0, %v3125
      %3127 = vmatmul.f32.gmra.mxu0 %v3032
      %v3128 = vpop.f32.mrf.mxu0
      %v3129 = vadd.f32 0.0, %v3128
      %3130 = vmatmul.f32.gmra.mxu0 %v3035
      %v3131 = vpop.f32.mrf.mxu0
      %v3132 = vadd.f32 0.0, %v3131
      %3133 = vmatmul.f32.gmra.mxu0 %v3038
      %v3134 = vpop.f32.mrf.mxu0
      %v3135 = vadd.f32 0.0, %v3134
      %3136 = vmatmul.f32.gmra.mxu0 %v3041
      %v3137 = vpop.f32.mrf.mxu0
      %v3138 = vadd.f32 0.0, %v3137
      %3139 = vdwg.mxu0
      %v3140 = vadd.f32 %v2943, %v3094
      %v3141 = vadd.f32 %v2944, %v3126
      %v3142 = vadd.f32 %v2945, %v3097
      %v3143 = vadd.f32 %v2946, %v3129
      %v3144 = vadd.f32 %v2947, %v3100
      %v3145 = vadd.f32 %v2948, %v3132
      %v3146 = vadd.f32 %v2949, %v3103
      %v3147 = vadd.f32 %v2950, %v3135
      %v3148 = vadd.f32 %v2951, %v3106
      %v3149 = vadd.f32 %v2952, %v3138
      %s3150 = scalar_lea.vmem %s6, 320
      %v3151 = vld [vmem:[%s3150] sm:$0xff]
      %v3152 = vld [vmem:[%s3150 + $0x8] sm:$0xff]
      %v3153 = vld [vmem:[%s3150 + $0x10] sm:$0xff]
      %v3154 = vld [vmem:[%s3150 + $0x18] sm:$0xff]
      %v3155 = vld [vmem:[%s3150 + $0x20] sm:$0xff]
      %v3156 = vld [vmem:[%s3150 + $0x28] sm:$0xff]
      %v3157 = vld [vmem:[%s3150 + $0x30] sm:$0xff]
      %v3158 = vld [vmem:[%s3150 + $0x38] sm:$0xff]
      %v3159 = vld [vmem:[%s3150 + $0x40] sm:$0xf]
      %v3160 = vld [vmem:[%s3150 + $0x48] sm:$0xf]
      %v3162 = vsel %vm2389, %v3152, 0
      %v3165 = vsel %vm2389, %v3154, 0
      %v3168 = vsel %vm2389, %v3156, 0
      %v3171 = vsel %vm2389, %v3158, 0
      %v3174 = vsel %vm2389, %v3160, 0
      %3176 = vmatpush.msra.mxu0 %v2365
      %3177 = vmatpush.msra.mxu0 %v2364
      %3178 = vmatpush.msra.mxu0 %v2363
      %3179 = vmatpush.msra.mxu0 %v2362
      %3180 = vmatpush.msra.mxu0 %v2361
      %3181 = vmatpush.msra.mxu0 %v2360
      %3182 = vmatpush.msra.mxu0 %v2359
      %3183 = vmatpush.msra.mxu0 %v2358
      %3184 = vmatpush.msra.mxu0 %v2357
      %3185 = vmatpush.msra.mxu0 %v2356
      %3186 = vmatpush.msra.mxu0 %v2355
      %3187 = vmatpush.msra.mxu0 %v2354
      %3188 = vmatpush.msra.mxu0 %v2353
      %3189 = vmatpush.msra.mxu0 %v2352
      %3190 = vmatpush.msra.mxu0 %v2351
      %3191 = vmatpush.msra.mxu0 %v2350
      %3192 = vmatmul.f32.gmra.mxu0 %v3151
      %v3193 = vpop.f32.mrf.mxu0
      %v3194 = vadd.f32 0.0, %v3193
      %3195 = vmatmul.f32.gmra.mxu0 %v3153
      %v3196 = vpop.f32.mrf.mxu0
      %v3197 = vadd.f32 0.0, %v3196
      %3198 = vmatmul.f32.gmra.mxu0 %v3155
      %v3199 = vpop.f32.mrf.mxu0
      %v3200 = vadd.f32 0.0, %v3199
      %3201 = vmatmul.f32.gmra.mxu0 %v3157
      %v3202 = vpop.f32.mrf.mxu0
      %v3203 = vadd.f32 0.0, %v3202
      %3204 = vmatmul.f32.gmra.mxu0 %v3159
      %v3205 = vpop.f32.mrf.mxu0
      %v3206 = vadd.f32 0.0, %v3205
      %3207 = vdwg.mxu0
      %3208 = vmatpush.msra.mxu0 0.0
      %3209 = vmatpush.msra.mxu0 0.0
      %3210 = vmatpush.msra.mxu0 0.0
      %3211 = vmatpush.msra.mxu0 %v2407
      %3212 = vmatpush.msra.mxu0 %v2377
      %3213 = vmatpush.msra.mxu0 %v2376
      %3214 = vmatpush.msra.mxu0 %v2375
      %3215 = vmatpush.msra.mxu0 %v2374
      %3216 = vmatpush.msra.mxu0 %v2373
      %3217 = vmatpush.msra.mxu0 %v2372
      %3218 = vmatpush.msra.mxu0 %v2371
      %3219 = vmatpush.msra.mxu0 %v2370
      %3220 = vmatpush.msra.mxu0 %v2369
      %3221 = vmatpush.msra.mxu0 %v2368
      %3222 = vmatpush.msra.mxu0 %v2367
      %3223 = vmatpush.msra.mxu0 %v2366
      %3224 = vmatmul.f32.gmra.mxu0 %v3162
      %v3225 = vpop.f32.mrf.mxu0
      %v3226 = vadd.f32 %v3194, %v3225
      %3227 = vmatmul.f32.gmra.mxu0 %v3165
      %v3228 = vpop.f32.mrf.mxu0
      %v3229 = vadd.f32 %v3197, %v3228
      %3230 = vmatmul.f32.gmra.mxu0 %v3168
      %v3231 = vpop.f32.mrf.mxu0
      %v3232 = vadd.f32 %v3200, %v3231
      %3233 = vmatmul.f32.gmra.mxu0 %v3171
      %v3234 = vpop.f32.mrf.mxu0
      %v3235 = vadd.f32 %v3203, %v3234
      %3236 = vmatmul.f32.gmra.mxu0 %v3174
      %v3237 = vpop.f32.mrf.mxu0
      %v3238 = vadd.f32 %v3206, %v3237
      %3239 = vdwg.mxu0
      %s3240 = scalar_lea.vmem %s4, 1024
      %v3241 = vld [vmem:[%s3240] sm:$0xff]
      %v3242 = vld [vmem:[%s3240 + $0x8] sm:$0xff]
      %v3243 = vld [vmem:[%s3240 + $0x10] sm:$0xff]
      %v3244 = vld [vmem:[%s3240 + $0x18] sm:$0xff]
      %v3245 = vld [vmem:[%s3240 + $0x20] sm:$0xff]
      %v3246 = vld [vmem:[%s3240 + $0x28] sm:$0xff]
      %v3247 = vld [vmem:[%s3240 + $0x30] sm:$0xff]
      %v3248 = vld [vmem:[%s3240 + $0x38] sm:$0xff]
      %v3249 = vld [vmem:[%s3240 + $0x40] sm:$0xff]
      %v3250 = vld [vmem:[%s3240 + $0x48] sm:$0xff]
      %v3251 = vld [vmem:[%s3240 + $0x50] sm:$0xff]
      %v3252 = vld [vmem:[%s3240 + $0x58] sm:$0xff]
      %v3253 = vld [vmem:[%s3240 + $0x60] sm:$0xff]
      %v3254 = vld [vmem:[%s3240 + $0x68] sm:$0xff]
      %v3255 = vld [vmem:[%s3240 + $0x70] sm:$0xff]
      %v3256 = vld [vmem:[%s3240 + $0x78] sm:$0xff]
      %v3257 = vld [vmem:[%s3240 + $0x80] sm:$0xff]
      %v3258 = vld [vmem:[%s3240 + $0x88] sm:$0xff]
      %v3259 = vld [vmem:[%s3240 + $0x90] sm:$0xff]
      %v3260 = vld [vmem:[%s3240 + $0x98] sm:$0xff]
      %v3261 = vld [vmem:[%s3240 + $0xa0] sm:$0xff]
      %v3262 = vld [vmem:[%s3240 + $0xa8] sm:$0xff]
      %v3263 = vld [vmem:[%s3240 + $0xb0] sm:$0xff]
      %v3264 = vld [vmem:[%s3240 + $0xb8] sm:$0xff]
      %v3265 = vld [vmem:[%s3240 + $0xc0] sm:$0xff]
      %v3266 = vld [vmem:[%s3240 + $0xc8] sm:$0xff]
      %v3267 = vld [vmem:[%s3240 + $0xd0] sm:$0xff]
      %v3268 = vld [vmem:[%s3240 + $0xd8] sm:$0xff]
      %v3269 = vld [vmem:[%s3240 + $0xe0] sm:$0xff]
      %v3270 = vld [vmem:[%s3240 + $0xe8] sm:$0xff]
      %v3271 = vld [vmem:[%s3240 + $0xf0] sm:$0xff]
      %v3272 = vld [vmem:[%s3240 + $0xf8] sm:$0xff]
      %3273 = vmatpush.msra.mxu0 %v3271
      %3274 = vmatpush.msra.mxu0 %v3269
      %3275 = vmatpush.msra.mxu0 %v3267
      %3276 = vmatpush.msra.mxu0 %v3265
      %3277 = vmatpush.msra.mxu0 %v3263
      %3278 = vmatpush.msra.mxu0 %v3261
      %3279 = vmatpush.msra.mxu0 %v3259
      %3280 = vmatpush.msra.mxu0 %v3257
      %3281 = vmatpush.msra.mxu0 %v3255
      %3282 = vmatpush.msra.mxu0 %v3253
      %3283 = vmatpush.msra.mxu0 %v3251
      %3284 = vmatpush.msra.mxu0 %v3249
      %3285 = vmatpush.msra.mxu0 %v3247
      %3286 = vmatpush.msra.mxu0 %v3245
      %3287 = vmatpush.msra.mxu0 %v3243
      %3288 = vmatpush.msra.mxu0 %v3241
      %3289 = vmatmul.f32.gmra.mxu0 %v3226
      %v3290 = vpop.f32.mrf.mxu0
      %v3291 = vadd.f32 0.0, %v3290
      %3292 = vmatmul.f32.gmra.mxu0 %v3229
      %v3293 = vpop.f32.mrf.mxu0
      %v3294 = vadd.f32 0.0, %v3293
      %3295 = vmatmul.f32.gmra.mxu0 %v3232
      %v3296 = vpop.f32.mrf.mxu0
      %v3297 = vadd.f32 0.0, %v3296
      %3298 = vmatmul.f32.gmra.mxu0 %v3235
      %v3299 = vpop.f32.mrf.mxu0
      %v3300 = vadd.f32 0.0, %v3299
      %3301 = vmatmul.f32.gmra.mxu0 %v3238
      %v3302 = vpop.f32.mrf.mxu0
      %v3303 = vadd.f32 0.0, %v3302
      %3304 = vdwg.mxu0
      %3305 = vmatpush.msra.mxu0 %v3272
      %3306 = vmatpush.msra.mxu0 %v3270
      %3307 = vmatpush.msra.mxu0 %v3268
      %3308 = vmatpush.msra.mxu0 %v3266
      %3309 = vmatpush.msra.mxu0 %v3264
      %3310 = vmatpush.msra.mxu0 %v3262
      %3311 = vmatpush.msra.mxu0 %v3260
      %3312 = vmatpush.msra.mxu0 %v3258
      %3313 = vmatpush.msra.mxu0 %v3256
      %3314 = vmatpush.msra.mxu0 %v3254
      %3315 = vmatpush.msra.mxu0 %v3252
      %3316 = vmatpush.msra.mxu0 %v3250
      %3317 = vmatpush.msra.mxu0 %v3248
      %3318 = vmatpush.msra.mxu0 %v3246
      %3319 = vmatpush.msra.mxu0 %v3244
      %3320 = vmatpush.msra.mxu0 %v3242
      %3321 = vmatmul.f32.gmra.mxu0 %v3226
      %v3322 = vpop.f32.mrf.mxu0
      %v3323 = vadd.f32 0.0, %v3322
      %3324 = vmatmul.f32.gmra.mxu0 %v3229
      %v3325 = vpop.f32.mrf.mxu0
      %v3326 = vadd.f32 0.0, %v3325
      %3327 = vmatmul.f32.gmra.mxu0 %v3232
      %v3328 = vpop.f32.mrf.mxu0
      %v3329 = vadd.f32 0.0, %v3328
      %3330 = vmatmul.f32.gmra.mxu0 %v3235
      %v3331 = vpop.f32.mrf.mxu0
      %v3332 = vadd.f32 0.0, %v3331
      %3333 = vmatmul.f32.gmra.mxu0 %v3238
      %v3334 = vpop.f32.mrf.mxu0
      %v3335 = vadd.f32 0.0, %v3334
      %3336 = vdwg.mxu0
      %v3337 = vadd.f32 %v3140, %v3291
      %v3338 = vadd.f32 %v3141, %v3323
      %v3339 = vadd.f32 %v3142, %v3294
      %v3340 = vadd.f32 %v3143, %v3326
      %v3341 = vadd.f32 %v3144, %v3297
      %v3342 = vadd.f32 %v3145, %v3329
      %v3343 = vadd.f32 %v3146, %v3300
      %v3344 = vadd.f32 %v3147, %v3332
      %v3345 = vadd.f32 %v3148, %v3303
      %v3346 = vadd.f32 %v3149, %v3335
      %s3347 = scalar_lea.vmem %s6, 400
      %v3348 = vld [vmem:[%s3347] sm:$0xff]
      %v3349 = vld [vmem:[%s3347 + $0x8] sm:$0xff]
      %v3350 = vld [vmem:[%s3347 + $0x10] sm:$0xff]
      %v3351 = vld [vmem:[%s3347 + $0x18] sm:$0xff]
      %v3352 = vld [vmem:[%s3347 + $0x20] sm:$0xff]
      %v3353 = vld [vmem:[%s3347 + $0x28] sm:$0xff]
      %v3354 = vld [vmem:[%s3347 + $0x30] sm:$0xff]
      %v3355 = vld [vmem:[%s3347 + $0x38] sm:$0xff]
      %v3356 = vld [vmem:[%s3347 + $0x40] sm:$0xf]
      %v3357 = vld [vmem:[%s3347 + $0x48] sm:$0xf]
      %v3359 = vsel %vm2389, %v3349, 0
      %v3362 = vsel %vm2389, %v3351, 0
      %v3365 = vsel %vm2389, %v3353, 0
      %v3368 = vsel %vm2389, %v3355, 0
      %v3371 = vsel %vm2389, %v3357, 0
      %3373 = vmatpush.msra.mxu0 %v2365
      %3374 = vmatpush.msra.mxu0 %v2364
      %3375 = vmatpush.msra.mxu0 %v2363
      %3376 = vmatpush.msra.mxu0 %v2362
      %3377 = vmatpush.msra.mxu0 %v2361
      %3378 = vmatpush.msra.mxu0 %v2360
      %3379 = vmatpush.msra.mxu0 %v2359
      %3380 = vmatpush.msra.mxu0 %v2358
      %3381 = vmatpush.msra.mxu0 %v2357
      %3382 = vmatpush.msra.mxu0 %v2356
      %3383 = vmatpush.msra.mxu0 %v2355
      %3384 = vmatpush.msra.mxu0 %v2354
      %3385 = vmatpush.msra.mxu0 %v2353
      %3386 = vmatpush.msra.mxu0 %v2352
      %3387 = vmatpush.msra.mxu0 %v2351
      %3388 = vmatpush.msra.mxu0 %v2350
      %3389 = vmatmul.f32.gmra.mxu0 %v3348
      %v3390 = vpop.f32.mrf.mxu0
      %v3391 = vadd.f32 0.0, %v3390
      %3392 = vmatmul.f32.gmra.mxu0 %v3350
      %v3393 = vpop.f32.mrf.mxu0
      %v3394 = vadd.f32 0.0, %v3393
      %3395 = vmatmul.f32.gmra.mxu0 %v3352
      %v3396 = vpop.f32.mrf.mxu0
      %v3397 = vadd.f32 0.0, %v3396
      %3398 = vmatmul.f32.gmra.mxu0 %v3354
      %v3399 = vpop.f32.mrf.mxu0
      %v3400 = vadd.f32 0.0, %v3399
      %3401 = vmatmul.f32.gmra.mxu0 %v3356
      %v3402 = vpop.f32.mrf.mxu0
      %v3403 = vadd.f32 0.0, %v3402
      %3404 = vdwg.mxu0
      %3405 = vmatpush.msra.mxu0 0.0
      %3406 = vmatpush.msra.mxu0 0.0
      %3407 = vmatpush.msra.mxu0 0.0
      %3408 = vmatpush.msra.mxu0 %v2407
      %3409 = vmatpush.msra.mxu0 %v2377
      %3410 = vmatpush.msra.mxu0 %v2376
      %3411 = vmatpush.msra.mxu0 %v2375
      %3412 = vmatpush.msra.mxu0 %v2374
      %3413 = vmatpush.msra.mxu0 %v2373
      %3414 = vmatpush.msra.mxu0 %v2372
      %3415 = vmatpush.msra.mxu0 %v2371
      %3416 = vmatpush.msra.mxu0 %v2370
      %3417 = vmatpush.msra.mxu0 %v2369
      %3418 = vmatpush.msra.mxu0 %v2368
      %3419 = vmatpush.msra.mxu0 %v2367
      %3420 = vmatpush.msra.mxu0 %v2366
      %3421 = vmatmul.f32.gmra.mxu0 %v3359
      %v3422 = vpop.f32.mrf.mxu0
      %v3423 = vadd.f32 %v3391, %v3422
      %3424 = vmatmul.f32.gmra.mxu0 %v3362
      %v3425 = vpop.f32.mrf.mxu0
      %v3426 = vadd.f32 %v3394, %v3425
      %3427 = vmatmul.f32.gmra.mxu0 %v3365
      %v3428 = vpop.f32.mrf.mxu0
      %v3429 = vadd.f32 %v3397, %v3428
      %3430 = vmatmul.f32.gmra.mxu0 %v3368
      %v3431 = vpop.f32.mrf.mxu0
      %v3432 = vadd.f32 %v3400, %v3431
      %3433 = vmatmul.f32.gmra.mxu0 %v3371
      %v3434 = vpop.f32.mrf.mxu0
      %v3435 = vadd.f32 %v3403, %v3434
      %3436 = vdwg.mxu0
      %s3437 = scalar_lea.vmem %s4, 1280
      %v3438 = vld [vmem:[%s3437] sm:$0xff]
      %v3439 = vld [vmem:[%s3437 + $0x8] sm:$0xff]
      %v3440 = vld [vmem:[%s3437 + $0x10] sm:$0xff]
      %v3441 = vld [vmem:[%s3437 + $0x18] sm:$0xff]
      %v3442 = vld [vmem:[%s3437 + $0x20] sm:$0xff]
      %v3443 = vld [vmem:[%s3437 + $0x28] sm:$0xff]
      %v3444 = vld [vmem:[%s3437 + $0x30] sm:$0xff]
      %v3445 = vld [vmem:[%s3437 + $0x38] sm:$0xff]
      %v3446 = vld [vmem:[%s3437 + $0x40] sm:$0xff]
      %v3447 = vld [vmem:[%s3437 + $0x48] sm:$0xff]
      %v3448 = vld [vmem:[%s3437 + $0x50] sm:$0xff]
      %v3449 = vld [vmem:[%s3437 + $0x58] sm:$0xff]
      %v3450 = vld [vmem:[%s3437 + $0x60] sm:$0xff]
      %v3451 = vld [vmem:[%s3437 + $0x68] sm:$0xff]
      %v3452 = vld [vmem:[%s3437 + $0x70] sm:$0xff]
      %v3453 = vld [vmem:[%s3437 + $0x78] sm:$0xff]
      %v3454 = vld [vmem:[%s3437 + $0x80] sm:$0xff]
      %v3455 = vld [vmem:[%s3437 + $0x88] sm:$0xff]
      %v3456 = vld [vmem:[%s3437 + $0x90] sm:$0xff]
      %v3457 = vld [vmem:[%s3437 + $0x98] sm:$0xff]
      %v3458 = vld [vmem:[%s3437 + $0xa0] sm:$0xff]
      %v3459 = vld [vmem:[%s3437 + $0xa8] sm:$0xff]
      %v3460 = vld [vmem:[%s3437 + $0xb0] sm:$0xff]
      %v3461 = vld [vmem:[%s3437 + $0xb8] sm:$0xff]
      %v3462 = vld [vmem:[%s3437 + $0xc0] sm:$0xff]
      %v3463 = vld [vmem:[%s3437 + $0xc8] sm:$0xff]
      %v3464 = vld [vmem:[%s3437 + $0xd0] sm:$0xff]
      %v3465 = vld [vmem:[%s3437 + $0xd8] sm:$0xff]
      %v3466 = vld [vmem:[%s3437 + $0xe0] sm:$0xff]
      %v3467 = vld [vmem:[%s3437 + $0xe8] sm:$0xff]
      %v3468 = vld [vmem:[%s3437 + $0xf0] sm:$0xff]
      %v3469 = vld [vmem:[%s3437 + $0xf8] sm:$0xff]
      %3470 = vmatpush.msra.mxu0 %v3468
      %3471 = vmatpush.msra.mxu0 %v3466
      %3472 = vmatpush.msra.mxu0 %v3464
      %3473 = vmatpush.msra.mxu0 %v3462
      %3474 = vmatpush.msra.mxu0 %v3460
      %3475 = vmatpush.msra.mxu0 %v3458
      %3476 = vmatpush.msra.mxu0 %v3456
      %3477 = vmatpush.msra.mxu0 %v3454
      %3478 = vmatpush.msra.mxu0 %v3452
      %3479 = vmatpush.msra.mxu0 %v3450
      %3480 = vmatpush.msra.mxu0 %v3448
      %3481 = vmatpush.msra.mxu0 %v3446
      %3482 = vmatpush.msra.mxu0 %v3444
      %3483 = vmatpush.msra.mxu0 %v3442
      %3484 = vmatpush.msra.mxu0 %v3440
      %3485 = vmatpush.msra.mxu0 %v3438
      %3486 = vmatmul.f32.gmra.mxu0 %v3423
      %v3487 = vpop.f32.mrf.mxu0
      %v3488 = vadd.f32 0.0, %v3487
      %3489 = vmatmul.f32.gmra.mxu0 %v3426
      %v3490 = vpop.f32.mrf.mxu0
      %v3491 = vadd.f32 0.0, %v3490
      %3492 = vmatmul.f32.gmra.mxu0 %v3429
      %v3493 = vpop.f32.mrf.mxu0
      %v3494 = vadd.f32 0.0, %v3493
      %3495 = vmatmul.f32.gmra.mxu0 %v3432
      %v3496 = vpop.f32.mrf.mxu0
      %v3497 = vadd.f32 0.0, %v3496
      %3498 = vmatmul.f32.gmra.mxu0 %v3435
      %v3499 = vpop.f32.mrf.mxu0
      %v3500 = vadd.f32 0.0, %v3499
      %3501 = vdwg.mxu0
      %3502 = vmatpush.msra.mxu0 %v3469
      %3503 = vmatpush.msra.mxu0 %v3467
      %3504 = vmatpush.msra.mxu0 %v3465
      %3505 = vmatpush.msra.mxu0 %v3463
      %3506 = vmatpush.msra.mxu0 %v3461
      %3507 = vmatpush.msra.mxu0 %v3459
      %3508 = vmatpush.msra.mxu0 %v3457
      %3509 = vmatpush.msra.mxu0 %v3455
      %3510 = vmatpush.msra.mxu0 %v3453
      %3511 = vmatpush.msra.mxu0 %v3451
      %3512 = vmatpush.msra.mxu0 %v3449
      %3513 = vmatpush.msra.mxu0 %v3447
      %3514 = vmatpush.msra.mxu0 %v3445
      %3515 = vmatpush.msra.mxu0 %v3443
      %3516 = vmatpush.msra.mxu0 %v3441
      %3517 = vmatpush.msra.mxu0 %v3439
      %3518 = vmatmul.f32.gmra.mxu0 %v3423
      %v3519 = vpop.f32.mrf.mxu0
      %v3520 = vadd.f32 0.0, %v3519
      %3521 = vmatmul.f32.gmra.mxu0 %v3426
      %v3522 = vpop.f32.mrf.mxu0
      %v3523 = vadd.f32 0.0, %v3522
      %3524 = vmatmul.f32.gmra.mxu0 %v3429
      %v3525 = vpop.f32.mrf.mxu0
      %v3526 = vadd.f32 0.0, %v3525
      %3527 = vmatmul.f32.gmra.mxu0 %v3432
      %v3528 = vpop.f32.mrf.mxu0
      %v3529 = vadd.f32 0.0, %v3528
      %3530 = vmatmul.f32.gmra.mxu0 %v3435
      %v3531 = vpop.f32.mrf.mxu0
      %v3532 = vadd.f32 0.0, %v3531
      %3533 = vdwg.mxu0
      %v3534 = vadd.f32 %v3337, %v3488
      %v3535 = vadd.f32 %v3338, %v3520
      %v3536 = vadd.f32 %v3339, %v3491
      %v3537 = vadd.f32 %v3340, %v3523
      %v3538 = vadd.f32 %v3341, %v3494
      %v3539 = vadd.f32 %v3342, %v3526
      %v3540 = vadd.f32 %v3343, %v3497
      %v3541 = vadd.f32 %v3344, %v3529
      %v3542 = vadd.f32 %v3345, %v3500
      %v3543 = vadd.f32 %v3346, %v3532
      %s3544 = scalar_lea.vmem %s6, 480
      %v3545 = vld [vmem:[%s3544] sm:$0xff]
      %v3546 = vld [vmem:[%s3544 + $0x8] sm:$0xff]
      %v3547 = vld [vmem:[%s3544 + $0x10] sm:$0xff]
      %v3548 = vld [vmem:[%s3544 + $0x18] sm:$0xff]
      %v3549 = vld [vmem:[%s3544 + $0x20] sm:$0xff]
      %v3550 = vld [vmem:[%s3544 + $0x28] sm:$0xff]
      %v3551 = vld [vmem:[%s3544 + $0x30] sm:$0xff]
      %v3552 = vld [vmem:[%s3544 + $0x38] sm:$0xff]
      %v3553 = vld [vmem:[%s3544 + $0x40] sm:$0xf]
      %v3554 = vld [vmem:[%s3544 + $0x48] sm:$0xf]
      %v3556 = vsel %vm2389, %v3546, 0
      %v3559 = vsel %vm2389, %v3548, 0
      %v3562 = vsel %vm2389, %v3550, 0
      %v3565 = vsel %vm2389, %v3552, 0
      %v3568 = vsel %vm2389, %v3554, 0
      %3570 = vmatpush.msra.mxu0 %v2365
      %3571 = vmatpush.msra.mxu0 %v2364
      %3572 = vmatpush.msra.mxu0 %v2363
      %3573 = vmatpush.msra.mxu0 %v2362
      %3574 = vmatpush.msra.mxu0 %v2361
      %3575 = vmatpush.msra.mxu0 %v2360
      %3576 = vmatpush.msra.mxu0 %v2359
      %3577 = vmatpush.msra.mxu0 %v2358
      %3578 = vmatpush.msra.mxu0 %v2357
      %3579 = vmatpush.msra.mxu0 %v2356
      %3580 = vmatpush.msra.mxu0 %v2355
      %3581 = vmatpush.msra.mxu0 %v2354
      %3582 = vmatpush.msra.mxu0 %v2353
      %3583 = vmatpush.msra.mxu0 %v2352
      %3584 = vmatpush.msra.mxu0 %v2351
      %3585 = vmatpush.msra.mxu0 %v2350
      %3586 = vmatmul.f32.gmra.mxu0 %v3545
      %v3587 = vpop.f32.mrf.mxu0
      %v3588 = vadd.f32 0.0, %v3587
      %3589 = vmatmul.f32.gmra.mxu0 %v3547
      %v3590 = vpop.f32.mrf.mxu0
      %v3591 = vadd.f32 0.0, %v3590
      %3592 = vmatmul.f32.gmra.mxu0 %v3549
      %v3593 = vpop.f32.mrf.mxu0
      %v3594 = vadd.f32 0.0, %v3593
      %3595 = vmatmul.f32.gmra.mxu0 %v3551
      %v3596 = vpop.f32.mrf.mxu0
      %v3597 = vadd.f32 0.0, %v3596
      %3598 = vmatmul.f32.gmra.mxu0 %v3553
      %v3599 = vpop.f32.mrf.mxu0
      %v3600 = vadd.f32 0.0, %v3599
      %3601 = vdwg.mxu0
      %3602 = vmatpush.msra.mxu0 0.0
      %3603 = vmatpush.msra.mxu0 0.0
      %3604 = vmatpush.msra.mxu0 0.0
      %3605 = vmatpush.msra.mxu0 %v2407
      %3606 = vmatpush.msra.mxu0 %v2377
      %3607 = vmatpush.msra.mxu0 %v2376
      %3608 = vmatpush.msra.mxu0 %v2375
      %3609 = vmatpush.msra.mxu0 %v2374
      %3610 = vmatpush.msra.mxu0 %v2373
      %3611 = vmatpush.msra.mxu0 %v2372
      %3612 = vmatpush.msra.mxu0 %v2371
      %3613 = vmatpush.msra.mxu0 %v2370
      %3614 = vmatpush.msra.mxu0 %v2369
      %3615 = vmatpush.msra.mxu0 %v2368
      %3616 = vmatpush.msra.mxu0 %v2367
      %3617 = vmatpush.msra.mxu0 %v2366
      %3618 = vmatmul.f32.gmra.mxu0 %v3556
      %v3619 = vpop.f32.mrf.mxu0
      %v3620 = vadd.f32 %v3588, %v3619
      %3621 = vmatmul.f32.gmra.mxu0 %v3559
      %v3622 = vpop.f32.mrf.mxu0
      %v3623 = vadd.f32 %v3591, %v3622
      %3624 = vmatmul.f32.gmra.mxu0 %v3562
      %v3625 = vpop.f32.mrf.mxu0
      %v3626 = vadd.f32 %v3594, %v3625
      %3627 = vmatmul.f32.gmra.mxu0 %v3565
      %v3628 = vpop.f32.mrf.mxu0
      %v3629 = vadd.f32 %v3597, %v3628
      %3630 = vmatmul.f32.gmra.mxu0 %v3568
      %v3631 = vpop.f32.mrf.mxu0
      %v3632 = vadd.f32 %v3600, %v3631
      %3633 = vdwg.mxu0
      %s3634 = scalar_lea.vmem %s4, 1536
      %v3635 = vld [vmem:[%s3634] sm:$0xff]
      %v3636 = vld [vmem:[%s3634 + $0x8] sm:$0xff]
      %v3637 = vld [vmem:[%s3634 + $0x10] sm:$0xff]
      %v3638 = vld [vmem:[%s3634 + $0x18] sm:$0xff]
      %v3639 = vld [vmem:[%s3634 + $0x20] sm:$0xff]
      %v3640 = vld [vmem:[%s3634 + $0x28] sm:$0xff]
      %v3641 = vld [vmem:[%s3634 + $0x30] sm:$0xff]
      %v3642 = vld [vmem:[%s3634 + $0x38] sm:$0xff]
      %v3643 = vld [vmem:[%s3634 + $0x40] sm:$0xff]
      %v3644 = vld [vmem:[%s3634 + $0x48] sm:$0xff]
      %v3645 = vld [vmem:[%s3634 + $0x50] sm:$0xff]
      %v3646 = vld [vmem:[%s3634 + $0x58] sm:$0xff]
      %v3647 = vld [vmem:[%s3634 + $0x60] sm:$0xff]
      %v3648 = vld [vmem:[%s3634 + $0x68] sm:$0xff]
      %v3649 = vld [vmem:[%s3634 + $0x70] sm:$0xff]
      %v3650 = vld [vmem:[%s3634 + $0x78] sm:$0xff]
      %v3651 = vld [vmem:[%s3634 + $0x80] sm:$0xff]
      %v3652 = vld [vmem:[%s3634 + $0x88] sm:$0xff]
      %v3653 = vld [vmem:[%s3634 + $0x90] sm:$0xff]
      %v3654 = vld [vmem:[%s3634 + $0x98] sm:$0xff]
      %v3655 = vld [vmem:[%s3634 + $0xa0] sm:$0xff]
      %v3656 = vld [vmem:[%s3634 + $0xa8] sm:$0xff]
      %v3657 = vld [vmem:[%s3634 + $0xb0] sm:$0xff]
      %v3658 = vld [vmem:[%s3634 + $0xb8] sm:$0xff]
      %v3659 = vld [vmem:[%s3634 + $0xc0] sm:$0xff]
      %v3660 = vld [vmem:[%s3634 + $0xc8] sm:$0xff]
      %v3661 = vld [vmem:[%s3634 + $0xd0] sm:$0xff]
      %v3662 = vld [vmem:[%s3634 + $0xd8] sm:$0xff]
      %v3663 = vld [vmem:[%s3634 + $0xe0] sm:$0xff]
      %v3664 = vld [vmem:[%s3634 + $0xe8] sm:$0xff]
      %v3665 = vld [vmem:[%s3634 + $0xf0] sm:$0xff]
      %v3666 = vld [vmem:[%s3634 + $0xf8] sm:$0xff]
      %3667 = vmatpush.msra.mxu0 %v3665
      %3668 = vmatpush.msra.mxu0 %v3663
      %3669 = vmatpush.msra.mxu0 %v3661
      %3670 = vmatpush.msra.mxu0 %v3659
      %3671 = vmatpush.msra.mxu0 %v3657
      %3672 = vmatpush.msra.mxu0 %v3655
      %3673 = vmatpush.msra.mxu0 %v3653
      %3674 = vmatpush.msra.mxu0 %v3651
      %3675 = vmatpush.msra.mxu0 %v3649
      %3676 = vmatpush.msra.mxu0 %v3647
      %3677 = vmatpush.msra.mxu0 %v3645
      %3678 = vmatpush.msra.mxu0 %v3643
      %3679 = vmatpush.msra.mxu0 %v3641
      %3680 = vmatpush.msra.mxu0 %v3639
      %3681 = vmatpush.msra.mxu0 %v3637
      %3682 = vmatpush.msra.mxu0 %v3635
      %3683 = vmatmul.f32.gmra.mxu0 %v3620
      %v3684 = vpop.f32.mrf.mxu0
      %v3685 = vadd.f32 0.0, %v3684
      %3686 = vmatmul.f32.gmra.mxu0 %v3623
      %v3687 = vpop.f32.mrf.mxu0
      %v3688 = vadd.f32 0.0, %v3687
      %3689 = vmatmul.f32.gmra.mxu0 %v3626
      %v3690 = vpop.f32.mrf.mxu0
      %v3691 = vadd.f32 0.0, %v3690
      %3692 = vmatmul.f32.gmra.mxu0 %v3629
      %v3693 = vpop.f32.mrf.mxu0
      %v3694 = vadd.f32 0.0, %v3693
      %3695 = vmatmul.f32.gmra.mxu0 %v3632
      %v3696 = vpop.f32.mrf.mxu0
      %v3697 = vadd.f32 0.0, %v3696
      %3698 = vdwg.mxu0
      %3699 = vmatpush.msra.mxu0 %v3666
      %3700 = vmatpush.msra.mxu0 %v3664
      %3701 = vmatpush.msra.mxu0 %v3662
      %3702 = vmatpush.msra.mxu0 %v3660
      %3703 = vmatpush.msra.mxu0 %v3658
      %3704 = vmatpush.msra.mxu0 %v3656
      %3705 = vmatpush.msra.mxu0 %v3654
      %3706 = vmatpush.msra.mxu0 %v3652
      %3707 = vmatpush.msra.mxu0 %v3650
      %3708 = vmatpush.msra.mxu0 %v3648
      %3709 = vmatpush.msra.mxu0 %v3646
      %3710 = vmatpush.msra.mxu0 %v3644
      %3711 = vmatpush.msra.mxu0 %v3642
      %3712 = vmatpush.msra.mxu0 %v3640
      %3713 = vmatpush.msra.mxu0 %v3638
      %3714 = vmatpush.msra.mxu0 %v3636
      %3715 = vmatmul.f32.gmra.mxu0 %v3620
      %v3716 = vpop.f32.mrf.mxu0
      %v3717 = vadd.f32 0.0, %v3716
      %3718 = vmatmul.f32.gmra.mxu0 %v3623
      %v3719 = vpop.f32.mrf.mxu0
      %v3720 = vadd.f32 0.0, %v3719
      %3721 = vmatmul.f32.gmra.mxu0 %v3626
      %v3722 = vpop.f32.mrf.mxu0
      %v3723 = vadd.f32 0.0, %v3722
      %3724 = vmatmul.f32.gmra.mxu0 %v3629
      %v3725 = vpop.f32.mrf.mxu0
      %v3726 = vadd.f32 0.0, %v3725
      %3727 = vmatmul.f32.gmra.mxu0 %v3632
      %v3728 = vpop.f32.mrf.mxu0
      %v3729 = vadd.f32 0.0, %v3728
      %3730 = vdwg.mxu0
      %v3731 = vadd.f32 %v3534, %v3685
      %v3732 = vadd.f32 %v3535, %v3717
      %v3733 = vadd.f32 %v3536, %v3688
      %v3734 = vadd.f32 %v3537, %v3720
      %v3735 = vadd.f32 %v3538, %v3691
      %v3736 = vadd.f32 %v3539, %v3723
      %v3737 = vadd.f32 %v3540, %v3694
      %v3738 = vadd.f32 %v3541, %v3726
      %v3739 = vadd.f32 %v3542, %v3697
      %v3740 = vadd.f32 %v3543, %v3729
      %s3741 = scalar_lea.vmem %s6, 560
      %v3742 = vld [vmem:[%s3741] sm:$0xff]
      %v3743 = vld [vmem:[%s3741 + $0x8] sm:$0xff]
      %v3744 = vld [vmem:[%s3741 + $0x10] sm:$0xff]
      %v3745 = vld [vmem:[%s3741 + $0x18] sm:$0xff]
      %v3746 = vld [vmem:[%s3741 + $0x20] sm:$0xff]
      %v3747 = vld [vmem:[%s3741 + $0x28] sm:$0xff]
      %v3748 = vld [vmem:[%s3741 + $0x30] sm:$0xff]
      %v3749 = vld [vmem:[%s3741 + $0x38] sm:$0xff]
      %v3750 = vld [vmem:[%s3741 + $0x40] sm:$0xf]
      %v3751 = vld [vmem:[%s3741 + $0x48] sm:$0xf]
      %v3753 = vsel %vm2389, %v3743, 0
      %v3756 = vsel %vm2389, %v3745, 0
      %v3759 = vsel %vm2389, %v3747, 0
      %v3762 = vsel %vm2389, %v3749, 0
      %v3765 = vsel %vm2389, %v3751, 0
      %3767 = vmatpush.msra.mxu0 %v2365
      %3768 = vmatpush.msra.mxu0 %v2364
      %3769 = vmatpush.msra.mxu0 %v2363
      %3770 = vmatpush.msra.mxu0 %v2362
      %3771 = vmatpush.msra.mxu0 %v2361
      %3772 = vmatpush.msra.mxu0 %v2360
      %3773 = vmatpush.msra.mxu0 %v2359
      %3774 = vmatpush.msra.mxu0 %v2358
      %3775 = vmatpush.msra.mxu0 %v2357
      %3776 = vmatpush.msra.mxu0 %v2356
      %3777 = vmatpush.msra.mxu0 %v2355
      %3778 = vmatpush.msra.mxu0 %v2354
      %3779 = vmatpush.msra.mxu0 %v2353
      %3780 = vmatpush.msra.mxu0 %v2352
      %3781 = vmatpush.msra.mxu0 %v2351
      %3782 = vmatpush.msra.mxu0 %v2350
      %3783 = vmatmul.f32.gmra.mxu0 %v3742
      %v3784 = vpop.f32.mrf.mxu0
      %v3785 = vadd.f32 0.0, %v3784
      %3786 = vmatmul.f32.gmra.mxu0 %v3744
      %v3787 = vpop.f32.mrf.mxu0
      %v3788 = vadd.f32 0.0, %v3787
      %3789 = vmatmul.f32.gmra.mxu0 %v3746
      %v3790 = vpop.f32.mrf.mxu0
      %v3791 = vadd.f32 0.0, %v3790
      %3792 = vmatmul.f32.gmra.mxu0 %v3748
      %v3793 = vpop.f32.mrf.mxu0
      %v3794 = vadd.f32 0.0, %v3793
      %3795 = vmatmul.f32.gmra.mxu0 %v3750
      %v3796 = vpop.f32.mrf.mxu0
      %v3797 = vadd.f32 0.0, %v3796
      %3798 = vdwg.mxu0
      %3799 = vmatpush.msra.mxu0 0.0
      %3800 = vmatpush.msra.mxu0 0.0
      %3801 = vmatpush.msra.mxu0 0.0
      %3802 = vmatpush.msra.mxu0 %v2407
      %3803 = vmatpush.msra.mxu0 %v2377
      %3804 = vmatpush.msra.mxu0 %v2376
      %3805 = vmatpush.msra.mxu0 %v2375
      %3806 = vmatpush.msra.mxu0 %v2374
      %3807 = vmatpush.msra.mxu0 %v2373
      %3808 = vmatpush.msra.mxu0 %v2372
      %3809 = vmatpush.msra.mxu0 %v2371
      %3810 = vmatpush.msra.mxu0 %v2370
      %3811 = vmatpush.msra.mxu0 %v2369
      %3812 = vmatpush.msra.mxu0 %v2368
      %3813 = vmatpush.msra.mxu0 %v2367
      %3814 = vmatpush.msra.mxu0 %v2366
      %3815 = vmatmul.f32.gmra.mxu0 %v3753
      %v3816 = vpop.f32.mrf.mxu0
      %v3817 = vadd.f32 %v3785, %v3816
      %3818 = vmatmul.f32.gmra.mxu0 %v3756
      %v3819 = vpop.f32.mrf.mxu0
      %v3820 = vadd.f32 %v3788, %v3819
      %3821 = vmatmul.f32.gmra.mxu0 %v3759
      %v3822 = vpop.f32.mrf.mxu0
      %v3823 = vadd.f32 %v3791, %v3822
      %3824 = vmatmul.f32.gmra.mxu0 %v3762
      %v3825 = vpop.f32.mrf.mxu0
      %v3826 = vadd.f32 %v3794, %v3825
      %3827 = vmatmul.f32.gmra.mxu0 %v3765
      %v3828 = vpop.f32.mrf.mxu0
      %v3829 = vadd.f32 %v3797, %v3828
      %3830 = vdwg.mxu0
      %s3831 = scalar_lea.vmem %s4, 1792
      %v3832 = vld [vmem:[%s3831] sm:$0xff]
      %v3833 = vld [vmem:[%s3831 + $0x8] sm:$0xff]
      %v3834 = vld [vmem:[%s3831 + $0x10] sm:$0xff]
      %v3835 = vld [vmem:[%s3831 + $0x18] sm:$0xff]
      %v3836 = vld [vmem:[%s3831 + $0x20] sm:$0xff]
      %v3837 = vld [vmem:[%s3831 + $0x28] sm:$0xff]
      %v3838 = vld [vmem:[%s3831 + $0x30] sm:$0xff]
      %v3839 = vld [vmem:[%s3831 + $0x38] sm:$0xff]
      %v3840 = vld [vmem:[%s3831 + $0x40] sm:$0xff]
      %v3841 = vld [vmem:[%s3831 + $0x48] sm:$0xff]
      %v3842 = vld [vmem:[%s3831 + $0x50] sm:$0xff]
      %v3843 = vld [vmem:[%s3831 + $0x58] sm:$0xff]
      %v3844 = vld [vmem:[%s3831 + $0x60] sm:$0xff]
      %v3845 = vld [vmem:[%s3831 + $0x68] sm:$0xff]
      %v3846 = vld [vmem:[%s3831 + $0x70] sm:$0xff]
      %v3847 = vld [vmem:[%s3831 + $0x78] sm:$0xff]
      %v3848 = vld [vmem:[%s3831 + $0x80] sm:$0xff]
      %v3849 = vld [vmem:[%s3831 + $0x88] sm:$0xff]
      %v3850 = vld [vmem:[%s3831 + $0x90] sm:$0xff]
      %v3851 = vld [vmem:[%s3831 + $0x98] sm:$0xff]
      %v3852 = vld [vmem:[%s3831 + $0xa0] sm:$0xff]
      %v3853 = vld [vmem:[%s3831 + $0xa8] sm:$0xff]
      %v3854 = vld [vmem:[%s3831 + $0xb0] sm:$0xff]
      %v3855 = vld [vmem:[%s3831 + $0xb8] sm:$0xff]
      %v3856 = vld [vmem:[%s3831 + $0xc0] sm:$0xff]
      %v3857 = vld [vmem:[%s3831 + $0xc8] sm:$0xff]
      %v3858 = vld [vmem:[%s3831 + $0xd0] sm:$0xff]
      %v3859 = vld [vmem:[%s3831 + $0xd8] sm:$0xff]
      %v3860 = vld [vmem:[%s3831 + $0xe0] sm:$0xff]
      %v3861 = vld [vmem:[%s3831 + $0xe8] sm:$0xff]
      %v3862 = vld [vmem:[%s3831 + $0xf0] sm:$0xff]
      %v3863 = vld [vmem:[%s3831 + $0xf8] sm:$0xff]
      %3864 = vmatpush.msra.mxu0 %v3862
      %3865 = vmatpush.msra.mxu0 %v3860
      %3866 = vmatpush.msra.mxu0 %v3858
      %3867 = vmatpush.msra.mxu0 %v3856
      %3868 = vmatpush.msra.mxu0 %v3854
      %3869 = vmatpush.msra.mxu0 %v3852
      %3870 = vmatpush.msra.mxu0 %v3850
      %3871 = vmatpush.msra.mxu0 %v3848
      %3872 = vmatpush.msra.mxu0 %v3846
      %3873 = vmatpush.msra.mxu0 %v3844
      %3874 = vmatpush.msra.mxu0 %v3842
      %3875 = vmatpush.msra.mxu0 %v3840
      %3876 = vmatpush.msra.mxu0 %v3838
      %3877 = vmatpush.msra.mxu0 %v3836
      %3878 = vmatpush.msra.mxu0 %v3834
      %3879 = vmatpush.msra.mxu0 %v3832
      %3880 = vmatmul.f32.gmra.mxu0 %v3817
      %v3881 = vpop.f32.mrf.mxu0
      %v3882 = vadd.f32 0.0, %v3881
      %3883 = vmatmul.f32.gmra.mxu0 %v3820
      %v3884 = vpop.f32.mrf.mxu0
      %v3885 = vadd.f32 0.0, %v3884
      %3886 = vmatmul.f32.gmra.mxu0 %v3823
      %v3887 = vpop.f32.mrf.mxu0
      %v3888 = vadd.f32 0.0, %v3887
      %3889 = vmatmul.f32.gmra.mxu0 %v3826
      %v3890 = vpop.f32.mrf.mxu0
      %v3891 = vadd.f32 0.0, %v3890
      %3892 = vmatmul.f32.gmra.mxu0 %v3829
      %v3893 = vpop.f32.mrf.mxu0
      %v3894 = vadd.f32 0.0, %v3893
      %3895 = vdwg.mxu0
      %3896 = vmatpush.msra.mxu0 %v3863
      %3897 = vmatpush.msra.mxu0 %v3861
      %3898 = vmatpush.msra.mxu0 %v3859
      %3899 = vmatpush.msra.mxu0 %v3857
      %3900 = vmatpush.msra.mxu0 %v3855
      %3901 = vmatpush.msra.mxu0 %v3853
      %3902 = vmatpush.msra.mxu0 %v3851
      %3903 = vmatpush.msra.mxu0 %v3849
      %3904 = vmatpush.msra.mxu0 %v3847
      %3905 = vmatpush.msra.mxu0 %v3845
      %3906 = vmatpush.msra.mxu0 %v3843
      %3907 = vmatpush.msra.mxu0 %v3841
      %3908 = vmatpush.msra.mxu0 %v3839
      %3909 = vmatpush.msra.mxu0 %v3837
      %3910 = vmatpush.msra.mxu0 %v3835
      %3911 = vmatpush.msra.mxu0 %v3833
      %3912 = vmatmul.f32.gmra.mxu0 %v3817
      %v3913 = vpop.f32.mrf.mxu0
      %v3914 = vadd.f32 0.0, %v3913
      %3915 = vmatmul.f32.gmra.mxu0 %v3820
      %v3916 = vpop.f32.mrf.mxu0
      %v3917 = vadd.f32 0.0, %v3916
      %3918 = vmatmul.f32.gmra.mxu0 %v3823
      %v3919 = vpop.f32.mrf.mxu0
      %v3920 = vadd.f32 0.0, %v3919
      %3921 = vmatmul.f32.gmra.mxu0 %v3826
      %v3922 = vpop.f32.mrf.mxu0
      %v3923 = vadd.f32 0.0, %v3922
      %3924 = vmatmul.f32.gmra.mxu0 %v3829
      %v3925 = vpop.f32.mrf.mxu0
      %v3926 = vadd.f32 0.0, %v3925
      %3927 = vdwg.mxu0
      %v3928 = vadd.f32 %v3731, %v3882
      %v3929 = vadd.f32 %v3732, %v3914
      %v3930 = vadd.f32 %v3733, %v3885
      %v3931 = vadd.f32 %v3734, %v3917
      %v3932 = vadd.f32 %v3735, %v3888
      %v3933 = vadd.f32 %v3736, %v3920
      %v3934 = vadd.f32 %v3737, %v3891
      %v3935 = vadd.f32 %v3738, %v3923
      %v3936 = vadd.f32 %v3739, %v3894
      %v3937 = vadd.f32 %v3740, %v3926
      %s3938 = scalar_lea.vmem %s6, 640
      %v3939 = vld [vmem:[%s3938] sm:$0xff]
      %v3940 = vld [vmem:[%s3938 + $0x8] sm:$0xff]
      %v3941 = vld [vmem:[%s3938 + $0x10] sm:$0xff]
      %v3942 = vld [vmem:[%s3938 + $0x18] sm:$0xff]
      %v3943 = vld [vmem:[%s3938 + $0x20] sm:$0xff]
      %v3944 = vld [vmem:[%s3938 + $0x28] sm:$0xff]
      %v3945 = vld [vmem:[%s3938 + $0x30] sm:$0xff]
      %v3946 = vld [vmem:[%s3938 + $0x38] sm:$0xff]
      %v3947 = vld [vmem:[%s3938 + $0x40] sm:$0xf]
      %v3948 = vld [vmem:[%s3938 + $0x48] sm:$0xf]
      %v3950 = vsel %vm2389, %v3940, 0
      %v3953 = vsel %vm2389, %v3942, 0
      %v3956 = vsel %vm2389, %v3944, 0
      %v3959 = vsel %vm2389, %v3946, 0
      %v3962 = vsel %vm2389, %v3948, 0
      %3964 = vmatpush.msra.mxu0 %v2365
      %3965 = vmatpush.msra.mxu0 %v2364
      %3966 = vmatpush.msra.mxu0 %v2363
      %3967 = vmatpush.msra.mxu0 %v2362
      %3968 = vmatpush.msra.mxu0 %v2361
      %3969 = vmatpush.msra.mxu0 %v2360
      %3970 = vmatpush.msra.mxu0 %v2359
      %3971 = vmatpush.msra.mxu0 %v2358
      %3972 = vmatpush.msra.mxu0 %v2357
      %3973 = vmatpush.msra.mxu0 %v2356
      %3974 = vmatpush.msra.mxu0 %v2355
      %3975 = vmatpush.msra.mxu0 %v2354
      %3976 = vmatpush.msra.mxu0 %v2353
      %3977 = vmatpush.msra.mxu0 %v2352
      %3978 = vmatpush.msra.mxu0 %v2351
      %3979 = vmatpush.msra.mxu0 %v2350
      %3980 = vmatmul.f32.gmra.mxu0 %v3939
      %v3981 = vpop.f32.mrf.mxu0
      %v3982 = vadd.f32 0.0, %v3981
      %3983 = vmatmul.f32.gmra.mxu0 %v3941
      %v3984 = vpop.f32.mrf.mxu0
      %v3985 = vadd.f32 0.0, %v3984
      %3986 = vmatmul.f32.gmra.mxu0 %v3943
      %v3987 = vpop.f32.mrf.mxu0
      %v3988 = vadd.f32 0.0, %v3987
      %3989 = vmatmul.f32.gmra.mxu0 %v3945
      %v3990 = vpop.f32.mrf.mxu0
      %v3991 = vadd.f32 0.0, %v3990
      %3992 = vmatmul.f32.gmra.mxu0 %v3947
      %v3993 = vpop.f32.mrf.mxu0
      %v3994 = vadd.f32 0.0, %v3993
      %3995 = vdwg.mxu0
      %3996 = vmatpush.msra.mxu0 0.0
      %3997 = vmatpush.msra.mxu0 0.0
      %3998 = vmatpush.msra.mxu0 0.0
      %3999 = vmatpush.msra.mxu0 %v2407
      %4000 = vmatpush.msra.mxu0 %v2377
      %4001 = vmatpush.msra.mxu0 %v2376
      %4002 = vmatpush.msra.mxu0 %v2375
      %4003 = vmatpush.msra.mxu0 %v2374
      %4004 = vmatpush.msra.mxu0 %v2373
      %4005 = vmatpush.msra.mxu0 %v2372
      %4006 = vmatpush.msra.mxu0 %v2371
      %4007 = vmatpush.msra.mxu0 %v2370
      %4008 = vmatpush.msra.mxu0 %v2369
      %4009 = vmatpush.msra.mxu0 %v2368
      %4010 = vmatpush.msra.mxu0 %v2367
      %4011 = vmatpush.msra.mxu0 %v2366
      %4012 = vmatmul.f32.gmra.mxu0 %v3950
      %v4013 = vpop.f32.mrf.mxu0
      %v4014 = vadd.f32 %v3982, %v4013
      %4015 = vmatmul.f32.gmra.mxu0 %v3953
      %v4016 = vpop.f32.mrf.mxu0
      %v4017 = vadd.f32 %v3985, %v4016
      %4018 = vmatmul.f32.gmra.mxu0 %v3956
      %v4019 = vpop.f32.mrf.mxu0
      %v4020 = vadd.f32 %v3988, %v4019
      %4021 = vmatmul.f32.gmra.mxu0 %v3959
      %v4022 = vpop.f32.mrf.mxu0
      %v4023 = vadd.f32 %v3991, %v4022
      %4024 = vmatmul.f32.gmra.mxu0 %v3962
      %v4025 = vpop.f32.mrf.mxu0
      %v4026 = vadd.f32 %v3994, %v4025
      %4027 = vdwg.mxu0
      %s4028 = scalar_lea.vmem %s4, 2048
      %v4029 = vld [vmem:[%s4028] sm:$0xff]
      %v4030 = vld [vmem:[%s4028 + $0x8] sm:$0xff]
      %v4031 = vld [vmem:[%s4028 + $0x10] sm:$0xff]
      %v4032 = vld [vmem:[%s4028 + $0x18] sm:$0xff]
      %v4033 = vld [vmem:[%s4028 + $0x20] sm:$0xff]
      %v4034 = vld [vmem:[%s4028 + $0x28] sm:$0xff]
      %v4035 = vld [vmem:[%s4028 + $0x30] sm:$0xff]
      %v4036 = vld [vmem:[%s4028 + $0x38] sm:$0xff]
      %v4037 = vld [vmem:[%s4028 + $0x40] sm:$0xff]
      %v4038 = vld [vmem:[%s4028 + $0x48] sm:$0xff]
      %v4039 = vld [vmem:[%s4028 + $0x50] sm:$0xff]
      %v4040 = vld [vmem:[%s4028 + $0x58] sm:$0xff]
      %v4041 = vld [vmem:[%s4028 + $0x60] sm:$0xff]
      %v4042 = vld [vmem:[%s4028 + $0x68] sm:$0xff]
      %v4043 = vld [vmem:[%s4028 + $0x70] sm:$0xff]
      %v4044 = vld [vmem:[%s4028 + $0x78] sm:$0xff]
      %v4045 = vld [vmem:[%s4028 + $0x80] sm:$0xff]
      %v4046 = vld [vmem:[%s4028 + $0x88] sm:$0xff]
      %v4047 = vld [vmem:[%s4028 + $0x90] sm:$0xff]
      %v4048 = vld [vmem:[%s4028 + $0x98] sm:$0xff]
      %v4049 = vld [vmem:[%s4028 + $0xa0] sm:$0xff]
      %v4050 = vld [vmem:[%s4028 + $0xa8] sm:$0xff]
      %v4051 = vld [vmem:[%s4028 + $0xb0] sm:$0xff]
      %v4052 = vld [vmem:[%s4028 + $0xb8] sm:$0xff]
      %v4053 = vld [vmem:[%s4028 + $0xc0] sm:$0xff]
      %v4054 = vld [vmem:[%s4028 + $0xc8] sm:$0xff]
      %v4055 = vld [vmem:[%s4028 + $0xd0] sm:$0xff]
      %v4056 = vld [vmem:[%s4028 + $0xd8] sm:$0xff]
      %v4057 = vld [vmem:[%s4028 + $0xe0] sm:$0xff]
      %v4058 = vld [vmem:[%s4028 + $0xe8] sm:$0xff]
      %v4059 = vld [vmem:[%s4028 + $0xf0] sm:$0xff]
      %v4060 = vld [vmem:[%s4028 + $0xf8] sm:$0xff]
      %4061 = vmatpush.msra.mxu0 %v4059
      %4062 = vmatpush.msra.mxu0 %v4057
      %4063 = vmatpush.msra.mxu0 %v4055
      %4064 = vmatpush.msra.mxu0 %v4053
      %4065 = vmatpush.msra.mxu0 %v4051
      %4066 = vmatpush.msra.mxu0 %v4049
      %4067 = vmatpush.msra.mxu0 %v4047
      %4068 = vmatpush.msra.mxu0 %v4045
      %4069 = vmatpush.msra.mxu0 %v4043
      %4070 = vmatpush.msra.mxu0 %v4041
      %4071 = vmatpush.msra.mxu0 %v4039
      %4072 = vmatpush.msra.mxu0 %v4037
      %4073 = vmatpush.msra.mxu0 %v4035
      %4074 = vmatpush.msra.mxu0 %v4033
      %4075 = vmatpush.msra.mxu0 %v4031
      %4076 = vmatpush.msra.mxu0 %v4029
      %4077 = vmatmul.f32.gmra.mxu0 %v4014
      %v4078 = vpop.f32.mrf.mxu0
      %v4079 = vadd.f32 0.0, %v4078
      %4080 = vmatmul.f32.gmra.mxu0 %v4017
      %v4081 = vpop.f32.mrf.mxu0
      %v4082 = vadd.f32 0.0, %v4081
      %4083 = vmatmul.f32.gmra.mxu0 %v4020
      %v4084 = vpop.f32.mrf.mxu0
      %v4085 = vadd.f32 0.0, %v4084
      %4086 = vmatmul.f32.gmra.mxu0 %v4023
      %v4087 = vpop.f32.mrf.mxu0
      %v4088 = vadd.f32 0.0, %v4087
      %4089 = vmatmul.f32.gmra.mxu0 %v4026
      %v4090 = vpop.f32.mrf.mxu0
      %v4091 = vadd.f32 0.0, %v4090
      %4092 = vdwg.mxu0
      %4093 = vmatpush.msra.mxu0 %v4060
      %4094 = vmatpush.msra.mxu0 %v4058
      %4095 = vmatpush.msra.mxu0 %v4056
      %4096 = vmatpush.msra.mxu0 %v4054
      %4097 = vmatpush.msra.mxu0 %v4052
      %4098 = vmatpush.msra.mxu0 %v4050
      %4099 = vmatpush.msra.mxu0 %v4048
      %4100 = vmatpush.msra.mxu0 %v4046
      %4101 = vmatpush.msra.mxu0 %v4044
      %4102 = vmatpush.msra.mxu0 %v4042
      %4103 = vmatpush.msra.mxu0 %v4040
      %4104 = vmatpush.msra.mxu0 %v4038
      %4105 = vmatpush.msra.mxu0 %v4036
      %4106 = vmatpush.msra.mxu0 %v4034
      %4107 = vmatpush.msra.mxu0 %v4032
      %4108 = vmatpush.msra.mxu0 %v4030
      %4109 = vmatmul.f32.gmra.mxu0 %v4014
      %v4110 = vpop.f32.mrf.mxu0
      %v4111 = vadd.f32 0.0, %v4110
      %4112 = vmatmul.f32.gmra.mxu0 %v4017
      %v4113 = vpop.f32.mrf.mxu0
      %v4114 = vadd.f32 0.0, %v4113
      %4115 = vmatmul.f32.gmra.mxu0 %v4020
      %v4116 = vpop.f32.mrf.mxu0
      %v4117 = vadd.f32 0.0, %v4116
      %4118 = vmatmul.f32.gmra.mxu0 %v4023
      %v4119 = vpop.f32.mrf.mxu0
      %v4120 = vadd.f32 0.0, %v4119
      %4121 = vmatmul.f32.gmra.mxu0 %v4026
      %v4122 = vpop.f32.mrf.mxu0
      %v4123 = vadd.f32 0.0, %v4122
      %4124 = vdwg.mxu0
      %v4125 = vadd.f32 %v3928, %v4079
      %v4126 = vadd.f32 %v3929, %v4111
      %v4127 = vadd.f32 %v3930, %v4082
      %v4128 = vadd.f32 %v3931, %v4114
      %v4129 = vadd.f32 %v3932, %v4085
      %v4130 = vadd.f32 %v3933, %v4117
      %v4131 = vadd.f32 %v3934, %v4088
      %v4132 = vadd.f32 %v3935, %v4120
      %v4133 = vadd.f32 %v3936, %v4091
      %v4134 = vadd.f32 %v3937, %v4123
      %s4135 = scalar_lea.vmem %s6, 720
      %v4136 = vld [vmem:[%s4135] sm:$0xff]
      %v4137 = vld [vmem:[%s4135 + $0x8] sm:$0xff]
      %v4138 = vld [vmem:[%s4135 + $0x10] sm:$0xff]
      %v4139 = vld [vmem:[%s4135 + $0x18] sm:$0xff]
      %v4140 = vld [vmem:[%s4135 + $0x20] sm:$0xff]
      %v4141 = vld [vmem:[%s4135 + $0x28] sm:$0xff]
      %v4142 = vld [vmem:[%s4135 + $0x30] sm:$0xff]
      %v4143 = vld [vmem:[%s4135 + $0x38] sm:$0xff]
      %v4144 = vld [vmem:[%s4135 + $0x40] sm:$0xf]
      %v4145 = vld [vmem:[%s4135 + $0x48] sm:$0xf]
      %v4147 = vsel %vm2389, %v4137, 0
      %v4150 = vsel %vm2389, %v4139, 0
      %v4153 = vsel %vm2389, %v4141, 0
      %v4156 = vsel %vm2389, %v4143, 0
      %v4159 = vsel %vm2389, %v4145, 0
      %4161 = vmatpush.msra.mxu0 %v2365
      %4162 = vmatpush.msra.mxu0 %v2364
      %4163 = vmatpush.msra.mxu0 %v2363
      %4164 = vmatpush.msra.mxu0 %v2362
      %4165 = vmatpush.msra.mxu0 %v2361
      %4166 = vmatpush.msra.mxu0 %v2360
      %4167 = vmatpush.msra.mxu0 %v2359
      %4168 = vmatpush.msra.mxu0 %v2358
      %4169 = vmatpush.msra.mxu0 %v2357
      %4170 = vmatpush.msra.mxu0 %v2356
      %4171 = vmatpush.msra.mxu0 %v2355
      %4172 = vmatpush.msra.mxu0 %v2354
      %4173 = vmatpush.msra.mxu0 %v2353
      %4174 = vmatpush.msra.mxu0 %v2352
      %4175 = vmatpush.msra.mxu0 %v2351
      %4176 = vmatpush.msra.mxu0 %v2350
      %4177 = vmatmul.f32.gmra.mxu0 %v4136
      %v4178 = vpop.f32.mrf.mxu0
      %v4179 = vadd.f32 0.0, %v4178
      %4180 = vmatmul.f32.gmra.mxu0 %v4138
      %v4181 = vpop.f32.mrf.mxu0
      %v4182 = vadd.f32 0.0, %v4181
      %4183 = vmatmul.f32.gmra.mxu0 %v4140
      %v4184 = vpop.f32.mrf.mxu0
      %v4185 = vadd.f32 0.0, %v4184
      %4186 = vmatmul.f32.gmra.mxu0 %v4142
      %v4187 = vpop.f32.mrf.mxu0
      %v4188 = vadd.f32 0.0, %v4187
      %4189 = vmatmul.f32.gmra.mxu0 %v4144
      %v4190 = vpop.f32.mrf.mxu0
      %v4191 = vadd.f32 0.0, %v4190
      %4192 = vdwg.mxu0
      %4193 = vmatpush.msra.mxu0 0.0
      %4194 = vmatpush.msra.mxu0 0.0
      %4195 = vmatpush.msra.mxu0 0.0
      %4196 = vmatpush.msra.mxu0 %v2407
      %4197 = vmatpush.msra.mxu0 %v2377
      %4198 = vmatpush.msra.mxu0 %v2376
      %4199 = vmatpush.msra.mxu0 %v2375
      %4200 = vmatpush.msra.mxu0 %v2374
      %4201 = vmatpush.msra.mxu0 %v2373
      %4202 = vmatpush.msra.mxu0 %v2372
      %4203 = vmatpush.msra.mxu0 %v2371
      %4204 = vmatpush.msra.mxu0 %v2370
      %4205 = vmatpush.msra.mxu0 %v2369
      %4206 = vmatpush.msra.mxu0 %v2368
      %4207 = vmatpush.msra.mxu0 %v2367
      %4208 = vmatpush.msra.mxu0 %v2366
      %4209 = vmatmul.f32.gmra.mxu0 %v4147
      %v4210 = vpop.f32.mrf.mxu0
      %v4211 = vadd.f32 %v4179, %v4210
      %4212 = vmatmul.f32.gmra.mxu0 %v4150
      %v4213 = vpop.f32.mrf.mxu0
      %v4214 = vadd.f32 %v4182, %v4213
      %4215 = vmatmul.f32.gmra.mxu0 %v4153
      %v4216 = vpop.f32.mrf.mxu0
      %v4217 = vadd.f32 %v4185, %v4216
      %4218 = vmatmul.f32.gmra.mxu0 %v4156
      %v4219 = vpop.f32.mrf.mxu0
      %v4220 = vadd.f32 %v4188, %v4219
      %4221 = vmatmul.f32.gmra.mxu0 %v4159
      %v4222 = vpop.f32.mrf.mxu0
      %v4223 = vadd.f32 %v4191, %v4222
      %4224 = vdwg.mxu0
      %s4225 = scalar_lea.vmem %s4, 2304
      %v4226 = vld [vmem:[%s4225] sm:$0xff]
      %v4227 = vld [vmem:[%s4225 + $0x8] sm:$0xff]
      %v4228 = vld [vmem:[%s4225 + $0x10] sm:$0xff]
      %v4229 = vld [vmem:[%s4225 + $0x18] sm:$0xff]
      %v4230 = vld [vmem:[%s4225 + $0x20] sm:$0xff]
      %v4231 = vld [vmem:[%s4225 + $0x28] sm:$0xff]
      %v4232 = vld [vmem:[%s4225 + $0x30] sm:$0xff]
      %v4233 = vld [vmem:[%s4225 + $0x38] sm:$0xff]
      %v4234 = vld [vmem:[%s4225 + $0x40] sm:$0xff]
      %v4235 = vld [vmem:[%s4225 + $0x48] sm:$0xff]
      %v4236 = vld [vmem:[%s4225 + $0x50] sm:$0xff]
      %v4237 = vld [vmem:[%s4225 + $0x58] sm:$0xff]
      %v4238 = vld [vmem:[%s4225 + $0x60] sm:$0xff]
      %v4239 = vld [vmem:[%s4225 + $0x68] sm:$0xff]
      %v4240 = vld [vmem:[%s4225 + $0x70] sm:$0xff]
      %v4241 = vld [vmem:[%s4225 + $0x78] sm:$0xff]
      %v4242 = vld [vmem:[%s4225 + $0x80] sm:$0xff]
      %v4243 = vld [vmem:[%s4225 + $0x88] sm:$0xff]
      %v4244 = vld [vmem:[%s4225 + $0x90] sm:$0xff]
      %v4245 = vld [vmem:[%s4225 + $0x98] sm:$0xff]
      %v4246 = vld [vmem:[%s4225 + $0xa0] sm:$0xff]
      %v4247 = vld [vmem:[%s4225 + $0xa8] sm:$0xff]
      %v4248 = vld [vmem:[%s4225 + $0xb0] sm:$0xff]
      %v4249 = vld [vmem:[%s4225 + $0xb8] sm:$0xff]
      %v4250 = vld [vmem:[%s4225 + $0xc0] sm:$0xff]
      %v4251 = vld [vmem:[%s4225 + $0xc8] sm:$0xff]
      %v4252 = vld [vmem:[%s4225 + $0xd0] sm:$0xff]
      %v4253 = vld [vmem:[%s4225 + $0xd8] sm:$0xff]
      %v4254 = vld [vmem:[%s4225 + $0xe0] sm:$0xff]
      %v4255 = vld [vmem:[%s4225 + $0xe8] sm:$0xff]
      %v4256 = vld [vmem:[%s4225 + $0xf0] sm:$0xff]
      %v4257 = vld [vmem:[%s4225 + $0xf8] sm:$0xff]
      %4258 = vmatpush.msra.mxu0 %v4256
      %4259 = vmatpush.msra.mxu0 %v4254
      %4260 = vmatpush.msra.mxu0 %v4252
      %4261 = vmatpush.msra.mxu0 %v4250
      %4262 = vmatpush.msra.mxu0 %v4248
      %4263 = vmatpush.msra.mxu0 %v4246
      %4264 = vmatpush.msra.mxu0 %v4244
      %4265 = vmatpush.msra.mxu0 %v4242
      %4266 = vmatpush.msra.mxu0 %v4240
      %4267 = vmatpush.msra.mxu0 %v4238
      %4268 = vmatpush.msra.mxu0 %v4236
      %4269 = vmatpush.msra.mxu0 %v4234
      %4270 = vmatpush.msra.mxu0 %v4232
      %4271 = vmatpush.msra.mxu0 %v4230
      %4272 = vmatpush.msra.mxu0 %v4228
      %4273 = vmatpush.msra.mxu0 %v4226
      %4274 = vmatmul.f32.gmra.mxu0 %v4211
      %v4275 = vpop.f32.mrf.mxu0
      %v4276 = vadd.f32 0.0, %v4275
      %4277 = vmatmul.f32.gmra.mxu0 %v4214
      %v4278 = vpop.f32.mrf.mxu0
      %v4279 = vadd.f32 0.0, %v4278
      %4280 = vmatmul.f32.gmra.mxu0 %v4217
      %v4281 = vpop.f32.mrf.mxu0
      %v4282 = vadd.f32 0.0, %v4281
      %4283 = vmatmul.f32.gmra.mxu0 %v4220
      %v4284 = vpop.f32.mrf.mxu0
      %v4285 = vadd.f32 0.0, %v4284
      %4286 = vmatmul.f32.gmra.mxu0 %v4223
      %v4287 = vpop.f32.mrf.mxu0
      %v4288 = vadd.f32 0.0, %v4287
      %4289 = vdwg.mxu0
      %4290 = vmatpush.msra.mxu0 %v4257
      %4291 = vmatpush.msra.mxu0 %v4255
      %4292 = vmatpush.msra.mxu0 %v4253
      %4293 = vmatpush.msra.mxu0 %v4251
      %4294 = vmatpush.msra.mxu0 %v4249
      %4295 = vmatpush.msra.mxu0 %v4247
      %4296 = vmatpush.msra.mxu0 %v4245
      %4297 = vmatpush.msra.mxu0 %v4243
      %4298 = vmatpush.msra.mxu0 %v4241
      %4299 = vmatpush.msra.mxu0 %v4239
      %4300 = vmatpush.msra.mxu0 %v4237
      %4301 = vmatpush.msra.mxu0 %v4235
      %4302 = vmatpush.msra.mxu0 %v4233
      %4303 = vmatpush.msra.mxu0 %v4231
      %4304 = vmatpush.msra.mxu0 %v4229
      %4305 = vmatpush.msra.mxu0 %v4227
      %4306 = vmatmul.f32.gmra.mxu0 %v4211
      %v4307 = vpop.f32.mrf.mxu0
      %v4308 = vadd.f32 0.0, %v4307
      %4309 = vmatmul.f32.gmra.mxu0 %v4214
      %v4310 = vpop.f32.mrf.mxu0
      %v4311 = vadd.f32 0.0, %v4310
      %4312 = vmatmul.f32.gmra.mxu0 %v4217
      %v4313 = vpop.f32.mrf.mxu0
      %v4314 = vadd.f32 0.0, %v4313
      %4315 = vmatmul.f32.gmra.mxu0 %v4220
      %v4316 = vpop.f32.mrf.mxu0
      %v4317 = vadd.f32 0.0, %v4316
      %4318 = vmatmul.f32.gmra.mxu0 %v4223
      %v4319 = vpop.f32.mrf.mxu0
      %v4320 = vadd.f32 0.0, %v4319
      %4321 = vdwg.mxu0
      %v4322 = vadd.f32 %v4125, %v4276
      %v4323 = vadd.f32 %v4126, %v4308
      %v4324 = vadd.f32 %v4127, %v4279
      %v4325 = vadd.f32 %v4128, %v4311
      %v4326 = vadd.f32 %v4129, %v4282
      %v4327 = vadd.f32 %v4130, %v4314
      %v4328 = vadd.f32 %v4131, %v4285
      %v4329 = vadd.f32 %v4132, %v4317
      %v4330 = vadd.f32 %v4133, %v4288
      %v4331 = vadd.f32 %v4134, %v4320
      %s4332 = scalar_lea.vmem %s6, 800
      %v4333 = vld [vmem:[%s4332] sm:$0xff]
      %v4334 = vld [vmem:[%s4332 + $0x8] sm:$0xff]
      %v4335 = vld [vmem:[%s4332 + $0x10] sm:$0xff]
      %v4336 = vld [vmem:[%s4332 + $0x18] sm:$0xff]
      %v4337 = vld [vmem:[%s4332 + $0x20] sm:$0xff]
      %v4338 = vld [vmem:[%s4332 + $0x28] sm:$0xff]
      %v4339 = vld [vmem:[%s4332 + $0x30] sm:$0xff]
      %v4340 = vld [vmem:[%s4332 + $0x38] sm:$0xff]
      %v4341 = vld [vmem:[%s4332 + $0x40] sm:$0xf]
      %v4342 = vld [vmem:[%s4332 + $0x48] sm:$0xf]
      %v4344 = vsel %vm2389, %v4334, 0
      %v4347 = vsel %vm2389, %v4336, 0
      %v4350 = vsel %vm2389, %v4338, 0
      %v4353 = vsel %vm2389, %v4340, 0
      %v4356 = vsel %vm2389, %v4342, 0
      %4358 = vmatpush.msra.mxu0 %v2365
      %4359 = vmatpush.msra.mxu0 %v2364
      %4360 = vmatpush.msra.mxu0 %v2363
      %4361 = vmatpush.msra.mxu0 %v2362
      %4362 = vmatpush.msra.mxu0 %v2361
      %4363 = vmatpush.msra.mxu0 %v2360
      %4364 = vmatpush.msra.mxu0 %v2359
      %4365 = vmatpush.msra.mxu0 %v2358
      %4366 = vmatpush.msra.mxu0 %v2357
      %4367 = vmatpush.msra.mxu0 %v2356
      %4368 = vmatpush.msra.mxu0 %v2355
      %4369 = vmatpush.msra.mxu0 %v2354
      %4370 = vmatpush.msra.mxu0 %v2353
      %4371 = vmatpush.msra.mxu0 %v2352
      %4372 = vmatpush.msra.mxu0 %v2351
      %4373 = vmatpush.msra.mxu0 %v2350
      %4374 = vmatmul.f32.gmra.mxu0 %v4333
      %v4375 = vpop.f32.mrf.mxu0
      %v4376 = vadd.f32 0.0, %v4375
      %4377 = vmatmul.f32.gmra.mxu0 %v4335
      %v4378 = vpop.f32.mrf.mxu0
      %v4379 = vadd.f32 0.0, %v4378
      %4380 = vmatmul.f32.gmra.mxu0 %v4337
      %v4381 = vpop.f32.mrf.mxu0
      %v4382 = vadd.f32 0.0, %v4381
      %4383 = vmatmul.f32.gmra.mxu0 %v4339
      %v4384 = vpop.f32.mrf.mxu0
      %v4385 = vadd.f32 0.0, %v4384
      %4386 = vmatmul.f32.gmra.mxu0 %v4341
      %v4387 = vpop.f32.mrf.mxu0
      %v4388 = vadd.f32 0.0, %v4387
      %4389 = vdwg.mxu0
      %4390 = vmatpush.msra.mxu0 0.0
      %4391 = vmatpush.msra.mxu0 0.0
      %4392 = vmatpush.msra.mxu0 0.0
      %4393 = vmatpush.msra.mxu0 %v2407
      %4394 = vmatpush.msra.mxu0 %v2377
      %4395 = vmatpush.msra.mxu0 %v2376
      %4396 = vmatpush.msra.mxu0 %v2375
      %4397 = vmatpush.msra.mxu0 %v2374
      %4398 = vmatpush.msra.mxu0 %v2373
      %4399 = vmatpush.msra.mxu0 %v2372
      %4400 = vmatpush.msra.mxu0 %v2371
      %4401 = vmatpush.msra.mxu0 %v2370
      %4402 = vmatpush.msra.mxu0 %v2369
      %4403 = vmatpush.msra.mxu0 %v2368
      %4404 = vmatpush.msra.mxu0 %v2367
      %4405 = vmatpush.msra.mxu0 %v2366
      %4406 = vmatmul.f32.gmra.mxu0 %v4344
      %v4407 = vpop.f32.mrf.mxu0
      %v4408 = vadd.f32 %v4376, %v4407
      %4409 = vmatmul.f32.gmra.mxu0 %v4347
      %v4410 = vpop.f32.mrf.mxu0
      %v4411 = vadd.f32 %v4379, %v4410
      %4412 = vmatmul.f32.gmra.mxu0 %v4350
      %v4413 = vpop.f32.mrf.mxu0
      %v4414 = vadd.f32 %v4382, %v4413
      %4415 = vmatmul.f32.gmra.mxu0 %v4353
      %v4416 = vpop.f32.mrf.mxu0
      %v4417 = vadd.f32 %v4385, %v4416
      %4418 = vmatmul.f32.gmra.mxu0 %v4356
      %v4419 = vpop.f32.mrf.mxu0
      %v4420 = vadd.f32 %v4388, %v4419
      %4421 = vdwg.mxu0
      %s4422 = scalar_lea.vmem %s4, 2560
      %v4423 = vld [vmem:[%s4422] sm:$0xff]
      %v4424 = vld [vmem:[%s4422 + $0x8] sm:$0xff]
      %v4425 = vld [vmem:[%s4422 + $0x10] sm:$0xff]
      %v4426 = vld [vmem:[%s4422 + $0x18] sm:$0xff]
      %v4427 = vld [vmem:[%s4422 + $0x20] sm:$0xff]
      %v4428 = vld [vmem:[%s4422 + $0x28] sm:$0xff]
      %v4429 = vld [vmem:[%s4422 + $0x30] sm:$0xff]
      %v4430 = vld [vmem:[%s4422 + $0x38] sm:$0xff]
      %v4431 = vld [vmem:[%s4422 + $0x40] sm:$0xff]
      %v4432 = vld [vmem:[%s4422 + $0x48] sm:$0xff]
      %v4433 = vld [vmem:[%s4422 + $0x50] sm:$0xff]
      %v4434 = vld [vmem:[%s4422 + $0x58] sm:$0xff]
      %v4435 = vld [vmem:[%s4422 + $0x60] sm:$0xff]
      %v4436 = vld [vmem:[%s4422 + $0x68] sm:$0xff]
      %v4437 = vld [vmem:[%s4422 + $0x70] sm:$0xff]
      %v4438 = vld [vmem:[%s4422 + $0x78] sm:$0xff]
      %v4439 = vld [vmem:[%s4422 + $0x80] sm:$0xff]
      %v4440 = vld [vmem:[%s4422 + $0x88] sm:$0xff]
      %v4441 = vld [vmem:[%s4422 + $0x90] sm:$0xff]
      %v4442 = vld [vmem:[%s4422 + $0x98] sm:$0xff]
      %v4443 = vld [vmem:[%s4422 + $0xa0] sm:$0xff]
      %v4444 = vld [vmem:[%s4422 + $0xa8] sm:$0xff]
      %v4445 = vld [vmem:[%s4422 + $0xb0] sm:$0xff]
      %v4446 = vld [vmem:[%s4422 + $0xb8] sm:$0xff]
      %v4447 = vld [vmem:[%s4422 + $0xc0] sm:$0xff]
      %v4448 = vld [vmem:[%s4422 + $0xc8] sm:$0xff]
      %v4449 = vld [vmem:[%s4422 + $0xd0] sm:$0xff]
      %v4450 = vld [vmem:[%s4422 + $0xd8] sm:$0xff]
      %v4451 = vld [vmem:[%s4422 + $0xe0] sm:$0xff]
      %v4452 = vld [vmem:[%s4422 + $0xe8] sm:$0xff]
      %v4453 = vld [vmem:[%s4422 + $0xf0] sm:$0xff]
      %v4454 = vld [vmem:[%s4422 + $0xf8] sm:$0xff]
      %4455 = vmatpush.msra.mxu0 %v4453
      %4456 = vmatpush.msra.mxu0 %v4451
      %4457 = vmatpush.msra.mxu0 %v4449
      %4458 = vmatpush.msra.mxu0 %v4447
      %4459 = vmatpush.msra.mxu0 %v4445
      %4460 = vmatpush.msra.mxu0 %v4443
      %4461 = vmatpush.msra.mxu0 %v4441
      %4462 = vmatpush.msra.mxu0 %v4439
      %4463 = vmatpush.msra.mxu0 %v4437
      %4464 = vmatpush.msra.mxu0 %v4435
      %4465 = vmatpush.msra.mxu0 %v4433
      %4466 = vmatpush.msra.mxu0 %v4431
      %4467 = vmatpush.msra.mxu0 %v4429
      %4468 = vmatpush.msra.mxu0 %v4427
      %4469 = vmatpush.msra.mxu0 %v4425
      %4470 = vmatpush.msra.mxu0 %v4423
      %4471 = vmatmul.f32.gmra.mxu0 %v4408
      %v4472 = vpop.f32.mrf.mxu0
      %v4473 = vadd.f32 0.0, %v4472
      %4474 = vmatmul.f32.gmra.mxu0 %v4411
      %v4475 = vpop.f32.mrf.mxu0
      %v4476 = vadd.f32 0.0, %v4475
      %4477 = vmatmul.f32.gmra.mxu0 %v4414
      %v4478 = vpop.f32.mrf.mxu0
      %v4479 = vadd.f32 0.0, %v4478
      %4480 = vmatmul.f32.gmra.mxu0 %v4417
      %v4481 = vpop.f32.mrf.mxu0
      %v4482 = vadd.f32 0.0, %v4481
      %4483 = vmatmul.f32.gmra.mxu0 %v4420
      %v4484 = vpop.f32.mrf.mxu0
      %v4485 = vadd.f32 0.0, %v4484
      %4486 = vdwg.mxu0
      %4487 = vmatpush.msra.mxu0 %v4454
      %4488 = vmatpush.msra.mxu0 %v4452
      %4489 = vmatpush.msra.mxu0 %v4450
      %4490 = vmatpush.msra.mxu0 %v4448
      %4491 = vmatpush.msra.mxu0 %v4446
      %4492 = vmatpush.msra.mxu0 %v4444
      %4493 = vmatpush.msra.mxu0 %v4442
      %4494 = vmatpush.msra.mxu0 %v4440
      %4495 = vmatpush.msra.mxu0 %v4438
      %4496 = vmatpush.msra.mxu0 %v4436
      %4497 = vmatpush.msra.mxu0 %v4434
      %4498 = vmatpush.msra.mxu0 %v4432
      %4499 = vmatpush.msra.mxu0 %v4430
      %4500 = vmatpush.msra.mxu0 %v4428
      %4501 = vmatpush.msra.mxu0 %v4426
      %4502 = vmatpush.msra.mxu0 %v4424
      %4503 = vmatmul.f32.gmra.mxu0 %v4408
      %v4504 = vpop.f32.mrf.mxu0
      %v4505 = vadd.f32 0.0, %v4504
      %4506 = vmatmul.f32.gmra.mxu0 %v4411
      %v4507 = vpop.f32.mrf.mxu0
      %v4508 = vadd.f32 0.0, %v4507
      %4509 = vmatmul.f32.gmra.mxu0 %v4414
      %v4510 = vpop.f32.mrf.mxu0
      %v4511 = vadd.f32 0.0, %v4510
      %4512 = vmatmul.f32.gmra.mxu0 %v4417
      %v4513 = vpop.f32.mrf.mxu0
      %v4514 = vadd.f32 0.0, %v4513
      %4515 = vmatmul.f32.gmra.mxu0 %v4420
      %v4516 = vpop.f32.mrf.mxu0
      %v4517 = vadd.f32 0.0, %v4516
      %4518 = vdwg.mxu0
      %v4519 = vadd.f32 %v4322, %v4473
      %v4520 = vadd.f32 %v4323, %v4505
      %v4521 = vadd.f32 %v4324, %v4476
      %v4522 = vadd.f32 %v4325, %v4508
      %v4523 = vadd.f32 %v4326, %v4479
      %v4524 = vadd.f32 %v4327, %v4511
      %v4525 = vadd.f32 %v4328, %v4482
      %v4526 = vadd.f32 %v4329, %v4514
      %v4527 = vadd.f32 %v4330, %v4485
      %v4528 = vadd.f32 %v4331, %v4517
      %s4529 = scalar_lea.vmem %s6, 880
      %v4530 = vld [vmem:[%s4529] sm:$0xff]
      %v4531 = vld [vmem:[%s4529 + $0x8] sm:$0xff]
      %v4532 = vld [vmem:[%s4529 + $0x10] sm:$0xff]
      %v4533 = vld [vmem:[%s4529 + $0x18] sm:$0xff]
      %v4534 = vld [vmem:[%s4529 + $0x20] sm:$0xff]
      %v4535 = vld [vmem:[%s4529 + $0x28] sm:$0xff]
      %v4536 = vld [vmem:[%s4529 + $0x30] sm:$0xff]
      %v4537 = vld [vmem:[%s4529 + $0x38] sm:$0xff]
      %v4538 = vld [vmem:[%s4529 + $0x40] sm:$0xf]
      %v4539 = vld [vmem:[%s4529 + $0x48] sm:$0xf]
      %v4541 = vsel %vm2389, %v4531, 0
      %v4544 = vsel %vm2389, %v4533, 0
      %v4547 = vsel %vm2389, %v4535, 0
      %v4550 = vsel %vm2389, %v4537, 0
      %v4553 = vsel %vm2389, %v4539, 0
      %4555 = vmatpush.msra.mxu0 %v2365
      %4556 = vmatpush.msra.mxu0 %v2364
      %4557 = vmatpush.msra.mxu0 %v2363
      %4558 = vmatpush.msra.mxu0 %v2362
      %4559 = vmatpush.msra.mxu0 %v2361
      %4560 = vmatpush.msra.mxu0 %v2360
      %4561 = vmatpush.msra.mxu0 %v2359
      %4562 = vmatpush.msra.mxu0 %v2358
      %4563 = vmatpush.msra.mxu0 %v2357
      %4564 = vmatpush.msra.mxu0 %v2356
      %4565 = vmatpush.msra.mxu0 %v2355
      %4566 = vmatpush.msra.mxu0 %v2354
      %4567 = vmatpush.msra.mxu0 %v2353
      %4568 = vmatpush.msra.mxu0 %v2352
      %4569 = vmatpush.msra.mxu0 %v2351
      %4570 = vmatpush.msra.mxu0 %v2350
      %4571 = vmatmul.f32.gmra.mxu0 %v4530
      %v4572 = vpop.f32.mrf.mxu0
      %v4573 = vadd.f32 0.0, %v4572
      %4574 = vmatmul.f32.gmra.mxu0 %v4532
      %v4575 = vpop.f32.mrf.mxu0
      %v4576 = vadd.f32 0.0, %v4575
      %4577 = vmatmul.f32.gmra.mxu0 %v4534
      %v4578 = vpop.f32.mrf.mxu0
      %v4579 = vadd.f32 0.0, %v4578
      %4580 = vmatmul.f32.gmra.mxu0 %v4536
      %v4581 = vpop.f32.mrf.mxu0
      %v4582 = vadd.f32 0.0, %v4581
      %4583 = vmatmul.f32.gmra.mxu0 %v4538
      %v4584 = vpop.f32.mrf.mxu0
      %v4585 = vadd.f32 0.0, %v4584
      %4586 = vdwg.mxu0
      %4587 = vmatpush.msra.mxu0 0.0
      %4588 = vmatpush.msra.mxu0 0.0
      %4589 = vmatpush.msra.mxu0 0.0
      %4590 = vmatpush.msra.mxu0 %v2407
      %4591 = vmatpush.msra.mxu0 %v2377
      %4592 = vmatpush.msra.mxu0 %v2376
      %4593 = vmatpush.msra.mxu0 %v2375
      %4594 = vmatpush.msra.mxu0 %v2374
      %4595 = vmatpush.msra.mxu0 %v2373
      %4596 = vmatpush.msra.mxu0 %v2372
      %4597 = vmatpush.msra.mxu0 %v2371
      %4598 = vmatpush.msra.mxu0 %v2370
      %4599 = vmatpush.msra.mxu0 %v2369
      %4600 = vmatpush.msra.mxu0 %v2368
      %4601 = vmatpush.msra.mxu0 %v2367
      %4602 = vmatpush.msra.mxu0 %v2366
      %4603 = vmatmul.f32.gmra.mxu0 %v4541
      %v4604 = vpop.f32.mrf.mxu0
      %v4605 = vadd.f32 %v4573, %v4604
      %4606 = vmatmul.f32.gmra.mxu0 %v4544
      %v4607 = vpop.f32.mrf.mxu0
      %v4608 = vadd.f32 %v4576, %v4607
      %4609 = vmatmul.f32.gmra.mxu0 %v4547
      %v4610 = vpop.f32.mrf.mxu0
      %v4611 = vadd.f32 %v4579, %v4610
      %4612 = vmatmul.f32.gmra.mxu0 %v4550
      %v4613 = vpop.f32.mrf.mxu0
      %v4614 = vadd.f32 %v4582, %v4613
      %4615 = vmatmul.f32.gmra.mxu0 %v4553
      %v4616 = vpop.f32.mrf.mxu0
      %v4617 = vadd.f32 %v4585, %v4616
      %4618 = vdwg.mxu0
      %s4619 = scalar_lea.vmem %s4, 2816
      %v4620 = vld [vmem:[%s4619] sm:$0xff]
      %v4621 = vld [vmem:[%s4619 + $0x8] sm:$0xff]
      %v4622 = vld [vmem:[%s4619 + $0x10] sm:$0xff]
      %v4623 = vld [vmem:[%s4619 + $0x18] sm:$0xff]
      %v4624 = vld [vmem:[%s4619 + $0x20] sm:$0xff]
      %v4625 = vld [vmem:[%s4619 + $0x28] sm:$0xff]
      %v4626 = vld [vmem:[%s4619 + $0x30] sm:$0xff]
      %v4627 = vld [vmem:[%s4619 + $0x38] sm:$0xff]
      %v4628 = vld [vmem:[%s4619 + $0x40] sm:$0xff]
      %v4629 = vld [vmem:[%s4619 + $0x48] sm:$0xff]
      %v4630 = vld [vmem:[%s4619 + $0x50] sm:$0xff]
      %v4631 = vld [vmem:[%s4619 + $0x58] sm:$0xff]
      %v4632 = vld [vmem:[%s4619 + $0x60] sm:$0xff]
      %v4633 = vld [vmem:[%s4619 + $0x68] sm:$0xff]
      %v4634 = vld [vmem:[%s4619 + $0x70] sm:$0xff]
      %v4635 = vld [vmem:[%s4619 + $0x78] sm:$0xff]
      %v4636 = vld [vmem:[%s4619 + $0x80] sm:$0xff]
      %v4637 = vld [vmem:[%s4619 + $0x88] sm:$0xff]
      %v4638 = vld [vmem:[%s4619 + $0x90] sm:$0xff]
      %v4639 = vld [vmem:[%s4619 + $0x98] sm:$0xff]
      %v4640 = vld [vmem:[%s4619 + $0xa0] sm:$0xff]
      %v4641 = vld [vmem:[%s4619 + $0xa8] sm:$0xff]
      %v4642 = vld [vmem:[%s4619 + $0xb0] sm:$0xff]
      %v4643 = vld [vmem:[%s4619 + $0xb8] sm:$0xff]
      %v4644 = vld [vmem:[%s4619 + $0xc0] sm:$0xff]
      %v4645 = vld [vmem:[%s4619 + $0xc8] sm:$0xff]
      %v4646 = vld [vmem:[%s4619 + $0xd0] sm:$0xff]
      %v4647 = vld [vmem:[%s4619 + $0xd8] sm:$0xff]
      %v4648 = vld [vmem:[%s4619 + $0xe0] sm:$0xff]
      %v4649 = vld [vmem:[%s4619 + $0xe8] sm:$0xff]
      %v4650 = vld [vmem:[%s4619 + $0xf0] sm:$0xff]
      %v4651 = vld [vmem:[%s4619 + $0xf8] sm:$0xff]
      %4652 = vmatpush.msra.mxu0 %v4650
      %4653 = vmatpush.msra.mxu0 %v4648
      %4654 = vmatpush.msra.mxu0 %v4646
      %4655 = vmatpush.msra.mxu0 %v4644
      %4656 = vmatpush.msra.mxu0 %v4642
      %4657 = vmatpush.msra.mxu0 %v4640
      %4658 = vmatpush.msra.mxu0 %v4638
      %4659 = vmatpush.msra.mxu0 %v4636
      %4660 = vmatpush.msra.mxu0 %v4634
      %4661 = vmatpush.msra.mxu0 %v4632
      %4662 = vmatpush.msra.mxu0 %v4630
      %4663 = vmatpush.msra.mxu0 %v4628
      %4664 = vmatpush.msra.mxu0 %v4626
      %4665 = vmatpush.msra.mxu0 %v4624
      %4666 = vmatpush.msra.mxu0 %v4622
      %4667 = vmatpush.msra.mxu0 %v4620
      %4668 = vmatmul.f32.gmra.mxu0 %v4605
      %v4669 = vpop.f32.mrf.mxu0
      %v4670 = vadd.f32 0.0, %v4669
      %4671 = vmatmul.f32.gmra.mxu0 %v4608
      %v4672 = vpop.f32.mrf.mxu0
      %v4673 = vadd.f32 0.0, %v4672
      %4674 = vmatmul.f32.gmra.mxu0 %v4611
      %v4675 = vpop.f32.mrf.mxu0
      %v4676 = vadd.f32 0.0, %v4675
      %4677 = vmatmul.f32.gmra.mxu0 %v4614
      %v4678 = vpop.f32.mrf.mxu0
      %v4679 = vadd.f32 0.0, %v4678
      %4680 = vmatmul.f32.gmra.mxu0 %v4617
      %v4681 = vpop.f32.mrf.mxu0
      %v4682 = vadd.f32 0.0, %v4681
      %4683 = vdwg.mxu0
      %4684 = vmatpush.msra.mxu0 %v4651
      %4685 = vmatpush.msra.mxu0 %v4649
      %4686 = vmatpush.msra.mxu0 %v4647
      %4687 = vmatpush.msra.mxu0 %v4645
      %4688 = vmatpush.msra.mxu0 %v4643
      %4689 = vmatpush.msra.mxu0 %v4641
      %4690 = vmatpush.msra.mxu0 %v4639
      %4691 = vmatpush.msra.mxu0 %v4637
      %4692 = vmatpush.msra.mxu0 %v4635
      %4693 = vmatpush.msra.mxu0 %v4633
      %4694 = vmatpush.msra.mxu0 %v4631
      %4695 = vmatpush.msra.mxu0 %v4629
      %4696 = vmatpush.msra.mxu0 %v4627
      %4697 = vmatpush.msra.mxu0 %v4625
      %4698 = vmatpush.msra.mxu0 %v4623
      %4699 = vmatpush.msra.mxu0 %v4621
      %4700 = vmatmul.f32.gmra.mxu0 %v4605
      %v4701 = vpop.f32.mrf.mxu0
      %v4702 = vadd.f32 0.0, %v4701
      %4703 = vmatmul.f32.gmra.mxu0 %v4608
      %v4704 = vpop.f32.mrf.mxu0
      %v4705 = vadd.f32 0.0, %v4704
      %4706 = vmatmul.f32.gmra.mxu0 %v4611
      %v4707 = vpop.f32.mrf.mxu0
      %v4708 = vadd.f32 0.0, %v4707
      %4709 = vmatmul.f32.gmra.mxu0 %v4614
      %v4710 = vpop.f32.mrf.mxu0
      %v4711 = vadd.f32 0.0, %v4710
      %4712 = vmatmul.f32.gmra.mxu0 %v4617
      %v4713 = vpop.f32.mrf.mxu0
      %v4714 = vadd.f32 0.0, %v4713
      %4715 = vdwg.mxu0
      %v4716 = vadd.f32 %v4519, %v4670
      %v4717 = vadd.f32 %v4520, %v4702
      %v4718 = vadd.f32 %v4521, %v4673
      %v4719 = vadd.f32 %v4522, %v4705
      %v4720 = vadd.f32 %v4523, %v4676
      %v4721 = vadd.f32 %v4524, %v4708
      %v4722 = vadd.f32 %v4525, %v4679
      %v4723 = vadd.f32 %v4526, %v4711
      %v4724 = vadd.f32 %v4527, %v4682
      %v4725 = vadd.f32 %v4528, %v4714
      %s4726 = scalar_lea.vmem %s6, 960
      %v4727 = vld [vmem:[%s4726] sm:$0xff]
      %v4728 = vld [vmem:[%s4726 + $0x8] sm:$0xff]
      %v4729 = vld [vmem:[%s4726 + $0x10] sm:$0xff]
      %v4730 = vld [vmem:[%s4726 + $0x18] sm:$0xff]
      %v4731 = vld [vmem:[%s4726 + $0x20] sm:$0xff]
      %v4732 = vld [vmem:[%s4726 + $0x28] sm:$0xff]
      %v4733 = vld [vmem:[%s4726 + $0x30] sm:$0xff]
      %v4734 = vld [vmem:[%s4726 + $0x38] sm:$0xff]
      %v4735 = vld [vmem:[%s4726 + $0x40] sm:$0xf]
      %v4736 = vld [vmem:[%s4726 + $0x48] sm:$0xf]
      %v4738 = vsel %vm2389, %v4728, 0
      %v4741 = vsel %vm2389, %v4730, 0
      %v4744 = vsel %vm2389, %v4732, 0
      %v4747 = vsel %vm2389, %v4734, 0
      %v4750 = vsel %vm2389, %v4736, 0
      %4752 = vmatpush.msra.mxu0 %v2365
      %4753 = vmatpush.msra.mxu0 %v2364
      %4754 = vmatpush.msra.mxu0 %v2363
      %4755 = vmatpush.msra.mxu0 %v2362
      %4756 = vmatpush.msra.mxu0 %v2361
      %4757 = vmatpush.msra.mxu0 %v2360
      %4758 = vmatpush.msra.mxu0 %v2359
      %4759 = vmatpush.msra.mxu0 %v2358
      %4760 = vmatpush.msra.mxu0 %v2357
      %4761 = vmatpush.msra.mxu0 %v2356
      %4762 = vmatpush.msra.mxu0 %v2355
      %4763 = vmatpush.msra.mxu0 %v2354
      %4764 = vmatpush.msra.mxu0 %v2353
      %4765 = vmatpush.msra.mxu0 %v2352
      %4766 = vmatpush.msra.mxu0 %v2351
      %4767 = vmatpush.msra.mxu0 %v2350
      %4768 = vmatmul.f32.gmra.mxu0 %v4727
      %v4769 = vpop.f32.mrf.mxu0
      %v4770 = vadd.f32 0.0, %v4769
      %4771 = vmatmul.f32.gmra.mxu0 %v4729
      %v4772 = vpop.f32.mrf.mxu0
      %v4773 = vadd.f32 0.0, %v4772
      %4774 = vmatmul.f32.gmra.mxu0 %v4731
      %v4775 = vpop.f32.mrf.mxu0
      %v4776 = vadd.f32 0.0, %v4775
      %4777 = vmatmul.f32.gmra.mxu0 %v4733
      %v4778 = vpop.f32.mrf.mxu0
      %v4779 = vadd.f32 0.0, %v4778
      %4780 = vmatmul.f32.gmra.mxu0 %v4735
      %v4781 = vpop.f32.mrf.mxu0
      %v4782 = vadd.f32 0.0, %v4781
      %4783 = vdwg.mxu0
      %4784 = vmatpush.msra.mxu0 0.0
      %4785 = vmatpush.msra.mxu0 0.0
      %4786 = vmatpush.msra.mxu0 0.0
      %4787 = vmatpush.msra.mxu0 %v2407
      %4788 = vmatpush.msra.mxu0 %v2377
      %4789 = vmatpush.msra.mxu0 %v2376
      %4790 = vmatpush.msra.mxu0 %v2375
      %4791 = vmatpush.msra.mxu0 %v2374
      %4792 = vmatpush.msra.mxu0 %v2373
      %4793 = vmatpush.msra.mxu0 %v2372
      %4794 = vmatpush.msra.mxu0 %v2371
      %4795 = vmatpush.msra.mxu0 %v2370
      %4796 = vmatpush.msra.mxu0 %v2369
      %4797 = vmatpush.msra.mxu0 %v2368
      %4798 = vmatpush.msra.mxu0 %v2367
      %4799 = vmatpush.msra.mxu0 %v2366
      %4800 = vmatmul.f32.gmra.mxu0 %v4738
      %v4801 = vpop.f32.mrf.mxu0
      %v4802 = vadd.f32 %v4770, %v4801
      %4803 = vmatmul.f32.gmra.mxu0 %v4741
      %v4804 = vpop.f32.mrf.mxu0
      %v4805 = vadd.f32 %v4773, %v4804
      %4806 = vmatmul.f32.gmra.mxu0 %v4744
      %v4807 = vpop.f32.mrf.mxu0
      %v4808 = vadd.f32 %v4776, %v4807
      %4809 = vmatmul.f32.gmra.mxu0 %v4747
      %v4810 = vpop.f32.mrf.mxu0
      %v4811 = vadd.f32 %v4779, %v4810
      %4812 = vmatmul.f32.gmra.mxu0 %v4750
      %v4813 = vpop.f32.mrf.mxu0
      %v4814 = vadd.f32 %v4782, %v4813
      %4815 = vdwg.mxu0
      %s4816 = scalar_lea.vmem %s4, 3072
      %v4817 = vld [vmem:[%s4816] sm:$0xff]
      %v4818 = vld [vmem:[%s4816 + $0x8] sm:$0xff]
      %v4819 = vld [vmem:[%s4816 + $0x10] sm:$0xff]
      %v4820 = vld [vmem:[%s4816 + $0x18] sm:$0xff]
      %v4821 = vld [vmem:[%s4816 + $0x20] sm:$0xff]
      %v4822 = vld [vmem:[%s4816 + $0x28] sm:$0xff]
      %v4823 = vld [vmem:[%s4816 + $0x30] sm:$0xff]
      %v4824 = vld [vmem:[%s4816 + $0x38] sm:$0xff]
      %v4825 = vld [vmem:[%s4816 + $0x40] sm:$0xff]
      %v4826 = vld [vmem:[%s4816 + $0x48] sm:$0xff]
      %v4827 = vld [vmem:[%s4816 + $0x50] sm:$0xff]
      %v4828 = vld [vmem:[%s4816 + $0x58] sm:$0xff]
      %v4829 = vld [vmem:[%s4816 + $0x60] sm:$0xff]
      %v4830 = vld [vmem:[%s4816 + $0x68] sm:$0xff]
      %v4831 = vld [vmem:[%s4816 + $0x70] sm:$0xff]
      %v4832 = vld [vmem:[%s4816 + $0x78] sm:$0xff]
      %v4833 = vld [vmem:[%s4816 + $0x80] sm:$0xff]
      %v4834 = vld [vmem:[%s4816 + $0x88] sm:$0xff]
      %v4835 = vld [vmem:[%s4816 + $0x90] sm:$0xff]
      %v4836 = vld [vmem:[%s4816 + $0x98] sm:$0xff]
      %v4837 = vld [vmem:[%s4816 + $0xa0] sm:$0xff]
      %v4838 = vld [vmem:[%s4816 + $0xa8] sm:$0xff]
      %v4839 = vld [vmem:[%s4816 + $0xb0] sm:$0xff]
      %v4840 = vld [vmem:[%s4816 + $0xb8] sm:$0xff]
      %v4841 = vld [vmem:[%s4816 + $0xc0] sm:$0xff]
      %v4842 = vld [vmem:[%s4816 + $0xc8] sm:$0xff]
      %v4843 = vld [vmem:[%s4816 + $0xd0] sm:$0xff]
      %v4844 = vld [vmem:[%s4816 + $0xd8] sm:$0xff]
      %v4845 = vld [vmem:[%s4816 + $0xe0] sm:$0xff]
      %v4846 = vld [vmem:[%s4816 + $0xe8] sm:$0xff]
      %v4847 = vld [vmem:[%s4816 + $0xf0] sm:$0xff]
      %v4848 = vld [vmem:[%s4816 + $0xf8] sm:$0xff]
      %4849 = vmatpush.msra.mxu0 %v4847
      %4850 = vmatpush.msra.mxu0 %v4845
      %4851 = vmatpush.msra.mxu0 %v4843
      %4852 = vmatpush.msra.mxu0 %v4841
      %4853 = vmatpush.msra.mxu0 %v4839
      %4854 = vmatpush.msra.mxu0 %v4837
      %4855 = vmatpush.msra.mxu0 %v4835
      %4856 = vmatpush.msra.mxu0 %v4833
      %4857 = vmatpush.msra.mxu0 %v4831
      %4858 = vmatpush.msra.mxu0 %v4829
      %4859 = vmatpush.msra.mxu0 %v4827
      %4860 = vmatpush.msra.mxu0 %v4825
      %4861 = vmatpush.msra.mxu0 %v4823
      %4862 = vmatpush.msra.mxu0 %v4821
      %4863 = vmatpush.msra.mxu0 %v4819
      %4864 = vmatpush.msra.mxu0 %v4817
      %4865 = vmatmul.f32.gmra.mxu0 %v4802
      %v4866 = vpop.f32.mrf.mxu0
      %v4867 = vadd.f32 0.0, %v4866
      %4868 = vmatmul.f32.gmra.mxu0 %v4805
      %v4869 = vpop.f32.mrf.mxu0
      %v4870 = vadd.f32 0.0, %v4869
      %4871 = vmatmul.f32.gmra.mxu0 %v4808
      %v4872 = vpop.f32.mrf.mxu0
      %v4873 = vadd.f32 0.0, %v4872
      %4874 = vmatmul.f32.gmra.mxu0 %v4811
      %v4875 = vpop.f32.mrf.mxu0
      %v4876 = vadd.f32 0.0, %v4875
      %4877 = vmatmul.f32.gmra.mxu0 %v4814
      %v4878 = vpop.f32.mrf.mxu0
      %v4879 = vadd.f32 0.0, %v4878
      %4880 = vdwg.mxu0
      %4881 = vmatpush.msra.mxu0 %v4848
      %4882 = vmatpush.msra.mxu0 %v4846
      %4883 = vmatpush.msra.mxu0 %v4844
      %4884 = vmatpush.msra.mxu0 %v4842
      %4885 = vmatpush.msra.mxu0 %v4840
      %4886 = vmatpush.msra.mxu0 %v4838
      %4887 = vmatpush.msra.mxu0 %v4836
      %4888 = vmatpush.msra.mxu0 %v4834
      %4889 = vmatpush.msra.mxu0 %v4832
      %4890 = vmatpush.msra.mxu0 %v4830
      %4891 = vmatpush.msra.mxu0 %v4828
      %4892 = vmatpush.msra.mxu0 %v4826
      %4893 = vmatpush.msra.mxu0 %v4824
      %4894 = vmatpush.msra.mxu0 %v4822
      %4895 = vmatpush.msra.mxu0 %v4820
      %4896 = vmatpush.msra.mxu0 %v4818
      %4897 = vmatmul.f32.gmra.mxu0 %v4802
      %v4898 = vpop.f32.mrf.mxu0
      %v4899 = vadd.f32 0.0, %v4898
      %4900 = vmatmul.f32.gmra.mxu0 %v4805
      %v4901 = vpop.f32.mrf.mxu0
      %v4902 = vadd.f32 0.0, %v4901
      %4903 = vmatmul.f32.gmra.mxu0 %v4808
      %v4904 = vpop.f32.mrf.mxu0
      %v4905 = vadd.f32 0.0, %v4904
      %4906 = vmatmul.f32.gmra.mxu0 %v4811
      %v4907 = vpop.f32.mrf.mxu0
      %v4908 = vadd.f32 0.0, %v4907
      %4909 = vmatmul.f32.gmra.mxu0 %v4814
      %v4910 = vpop.f32.mrf.mxu0
      %v4911 = vadd.f32 0.0, %v4910
      %4912 = vdwg.mxu0
      %v4913 = vadd.f32 %v4716, %v4867
      %v4914 = vadd.f32 %v4717, %v4899
      %v4915 = vadd.f32 %v4718, %v4870
      %v4916 = vadd.f32 %v4719, %v4902
      %v4917 = vadd.f32 %v4720, %v4873
      %v4918 = vadd.f32 %v4721, %v4905
      %v4919 = vadd.f32 %v4722, %v4876
      %v4920 = vadd.f32 %v4723, %v4908
      %v4921 = vadd.f32 %v4724, %v4879
      %v4922 = vadd.f32 %v4725, %v4911
      %s4923 = scalar_lea.vmem %s6, 1040
      %v4924 = vld [vmem:[%s4923] sm:$0xff]
      %v4925 = vld [vmem:[%s4923 + $0x8] sm:$0xff]
      %v4926 = vld [vmem:[%s4923 + $0x10] sm:$0xff]
      %v4927 = vld [vmem:[%s4923 + $0x18] sm:$0xff]
      %v4928 = vld [vmem:[%s4923 + $0x20] sm:$0xff]
      %v4929 = vld [vmem:[%s4923 + $0x28] sm:$0xff]
      %v4930 = vld [vmem:[%s4923 + $0x30] sm:$0xff]
      %v4931 = vld [vmem:[%s4923 + $0x38] sm:$0xff]
      %v4932 = vld [vmem:[%s4923 + $0x40] sm:$0xf]
      %v4933 = vld [vmem:[%s4923 + $0x48] sm:$0xf]
      %v4935 = vsel %vm2389, %v4925, 0
      %v4938 = vsel %vm2389, %v4927, 0
      %v4941 = vsel %vm2389, %v4929, 0
      %v4944 = vsel %vm2389, %v4931, 0
      %v4947 = vsel %vm2389, %v4933, 0
      %4949 = vmatpush.msra.mxu0 %v2365
      %4950 = vmatpush.msra.mxu0 %v2364
      %4951 = vmatpush.msra.mxu0 %v2363
      %4952 = vmatpush.msra.mxu0 %v2362
      %4953 = vmatpush.msra.mxu0 %v2361
      %4954 = vmatpush.msra.mxu0 %v2360
      %4955 = vmatpush.msra.mxu0 %v2359
      %4956 = vmatpush.msra.mxu0 %v2358
      %4957 = vmatpush.msra.mxu0 %v2357
      %4958 = vmatpush.msra.mxu0 %v2356
      %4959 = vmatpush.msra.mxu0 %v2355
      %4960 = vmatpush.msra.mxu0 %v2354
      %4961 = vmatpush.msra.mxu0 %v2353
      %4962 = vmatpush.msra.mxu0 %v2352
      %4963 = vmatpush.msra.mxu0 %v2351
      %4964 = vmatpush.msra.mxu0 %v2350
      %4965 = vmatmul.f32.gmra.mxu0 %v4924
      %v4966 = vpop.f32.mrf.mxu0
      %v4967 = vadd.f32 0.0, %v4966
      %4968 = vmatmul.f32.gmra.mxu0 %v4926
      %v4969 = vpop.f32.mrf.mxu0
      %v4970 = vadd.f32 0.0, %v4969
      %4971 = vmatmul.f32.gmra.mxu0 %v4928
      %v4972 = vpop.f32.mrf.mxu0
      %v4973 = vadd.f32 0.0, %v4972
      %4974 = vmatmul.f32.gmra.mxu0 %v4930
      %v4975 = vpop.f32.mrf.mxu0
      %v4976 = vadd.f32 0.0, %v4975
      %4977 = vmatmul.f32.gmra.mxu0 %v4932
      %v4978 = vpop.f32.mrf.mxu0
      %v4979 = vadd.f32 0.0, %v4978
      %4980 = vdwg.mxu0
      %4981 = vmatpush.msra.mxu0 0.0
      %4982 = vmatpush.msra.mxu0 0.0
      %4983 = vmatpush.msra.mxu0 0.0
      %4984 = vmatpush.msra.mxu0 %v2407
      %4985 = vmatpush.msra.mxu0 %v2377
      %4986 = vmatpush.msra.mxu0 %v2376
      %4987 = vmatpush.msra.mxu0 %v2375
      %4988 = vmatpush.msra.mxu0 %v2374
      %4989 = vmatpush.msra.mxu0 %v2373
      %4990 = vmatpush.msra.mxu0 %v2372
      %4991 = vmatpush.msra.mxu0 %v2371
      %4992 = vmatpush.msra.mxu0 %v2370
      %4993 = vmatpush.msra.mxu0 %v2369
      %4994 = vmatpush.msra.mxu0 %v2368
      %4995 = vmatpush.msra.mxu0 %v2367
      %4996 = vmatpush.msra.mxu0 %v2366
      %4997 = vmatmul.f32.gmra.mxu0 %v4935
      %v4998 = vpop.f32.mrf.mxu0
      %v4999 = vadd.f32 %v4967, %v4998
      %5000 = vmatmul.f32.gmra.mxu0 %v4938
      %v5001 = vpop.f32.mrf.mxu0
      %v5002 = vadd.f32 %v4970, %v5001
      %5003 = vmatmul.f32.gmra.mxu0 %v4941
      %v5004 = vpop.f32.mrf.mxu0
      %v5005 = vadd.f32 %v4973, %v5004
      %5006 = vmatmul.f32.gmra.mxu0 %v4944
      %v5007 = vpop.f32.mrf.mxu0
      %v5008 = vadd.f32 %v4976, %v5007
      %5009 = vmatmul.f32.gmra.mxu0 %v4947
      %v5010 = vpop.f32.mrf.mxu0
      %v5011 = vadd.f32 %v4979, %v5010
      %5012 = vdwg.mxu0
      %s5013 = scalar_lea.vmem %s4, 3328
      %v5014 = vld [vmem:[%s5013] sm:$0xff]
      %v5015 = vld [vmem:[%s5013 + $0x8] sm:$0xff]
      %v5016 = vld [vmem:[%s5013 + $0x10] sm:$0xff]
      %v5017 = vld [vmem:[%s5013 + $0x18] sm:$0xff]
      %v5018 = vld [vmem:[%s5013 + $0x20] sm:$0xff]
      %v5019 = vld [vmem:[%s5013 + $0x28] sm:$0xff]
      %v5020 = vld [vmem:[%s5013 + $0x30] sm:$0xff]
      %v5021 = vld [vmem:[%s5013 + $0x38] sm:$0xff]
      %v5022 = vld [vmem:[%s5013 + $0x40] sm:$0xff]
      %v5023 = vld [vmem:[%s5013 + $0x48] sm:$0xff]
      %v5024 = vld [vmem:[%s5013 + $0x50] sm:$0xff]
      %v5025 = vld [vmem:[%s5013 + $0x58] sm:$0xff]
      %v5026 = vld [vmem:[%s5013 + $0x60] sm:$0xff]
      %v5027 = vld [vmem:[%s5013 + $0x68] sm:$0xff]
      %v5028 = vld [vmem:[%s5013 + $0x70] sm:$0xff]
      %v5029 = vld [vmem:[%s5013 + $0x78] sm:$0xff]
      %v5030 = vld [vmem:[%s5013 + $0x80] sm:$0xff]
      %v5031 = vld [vmem:[%s5013 + $0x88] sm:$0xff]
      %v5032 = vld [vmem:[%s5013 + $0x90] sm:$0xff]
      %v5033 = vld [vmem:[%s5013 + $0x98] sm:$0xff]
      %v5034 = vld [vmem:[%s5013 + $0xa0] sm:$0xff]
      %v5035 = vld [vmem:[%s5013 + $0xa8] sm:$0xff]
      %v5036 = vld [vmem:[%s5013 + $0xb0] sm:$0xff]
      %v5037 = vld [vmem:[%s5013 + $0xb8] sm:$0xff]
      %v5038 = vld [vmem:[%s5013 + $0xc0] sm:$0xff]
      %v5039 = vld [vmem:[%s5013 + $0xc8] sm:$0xff]
      %v5040 = vld [vmem:[%s5013 + $0xd0] sm:$0xff]
      %v5041 = vld [vmem:[%s5013 + $0xd8] sm:$0xff]
      %v5042 = vld [vmem:[%s5013 + $0xe0] sm:$0xff]
      %v5043 = vld [vmem:[%s5013 + $0xe8] sm:$0xff]
      %v5044 = vld [vmem:[%s5013 + $0xf0] sm:$0xff]
      %v5045 = vld [vmem:[%s5013 + $0xf8] sm:$0xff]
      %5046 = vmatpush.msra.mxu0 %v5044
      %5047 = vmatpush.msra.mxu0 %v5042
      %5048 = vmatpush.msra.mxu0 %v5040
      %5049 = vmatpush.msra.mxu0 %v5038
      %5050 = vmatpush.msra.mxu0 %v5036
      %5051 = vmatpush.msra.mxu0 %v5034
      %5052 = vmatpush.msra.mxu0 %v5032
      %5053 = vmatpush.msra.mxu0 %v5030
      %5054 = vmatpush.msra.mxu0 %v5028
      %5055 = vmatpush.msra.mxu0 %v5026
      %5056 = vmatpush.msra.mxu0 %v5024
      %5057 = vmatpush.msra.mxu0 %v5022
      %5058 = vmatpush.msra.mxu0 %v5020
      %5059 = vmatpush.msra.mxu0 %v5018
      %5060 = vmatpush.msra.mxu0 %v5016
      %5061 = vmatpush.msra.mxu0 %v5014
      %5062 = vmatmul.f32.gmra.mxu0 %v4999
      %v5063 = vpop.f32.mrf.mxu0
      %v5064 = vadd.f32 0.0, %v5063
      %5065 = vmatmul.f32.gmra.mxu0 %v5002
      %v5066 = vpop.f32.mrf.mxu0
      %v5067 = vadd.f32 0.0, %v5066
      %5068 = vmatmul.f32.gmra.mxu0 %v5005
      %v5069 = vpop.f32.mrf.mxu0
      %v5070 = vadd.f32 0.0, %v5069
      %5071 = vmatmul.f32.gmra.mxu0 %v5008
      %v5072 = vpop.f32.mrf.mxu0
      %v5073 = vadd.f32 0.0, %v5072
      %5074 = vmatmul.f32.gmra.mxu0 %v5011
      %v5075 = vpop.f32.mrf.mxu0
      %v5076 = vadd.f32 0.0, %v5075
      %5077 = vdwg.mxu0
      %5078 = vmatpush.msra.mxu0 %v5045
      %5079 = vmatpush.msra.mxu0 %v5043
      %5080 = vmatpush.msra.mxu0 %v5041
      %5081 = vmatpush.msra.mxu0 %v5039
      %5082 = vmatpush.msra.mxu0 %v5037
      %5083 = vmatpush.msra.mxu0 %v5035
      %5084 = vmatpush.msra.mxu0 %v5033
      %5085 = vmatpush.msra.mxu0 %v5031
      %5086 = vmatpush.msra.mxu0 %v5029
      %5087 = vmatpush.msra.mxu0 %v5027
      %5088 = vmatpush.msra.mxu0 %v5025
      %5089 = vmatpush.msra.mxu0 %v5023
      %5090 = vmatpush.msra.mxu0 %v5021
      %5091 = vmatpush.msra.mxu0 %v5019
      %5092 = vmatpush.msra.mxu0 %v5017
      %5093 = vmatpush.msra.mxu0 %v5015
      %5094 = vmatmul.f32.gmra.mxu0 %v4999
      %v5095 = vpop.f32.mrf.mxu0
      %v5096 = vadd.f32 0.0, %v5095
      %5097 = vmatmul.f32.gmra.mxu0 %v5002
      %v5098 = vpop.f32.mrf.mxu0
      %v5099 = vadd.f32 0.0, %v5098
      %5100 = vmatmul.f32.gmra.mxu0 %v5005
      %v5101 = vpop.f32.mrf.mxu0
      %v5102 = vadd.f32 0.0, %v5101
      %5103 = vmatmul.f32.gmra.mxu0 %v5008
      %v5104 = vpop.f32.mrf.mxu0
      %v5105 = vadd.f32 0.0, %v5104
      %5106 = vmatmul.f32.gmra.mxu0 %v5011
      %v5107 = vpop.f32.mrf.mxu0
      %v5108 = vadd.f32 0.0, %v5107
      %5109 = vdwg.mxu0
      %v5110 = vadd.f32 %v4913, %v5064
      %v5111 = vadd.f32 %v4914, %v5096
      %v5112 = vadd.f32 %v4915, %v5067
      %v5113 = vadd.f32 %v4916, %v5099
      %v5114 = vadd.f32 %v4917, %v5070
      %v5115 = vadd.f32 %v4918, %v5102
      %v5116 = vadd.f32 %v4919, %v5073
      %v5117 = vadd.f32 %v4920, %v5105
      %v5118 = vadd.f32 %v4921, %v5076
      %v5119 = vadd.f32 %v4922, %v5108
      %s5120 = scalar_lea.vmem %s6, 1120
      %v5121 = vld [vmem:[%s5120] sm:$0xff]
      %v5122 = vld [vmem:[%s5120 + $0x8] sm:$0xff]
      %v5123 = vld [vmem:[%s5120 + $0x10] sm:$0xff]
      %v5124 = vld [vmem:[%s5120 + $0x18] sm:$0xff]
      %v5125 = vld [vmem:[%s5120 + $0x20] sm:$0xff]
      %v5126 = vld [vmem:[%s5120 + $0x28] sm:$0xff]
      %v5127 = vld [vmem:[%s5120 + $0x30] sm:$0xff]
      %v5128 = vld [vmem:[%s5120 + $0x38] sm:$0xff]
      %v5129 = vld [vmem:[%s5120 + $0x40] sm:$0xf]
      %v5130 = vld [vmem:[%s5120 + $0x48] sm:$0xf]
      %v5132 = vsel %vm2389, %v5122, 0
      %v5135 = vsel %vm2389, %v5124, 0
      %v5138 = vsel %vm2389, %v5126, 0
      %v5141 = vsel %vm2389, %v5128, 0
      %v5144 = vsel %vm2389, %v5130, 0
      %5146 = vmatpush.msra.mxu0 %v2365
      %5147 = vmatpush.msra.mxu0 %v2364
      %5148 = vmatpush.msra.mxu0 %v2363
      %5149 = vmatpush.msra.mxu0 %v2362
      %5150 = vmatpush.msra.mxu0 %v2361
      %5151 = vmatpush.msra.mxu0 %v2360
      %5152 = vmatpush.msra.mxu0 %v2359
      %5153 = vmatpush.msra.mxu0 %v2358
      %5154 = vmatpush.msra.mxu0 %v2357
      %5155 = vmatpush.msra.mxu0 %v2356
      %5156 = vmatpush.msra.mxu0 %v2355
      %5157 = vmatpush.msra.mxu0 %v2354
      %5158 = vmatpush.msra.mxu0 %v2353
      %5159 = vmatpush.msra.mxu0 %v2352
      %5160 = vmatpush.msra.mxu0 %v2351
      %5161 = vmatpush.msra.mxu0 %v2350
      %5162 = vmatmul.f32.gmra.mxu0 %v5121
      %v5163 = vpop.f32.mrf.mxu0
      %v5164 = vadd.f32 0.0, %v5163
      %5165 = vmatmul.f32.gmra.mxu0 %v5123
      %v5166 = vpop.f32.mrf.mxu0
      %v5167 = vadd.f32 0.0, %v5166
      %5168 = vmatmul.f32.gmra.mxu0 %v5125
      %v5169 = vpop.f32.mrf.mxu0
      %v5170 = vadd.f32 0.0, %v5169
      %5171 = vmatmul.f32.gmra.mxu0 %v5127
      %v5172 = vpop.f32.mrf.mxu0
      %v5173 = vadd.f32 0.0, %v5172
      %5174 = vmatmul.f32.gmra.mxu0 %v5129
      %v5175 = vpop.f32.mrf.mxu0
      %v5176 = vadd.f32 0.0, %v5175
      %5177 = vdwg.mxu0
      %5178 = vmatpush.msra.mxu0 0.0
      %5179 = vmatpush.msra.mxu0 0.0
      %5180 = vmatpush.msra.mxu0 0.0
      %5181 = vmatpush.msra.mxu0 %v2407
      %5182 = vmatpush.msra.mxu0 %v2377
      %5183 = vmatpush.msra.mxu0 %v2376
      %5184 = vmatpush.msra.mxu0 %v2375
      %5185 = vmatpush.msra.mxu0 %v2374
      %5186 = vmatpush.msra.mxu0 %v2373
      %5187 = vmatpush.msra.mxu0 %v2372
      %5188 = vmatpush.msra.mxu0 %v2371
      %5189 = vmatpush.msra.mxu0 %v2370
      %5190 = vmatpush.msra.mxu0 %v2369
      %5191 = vmatpush.msra.mxu0 %v2368
      %5192 = vmatpush.msra.mxu0 %v2367
      %5193 = vmatpush.msra.mxu0 %v2366
      %5194 = vmatmul.f32.gmra.mxu0 %v5132
      %v5195 = vpop.f32.mrf.mxu0
      %v5196 = vadd.f32 %v5164, %v5195
      %5197 = vmatmul.f32.gmra.mxu0 %v5135
      %v5198 = vpop.f32.mrf.mxu0
      %v5199 = vadd.f32 %v5167, %v5198
      %5200 = vmatmul.f32.gmra.mxu0 %v5138
      %v5201 = vpop.f32.mrf.mxu0
      %v5202 = vadd.f32 %v5170, %v5201
      %5203 = vmatmul.f32.gmra.mxu0 %v5141
      %v5204 = vpop.f32.mrf.mxu0
      %v5205 = vadd.f32 %v5173, %v5204
      %5206 = vmatmul.f32.gmra.mxu0 %v5144
      %v5207 = vpop.f32.mrf.mxu0
      %v5208 = vadd.f32 %v5176, %v5207
      %5209 = vdwg.mxu0
      %s5210 = scalar_lea.vmem %s4, 3584
      %v5211 = vld [vmem:[%s5210] sm:$0xff]
      %v5212 = vld [vmem:[%s5210 + $0x8] sm:$0xff]
      %v5213 = vld [vmem:[%s5210 + $0x10] sm:$0xff]
      %v5214 = vld [vmem:[%s5210 + $0x18] sm:$0xff]
      %v5215 = vld [vmem:[%s5210 + $0x20] sm:$0xff]
      %v5216 = vld [vmem:[%s5210 + $0x28] sm:$0xff]
      %v5217 = vld [vmem:[%s5210 + $0x30] sm:$0xff]
      %v5218 = vld [vmem:[%s5210 + $0x38] sm:$0xff]
      %v5219 = vld [vmem:[%s5210 + $0x40] sm:$0xff]
      %v5220 = vld [vmem:[%s5210 + $0x48] sm:$0xff]
      %v5221 = vld [vmem:[%s5210 + $0x50] sm:$0xff]
      %v5222 = vld [vmem:[%s5210 + $0x58] sm:$0xff]
      %v5223 = vld [vmem:[%s5210 + $0x60] sm:$0xff]
      %v5224 = vld [vmem:[%s5210 + $0x68] sm:$0xff]
      %v5225 = vld [vmem:[%s5210 + $0x70] sm:$0xff]
      %v5226 = vld [vmem:[%s5210 + $0x78] sm:$0xff]
      %v5227 = vld [vmem:[%s5210 + $0x80] sm:$0xff]
      %v5228 = vld [vmem:[%s5210 + $0x88] sm:$0xff]
      %v5229 = vld [vmem:[%s5210 + $0x90] sm:$0xff]
      %v5230 = vld [vmem:[%s5210 + $0x98] sm:$0xff]
      %v5231 = vld [vmem:[%s5210 + $0xa0] sm:$0xff]
      %v5232 = vld [vmem:[%s5210 + $0xa8] sm:$0xff]
      %v5233 = vld [vmem:[%s5210 + $0xb0] sm:$0xff]
      %v5234 = vld [vmem:[%s5210 + $0xb8] sm:$0xff]
      %v5235 = vld [vmem:[%s5210 + $0xc0] sm:$0xff]
      %v5236 = vld [vmem:[%s5210 + $0xc8] sm:$0xff]
      %v5237 = vld [vmem:[%s5210 + $0xd0] sm:$0xff]
      %v5238 = vld [vmem:[%s5210 + $0xd8] sm:$0xff]
      %v5239 = vld [vmem:[%s5210 + $0xe0] sm:$0xff]
      %v5240 = vld [vmem:[%s5210 + $0xe8] sm:$0xff]
      %v5241 = vld [vmem:[%s5210 + $0xf0] sm:$0xff]
      %v5242 = vld [vmem:[%s5210 + $0xf8] sm:$0xff]
      %5243 = vmatpush.msra.mxu0 %v5241
      %5244 = vmatpush.msra.mxu0 %v5239
      %5245 = vmatpush.msra.mxu0 %v5237
      %5246 = vmatpush.msra.mxu0 %v5235
      %5247 = vmatpush.msra.mxu0 %v5233
      %5248 = vmatpush.msra.mxu0 %v5231
      %5249 = vmatpush.msra.mxu0 %v5229
      %5250 = vmatpush.msra.mxu0 %v5227
      %5251 = vmatpush.msra.mxu0 %v5225
      %5252 = vmatpush.msra.mxu0 %v5223
      %5253 = vmatpush.msra.mxu0 %v5221
      %5254 = vmatpush.msra.mxu0 %v5219
      %5255 = vmatpush.msra.mxu0 %v5217
      %5256 = vmatpush.msra.mxu0 %v5215
      %5257 = vmatpush.msra.mxu0 %v5213
      %5258 = vmatpush.msra.mxu0 %v5211
      %5259 = vmatmul.f32.gmra.mxu0 %v5196
      %v5260 = vpop.f32.mrf.mxu0
      %v5261 = vadd.f32 0.0, %v5260
      %5262 = vmatmul.f32.gmra.mxu0 %v5199
      %v5263 = vpop.f32.mrf.mxu0
      %v5264 = vadd.f32 0.0, %v5263
      %5265 = vmatmul.f32.gmra.mxu0 %v5202
      %v5266 = vpop.f32.mrf.mxu0
      %v5267 = vadd.f32 0.0, %v5266
      %5268 = vmatmul.f32.gmra.mxu0 %v5205
      %v5269 = vpop.f32.mrf.mxu0
      %v5270 = vadd.f32 0.0, %v5269
      %5271 = vmatmul.f32.gmra.mxu0 %v5208
      %v5272 = vpop.f32.mrf.mxu0
      %v5273 = vadd.f32 0.0, %v5272
      %5274 = vdwg.mxu0
      %5275 = vmatpush.msra.mxu0 %v5242
      %5276 = vmatpush.msra.mxu0 %v5240
      %5277 = vmatpush.msra.mxu0 %v5238
      %5278 = vmatpush.msra.mxu0 %v5236
      %5279 = vmatpush.msra.mxu0 %v5234
      %5280 = vmatpush.msra.mxu0 %v5232
      %5281 = vmatpush.msra.mxu0 %v5230
      %5282 = vmatpush.msra.mxu0 %v5228
      %5283 = vmatpush.msra.mxu0 %v5226
      %5284 = vmatpush.msra.mxu0 %v5224
      %5285 = vmatpush.msra.mxu0 %v5222
      %5286 = vmatpush.msra.mxu0 %v5220
      %5287 = vmatpush.msra.mxu0 %v5218
      %5288 = vmatpush.msra.mxu0 %v5216
      %5289 = vmatpush.msra.mxu0 %v5214
      %5290 = vmatpush.msra.mxu0 %v5212
      %5291 = vmatmul.f32.gmra.mxu0 %v5196
      %v5292 = vpop.f32.mrf.mxu0
      %v5293 = vadd.f32 0.0, %v5292
      %5294 = vmatmul.f32.gmra.mxu0 %v5199
      %v5295 = vpop.f32.mrf.mxu0
      %v5296 = vadd.f32 0.0, %v5295
      %5297 = vmatmul.f32.gmra.mxu0 %v5202
      %v5298 = vpop.f32.mrf.mxu0
      %v5299 = vadd.f32 0.0, %v5298
      %5300 = vmatmul.f32.gmra.mxu0 %v5205
      %v5301 = vpop.f32.mrf.mxu0
      %v5302 = vadd.f32 0.0, %v5301
      %5303 = vmatmul.f32.gmra.mxu0 %v5208
      %v5304 = vpop.f32.mrf.mxu0
      %v5305 = vadd.f32 0.0, %v5304
      %5306 = vdwg.mxu0
      %v5307 = vadd.f32 %v5110, %v5261
      %v5308 = vadd.f32 %v5111, %v5293
      %v5309 = vadd.f32 %v5112, %v5264
      %v5310 = vadd.f32 %v5113, %v5296
      %v5311 = vadd.f32 %v5114, %v5267
      %v5312 = vadd.f32 %v5115, %v5299
      %v5313 = vadd.f32 %v5116, %v5270
      %v5314 = vadd.f32 %v5117, %v5302
      %v5315 = vadd.f32 %v5118, %v5273
      %v5316 = vadd.f32 %v5119, %v5305
      %s5317 = scalar_lea.vmem %s6, 1200
      %v5318 = vld [vmem:[%s5317] sm:$0xff]
      %v5319 = vld [vmem:[%s5317 + $0x8] sm:$0xff]
      %v5320 = vld [vmem:[%s5317 + $0x10] sm:$0xff]
      %v5321 = vld [vmem:[%s5317 + $0x18] sm:$0xff]
      %v5322 = vld [vmem:[%s5317 + $0x20] sm:$0xff]
      %v5323 = vld [vmem:[%s5317 + $0x28] sm:$0xff]
      %v5324 = vld [vmem:[%s5317 + $0x30] sm:$0xff]
      %v5325 = vld [vmem:[%s5317 + $0x38] sm:$0xff]
      %v5326 = vld [vmem:[%s5317 + $0x40] sm:$0xf]
      %v5327 = vld [vmem:[%s5317 + $0x48] sm:$0xf]
      %v5329 = vsel %vm2389, %v5319, 0
      %v5332 = vsel %vm2389, %v5321, 0
      %v5335 = vsel %vm2389, %v5323, 0
      %v5338 = vsel %vm2389, %v5325, 0
      %v5341 = vsel %vm2389, %v5327, 0
      %5343 = vmatpush.msra.mxu0 %v2365
      %5344 = vmatpush.msra.mxu0 %v2364
      %5345 = vmatpush.msra.mxu0 %v2363
      %5346 = vmatpush.msra.mxu0 %v2362
      %5347 = vmatpush.msra.mxu0 %v2361
      %5348 = vmatpush.msra.mxu0 %v2360
      %5349 = vmatpush.msra.mxu0 %v2359
      %5350 = vmatpush.msra.mxu0 %v2358
      %5351 = vmatpush.msra.mxu0 %v2357
      %5352 = vmatpush.msra.mxu0 %v2356
      %5353 = vmatpush.msra.mxu0 %v2355
      %5354 = vmatpush.msra.mxu0 %v2354
      %5355 = vmatpush.msra.mxu0 %v2353
      %5356 = vmatpush.msra.mxu0 %v2352
      %5357 = vmatpush.msra.mxu0 %v2351
      %5358 = vmatpush.msra.mxu0 %v2350
      %5359 = vmatmul.f32.gmra.mxu0 %v5318
      %v5360 = vpop.f32.mrf.mxu0
      %v5361 = vadd.f32 0.0, %v5360
      %5362 = vmatmul.f32.gmra.mxu0 %v5320
      %v5363 = vpop.f32.mrf.mxu0
      %v5364 = vadd.f32 0.0, %v5363
      %5365 = vmatmul.f32.gmra.mxu0 %v5322
      %v5366 = vpop.f32.mrf.mxu0
      %v5367 = vadd.f32 0.0, %v5366
      %5368 = vmatmul.f32.gmra.mxu0 %v5324
      %v5369 = vpop.f32.mrf.mxu0
      %v5370 = vadd.f32 0.0, %v5369
      %5371 = vmatmul.f32.gmra.mxu0 %v5326
      %v5372 = vpop.f32.mrf.mxu0
      %v5373 = vadd.f32 0.0, %v5372
      %5374 = vdwg.mxu0
      %5375 = vmatpush.msra.mxu0 0.0
      %5376 = vmatpush.msra.mxu0 0.0
      %5377 = vmatpush.msra.mxu0 0.0
      %5378 = vmatpush.msra.mxu0 %v2407
      %5379 = vmatpush.msra.mxu0 %v2377
      %5380 = vmatpush.msra.mxu0 %v2376
      %5381 = vmatpush.msra.mxu0 %v2375
      %5382 = vmatpush.msra.mxu0 %v2374
      %5383 = vmatpush.msra.mxu0 %v2373
      %5384 = vmatpush.msra.mxu0 %v2372
      %5385 = vmatpush.msra.mxu0 %v2371
      %5386 = vmatpush.msra.mxu0 %v2370
      %5387 = vmatpush.msra.mxu0 %v2369
      %5388 = vmatpush.msra.mxu0 %v2368
      %5389 = vmatpush.msra.mxu0 %v2367
      %5390 = vmatpush.msra.mxu0 %v2366
      %5391 = vmatmul.f32.gmra.mxu0 %v5329
      %v5392 = vpop.f32.mrf.mxu0
      %v5393 = vadd.f32 %v5361, %v5392
      %5394 = vmatmul.f32.gmra.mxu0 %v5332
      %v5395 = vpop.f32.mrf.mxu0
      %v5396 = vadd.f32 %v5364, %v5395
      %5397 = vmatmul.f32.gmra.mxu0 %v5335
      %v5398 = vpop.f32.mrf.mxu0
      %v5399 = vadd.f32 %v5367, %v5398
      %5400 = vmatmul.f32.gmra.mxu0 %v5338
      %v5401 = vpop.f32.mrf.mxu0
      %v5402 = vadd.f32 %v5370, %v5401
      %5403 = vmatmul.f32.gmra.mxu0 %v5341
      %v5404 = vpop.f32.mrf.mxu0
      %v5405 = vadd.f32 %v5373, %v5404
      %5406 = vdwg.mxu0
      %s5407 = scalar_lea.vmem %s4, 3840
      %v5408 = vld [vmem:[%s5407] sm:$0xff]
      %v5409 = vld [vmem:[%s5407 + $0x8] sm:$0xff]
      %v5410 = vld [vmem:[%s5407 + $0x10] sm:$0xff]
      %v5411 = vld [vmem:[%s5407 + $0x18] sm:$0xff]
      %v5412 = vld [vmem:[%s5407 + $0x20] sm:$0xff]
      %v5413 = vld [vmem:[%s5407 + $0x28] sm:$0xff]
      %v5414 = vld [vmem:[%s5407 + $0x30] sm:$0xff]
      %v5415 = vld [vmem:[%s5407 + $0x38] sm:$0xff]
      %v5416 = vld [vmem:[%s5407 + $0x40] sm:$0xff]
      %v5417 = vld [vmem:[%s5407 + $0x48] sm:$0xff]
      %v5418 = vld [vmem:[%s5407 + $0x50] sm:$0xff]
      %v5419 = vld [vmem:[%s5407 + $0x58] sm:$0xff]
      %v5420 = vld [vmem:[%s5407 + $0x60] sm:$0xff]
      %v5421 = vld [vmem:[%s5407 + $0x68] sm:$0xff]
      %v5422 = vld [vmem:[%s5407 + $0x70] sm:$0xff]
      %v5423 = vld [vmem:[%s5407 + $0x78] sm:$0xff]
      %v5424 = vld [vmem:[%s5407 + $0x80] sm:$0xff]
      %v5425 = vld [vmem:[%s5407 + $0x88] sm:$0xff]
      %v5426 = vld [vmem:[%s5407 + $0x90] sm:$0xff]
      %v5427 = vld [vmem:[%s5407 + $0x98] sm:$0xff]
      %v5428 = vld [vmem:[%s5407 + $0xa0] sm:$0xff]
      %v5429 = vld [vmem:[%s5407 + $0xa8] sm:$0xff]
      %v5430 = vld [vmem:[%s5407 + $0xb0] sm:$0xff]
      %v5431 = vld [vmem:[%s5407 + $0xb8] sm:$0xff]
      %v5432 = vld [vmem:[%s5407 + $0xc0] sm:$0xff]
      %v5433 = vld [vmem:[%s5407 + $0xc8] sm:$0xff]
      %v5434 = vld [vmem:[%s5407 + $0xd0] sm:$0xff]
      %v5435 = vld [vmem:[%s5407 + $0xd8] sm:$0xff]
      %v5436 = vld [vmem:[%s5407 + $0xe0] sm:$0xff]
      %v5437 = vld [vmem:[%s5407 + $0xe8] sm:$0xff]
      %v5438 = vld [vmem:[%s5407 + $0xf0] sm:$0xff]
      %v5439 = vld [vmem:[%s5407 + $0xf8] sm:$0xff]
      %5440 = vmatpush.msra.mxu0 %v5438
      %5441 = vmatpush.msra.mxu0 %v5436
      %5442 = vmatpush.msra.mxu0 %v5434
      %5443 = vmatpush.msra.mxu0 %v5432
      %5444 = vmatpush.msra.mxu0 %v5430
      %5445 = vmatpush.msra.mxu0 %v5428
      %5446 = vmatpush.msra.mxu0 %v5426
      %5447 = vmatpush.msra.mxu0 %v5424
      %5448 = vmatpush.msra.mxu0 %v5422
      %5449 = vmatpush.msra.mxu0 %v5420
      %5450 = vmatpush.msra.mxu0 %v5418
      %5451 = vmatpush.msra.mxu0 %v5416
      %5452 = vmatpush.msra.mxu0 %v5414
      %5453 = vmatpush.msra.mxu0 %v5412
      %5454 = vmatpush.msra.mxu0 %v5410
      %5455 = vmatpush.msra.mxu0 %v5408
      %5456 = vmatmul.f32.gmra.mxu0 %v5393
      %v5457 = vpop.f32.mrf.mxu0
      %v5458 = vadd.f32 0.0, %v5457
      %5459 = vmatmul.f32.gmra.mxu0 %v5396
      %v5460 = vpop.f32.mrf.mxu0
      %v5461 = vadd.f32 0.0, %v5460
      %5462 = vmatmul.f32.gmra.mxu0 %v5399
      %v5463 = vpop.f32.mrf.mxu0
      %v5464 = vadd.f32 0.0, %v5463
      %5465 = vmatmul.f32.gmra.mxu0 %v5402
      %v5466 = vpop.f32.mrf.mxu0
      %v5467 = vadd.f32 0.0, %v5466
      %5468 = vmatmul.f32.gmra.mxu0 %v5405
      %v5469 = vpop.f32.mrf.mxu0
      %v5470 = vadd.f32 0.0, %v5469
      %5471 = vdwg.mxu0
      %5472 = vmatpush.msra.mxu0 %v5439
      %5473 = vmatpush.msra.mxu0 %v5437
      %5474 = vmatpush.msra.mxu0 %v5435
      %5475 = vmatpush.msra.mxu0 %v5433
      %5476 = vmatpush.msra.mxu0 %v5431
      %5477 = vmatpush.msra.mxu0 %v5429
      %5478 = vmatpush.msra.mxu0 %v5427
      %5479 = vmatpush.msra.mxu0 %v5425
      %5480 = vmatpush.msra.mxu0 %v5423
      %5481 = vmatpush.msra.mxu0 %v5421
      %5482 = vmatpush.msra.mxu0 %v5419
      %5483 = vmatpush.msra.mxu0 %v5417
      %5484 = vmatpush.msra.mxu0 %v5415
      %5485 = vmatpush.msra.mxu0 %v5413
      %5486 = vmatpush.msra.mxu0 %v5411
      %5487 = vmatpush.msra.mxu0 %v5409
      %5488 = vmatmul.f32.gmra.mxu0 %v5393
      %v5489 = vpop.f32.mrf.mxu0
      %v5490 = vadd.f32 0.0, %v5489
      %5491 = vmatmul.f32.gmra.mxu0 %v5396
      %v5492 = vpop.f32.mrf.mxu0
      %v5493 = vadd.f32 0.0, %v5492
      %5494 = vmatmul.f32.gmra.mxu0 %v5399
      %v5495 = vpop.f32.mrf.mxu0
      %v5496 = vadd.f32 0.0, %v5495
      %5497 = vmatmul.f32.gmra.mxu0 %v5402
      %v5498 = vpop.f32.mrf.mxu0
      %v5499 = vadd.f32 0.0, %v5498
      %5500 = vmatmul.f32.gmra.mxu0 %v5405
      %v5501 = vpop.f32.mrf.mxu0
      %v5502 = vadd.f32 0.0, %v5501
      %5503 = vdwg.mxu0
      %v5504 = vadd.f32 %v5307, %v5458
      %v5505 = vadd.f32 %v5308, %v5490
      %v5506 = vadd.f32 %v5309, %v5461
      %v5507 = vadd.f32 %v5310, %v5493
      %v5508 = vadd.f32 %v5311, %v5464
      %v5509 = vadd.f32 %v5312, %v5496
      %v5510 = vadd.f32 %v5313, %v5467
      %v5511 = vadd.f32 %v5314, %v5499
      %v5512 = vadd.f32 %v5315, %v5470
      %v5513 = vadd.f32 %v5316, %v5502
      %v5514 = vld [vmem:[%s5] sm:$0x3]
      %v5516 = vperm.slane %v5514, 0
      %v5517 = vperm.slane %v5514, 1
      %v5520 = vadd.f32 %v5504, %v5516
      %v5521 = vadd.f32 %v5505, %v5517
      %v5522 = vadd.f32 %v5506, %v5516
      %v5523 = vadd.f32 %v5507, %v5517
      %v5524 = vadd.f32 %v5508, %v5516
      %v5525 = vadd.f32 %v5509, %v5517
      %v5526 = vadd.f32 %v5510, %v5516
      %v5527 = vadd.f32 %v5511, %v5517
      %v5528 = vadd.f32 %v5512, %v5516
      %v5529 = vadd.f32 %v5513, %v5517
      %v5530 = vmax.f32 %v5520, 0.0
      %v5531 = vmax.f32 %v5521, 0.0
      %v5532 = vmax.f32 %v5522, 0.0
      %v5533 = vmax.f32 %v5523, 0.0
      %v5534 = vmax.f32 %v5524, 0.0
      %v5535 = vmax.f32 %v5525, 0.0
      %v5536 = vmax.f32 %v5526, 0.0
      %v5537 = vmax.f32 %v5527, 0.0
      %v5538 = vmax.f32 %v5528, 0.0
      %v5539 = vmax.f32 %v5529, 0.0
      %v5540 = vld [vmem:[%s9] sm:$0xff]
      %v5541 = vld [vmem:[%s9 + $0x8] sm:$0xff]
      %vm5542 = vcmask 293888
      %v5544 = vsel %vm5542, %v5540, 0
      %v5547 = vsel %vm5542, %v5541, 0
      %vm5549 = vcmask 1043456
      %v5551 = vsel %vm5549, %v5538, 0
      %v5554 = vsel %vm5549, %v5539, 0
      %5556 = vmatpush.msra.mxu0 0.0
      %5557 = vmatpush.msra.mxu0 0.0
      %5558 = vmatpush.msra.mxu0 0.0
      %5559 = vmatpush.msra.mxu0 0.0
      %5560 = vmatpush.msra.mxu0 0.0
      %5561 = vmatpush.msra.mxu0 0.0
      %5562 = vmatpush.msra.mxu0 0.0
      %5563 = vmatpush.msra.mxu0 0.0
      %5564 = vmatpush.msra.mxu0 0.0
      %5565 = vmatpush.msra.mxu0 0.0
      %5566 = vmatpush.msra.mxu0 0.0
      %5567 = vmatpush.msra.mxu0 %v5551
      %5568 = vmatpush.msra.mxu0 %v5536
      %5569 = vmatpush.msra.mxu0 %v5534
      %5570 = vmatpush.msra.mxu0 %v5532
      %5571 = vmatpush.msra.mxu0 %v5530
      %5572 = vmatmul.f32.gmra.mxu0 %v5544
      %v5573 = vpop.f32.mrf.mxu0
      %v5574 = vadd.f32 0.0, %v5573
      %5575 = vmatmul.f32.gmra.mxu0 %v5547
      %v5576 = vpop.f32.mrf.mxu0
      %v5577 = vadd.f32 0.0, %v5576
      %5578 = vdwg.mxu0
      %5579 = vmatpush.msra.mxu0 0.0
      %5580 = vmatpush.msra.mxu0 0.0
      %5581 = vmatpush.msra.mxu0 0.0
      %5582 = vmatpush.msra.mxu0 0.0
      %5583 = vmatpush.msra.mxu0 0.0
      %5584 = vmatpush.msra.mxu0 0.0
      %5585 = vmatpush.msra.mxu0 0.0
      %5586 = vmatpush.msra.mxu0 0.0
      %5587 = vmatpush.msra.mxu0 0.0
      %5588 = vmatpush.msra.mxu0 0.0
      %5589 = vmatpush.msra.mxu0 0.0
      %5590 = vmatpush.msra.mxu0 %v5554
      %5591 = vmatpush.msra.mxu0 %v5537
      %5592 = vmatpush.msra.mxu0 %v5535
      %5593 = vmatpush.msra.mxu0 %v5533
      %5594 = vmatpush.msra.mxu0 %v5531
      %5595 = vmatmul.f32.gmra.mxu0 %v5544
      %v5596 = vpop.f32.mrf.mxu0
      %v5597 = vadd.f32 0.0, %v5596
      %5598 = vmatmul.f32.gmra.mxu0 %v5547
      %v5599 = vpop.f32.mrf.mxu0
      %v5600 = vadd.f32 0.0, %v5599
      %5601 = vdwg.mxu0
      %v5602 = vld [vmem:[%s7] sm:$0xff]
      %v5603 = vld [vmem:[%s7 + $0x8] sm:$0xff]
      %v5604 = vld [vmem:[%s7 + $0x10] sm:$0xff]
      %v5605 = vld [vmem:[%s7 + $0x18] sm:$0xff]
      %v5606 = vld [vmem:[%s7 + $0x20] sm:$0xff]
      %v5607 = vld [vmem:[%s7 + $0x28] sm:$0xff]
      %v5608 = vld [vmem:[%s7 + $0x30] sm:$0xff]
      %v5609 = vld [vmem:[%s7 + $0x38] sm:$0xff]
      %v5610 = vld [vmem:[%s7 + $0x40] sm:$0xff]
      %v5611 = vld [vmem:[%s7 + $0x48] sm:$0xff]
      %v5612 = vld [vmem:[%s7 + $0x50] sm:$0xff]
      %v5613 = vld [vmem:[%s7 + $0x58] sm:$0xff]
      %v5614 = vld [vmem:[%s7 + $0x60] sm:$0xff]
      %v5615 = vld [vmem:[%s7 + $0x68] sm:$0xff]
      %v5616 = vld [vmem:[%s7 + $0x70] sm:$0xff]
      %v5617 = vld [vmem:[%s7 + $0x78] sm:$0xff]
      %v5618 = vld [vmem:[%s7 + $0x80] sm:$0xff]
      %v5619 = vld [vmem:[%s7 + $0x88] sm:$0xff]
      %v5620 = vld [vmem:[%s7 + $0x90] sm:$0xff]
      %v5621 = vld [vmem:[%s7 + $0x98] sm:$0xff]
      %v5622 = vld [vmem:[%s7 + $0xa0] sm:$0xff]
      %v5623 = vld [vmem:[%s7 + $0xa8] sm:$0xff]
      %v5624 = vld [vmem:[%s7 + $0xb0] sm:$0xff]
      %v5625 = vld [vmem:[%s7 + $0xb8] sm:$0xff]
      %v5626 = vld [vmem:[%s7 + $0xc0] sm:$0xff]
      %v5627 = vld [vmem:[%s7 + $0xc8] sm:$0xff]
      %v5628 = vld [vmem:[%s7 + $0xd0] sm:$0xff]
      %v5629 = vld [vmem:[%s7 + $0xd8] sm:$0xff]
      %v5630 = vld [vmem:[%s7 + $0xe0] sm:$0xff]
      %v5631 = vld [vmem:[%s7 + $0xe8] sm:$0xff]
      %v5632 = vld [vmem:[%s7 + $0xf0] sm:$0xff]
      %v5633 = vld [vmem:[%s7 + $0xf8] sm:$0xff]
      %v5634 = vld [vmem:[%s7 + $0x100] sm:$0xff]
      %v5635 = vld [vmem:[%s7 + $0x108] sm:$0xff]
      %v5636 = vld [vmem:[%s7 + $0x110] sm:$0xff]
      %v5637 = vld [vmem:[%s7 + $0x118] sm:$0xff]
      %v5638 = vld [vmem:[%s7 + $0x120] sm:$0xff]
      %v5639 = vld [vmem:[%s7 + $0x128] sm:$0xff]
      %v5640 = vld [vmem:[%s7 + $0x130] sm:$0xff]
      %v5641 = vld [vmem:[%s7 + $0x138] sm:$0xff]
      %v5642 = vld [vmem:[%s7 + $0x140] sm:$0xff]
      %v5643 = vld [vmem:[%s7 + $0x148] sm:$0xff]
      %v5644 = vld [vmem:[%s7 + $0x150] sm:$0xff]
      %v5645 = vld [vmem:[%s7 + $0x158] sm:$0xff]
      %v5646 = vld [vmem:[%s7 + $0x160] sm:$0xff]
      %v5647 = vld [vmem:[%s7 + $0x168] sm:$0xff]
      %v5648 = vld [vmem:[%s7 + $0x170] sm:$0xff]
      %v5649 = vld [vmem:[%s7 + $0x178] sm:$0xff]
      %v5650 = vld [vmem:[%s7 + $0x180] sm:$0xff]
      %v5651 = vld [vmem:[%s7 + $0x188] sm:$0xff]
      %v5652 = vld [vmem:[%s7 + $0x190] sm:$0xff]
      %v5653 = vld [vmem:[%s7 + $0x198] sm:$0xff]
      %v5654 = vld [vmem:[%s7 + $0x1a0] sm:$0xff]
      %v5655 = vld [vmem:[%s7 + $0x1a8] sm:$0xff]
      %v5656 = vld [vmem:[%s7 + $0x1b0] sm:$0xff]
      %v5657 = vld [vmem:[%s7 + $0x1b8] sm:$0xff]
      %v5658 = vld [vmem:[%s7 + $0x1c0] sm:$0xff]
      %v5659 = vld [vmem:[%s7 + $0x1c8] sm:$0xff]
      %v5660 = vld [vmem:[%s7 + $0x1d0] sm:$0xff]
      %v5661 = vld [vmem:[%s7 + $0x1d8] sm:$0xff]
      %v5662 = vld [vmem:[%s7 + $0x1e0] sm:$0xff]
      %v5663 = vld [vmem:[%s7 + $0x1e8] sm:$0xff]
      %v5664 = vld [vmem:[%s7 + $0x1f0] sm:$0xff]
      %v5665 = vld [vmem:[%s7 + $0x1f8] sm:$0xff]
      %s5666 = scalar_lea.vmem %s9, 16
      %v5667 = vld [vmem:[%s5666] sm:$0xff]
      %v5668 = vld [vmem:[%s5666 + $0x8] sm:$0xff]
      %v5670 = vsel %vm5542, %v5667, 0
      %v5673 = vsel %vm5542, %v5668, 0
      %5675 = vmatpush.msra.mxu0 0.0
      %5676 = vmatpush.msra.mxu0 0.0
      %5677 = vmatpush.msra.mxu0 0.0
      %5678 = vmatpush.msra.mxu0 0.0
      %5679 = vmatpush.msra.mxu0 0.0
      %5680 = vmatpush.msra.mxu0 0.0
      %5681 = vmatpush.msra.mxu0 0.0
      %5682 = vmatpush.msra.mxu0 0.0
      %5683 = vmatpush.msra.mxu0 0.0
      %5684 = vmatpush.msra.mxu0 0.0
      %5685 = vmatpush.msra.mxu0 0.0
      %5686 = vmatpush.msra.mxu0 %v5551
      %5687 = vmatpush.msra.mxu0 %v5536
      %5688 = vmatpush.msra.mxu0 %v5534
      %5689 = vmatpush.msra.mxu0 %v5532
      %5690 = vmatpush.msra.mxu0 %v5530
      %5691 = vmatmul.f32.gmra.mxu0 %v5670
      %v5692 = vpop.f32.mrf.mxu0
      %v5693 = vadd.f32 0.0, %v5692
      %5694 = vmatmul.f32.gmra.mxu0 %v5673
      %v5695 = vpop.f32.mrf.mxu0
      %v5696 = vadd.f32 0.0, %v5695
      %5697 = vdwg.mxu0
      %5698 = vmatpush.msra.mxu0 0.0
      %5699 = vmatpush.msra.mxu0 0.0
      %5700 = vmatpush.msra.mxu0 0.0
      %5701 = vmatpush.msra.mxu0 0.0
      %5702 = vmatpush.msra.mxu0 0.0
      %5703 = vmatpush.msra.mxu0 0.0
      %5704 = vmatpush.msra.mxu0 0.0
      %5705 = vmatpush.msra.mxu0 0.0
      %5706 = vmatpush.msra.mxu0 0.0
      %5707 = vmatpush.msra.mxu0 0.0
      %5708 = vmatpush.msra.mxu0 0.0
      %5709 = vmatpush.msra.mxu0 %v5554
      %5710 = vmatpush.msra.mxu0 %v5537
      %5711 = vmatpush.msra.mxu0 %v5535
      %5712 = vmatpush.msra.mxu0 %v5533
      %5713 = vmatpush.msra.mxu0 %v5531
      %5714 = vmatmul.f32.gmra.mxu0 %v5670
      %v5715 = vpop.f32.mrf.mxu0
      %v5716 = vadd.f32 0.0, %v5715
      %5717 = vmatmul.f32.gmra.mxu0 %v5673
      %v5718 = vpop.f32.mrf.mxu0
      %v5719 = vadd.f32 0.0, %v5718
      %5720 = vdwg.mxu0
      %s5721 = scalar_lea.vmem %s7, 512
      %v5722 = vld [vmem:[%s5721] sm:$0xff]
      %v5723 = vld [vmem:[%s5721 + $0x8] sm:$0xff]
      %v5724 = vld [vmem:[%s5721 + $0x10] sm:$0xff]
      %v5725 = vld [vmem:[%s5721 + $0x18] sm:$0xff]
      %v5726 = vld [vmem:[%s5721 + $0x20] sm:$0xff]
      %v5727 = vld [vmem:[%s5721 + $0x28] sm:$0xff]
      %v5728 = vld [vmem:[%s5721 + $0x30] sm:$0xff]
      %v5729 = vld [vmem:[%s5721 + $0x38] sm:$0xff]
      %v5730 = vld [vmem:[%s5721 + $0x40] sm:$0xff]
      %v5731 = vld [vmem:[%s5721 + $0x48] sm:$0xff]
      %v5732 = vld [vmem:[%s5721 + $0x50] sm:$0xff]
      %v5733 = vld [vmem:[%s5721 + $0x58] sm:$0xff]
      %v5734 = vld [vmem:[%s5721 + $0x60] sm:$0xff]
      %v5735 = vld [vmem:[%s5721 + $0x68] sm:$0xff]
      %v5736 = vld [vmem:[%s5721 + $0x70] sm:$0xff]
      %v5737 = vld [vmem:[%s5721 + $0x78] sm:$0xff]
      %v5738 = vld [vmem:[%s5721 + $0x80] sm:$0xff]
      %v5739 = vld [vmem:[%s5721 + $0x88] sm:$0xff]
      %v5740 = vld [vmem:[%s5721 + $0x90] sm:$0xff]
      %v5741 = vld [vmem:[%s5721 + $0x98] sm:$0xff]
      %v5742 = vld [vmem:[%s5721 + $0xa0] sm:$0xff]
      %v5743 = vld [vmem:[%s5721 + $0xa8] sm:$0xff]
      %v5744 = vld [vmem:[%s5721 + $0xb0] sm:$0xff]
      %v5745 = vld [vmem:[%s5721 + $0xb8] sm:$0xff]
      %v5746 = vld [vmem:[%s5721 + $0xc0] sm:$0xff]
      %v5747 = vld [vmem:[%s5721 + $0xc8] sm:$0xff]
      %v5748 = vld [vmem:[%s5721 + $0xd0] sm:$0xff]
      %v5749 = vld [vmem:[%s5721 + $0xd8] sm:$0xff]
      %v5750 = vld [vmem:[%s5721 + $0xe0] sm:$0xff]
      %v5751 = vld [vmem:[%s5721 + $0xe8] sm:$0xff]
      %v5752 = vld [vmem:[%s5721 + $0xf0] sm:$0xff]
      %v5753 = vld [vmem:[%s5721 + $0xf8] sm:$0xff]
      %v5754 = vld [vmem:[%s5721 + $0x100] sm:$0xff]
      %v5755 = vld [vmem:[%s5721 + $0x108] sm:$0xff]
      %v5756 = vld [vmem:[%s5721 + $0x110] sm:$0xff]
      %v5757 = vld [vmem:[%s5721 + $0x118] sm:$0xff]
      %v5758 = vld [vmem:[%s5721 + $0x120] sm:$0xff]
      %v5759 = vld [vmem:[%s5721 + $0x128] sm:$0xff]
      %v5760 = vld [vmem:[%s5721 + $0x130] sm:$0xff]
      %v5761 = vld [vmem:[%s5721 + $0x138] sm:$0xff]
      %v5762 = vld [vmem:[%s5721 + $0x140] sm:$0xff]
      %v5763 = vld [vmem:[%s5721 + $0x148] sm:$0xff]
      %v5764 = vld [vmem:[%s5721 + $0x150] sm:$0xff]
      %v5765 = vld [vmem:[%s5721 + $0x158] sm:$0xff]
      %v5766 = vld [vmem:[%s5721 + $0x160] sm:$0xff]
      %v5767 = vld [vmem:[%s5721 + $0x168] sm:$0xff]
      %v5768 = vld [vmem:[%s5721 + $0x170] sm:$0xff]
      %v5769 = vld [vmem:[%s5721 + $0x178] sm:$0xff]
      %v5770 = vld [vmem:[%s5721 + $0x180] sm:$0xff]
      %v5771 = vld [vmem:[%s5721 + $0x188] sm:$0xff]
      %v5772 = vld [vmem:[%s5721 + $0x190] sm:$0xff]
      %v5773 = vld [vmem:[%s5721 + $0x198] sm:$0xff]
      %v5774 = vld [vmem:[%s5721 + $0x1a0] sm:$0xff]
      %v5775 = vld [vmem:[%s5721 + $0x1a8] sm:$0xff]
      %v5776 = vld [vmem:[%s5721 + $0x1b0] sm:$0xff]
      %v5777 = vld [vmem:[%s5721 + $0x1b8] sm:$0xff]
      %v5778 = vld [vmem:[%s5721 + $0x1c0] sm:$0xff]
      %v5779 = vld [vmem:[%s5721 + $0x1c8] sm:$0xff]
      %v5780 = vld [vmem:[%s5721 + $0x1d0] sm:$0xff]
      %v5781 = vld [vmem:[%s5721 + $0x1d8] sm:$0xff]
      %v5782 = vld [vmem:[%s5721 + $0x1e0] sm:$0xff]
      %v5783 = vld [vmem:[%s5721 + $0x1e8] sm:$0xff]
      %v5784 = vld [vmem:[%s5721 + $0x1f0] sm:$0xff]
      %v5785 = vld [vmem:[%s5721 + $0x1f8] sm:$0xff]
      %5786 = vmatpush.msra.mxu0 %v5752
      %5787 = vmatpush.msra.mxu0 %v5750
      %5788 = vmatpush.msra.mxu0 %v5748
      %5789 = vmatpush.msra.mxu0 %v5746
      %5790 = vmatpush.msra.mxu0 %v5744
      %5791 = vmatpush.msra.mxu0 %v5742
      %5792 = vmatpush.msra.mxu0 %v5740
      %5793 = vmatpush.msra.mxu0 %v5738
      %5794 = vmatpush.msra.mxu0 %v5736
      %5795 = vmatpush.msra.mxu0 %v5734
      %5796 = vmatpush.msra.mxu0 %v5732
      %5797 = vmatpush.msra.mxu0 %v5730
      %5798 = vmatpush.msra.mxu0 %v5728
      %5799 = vmatpush.msra.mxu0 %v5726
      %5800 = vmatpush.msra.mxu0 %v5724
      %5801 = vmatpush.msra.mxu0 %v5722
      %5802 = vmatmul.f32.gmra.mxu0 %v5693
      %v5803 = vpop.f32.mrf.mxu0
      %v5804 = vadd.f32 0.0, %v5803
      %5805 = vmatmul.f32.gmra.mxu0 %v5696
      %v5806 = vpop.f32.mrf.mxu0
      %v5807 = vadd.f32 0.0, %v5806
      %5808 = vdwg.mxu0
      %5809 = vmatpush.msra.mxu0 %v5784
      %5810 = vmatpush.msra.mxu0 %v5782
      %5811 = vmatpush.msra.mxu0 %v5780
      %5812 = vmatpush.msra.mxu0 %v5778
      %5813 = vmatpush.msra.mxu0 %v5776
      %5814 = vmatpush.msra.mxu0 %v5774
      %5815 = vmatpush.msra.mxu0 %v5772
      %5816 = vmatpush.msra.mxu0 %v5770
      %5817 = vmatpush.msra.mxu0 %v5768
      %5818 = vmatpush.msra.mxu0 %v5766
      %5819 = vmatpush.msra.mxu0 %v5764
      %5820 = vmatpush.msra.mxu0 %v5762
      %5821 = vmatpush.msra.mxu0 %v5760
      %5822 = vmatpush.msra.mxu0 %v5758
      %5823 = vmatpush.msra.mxu0 %v5756
      %5824 = vmatpush.msra.mxu0 %v5754
      %5825 = vmatmul.f32.gmra.mxu0 %v5716
      %v5826 = vpop.f32.mrf.mxu0
      %v5827 = vadd.f32 %v5804, %v5826
      %5828 = vmatmul.f32.gmra.mxu0 %v5719
      %v5829 = vpop.f32.mrf.mxu0
      %v5830 = vadd.f32 %v5807, %v5829
      %5831 = vdwg.mxu0
      %5832 = vmatpush.msra.mxu0 %v5753
      %5833 = vmatpush.msra.mxu0 %v5751
      %5834 = vmatpush.msra.mxu0 %v5749
      %5835 = vmatpush.msra.mxu0 %v5747
      %5836 = vmatpush.msra.mxu0 %v5745
      %5837 = vmatpush.msra.mxu0 %v5743
      %5838 = vmatpush.msra.mxu0 %v5741
      %5839 = vmatpush.msra.mxu0 %v5739
      %5840 = vmatpush.msra.mxu0 %v5737
      %5841 = vmatpush.msra.mxu0 %v5735
      %5842 = vmatpush.msra.mxu0 %v5733
      %5843 = vmatpush.msra.mxu0 %v5731
      %5844 = vmatpush.msra.mxu0 %v5729
      %5845 = vmatpush.msra.mxu0 %v5727
      %5846 = vmatpush.msra.mxu0 %v5725
      %5847 = vmatpush.msra.mxu0 %v5723
      %5848 = vmatmul.f32.gmra.mxu0 %v5693
      %v5849 = vpop.f32.mrf.mxu0
      %v5850 = vadd.f32 0.0, %v5849
      %5851 = vmatmul.f32.gmra.mxu0 %v5696
      %v5852 = vpop.f32.mrf.mxu0
      %v5853 = vadd.f32 0.0, %v5852
      %5854 = vdwg.mxu0
      %5855 = vmatpush.msra.mxu0 %v5785
      %5856 = vmatpush.msra.mxu0 %v5783
      %5857 = vmatpush.msra.mxu0 %v5781
      %5858 = vmatpush.msra.mxu0 %v5779
      %5859 = vmatpush.msra.mxu0 %v5777
      %5860 = vmatpush.msra.mxu0 %v5775
      %5861 = vmatpush.msra.mxu0 %v5773
      %5862 = vmatpush.msra.mxu0 %v5771
      %5863 = vmatpush.msra.mxu0 %v5769
      %5864 = vmatpush.msra.mxu0 %v5767
      %5865 = vmatpush.msra.mxu0 %v5765
      %5866 = vmatpush.msra.mxu0 %v5763
      %5867 = vmatpush.msra.mxu0 %v5761
      %5868 = vmatpush.msra.mxu0 %v5759
      %5869 = vmatpush.msra.mxu0 %v5757
      %5870 = vmatpush.msra.mxu0 %v5755
      %5871 = vmatmul.f32.gmra.mxu0 %v5716
      %v5872 = vpop.f32.mrf.mxu0
      %v5873 = vadd.f32 %v5850, %v5872
      %5874 = vmatmul.f32.gmra.mxu0 %v5719
      %v5875 = vpop.f32.mrf.mxu0
      %v5876 = vadd.f32 %v5853, %v5875
      %5877 = vdwg.mxu0
      %5878 = vmatpush.msra.mxu0 %v5632
      %5879 = vmatpush.msra.mxu0 %v5630
      %5880 = vmatpush.msra.mxu0 %v5628
      %5881 = vmatpush.msra.mxu0 %v5626
      %5882 = vmatpush.msra.mxu0 %v5624
      %5883 = vmatpush.msra.mxu0 %v5622
      %5884 = vmatpush.msra.mxu0 %v5620
      %5885 = vmatpush.msra.mxu0 %v5618
      %5886 = vmatpush.msra.mxu0 %v5616
      %5887 = vmatpush.msra.mxu0 %v5614
      %5888 = vmatpush.msra.mxu0 %v5612
      %5889 = vmatpush.msra.mxu0 %v5610
      %5890 = vmatpush.msra.mxu0 %v5608
      %5891 = vmatpush.msra.mxu0 %v5606
      %5892 = vmatpush.msra.mxu0 %v5604
      %5893 = vmatpush.msra.mxu0 %v5602
      %5894 = vmatmul.f32.gmra.mxu0 %v5574
      %v5895 = vpop.f32.mrf.mxu0
      %v5896 = vadd.f32 %v5827, %v5895
      %5897 = vmatmul.f32.gmra.mxu0 %v5577
      %v5898 = vpop.f32.mrf.mxu0
      %v5899 = vadd.f32 %v5830, %v5898
      %5900 = vdwg.mxu0
      %5901 = vmatpush.msra.mxu0 %v5664
      %5902 = vmatpush.msra.mxu0 %v5662
      %5903 = vmatpush.msra.mxu0 %v5660
      %5904 = vmatpush.msra.mxu0 %v5658
      %5905 = vmatpush.msra.mxu0 %v5656
      %5906 = vmatpush.msra.mxu0 %v5654
      %5907 = vmatpush.msra.mxu0 %v5652
      %5908 = vmatpush.msra.mxu0 %v5650
      %5909 = vmatpush.msra.mxu0 %v5648
      %5910 = vmatpush.msra.mxu0 %v5646
      %5911 = vmatpush.msra.mxu0 %v5644
      %5912 = vmatpush.msra.mxu0 %v5642
      %5913 = vmatpush.msra.mxu0 %v5640
      %5914 = vmatpush.msra.mxu0 %v5638
      %5915 = vmatpush.msra.mxu0 %v5636
      %5916 = vmatpush.msra.mxu0 %v5634
      %5917 = vmatmul.f32.gmra.mxu0 %v5597
      %v5918 = vpop.f32.mrf.mxu0
      %v5919 = vadd.f32 %v5896, %v5918
      %5920 = vmatmul.f32.gmra.mxu0 %v5600
      %v5921 = vpop.f32.mrf.mxu0
      %v5922 = vadd.f32 %v5899, %v5921
      %5923 = vdwg.mxu0
      %5924 = vmatpush.msra.mxu0 %v5633
      %5925 = vmatpush.msra.mxu0 %v5631
      %5926 = vmatpush.msra.mxu0 %v5629
      %5927 = vmatpush.msra.mxu0 %v5627
      %5928 = vmatpush.msra.mxu0 %v5625
      %5929 = vmatpush.msra.mxu0 %v5623
      %5930 = vmatpush.msra.mxu0 %v5621
      %5931 = vmatpush.msra.mxu0 %v5619
      %5932 = vmatpush.msra.mxu0 %v5617
      %5933 = vmatpush.msra.mxu0 %v5615
      %5934 = vmatpush.msra.mxu0 %v5613
      %5935 = vmatpush.msra.mxu0 %v5611
      %5936 = vmatpush.msra.mxu0 %v5609
      %5937 = vmatpush.msra.mxu0 %v5607
      %5938 = vmatpush.msra.mxu0 %v5605
      %5939 = vmatpush.msra.mxu0 %v5603
      %5940 = vmatmul.f32.gmra.mxu0 %v5574
      %v5941 = vpop.f32.mrf.mxu0
      %v5942 = vadd.f32 %v5873, %v5941
      %5943 = vmatmul.f32.gmra.mxu0 %v5577
      %v5944 = vpop.f32.mrf.mxu0
      %v5945 = vadd.f32 %v5876, %v5944
      %5946 = vdwg.mxu0
      %5947 = vmatpush.msra.mxu0 %v5665
      %5948 = vmatpush.msra.mxu0 %v5663
      %5949 = vmatpush.msra.mxu0 %v5661
      %5950 = vmatpush.msra.mxu0 %v5659
      %5951 = vmatpush.msra.mxu0 %v5657
      %5952 = vmatpush.msra.mxu0 %v5655
      %5953 = vmatpush.msra.mxu0 %v5653
      %5954 = vmatpush.msra.mxu0 %v5651
      %5955 = vmatpush.msra.mxu0 %v5649
      %5956 = vmatpush.msra.mxu0 %v5647
      %5957 = vmatpush.msra.mxu0 %v5645
      %5958 = vmatpush.msra.mxu0 %v5643
      %5959 = vmatpush.msra.mxu0 %v5641
      %5960 = vmatpush.msra.mxu0 %v5639
      %5961 = vmatpush.msra.mxu0 %v5637
      %5962 = vmatpush.msra.mxu0 %v5635
      %5963 = vmatmul.f32.gmra.mxu0 %v5597
      %v5964 = vpop.f32.mrf.mxu0
      %v5965 = vadd.f32 %v5942, %v5964
      %5966 = vmatmul.f32.gmra.mxu0 %v5600
      %v5967 = vpop.f32.mrf.mxu0
      %v5968 = vadd.f32 %v5945, %v5967
      %5969 = vdwg.mxu0
      %s5970 = scalar_lea.vmem %s9, 32
      %v5971 = vld [vmem:[%s5970] sm:$0xff]
      %v5972 = vld [vmem:[%s5970 + $0x8] sm:$0xff]
      %v5974 = vsel %vm5542, %v5971, 0
      %v5977 = vsel %vm5542, %v5972, 0
      %5979 = vmatpush.msra.mxu0 0.0
      %5980 = vmatpush.msra.mxu0 0.0
      %5981 = vmatpush.msra.mxu0 0.0
      %5982 = vmatpush.msra.mxu0 0.0
      %5983 = vmatpush.msra.mxu0 0.0
      %5984 = vmatpush.msra.mxu0 0.0
      %5985 = vmatpush.msra.mxu0 0.0
      %5986 = vmatpush.msra.mxu0 0.0
      %5987 = vmatpush.msra.mxu0 0.0
      %5988 = vmatpush.msra.mxu0 0.0
      %5989 = vmatpush.msra.mxu0 0.0
      %5990 = vmatpush.msra.mxu0 %v5551
      %5991 = vmatpush.msra.mxu0 %v5536
      %5992 = vmatpush.msra.mxu0 %v5534
      %5993 = vmatpush.msra.mxu0 %v5532
      %5994 = vmatpush.msra.mxu0 %v5530
      %5995 = vmatmul.f32.gmra.mxu0 %v5974
      %v5996 = vpop.f32.mrf.mxu0
      %v5997 = vadd.f32 0.0, %v5996
      %5998 = vmatmul.f32.gmra.mxu0 %v5977
      %v5999 = vpop.f32.mrf.mxu0
      %v6000 = vadd.f32 0.0, %v5999
      %6001 = vdwg.mxu0
      %6002 = vmatpush.msra.mxu0 0.0
      %6003 = vmatpush.msra.mxu0 0.0
      %6004 = vmatpush.msra.mxu0 0.0
      %6005 = vmatpush.msra.mxu0 0.0
      %6006 = vmatpush.msra.mxu0 0.0
      %6007 = vmatpush.msra.mxu0 0.0
      %6008 = vmatpush.msra.mxu0 0.0
      %6009 = vmatpush.msra.mxu0 0.0
      %6010 = vmatpush.msra.mxu0 0.0
      %6011 = vmatpush.msra.mxu0 0.0
      %6012 = vmatpush.msra.mxu0 0.0
      %6013 = vmatpush.msra.mxu0 %v5554
      %6014 = vmatpush.msra.mxu0 %v5537
      %6015 = vmatpush.msra.mxu0 %v5535
      %6016 = vmatpush.msra.mxu0 %v5533
      %6017 = vmatpush.msra.mxu0 %v5531
      %6018 = vmatmul.f32.gmra.mxu0 %v5974
      %v6019 = vpop.f32.mrf.mxu0
      %v6020 = vadd.f32 0.0, %v6019
      %6021 = vmatmul.f32.gmra.mxu0 %v5977
      %v6022 = vpop.f32.mrf.mxu0
      %v6023 = vadd.f32 0.0, %v6022
      %6024 = vdwg.mxu0
      %s6025 = scalar_lea.vmem %s7, 1024
      %v6026 = vld [vmem:[%s6025] sm:$0xff]
      %v6027 = vld [vmem:[%s6025 + $0x8] sm:$0xff]
      %v6028 = vld [vmem:[%s6025 + $0x10] sm:$0xff]
      %v6029 = vld [vmem:[%s6025 + $0x18] sm:$0xff]
      %v6030 = vld [vmem:[%s6025 + $0x20] sm:$0xff]
      %v6031 = vld [vmem:[%s6025 + $0x28] sm:$0xff]
      %v6032 = vld [vmem:[%s6025 + $0x30] sm:$0xff]
      %v6033 = vld [vmem:[%s6025 + $0x38] sm:$0xff]
      %v6034 = vld [vmem:[%s6025 + $0x40] sm:$0xff]
      %v6035 = vld [vmem:[%s6025 + $0x48] sm:$0xff]
      %v6036 = vld [vmem:[%s6025 + $0x50] sm:$0xff]
      %v6037 = vld [vmem:[%s6025 + $0x58] sm:$0xff]
      %v6038 = vld [vmem:[%s6025 + $0x60] sm:$0xff]
      %v6039 = vld [vmem:[%s6025 + $0x68] sm:$0xff]
      %v6040 = vld [vmem:[%s6025 + $0x70] sm:$0xff]
      %v6041 = vld [vmem:[%s6025 + $0x78] sm:$0xff]
      %v6042 = vld [vmem:[%s6025 + $0x80] sm:$0xff]
      %v6043 = vld [vmem:[%s6025 + $0x88] sm:$0xff]
      %v6044 = vld [vmem:[%s6025 + $0x90] sm:$0xff]
      %v6045 = vld [vmem:[%s6025 + $0x98] sm:$0xff]
      %v6046 = vld [vmem:[%s6025 + $0xa0] sm:$0xff]
      %v6047 = vld [vmem:[%s6025 + $0xa8] sm:$0xff]
      %v6048 = vld [vmem:[%s6025 + $0xb0] sm:$0xff]
      %v6049 = vld [vmem:[%s6025 + $0xb8] sm:$0xff]
      %v6050 = vld [vmem:[%s6025 + $0xc0] sm:$0xff]
      %v6051 = vld [vmem:[%s6025 + $0xc8] sm:$0xff]
      %v6052 = vld [vmem:[%s6025 + $0xd0] sm:$0xff]
      %v6053 = vld [vmem:[%s6025 + $0xd8] sm:$0xff]
      %v6054 = vld [vmem:[%s6025 + $0xe0] sm:$0xff]
      %v6055 = vld [vmem:[%s6025 + $0xe8] sm:$0xff]
      %v6056 = vld [vmem:[%s6025 + $0xf0] sm:$0xff]
      %v6057 = vld [vmem:[%s6025 + $0xf8] sm:$0xff]
      %v6058 = vld [vmem:[%s6025 + $0x100] sm:$0xff]
      %v6059 = vld [vmem:[%s6025 + $0x108] sm:$0xff]
      %v6060 = vld [vmem:[%s6025 + $0x110] sm:$0xff]
      %v6061 = vld [vmem:[%s6025 + $0x118] sm:$0xff]
      %v6062 = vld [vmem:[%s6025 + $0x120] sm:$0xff]
      %v6063 = vld [vmem:[%s6025 + $0x128] sm:$0xff]
      %v6064 = vld [vmem:[%s6025 + $0x130] sm:$0xff]
      %v6065 = vld [vmem:[%s6025 + $0x138] sm:$0xff]
      %v6066 = vld [vmem:[%s6025 + $0x140] sm:$0xff]
      %v6067 = vld [vmem:[%s6025 + $0x148] sm:$0xff]
      %v6068 = vld [vmem:[%s6025 + $0x150] sm:$0xff]
      %v6069 = vld [vmem:[%s6025 + $0x158] sm:$0xff]
      %v6070 = vld [vmem:[%s6025 + $0x160] sm:$0xff]
      %v6071 = vld [vmem:[%s6025 + $0x168] sm:$0xff]
      %v6072 = vld [vmem:[%s6025 + $0x170] sm:$0xff]
      %v6073 = vld [vmem:[%s6025 + $0x178] sm:$0xff]
      %v6074 = vld [vmem:[%s6025 + $0x180] sm:$0xff]
      %v6075 = vld [vmem:[%s6025 + $0x188] sm:$0xff]
      %v6076 = vld [vmem:[%s6025 + $0x190] sm:$0xff]
      %v6077 = vld [vmem:[%s6025 + $0x198] sm:$0xff]
      %v6078 = vld [vmem:[%s6025 + $0x1a0] sm:$0xff]
      %v6079 = vld [vmem:[%s6025 + $0x1a8] sm:$0xff]
      %v6080 = vld [vmem:[%s6025 + $0x1b0] sm:$0xff]
      %v6081 = vld [vmem:[%s6025 + $0x1b8] sm:$0xff]
      %v6082 = vld [vmem:[%s6025 + $0x1c0] sm:$0xff]
      %v6083 = vld [vmem:[%s6025 + $0x1c8] sm:$0xff]
      %v6084 = vld [vmem:[%s6025 + $0x1d0] sm:$0xff]
      %v6085 = vld [vmem:[%s6025 + $0x1d8] sm:$0xff]
      %v6086 = vld [vmem:[%s6025 + $0x1e0] sm:$0xff]
      %v6087 = vld [vmem:[%s6025 + $0x1e8] sm:$0xff]
      %v6088 = vld [vmem:[%s6025 + $0x1f0] sm:$0xff]
      %v6089 = vld [vmem:[%s6025 + $0x1f8] sm:$0xff]
      %6090 = vmatpush.msra.mxu0 %v6056
      %6091 = vmatpush.msra.mxu0 %v6054
      %6092 = vmatpush.msra.mxu0 %v6052
      %6093 = vmatpush.msra.mxu0 %v6050
      %6094 = vmatpush.msra.mxu0 %v6048
      %6095 = vmatpush.msra.mxu0 %v6046
      %6096 = vmatpush.msra.mxu0 %v6044
      %6097 = vmatpush.msra.mxu0 %v6042
      %6098 = vmatpush.msra.mxu0 %v6040
      %6099 = vmatpush.msra.mxu0 %v6038
      %6100 = vmatpush.msra.mxu0 %v6036
      %6101 = vmatpush.msra.mxu0 %v6034
      %6102 = vmatpush.msra.mxu0 %v6032
      %6103 = vmatpush.msra.mxu0 %v6030
      %6104 = vmatpush.msra.mxu0 %v6028
      %6105 = vmatpush.msra.mxu0 %v6026
      %6106 = vmatmul.f32.gmra.mxu0 %v5997
      %v6107 = vpop.f32.mrf.mxu0
      %v6108 = vadd.f32 0.0, %v6107
      %6109 = vmatmul.f32.gmra.mxu0 %v6000
      %v6110 = vpop.f32.mrf.mxu0
      %v6111 = vadd.f32 0.0, %v6110
      %6112 = vdwg.mxu0
      %6113 = vmatpush.msra.mxu0 %v6088
      %6114 = vmatpush.msra.mxu0 %v6086
      %6115 = vmatpush.msra.mxu0 %v6084
      %6116 = vmatpush.msra.mxu0 %v6082
      %6117 = vmatpush.msra.mxu0 %v6080
      %6118 = vmatpush.msra.mxu0 %v6078
      %6119 = vmatpush.msra.mxu0 %v6076
      %6120 = vmatpush.msra.mxu0 %v6074
      %6121 = vmatpush.msra.mxu0 %v6072
      %6122 = vmatpush.msra.mxu0 %v6070
      %6123 = vmatpush.msra.mxu0 %v6068
      %6124 = vmatpush.msra.mxu0 %v6066
      %6125 = vmatpush.msra.mxu0 %v6064
      %6126 = vmatpush.msra.mxu0 %v6062
      %6127 = vmatpush.msra.mxu0 %v6060
      %6128 = vmatpush.msra.mxu0 %v6058
      %6129 = vmatmul.f32.gmra.mxu0 %v6020
      %v6130 = vpop.f32.mrf.mxu0
      %v6131 = vadd.f32 %v6108, %v6130
      %6132 = vmatmul.f32.gmra.mxu0 %v6023
      %v6133 = vpop.f32.mrf.mxu0
      %v6134 = vadd.f32 %v6111, %v6133
      %6135 = vdwg.mxu0
      %6136 = vmatpush.msra.mxu0 %v6057
      %6137 = vmatpush.msra.mxu0 %v6055
      %6138 = vmatpush.msra.mxu0 %v6053
      %6139 = vmatpush.msra.mxu0 %v6051
      %6140 = vmatpush.msra.mxu0 %v6049
      %6141 = vmatpush.msra.mxu0 %v6047
      %6142 = vmatpush.msra.mxu0 %v6045
      %6143 = vmatpush.msra.mxu0 %v6043
      %6144 = vmatpush.msra.mxu0 %v6041
      %6145 = vmatpush.msra.mxu0 %v6039
      %6146 = vmatpush.msra.mxu0 %v6037
      %6147 = vmatpush.msra.mxu0 %v6035
      %6148 = vmatpush.msra.mxu0 %v6033
      %6149 = vmatpush.msra.mxu0 %v6031
      %6150 = vmatpush.msra.mxu0 %v6029
      %6151 = vmatpush.msra.mxu0 %v6027
      %6152 = vmatmul.f32.gmra.mxu0 %v5997
      %v6153 = vpop.f32.mrf.mxu0
      %v6154 = vadd.f32 0.0, %v6153
      %6155 = vmatmul.f32.gmra.mxu0 %v6000
      %v6156 = vpop.f32.mrf.mxu0
      %v6157 = vadd.f32 0.0, %v6156
      %6158 = vdwg.mxu0
      %6159 = vmatpush.msra.mxu0 %v6089
      %6160 = vmatpush.msra.mxu0 %v6087
      %6161 = vmatpush.msra.mxu0 %v6085
      %6162 = vmatpush.msra.mxu0 %v6083
      %6163 = vmatpush.msra.mxu0 %v6081
      %6164 = vmatpush.msra.mxu0 %v6079
      %6165 = vmatpush.msra.mxu0 %v6077
      %6166 = vmatpush.msra.mxu0 %v6075
      %6167 = vmatpush.msra.mxu0 %v6073
      %6168 = vmatpush.msra.mxu0 %v6071
      %6169 = vmatpush.msra.mxu0 %v6069
      %6170 = vmatpush.msra.mxu0 %v6067
      %6171 = vmatpush.msra.mxu0 %v6065
      %6172 = vmatpush.msra.mxu0 %v6063
      %6173 = vmatpush.msra.mxu0 %v6061
      %6174 = vmatpush.msra.mxu0 %v6059
      %6175 = vmatmul.f32.gmra.mxu0 %v6020
      %v6176 = vpop.f32.mrf.mxu0
      %v6177 = vadd.f32 %v6154, %v6176
      %6178 = vmatmul.f32.gmra.mxu0 %v6023
      %v6179 = vpop.f32.mrf.mxu0
      %v6180 = vadd.f32 %v6157, %v6179
      %6181 = vdwg.mxu0
      %v6182 = vadd.f32 %v5919, %v6131
      %v6183 = vadd.f32 %v5965, %v6177
      %v6184 = vadd.f32 %v5922, %v6134
      %v6185 = vadd.f32 %v5968, %v6180
      %s6186 = scalar_lea.vmem %s9, 48
      %v6187 = vld [vmem:[%s6186] sm:$0xff]
      %v6188 = vld [vmem:[%s6186 + $0x8] sm:$0xff]
      %v6190 = vsel %vm5542, %v6187, 0
      %v6193 = vsel %vm5542, %v6188, 0
      %6195 = vmatpush.msra.mxu0 0.0
      %6196 = vmatpush.msra.mxu0 0.0
      %6197 = vmatpush.msra.mxu0 0.0
      %6198 = vmatpush.msra.mxu0 0.0
      %6199 = vmatpush.msra.mxu0 0.0
      %6200 = vmatpush.msra.mxu0 0.0
      %6201 = vmatpush.msra.mxu0 0.0
      %6202 = vmatpush.msra.mxu0 0.0
      %6203 = vmatpush.msra.mxu0 0.0
      %6204 = vmatpush.msra.mxu0 0.0
      %6205 = vmatpush.msra.mxu0 0.0
      %6206 = vmatpush.msra.mxu0 %v5551
      %6207 = vmatpush.msra.mxu0 %v5536
      %6208 = vmatpush.msra.mxu0 %v5534
      %6209 = vmatpush.msra.mxu0 %v5532
      %6210 = vmatpush.msra.mxu0 %v5530
      %6211 = vmatmul.f32.gmra.mxu0 %v6190
      %v6212 = vpop.f32.mrf.mxu0
      %v6213 = vadd.f32 0.0, %v6212
      %6214 = vmatmul.f32.gmra.mxu0 %v6193
      %v6215 = vpop.f32.mrf.mxu0
      %v6216 = vadd.f32 0.0, %v6215
      %6217 = vdwg.mxu0
      %6218 = vmatpush.msra.mxu0 0.0
      %6219 = vmatpush.msra.mxu0 0.0
      %6220 = vmatpush.msra.mxu0 0.0
      %6221 = vmatpush.msra.mxu0 0.0
      %6222 = vmatpush.msra.mxu0 0.0
      %6223 = vmatpush.msra.mxu0 0.0
      %6224 = vmatpush.msra.mxu0 0.0
      %6225 = vmatpush.msra.mxu0 0.0
      %6226 = vmatpush.msra.mxu0 0.0
      %6227 = vmatpush.msra.mxu0 0.0
      %6228 = vmatpush.msra.mxu0 0.0
      %6229 = vmatpush.msra.mxu0 %v5554
      %6230 = vmatpush.msra.mxu0 %v5537
      %6231 = vmatpush.msra.mxu0 %v5535
      %6232 = vmatpush.msra.mxu0 %v5533
      %6233 = vmatpush.msra.mxu0 %v5531
      %6234 = vmatmul.f32.gmra.mxu0 %v6190
      %v6235 = vpop.f32.mrf.mxu0
      %v6236 = vadd.f32 0.0, %v6235
      %6237 = vmatmul.f32.gmra.mxu0 %v6193
      %v6238 = vpop.f32.mrf.mxu0
      %v6239 = vadd.f32 0.0, %v6238
      %6240 = vdwg.mxu0
      %s6241 = scalar_lea.vmem %s7, 1536
      %v6242 = vld [vmem:[%s6241] sm:$0xff]
      %v6243 = vld [vmem:[%s6241 + $0x8] sm:$0xff]
      %v6244 = vld [vmem:[%s6241 + $0x10] sm:$0xff]
      %v6245 = vld [vmem:[%s6241 + $0x18] sm:$0xff]
      %v6246 = vld [vmem:[%s6241 + $0x20] sm:$0xff]
      %v6247 = vld [vmem:[%s6241 + $0x28] sm:$0xff]
      %v6248 = vld [vmem:[%s6241 + $0x30] sm:$0xff]
      %v6249 = vld [vmem:[%s6241 + $0x38] sm:$0xff]
      %v6250 = vld [vmem:[%s6241 + $0x40] sm:$0xff]
      %v6251 = vld [vmem:[%s6241 + $0x48] sm:$0xff]
      %v6252 = vld [vmem:[%s6241 + $0x50] sm:$0xff]
      %v6253 = vld [vmem:[%s6241 + $0x58] sm:$0xff]
      %v6254 = vld [vmem:[%s6241 + $0x60] sm:$0xff]
      %v6255 = vld [vmem:[%s6241 + $0x68] sm:$0xff]
      %v6256 = vld [vmem:[%s6241 + $0x70] sm:$0xff]
      %v6257 = vld [vmem:[%s6241 + $0x78] sm:$0xff]
      %v6258 = vld [vmem:[%s6241 + $0x80] sm:$0xff]
      %v6259 = vld [vmem:[%s6241 + $0x88] sm:$0xff]
      %v6260 = vld [vmem:[%s6241 + $0x90] sm:$0xff]
      %v6261 = vld [vmem:[%s6241 + $0x98] sm:$0xff]
      %v6262 = vld [vmem:[%s6241 + $0xa0] sm:$0xff]
      %v6263 = vld [vmem:[%s6241 + $0xa8] sm:$0xff]
      %v6264 = vld [vmem:[%s6241 + $0xb0] sm:$0xff]
      %v6265 = vld [vmem:[%s6241 + $0xb8] sm:$0xff]
      %v6266 = vld [vmem:[%s6241 + $0xc0] sm:$0xff]
      %v6267 = vld [vmem:[%s6241 + $0xc8] sm:$0xff]
      %v6268 = vld [vmem:[%s6241 + $0xd0] sm:$0xff]
      %v6269 = vld [vmem:[%s6241 + $0xd8] sm:$0xff]
      %v6270 = vld [vmem:[%s6241 + $0xe0] sm:$0xff]
      %v6271 = vld [vmem:[%s6241 + $0xe8] sm:$0xff]
      %v6272 = vld [vmem:[%s6241 + $0xf0] sm:$0xff]
      %v6273 = vld [vmem:[%s6241 + $0xf8] sm:$0xff]
      %v6274 = vld [vmem:[%s6241 + $0x100] sm:$0xff]
      %v6275 = vld [vmem:[%s6241 + $0x108] sm:$0xff]
      %v6276 = vld [vmem:[%s6241 + $0x110] sm:$0xff]
      %v6277 = vld [vmem:[%s6241 + $0x118] sm:$0xff]
      %v6278 = vld [vmem:[%s6241 + $0x120] sm:$0xff]
      %v6279 = vld [vmem:[%s6241 + $0x128] sm:$0xff]
      %v6280 = vld [vmem:[%s6241 + $0x130] sm:$0xff]
      %v6281 = vld [vmem:[%s6241 + $0x138] sm:$0xff]
      %v6282 = vld [vmem:[%s6241 + $0x140] sm:$0xff]
      %v6283 = vld [vmem:[%s6241 + $0x148] sm:$0xff]
      %v6284 = vld [vmem:[%s6241 + $0x150] sm:$0xff]
      %v6285 = vld [vmem:[%s6241 + $0x158] sm:$0xff]
      %v6286 = vld [vmem:[%s6241 + $0x160] sm:$0xff]
      %v6287 = vld [vmem:[%s6241 + $0x168] sm:$0xff]
      %v6288 = vld [vmem:[%s6241 + $0x170] sm:$0xff]
      %v6289 = vld [vmem:[%s6241 + $0x178] sm:$0xff]
      %v6290 = vld [vmem:[%s6241 + $0x180] sm:$0xff]
      %v6291 = vld [vmem:[%s6241 + $0x188] sm:$0xff]
      %v6292 = vld [vmem:[%s6241 + $0x190] sm:$0xff]
      %v6293 = vld [vmem:[%s6241 + $0x198] sm:$0xff]
      %v6294 = vld [vmem:[%s6241 + $0x1a0] sm:$0xff]
      %v6295 = vld [vmem:[%s6241 + $0x1a8] sm:$0xff]
      %v6296 = vld [vmem:[%s6241 + $0x1b0] sm:$0xff]
      %v6297 = vld [vmem:[%s6241 + $0x1b8] sm:$0xff]
      %v6298 = vld [vmem:[%s6241 + $0x1c0] sm:$0xff]
      %v6299 = vld [vmem:[%s6241 + $0x1c8] sm:$0xff]
      %v6300 = vld [vmem:[%s6241 + $0x1d0] sm:$0xff]
      %v6301 = vld [vmem:[%s6241 + $0x1d8] sm:$0xff]
      %v6302 = vld [vmem:[%s6241 + $0x1e0] sm:$0xff]
      %v6303 = vld [vmem:[%s6241 + $0x1e8] sm:$0xff]
      %v6304 = vld [vmem:[%s6241 + $0x1f0] sm:$0xff]
      %v6305 = vld [vmem:[%s6241 + $0x1f8] sm:$0xff]
      %6306 = vmatpush.msra.mxu0 %v6272
      %6307 = vmatpush.msra.mxu0 %v6270
      %6308 = vmatpush.msra.mxu0 %v6268
      %6309 = vmatpush.msra.mxu0 %v6266
      %6310 = vmatpush.msra.mxu0 %v6264
      %6311 = vmatpush.msra.mxu0 %v6262
      %6312 = vmatpush.msra.mxu0 %v6260
      %6313 = vmatpush.msra.mxu0 %v6258
      %6314 = vmatpush.msra.mxu0 %v6256
      %6315 = vmatpush.msra.mxu0 %v6254
      %6316 = vmatpush.msra.mxu0 %v6252
      %6317 = vmatpush.msra.mxu0 %v6250
      %6318 = vmatpush.msra.mxu0 %v6248
      %6319 = vmatpush.msra.mxu0 %v6246
      %6320 = vmatpush.msra.mxu0 %v6244
      %6321 = vmatpush.msra.mxu0 %v6242
      %6322 = vmatmul.f32.gmra.mxu0 %v6213
      %v6323 = vpop.f32.mrf.mxu0
      %v6324 = vadd.f32 0.0, %v6323
      %6325 = vmatmul.f32.gmra.mxu0 %v6216
      %v6326 = vpop.f32.mrf.mxu0
      %v6327 = vadd.f32 0.0, %v6326
      %6328 = vdwg.mxu0
      %6329 = vmatpush.msra.mxu0 %v6304
      %6330 = vmatpush.msra.mxu0 %v6302
      %6331 = vmatpush.msra.mxu0 %v6300
      %6332 = vmatpush.msra.mxu0 %v6298
      %6333 = vmatpush.msra.mxu0 %v6296
      %6334 = vmatpush.msra.mxu0 %v6294
      %6335 = vmatpush.msra.mxu0 %v6292
      %6336 = vmatpush.msra.mxu0 %v6290
      %6337 = vmatpush.msra.mxu0 %v6288
      %6338 = vmatpush.msra.mxu0 %v6286
      %6339 = vmatpush.msra.mxu0 %v6284
      %6340 = vmatpush.msra.mxu0 %v6282
      %6341 = vmatpush.msra.mxu0 %v6280
      %6342 = vmatpush.msra.mxu0 %v6278
      %6343 = vmatpush.msra.mxu0 %v6276
      %6344 = vmatpush.msra.mxu0 %v6274
      %6345 = vmatmul.f32.gmra.mxu0 %v6236
      %v6346 = vpop.f32.mrf.mxu0
      %v6347 = vadd.f32 %v6324, %v6346
      %6348 = vmatmul.f32.gmra.mxu0 %v6239
      %v6349 = vpop.f32.mrf.mxu0
      %v6350 = vadd.f32 %v6327, %v6349
      %6351 = vdwg.mxu0
      %6352 = vmatpush.msra.mxu0 %v6273
      %6353 = vmatpush.msra.mxu0 %v6271
      %6354 = vmatpush.msra.mxu0 %v6269
      %6355 = vmatpush.msra.mxu0 %v6267
      %6356 = vmatpush.msra.mxu0 %v6265
      %6357 = vmatpush.msra.mxu0 %v6263
      %6358 = vmatpush.msra.mxu0 %v6261
      %6359 = vmatpush.msra.mxu0 %v6259
      %6360 = vmatpush.msra.mxu0 %v6257
      %6361 = vmatpush.msra.mxu0 %v6255
      %6362 = vmatpush.msra.mxu0 %v6253
      %6363 = vmatpush.msra.mxu0 %v6251
      %6364 = vmatpush.msra.mxu0 %v6249
      %6365 = vmatpush.msra.mxu0 %v6247
      %6366 = vmatpush.msra.mxu0 %v6245
      %6367 = vmatpush.msra.mxu0 %v6243
      %6368 = vmatmul.f32.gmra.mxu0 %v6213
      %v6369 = vpop.f32.mrf.mxu0
      %v6370 = vadd.f32 0.0, %v6369
      %6371 = vmatmul.f32.gmra.mxu0 %v6216
      %v6372 = vpop.f32.mrf.mxu0
      %v6373 = vadd.f32 0.0, %v6372
      %6374 = vdwg.mxu0
      %6375 = vmatpush.msra.mxu0 %v6305
      %6376 = vmatpush.msra.mxu0 %v6303
      %6377 = vmatpush.msra.mxu0 %v6301
      %6378 = vmatpush.msra.mxu0 %v6299
      %6379 = vmatpush.msra.mxu0 %v6297
      %6380 = vmatpush.msra.mxu0 %v6295
      %6381 = vmatpush.msra.mxu0 %v6293
      %6382 = vmatpush.msra.mxu0 %v6291
      %6383 = vmatpush.msra.mxu0 %v6289
      %6384 = vmatpush.msra.mxu0 %v6287
      %6385 = vmatpush.msra.mxu0 %v6285
      %6386 = vmatpush.msra.mxu0 %v6283
      %6387 = vmatpush.msra.mxu0 %v6281
      %6388 = vmatpush.msra.mxu0 %v6279
      %6389 = vmatpush.msra.mxu0 %v6277
      %6390 = vmatpush.msra.mxu0 %v6275
      %6391 = vmatmul.f32.gmra.mxu0 %v6236
      %v6392 = vpop.f32.mrf.mxu0
      %v6393 = vadd.f32 %v6370, %v6392
      %6394 = vmatmul.f32.gmra.mxu0 %v6239
      %v6395 = vpop.f32.mrf.mxu0
      %v6396 = vadd.f32 %v6373, %v6395
      %6397 = vdwg.mxu0
      %v6398 = vadd.f32 %v6182, %v6347
      %v6399 = vadd.f32 %v6183, %v6393
      %v6400 = vadd.f32 %v6184, %v6350
      %v6401 = vadd.f32 %v6185, %v6396
      %s6402 = scalar_lea.vmem %s9, 64
      %v6403 = vld [vmem:[%s6402] sm:$0xff]
      %v6404 = vld [vmem:[%s6402 + $0x8] sm:$0xff]
      %v6406 = vsel %vm5542, %v6403, 0
      %v6409 = vsel %vm5542, %v6404, 0
      %6411 = vmatpush.msra.mxu0 0.0
      %6412 = vmatpush.msra.mxu0 0.0
      %6413 = vmatpush.msra.mxu0 0.0
      %6414 = vmatpush.msra.mxu0 0.0
      %6415 = vmatpush.msra.mxu0 0.0
      %6416 = vmatpush.msra.mxu0 0.0
      %6417 = vmatpush.msra.mxu0 0.0
      %6418 = vmatpush.msra.mxu0 0.0
      %6419 = vmatpush.msra.mxu0 0.0
      %6420 = vmatpush.msra.mxu0 0.0
      %6421 = vmatpush.msra.mxu0 0.0
      %6422 = vmatpush.msra.mxu0 %v5551
      %6423 = vmatpush.msra.mxu0 %v5536
      %6424 = vmatpush.msra.mxu0 %v5534
      %6425 = vmatpush.msra.mxu0 %v5532
      %6426 = vmatpush.msra.mxu0 %v5530
      %6427 = vmatmul.f32.gmra.mxu0 %v6406
      %v6428 = vpop.f32.mrf.mxu0
      %v6429 = vadd.f32 0.0, %v6428
      %6430 = vmatmul.f32.gmra.mxu0 %v6409
      %v6431 = vpop.f32.mrf.mxu0
      %v6432 = vadd.f32 0.0, %v6431
      %6433 = vdwg.mxu0
      %6434 = vmatpush.msra.mxu0 0.0
      %6435 = vmatpush.msra.mxu0 0.0
      %6436 = vmatpush.msra.mxu0 0.0
      %6437 = vmatpush.msra.mxu0 0.0
      %6438 = vmatpush.msra.mxu0 0.0
      %6439 = vmatpush.msra.mxu0 0.0
      %6440 = vmatpush.msra.mxu0 0.0
      %6441 = vmatpush.msra.mxu0 0.0
      %6442 = vmatpush.msra.mxu0 0.0
      %6443 = vmatpush.msra.mxu0 0.0
      %6444 = vmatpush.msra.mxu0 0.0
      %6445 = vmatpush.msra.mxu0 %v5554
      %6446 = vmatpush.msra.mxu0 %v5537
      %6447 = vmatpush.msra.mxu0 %v5535
      %6448 = vmatpush.msra.mxu0 %v5533
      %6449 = vmatpush.msra.mxu0 %v5531
      %6450 = vmatmul.f32.gmra.mxu0 %v6406
      %v6451 = vpop.f32.mrf.mxu0
      %v6452 = vadd.f32 0.0, %v6451
      %6453 = vmatmul.f32.gmra.mxu0 %v6409
      %v6454 = vpop.f32.mrf.mxu0
      %v6455 = vadd.f32 0.0, %v6454
      %6456 = vdwg.mxu0
      %s6457 = scalar_lea.vmem %s7, 2048
      %v6458 = vld [vmem:[%s6457] sm:$0xff]
      %v6459 = vld [vmem:[%s6457 + $0x8] sm:$0xff]
      %v6460 = vld [vmem:[%s6457 + $0x10] sm:$0xff]
      %v6461 = vld [vmem:[%s6457 + $0x18] sm:$0xff]
      %v6462 = vld [vmem:[%s6457 + $0x20] sm:$0xff]
      %v6463 = vld [vmem:[%s6457 + $0x28] sm:$0xff]
      %v6464 = vld [vmem:[%s6457 + $0x30] sm:$0xff]
      %v6465 = vld [vmem:[%s6457 + $0x38] sm:$0xff]
      %v6466 = vld [vmem:[%s6457 + $0x40] sm:$0xff]
      %v6467 = vld [vmem:[%s6457 + $0x48] sm:$0xff]
      %v6468 = vld [vmem:[%s6457 + $0x50] sm:$0xff]
      %v6469 = vld [vmem:[%s6457 + $0x58] sm:$0xff]
      %v6470 = vld [vmem:[%s6457 + $0x60] sm:$0xff]
      %v6471 = vld [vmem:[%s6457 + $0x68] sm:$0xff]
      %v6472 = vld [vmem:[%s6457 + $0x70] sm:$0xff]
      %v6473 = vld [vmem:[%s6457 + $0x78] sm:$0xff]
      %v6474 = vld [vmem:[%s6457 + $0x80] sm:$0xff]
      %v6475 = vld [vmem:[%s6457 + $0x88] sm:$0xff]
      %v6476 = vld [vmem:[%s6457 + $0x90] sm:$0xff]
      %v6477 = vld [vmem:[%s6457 + $0x98] sm:$0xff]
      %v6478 = vld [vmem:[%s6457 + $0xa0] sm:$0xff]
      %v6479 = vld [vmem:[%s6457 + $0xa8] sm:$0xff]
      %v6480 = vld [vmem:[%s6457 + $0xb0] sm:$0xff]
      %v6481 = vld [vmem:[%s6457 + $0xb8] sm:$0xff]
      %v6482 = vld [vmem:[%s6457 + $0xc0] sm:$0xff]
      %v6483 = vld [vmem:[%s6457 + $0xc8] sm:$0xff]
      %v6484 = vld [vmem:[%s6457 + $0xd0] sm:$0xff]
      %v6485 = vld [vmem:[%s6457 + $0xd8] sm:$0xff]
      %v6486 = vld [vmem:[%s6457 + $0xe0] sm:$0xff]
      %v6487 = vld [vmem:[%s6457 + $0xe8] sm:$0xff]
      %v6488 = vld [vmem:[%s6457 + $0xf0] sm:$0xff]
      %v6489 = vld [vmem:[%s6457 + $0xf8] sm:$0xff]
      %v6490 = vld [vmem:[%s6457 + $0x100] sm:$0xff]
      %v6491 = vld [vmem:[%s6457 + $0x108] sm:$0xff]
      %v6492 = vld [vmem:[%s6457 + $0x110] sm:$0xff]
      %v6493 = vld [vmem:[%s6457 + $0x118] sm:$0xff]
      %v6494 = vld [vmem:[%s6457 + $0x120] sm:$0xff]
      %v6495 = vld [vmem:[%s6457 + $0x128] sm:$0xff]
      %v6496 = vld [vmem:[%s6457 + $0x130] sm:$0xff]
      %v6497 = vld [vmem:[%s6457 + $0x138] sm:$0xff]
      %v6498 = vld [vmem:[%s6457 + $0x140] sm:$0xff]
      %v6499 = vld [vmem:[%s6457 + $0x148] sm:$0xff]
      %v6500 = vld [vmem:[%s6457 + $0x150] sm:$0xff]
      %v6501 = vld [vmem:[%s6457 + $0x158] sm:$0xff]
      %v6502 = vld [vmem:[%s6457 + $0x160] sm:$0xff]
      %v6503 = vld [vmem:[%s6457 + $0x168] sm:$0xff]
      %v6504 = vld [vmem:[%s6457 + $0x170] sm:$0xff]
      %v6505 = vld [vmem:[%s6457 + $0x178] sm:$0xff]
      %v6506 = vld [vmem:[%s6457 + $0x180] sm:$0xff]
      %v6507 = vld [vmem:[%s6457 + $0x188] sm:$0xff]
      %v6508 = vld [vmem:[%s6457 + $0x190] sm:$0xff]
      %v6509 = vld [vmem:[%s6457 + $0x198] sm:$0xff]
      %v6510 = vld [vmem:[%s6457 + $0x1a0] sm:$0xff]
      %v6511 = vld [vmem:[%s6457 + $0x1a8] sm:$0xff]
      %v6512 = vld [vmem:[%s6457 + $0x1b0] sm:$0xff]
      %v6513 = vld [vmem:[%s6457 + $0x1b8] sm:$0xff]
      %v6514 = vld [vmem:[%s6457 + $0x1c0] sm:$0xff]
      %v6515 = vld [vmem:[%s6457 + $0x1c8] sm:$0xff]
      %v6516 = vld [vmem:[%s6457 + $0x1d0] sm:$0xff]
      %v6517 = vld [vmem:[%s6457 + $0x1d8] sm:$0xff]
      %v6518 = vld [vmem:[%s6457 + $0x1e0] sm:$0xff]
      %v6519 = vld [vmem:[%s6457 + $0x1e8] sm:$0xff]
      %v6520 = vld [vmem:[%s6457 + $0x1f0] sm:$0xff]
      %v6521 = vld [vmem:[%s6457 + $0x1f8] sm:$0xff]
      %6522 = vmatpush.msra.mxu0 %v6488
      %6523 = vmatpush.msra.mxu0 %v6486
      %6524 = vmatpush.msra.mxu0 %v6484
      %6525 = vmatpush.msra.mxu0 %v6482
      %6526 = vmatpush.msra.mxu0 %v6480
      %6527 = vmatpush.msra.mxu0 %v6478
      %6528 = vmatpush.msra.mxu0 %v6476
      %6529 = vmatpush.msra.mxu0 %v6474
      %6530 = vmatpush.msra.mxu0 %v6472
      %6531 = vmatpush.msra.mxu0 %v6470
      %6532 = vmatpush.msra.mxu0 %v6468
      %6533 = vmatpush.msra.mxu0 %v6466
      %6534 = vmatpush.msra.mxu0 %v6464
      %6535 = vmatpush.msra.mxu0 %v6462
      %6536 = vmatpush.msra.mxu0 %v6460
      %6537 = vmatpush.msra.mxu0 %v6458
      %6538 = vmatmul.f32.gmra.mxu0 %v6429
      %v6539 = vpop.f32.mrf.mxu0
      %v6540 = vadd.f32 0.0, %v6539
      %6541 = vmatmul.f32.gmra.mxu0 %v6432
      %v6542 = vpop.f32.mrf.mxu0
      %v6543 = vadd.f32 0.0, %v6542
      %6544 = vdwg.mxu0
      %6545 = vmatpush.msra.mxu0 %v6520
      %6546 = vmatpush.msra.mxu0 %v6518
      %6547 = vmatpush.msra.mxu0 %v6516
      %6548 = vmatpush.msra.mxu0 %v6514
      %6549 = vmatpush.msra.mxu0 %v6512
      %6550 = vmatpush.msra.mxu0 %v6510
      %6551 = vmatpush.msra.mxu0 %v6508
      %6552 = vmatpush.msra.mxu0 %v6506
      %6553 = vmatpush.msra.mxu0 %v6504
      %6554 = vmatpush.msra.mxu0 %v6502
      %6555 = vmatpush.msra.mxu0 %v6500
      %6556 = vmatpush.msra.mxu0 %v6498
      %6557 = vmatpush.msra.mxu0 %v6496
      %6558 = vmatpush.msra.mxu0 %v6494
      %6559 = vmatpush.msra.mxu0 %v6492
      %6560 = vmatpush.msra.mxu0 %v6490
      %6561 = vmatmul.f32.gmra.mxu0 %v6452
      %v6562 = vpop.f32.mrf.mxu0
      %v6563 = vadd.f32 %v6540, %v6562
      %6564 = vmatmul.f32.gmra.mxu0 %v6455
      %v6565 = vpop.f32.mrf.mxu0
      %v6566 = vadd.f32 %v6543, %v6565
      %6567 = vdwg.mxu0
      %6568 = vmatpush.msra.mxu0 %v6489
      %6569 = vmatpush.msra.mxu0 %v6487
      %6570 = vmatpush.msra.mxu0 %v6485
      %6571 = vmatpush.msra.mxu0 %v6483
      %6572 = vmatpush.msra.mxu0 %v6481
      %6573 = vmatpush.msra.mxu0 %v6479
      %6574 = vmatpush.msra.mxu0 %v6477
      %6575 = vmatpush.msra.mxu0 %v6475
      %6576 = vmatpush.msra.mxu0 %v6473
      %6577 = vmatpush.msra.mxu0 %v6471
      %6578 = vmatpush.msra.mxu0 %v6469
      %6579 = vmatpush.msra.mxu0 %v6467
      %6580 = vmatpush.msra.mxu0 %v6465
      %6581 = vmatpush.msra.mxu0 %v6463
      %6582 = vmatpush.msra.mxu0 %v6461
      %6583 = vmatpush.msra.mxu0 %v6459
      %6584 = vmatmul.f32.gmra.mxu0 %v6429
      %v6585 = vpop.f32.mrf.mxu0
      %v6586 = vadd.f32 0.0, %v6585
      %6587 = vmatmul.f32.gmra.mxu0 %v6432
      %v6588 = vpop.f32.mrf.mxu0
      %v6589 = vadd.f32 0.0, %v6588
      %6590 = vdwg.mxu0
      %6591 = vmatpush.msra.mxu0 %v6521
      %6592 = vmatpush.msra.mxu0 %v6519
      %6593 = vmatpush.msra.mxu0 %v6517
      %6594 = vmatpush.msra.mxu0 %v6515
      %6595 = vmatpush.msra.mxu0 %v6513
      %6596 = vmatpush.msra.mxu0 %v6511
      %6597 = vmatpush.msra.mxu0 %v6509
      %6598 = vmatpush.msra.mxu0 %v6507
      %6599 = vmatpush.msra.mxu0 %v6505
      %6600 = vmatpush.msra.mxu0 %v6503
      %6601 = vmatpush.msra.mxu0 %v6501
      %6602 = vmatpush.msra.mxu0 %v6499
      %6603 = vmatpush.msra.mxu0 %v6497
      %6604 = vmatpush.msra.mxu0 %v6495
      %6605 = vmatpush.msra.mxu0 %v6493
      %6606 = vmatpush.msra.mxu0 %v6491
      %6607 = vmatmul.f32.gmra.mxu0 %v6452
      %v6608 = vpop.f32.mrf.mxu0
      %v6609 = vadd.f32 %v6586, %v6608
      %6610 = vmatmul.f32.gmra.mxu0 %v6455
      %v6611 = vpop.f32.mrf.mxu0
      %v6612 = vadd.f32 %v6589, %v6611
      %6613 = vdwg.mxu0
      %v6614 = vadd.f32 %v6398, %v6563
      %v6615 = vadd.f32 %v6399, %v6609
      %v6616 = vadd.f32 %v6400, %v6566
      %v6617 = vadd.f32 %v6401, %v6612
      %s6618 = scalar_lea.vmem %s9, 80
      %v6619 = vld [vmem:[%s6618] sm:$0xff]
      %v6620 = vld [vmem:[%s6618 + $0x8] sm:$0xff]
      %v6622 = vsel %vm5542, %v6619, 0
      %v6625 = vsel %vm5542, %v6620, 0
      %6627 = vmatpush.msra.mxu0 0.0
      %6628 = vmatpush.msra.mxu0 0.0
      %6629 = vmatpush.msra.mxu0 0.0
      %6630 = vmatpush.msra.mxu0 0.0
      %6631 = vmatpush.msra.mxu0 0.0
      %6632 = vmatpush.msra.mxu0 0.0
      %6633 = vmatpush.msra.mxu0 0.0
      %6634 = vmatpush.msra.mxu0 0.0
      %6635 = vmatpush.msra.mxu0 0.0
      %6636 = vmatpush.msra.mxu0 0.0
      %6637 = vmatpush.msra.mxu0 0.0
      %6638 = vmatpush.msra.mxu0 %v5551
      %6639 = vmatpush.msra.mxu0 %v5536
      %6640 = vmatpush.msra.mxu0 %v5534
      %6641 = vmatpush.msra.mxu0 %v5532
      %6642 = vmatpush.msra.mxu0 %v5530
      %6643 = vmatmul.f32.gmra.mxu0 %v6622
      %v6644 = vpop.f32.mrf.mxu0
      %v6645 = vadd.f32 0.0, %v6644
      %6646 = vmatmul.f32.gmra.mxu0 %v6625
      %v6647 = vpop.f32.mrf.mxu0
      %v6648 = vadd.f32 0.0, %v6647
      %6649 = vdwg.mxu0
      %6650 = vmatpush.msra.mxu0 0.0
      %6651 = vmatpush.msra.mxu0 0.0
      %6652 = vmatpush.msra.mxu0 0.0
      %6653 = vmatpush.msra.mxu0 0.0
      %6654 = vmatpush.msra.mxu0 0.0
      %6655 = vmatpush.msra.mxu0 0.0
      %6656 = vmatpush.msra.mxu0 0.0
      %6657 = vmatpush.msra.mxu0 0.0
      %6658 = vmatpush.msra.mxu0 0.0
      %6659 = vmatpush.msra.mxu0 0.0
      %6660 = vmatpush.msra.mxu0 0.0
      %6661 = vmatpush.msra.mxu0 %v5554
      %6662 = vmatpush.msra.mxu0 %v5537
      %6663 = vmatpush.msra.mxu0 %v5535
      %6664 = vmatpush.msra.mxu0 %v5533
      %6665 = vmatpush.msra.mxu0 %v5531
      %6666 = vmatmul.f32.gmra.mxu0 %v6622
      %v6667 = vpop.f32.mrf.mxu0
      %v6668 = vadd.f32 0.0, %v6667
      %6669 = vmatmul.f32.gmra.mxu0 %v6625
      %v6670 = vpop.f32.mrf.mxu0
      %v6671 = vadd.f32 0.0, %v6670
      %6672 = vdwg.mxu0
      %s6673 = scalar_lea.vmem %s7, 2560
      %v6674 = vld [vmem:[%s6673] sm:$0xff]
      %v6675 = vld [vmem:[%s6673 + $0x8] sm:$0xff]
      %v6676 = vld [vmem:[%s6673 + $0x10] sm:$0xff]
      %v6677 = vld [vmem:[%s6673 + $0x18] sm:$0xff]
      %v6678 = vld [vmem:[%s6673 + $0x20] sm:$0xff]
      %v6679 = vld [vmem:[%s6673 + $0x28] sm:$0xff]
      %v6680 = vld [vmem:[%s6673 + $0x30] sm:$0xff]
      %v6681 = vld [vmem:[%s6673 + $0x38] sm:$0xff]
      %v6682 = vld [vmem:[%s6673 + $0x40] sm:$0xff]
      %v6683 = vld [vmem:[%s6673 + $0x48] sm:$0xff]
      %v6684 = vld [vmem:[%s6673 + $0x50] sm:$0xff]
      %v6685 = vld [vmem:[%s6673 + $0x58] sm:$0xff]
      %v6686 = vld [vmem:[%s6673 + $0x60] sm:$0xff]
      %v6687 = vld [vmem:[%s6673 + $0x68] sm:$0xff]
      %v6688 = vld [vmem:[%s6673 + $0x70] sm:$0xff]
      %v6689 = vld [vmem:[%s6673 + $0x78] sm:$0xff]
      %v6690 = vld [vmem:[%s6673 + $0x80] sm:$0xff]
      %v6691 = vld [vmem:[%s6673 + $0x88] sm:$0xff]
      %v6692 = vld [vmem:[%s6673 + $0x90] sm:$0xff]
      %v6693 = vld [vmem:[%s6673 + $0x98] sm:$0xff]
      %v6694 = vld [vmem:[%s6673 + $0xa0] sm:$0xff]
      %v6695 = vld [vmem:[%s6673 + $0xa8] sm:$0xff]
      %v6696 = vld [vmem:[%s6673 + $0xb0] sm:$0xff]
      %v6697 = vld [vmem:[%s6673 + $0xb8] sm:$0xff]
      %v6698 = vld [vmem:[%s6673 + $0xc0] sm:$0xff]
      %v6699 = vld [vmem:[%s6673 + $0xc8] sm:$0xff]
      %v6700 = vld [vmem:[%s6673 + $0xd0] sm:$0xff]
      %v6701 = vld [vmem:[%s6673 + $0xd8] sm:$0xff]
      %v6702 = vld [vmem:[%s6673 + $0xe0] sm:$0xff]
      %v6703 = vld [vmem:[%s6673 + $0xe8] sm:$0xff]
      %v6704 = vld [vmem:[%s6673 + $0xf0] sm:$0xff]
      %v6705 = vld [vmem:[%s6673 + $0xf8] sm:$0xff]
      %v6706 = vld [vmem:[%s6673 + $0x100] sm:$0xff]
      %v6707 = vld [vmem:[%s6673 + $0x108] sm:$0xff]
      %v6708 = vld [vmem:[%s6673 + $0x110] sm:$0xff]
      %v6709 = vld [vmem:[%s6673 + $0x118] sm:$0xff]
      %v6710 = vld [vmem:[%s6673 + $0x120] sm:$0xff]
      %v6711 = vld [vmem:[%s6673 + $0x128] sm:$0xff]
      %v6712 = vld [vmem:[%s6673 + $0x130] sm:$0xff]
      %v6713 = vld [vmem:[%s6673 + $0x138] sm:$0xff]
      %v6714 = vld [vmem:[%s6673 + $0x140] sm:$0xff]
      %v6715 = vld [vmem:[%s6673 + $0x148] sm:$0xff]
      %v6716 = vld [vmem:[%s6673 + $0x150] sm:$0xff]
      %v6717 = vld [vmem:[%s6673 + $0x158] sm:$0xff]
      %v6718 = vld [vmem:[%s6673 + $0x160] sm:$0xff]
      %v6719 = vld [vmem:[%s6673 + $0x168] sm:$0xff]
      %v6720 = vld [vmem:[%s6673 + $0x170] sm:$0xff]
      %v6721 = vld [vmem:[%s6673 + $0x178] sm:$0xff]
      %v6722 = vld [vmem:[%s6673 + $0x180] sm:$0xff]
      %v6723 = vld [vmem:[%s6673 + $0x188] sm:$0xff]
      %v6724 = vld [vmem:[%s6673 + $0x190] sm:$0xff]
      %v6725 = vld [vmem:[%s6673 + $0x198] sm:$0xff]
      %v6726 = vld [vmem:[%s6673 + $0x1a0] sm:$0xff]
      %v6727 = vld [vmem:[%s6673 + $0x1a8] sm:$0xff]
      %v6728 = vld [vmem:[%s6673 + $0x1b0] sm:$0xff]
      %v6729 = vld [vmem:[%s6673 + $0x1b8] sm:$0xff]
      %v6730 = vld [vmem:[%s6673 + $0x1c0] sm:$0xff]
      %v6731 = vld [vmem:[%s6673 + $0x1c8] sm:$0xff]
      %v6732 = vld [vmem:[%s6673 + $0x1d0] sm:$0xff]
      %v6733 = vld [vmem:[%s6673 + $0x1d8] sm:$0xff]
      %v6734 = vld [vmem:[%s6673 + $0x1e0] sm:$0xff]
      %v6735 = vld [vmem:[%s6673 + $0x1e8] sm:$0xff]
      %v6736 = vld [vmem:[%s6673 + $0x1f0] sm:$0xff]
      %v6737 = vld [vmem:[%s6673 + $0x1f8] sm:$0xff]
      %6738 = vmatpush.msra.mxu0 %v6704
      %6739 = vmatpush.msra.mxu0 %v6702
      %6740 = vmatpush.msra.mxu0 %v6700
      %6741 = vmatpush.msra.mxu0 %v6698
      %6742 = vmatpush.msra.mxu0 %v6696
      %6743 = vmatpush.msra.mxu0 %v6694
      %6744 = vmatpush.msra.mxu0 %v6692
      %6745 = vmatpush.msra.mxu0 %v6690
      %6746 = vmatpush.msra.mxu0 %v6688
      %6747 = vmatpush.msra.mxu0 %v6686
      %6748 = vmatpush.msra.mxu0 %v6684
      %6749 = vmatpush.msra.mxu0 %v6682
      %6750 = vmatpush.msra.mxu0 %v6680
      %6751 = vmatpush.msra.mxu0 %v6678
      %6752 = vmatpush.msra.mxu0 %v6676
      %6753 = vmatpush.msra.mxu0 %v6674
      %6754 = vmatmul.f32.gmra.mxu0 %v6645
      %v6755 = vpop.f32.mrf.mxu0
      %v6756 = vadd.f32 0.0, %v6755
      %6757 = vmatmul.f32.gmra.mxu0 %v6648
      %v6758 = vpop.f32.mrf.mxu0
      %v6759 = vadd.f32 0.0, %v6758
      %6760 = vdwg.mxu0
      %6761 = vmatpush.msra.mxu0 %v6736
      %6762 = vmatpush.msra.mxu0 %v6734
      %6763 = vmatpush.msra.mxu0 %v6732
      %6764 = vmatpush.msra.mxu0 %v6730
      %6765 = vmatpush.msra.mxu0 %v6728
      %6766 = vmatpush.msra.mxu0 %v6726
      %6767 = vmatpush.msra.mxu0 %v6724
      %6768 = vmatpush.msra.mxu0 %v6722
      %6769 = vmatpush.msra.mxu0 %v6720
      %6770 = vmatpush.msra.mxu0 %v6718
      %6771 = vmatpush.msra.mxu0 %v6716
      %6772 = vmatpush.msra.mxu0 %v6714
      %6773 = vmatpush.msra.mxu0 %v6712
      %6774 = vmatpush.msra.mxu0 %v6710
      %6775 = vmatpush.msra.mxu0 %v6708
      %6776 = vmatpush.msra.mxu0 %v6706
      %6777 = vmatmul.f32.gmra.mxu0 %v6668
      %v6778 = vpop.f32.mrf.mxu0
      %v6779 = vadd.f32 %v6756, %v6778
      %6780 = vmatmul.f32.gmra.mxu0 %v6671
      %v6781 = vpop.f32.mrf.mxu0
      %v6782 = vadd.f32 %v6759, %v6781
      %6783 = vdwg.mxu0
      %6784 = vmatpush.msra.mxu0 %v6705
      %6785 = vmatpush.msra.mxu0 %v6703
      %6786 = vmatpush.msra.mxu0 %v6701
      %6787 = vmatpush.msra.mxu0 %v6699
      %6788 = vmatpush.msra.mxu0 %v6697
      %6789 = vmatpush.msra.mxu0 %v6695
      %6790 = vmatpush.msra.mxu0 %v6693
      %6791 = vmatpush.msra.mxu0 %v6691
      %6792 = vmatpush.msra.mxu0 %v6689
      %6793 = vmatpush.msra.mxu0 %v6687
      %6794 = vmatpush.msra.mxu0 %v6685
      %6795 = vmatpush.msra.mxu0 %v6683
      %6796 = vmatpush.msra.mxu0 %v6681
      %6797 = vmatpush.msra.mxu0 %v6679
      %6798 = vmatpush.msra.mxu0 %v6677
      %6799 = vmatpush.msra.mxu0 %v6675
      %6800 = vmatmul.f32.gmra.mxu0 %v6645
      %v6801 = vpop.f32.mrf.mxu0
      %v6802 = vadd.f32 0.0, %v6801
      %6803 = vmatmul.f32.gmra.mxu0 %v6648
      %v6804 = vpop.f32.mrf.mxu0
      %v6805 = vadd.f32 0.0, %v6804
      %6806 = vdwg.mxu0
      %6807 = vmatpush.msra.mxu0 %v6737
      %6808 = vmatpush.msra.mxu0 %v6735
      %6809 = vmatpush.msra.mxu0 %v6733
      %6810 = vmatpush.msra.mxu0 %v6731
      %6811 = vmatpush.msra.mxu0 %v6729
      %6812 = vmatpush.msra.mxu0 %v6727
      %6813 = vmatpush.msra.mxu0 %v6725
      %6814 = vmatpush.msra.mxu0 %v6723
      %6815 = vmatpush.msra.mxu0 %v6721
      %6816 = vmatpush.msra.mxu0 %v6719
      %6817 = vmatpush.msra.mxu0 %v6717
      %6818 = vmatpush.msra.mxu0 %v6715
      %6819 = vmatpush.msra.mxu0 %v6713
      %6820 = vmatpush.msra.mxu0 %v6711
      %6821 = vmatpush.msra.mxu0 %v6709
      %6822 = vmatpush.msra.mxu0 %v6707
      %6823 = vmatmul.f32.gmra.mxu0 %v6668
      %v6824 = vpop.f32.mrf.mxu0
      %v6825 = vadd.f32 %v6802, %v6824
      %6826 = vmatmul.f32.gmra.mxu0 %v6671
      %v6827 = vpop.f32.mrf.mxu0
      %v6828 = vadd.f32 %v6805, %v6827
      %6829 = vdwg.mxu0
      %v6830 = vadd.f32 %v6614, %v6779
      %v6831 = vadd.f32 %v6615, %v6825
      %v6832 = vadd.f32 %v6616, %v6782
      %v6833 = vadd.f32 %v6617, %v6828
      %s6834 = scalar_lea.vmem %s9, 96
      %v6835 = vld [vmem:[%s6834] sm:$0xff]
      %v6836 = vld [vmem:[%s6834 + $0x8] sm:$0xff]
      %v6838 = vsel %vm5542, %v6835, 0
      %v6841 = vsel %vm5542, %v6836, 0
      %6843 = vmatpush.msra.mxu0 0.0
      %6844 = vmatpush.msra.mxu0 0.0
      %6845 = vmatpush.msra.mxu0 0.0
      %6846 = vmatpush.msra.mxu0 0.0
      %6847 = vmatpush.msra.mxu0 0.0
      %6848 = vmatpush.msra.mxu0 0.0
      %6849 = vmatpush.msra.mxu0 0.0
      %6850 = vmatpush.msra.mxu0 0.0
      %6851 = vmatpush.msra.mxu0 0.0
      %6852 = vmatpush.msra.mxu0 0.0
      %6853 = vmatpush.msra.mxu0 0.0
      %6854 = vmatpush.msra.mxu0 %v5551
      %6855 = vmatpush.msra.mxu0 %v5536
      %6856 = vmatpush.msra.mxu0 %v5534
      %6857 = vmatpush.msra.mxu0 %v5532
      %6858 = vmatpush.msra.mxu0 %v5530
      %6859 = vmatmul.f32.gmra.mxu0 %v6838
      %v6860 = vpop.f32.mrf.mxu0
      %v6861 = vadd.f32 0.0, %v6860
      %6862 = vmatmul.f32.gmra.mxu0 %v6841
      %v6863 = vpop.f32.mrf.mxu0
      %v6864 = vadd.f32 0.0, %v6863
      %6865 = vdwg.mxu0
      %6866 = vmatpush.msra.mxu0 0.0
      %6867 = vmatpush.msra.mxu0 0.0
      %6868 = vmatpush.msra.mxu0 0.0
      %6869 = vmatpush.msra.mxu0 0.0
      %6870 = vmatpush.msra.mxu0 0.0
      %6871 = vmatpush.msra.mxu0 0.0
      %6872 = vmatpush.msra.mxu0 0.0
      %6873 = vmatpush.msra.mxu0 0.0
      %6874 = vmatpush.msra.mxu0 0.0
      %6875 = vmatpush.msra.mxu0 0.0
      %6876 = vmatpush.msra.mxu0 0.0
      %6877 = vmatpush.msra.mxu0 %v5554
      %6878 = vmatpush.msra.mxu0 %v5537
      %6879 = vmatpush.msra.mxu0 %v5535
      %6880 = vmatpush.msra.mxu0 %v5533
      %6881 = vmatpush.msra.mxu0 %v5531
      %6882 = vmatmul.f32.gmra.mxu0 %v6838
      %v6883 = vpop.f32.mrf.mxu0
      %v6884 = vadd.f32 0.0, %v6883
      %6885 = vmatmul.f32.gmra.mxu0 %v6841
      %v6886 = vpop.f32.mrf.mxu0
      %v6887 = vadd.f32 0.0, %v6886
      %6888 = vdwg.mxu0
      %s6889 = scalar_lea.vmem %s7, 3072
      %v6890 = vld [vmem:[%s6889] sm:$0xff]
      %v6891 = vld [vmem:[%s6889 + $0x8] sm:$0xff]
      %v6892 = vld [vmem:[%s6889 + $0x10] sm:$0xff]
      %v6893 = vld [vmem:[%s6889 + $0x18] sm:$0xff]
      %v6894 = vld [vmem:[%s6889 + $0x20] sm:$0xff]
      %v6895 = vld [vmem:[%s6889 + $0x28] sm:$0xff]
      %v6896 = vld [vmem:[%s6889 + $0x30] sm:$0xff]
      %v6897 = vld [vmem:[%s6889 + $0x38] sm:$0xff]
      %v6898 = vld [vmem:[%s6889 + $0x40] sm:$0xff]
      %v6899 = vld [vmem:[%s6889 + $0x48] sm:$0xff]
      %v6900 = vld [vmem:[%s6889 + $0x50] sm:$0xff]
      %v6901 = vld [vmem:[%s6889 + $0x58] sm:$0xff]
      %v6902 = vld [vmem:[%s6889 + $0x60] sm:$0xff]
      %v6903 = vld [vmem:[%s6889 + $0x68] sm:$0xff]
      %v6904 = vld [vmem:[%s6889 + $0x70] sm:$0xff]
      %v6905 = vld [vmem:[%s6889 + $0x78] sm:$0xff]
      %v6906 = vld [vmem:[%s6889 + $0x80] sm:$0xff]
      %v6907 = vld [vmem:[%s6889 + $0x88] sm:$0xff]
      %v6908 = vld [vmem:[%s6889 + $0x90] sm:$0xff]
      %v6909 = vld [vmem:[%s6889 + $0x98] sm:$0xff]
      %v6910 = vld [vmem:[%s6889 + $0xa0] sm:$0xff]
      %v6911 = vld [vmem:[%s6889 + $0xa8] sm:$0xff]
      %v6912 = vld [vmem:[%s6889 + $0xb0] sm:$0xff]
      %v6913 = vld [vmem:[%s6889 + $0xb8] sm:$0xff]
      %v6914 = vld [vmem:[%s6889 + $0xc0] sm:$0xff]
      %v6915 = vld [vmem:[%s6889 + $0xc8] sm:$0xff]
      %v6916 = vld [vmem:[%s6889 + $0xd0] sm:$0xff]
      %v6917 = vld [vmem:[%s6889 + $0xd8] sm:$0xff]
      %v6918 = vld [vmem:[%s6889 + $0xe0] sm:$0xff]
      %v6919 = vld [vmem:[%s6889 + $0xe8] sm:$0xff]
      %v6920 = vld [vmem:[%s6889 + $0xf0] sm:$0xff]
      %v6921 = vld [vmem:[%s6889 + $0xf8] sm:$0xff]
      %v6922 = vld [vmem:[%s6889 + $0x100] sm:$0xff]
      %v6923 = vld [vmem:[%s6889 + $0x108] sm:$0xff]
      %v6924 = vld [vmem:[%s6889 + $0x110] sm:$0xff]
      %v6925 = vld [vmem:[%s6889 + $0x118] sm:$0xff]
      %v6926 = vld [vmem:[%s6889 + $0x120] sm:$0xff]
      %v6927 = vld [vmem:[%s6889 + $0x128] sm:$0xff]
      %v6928 = vld [vmem:[%s6889 + $0x130] sm:$0xff]
      %v6929 = vld [vmem:[%s6889 + $0x138] sm:$0xff]
      %v6930 = vld [vmem:[%s6889 + $0x140] sm:$0xff]
      %v6931 = vld [vmem:[%s6889 + $0x148] sm:$0xff]
      %v6932 = vld [vmem:[%s6889 + $0x150] sm:$0xff]
      %v6933 = vld [vmem:[%s6889 + $0x158] sm:$0xff]
      %v6934 = vld [vmem:[%s6889 + $0x160] sm:$0xff]
      %v6935 = vld [vmem:[%s6889 + $0x168] sm:$0xff]
      %v6936 = vld [vmem:[%s6889 + $0x170] sm:$0xff]
      %v6937 = vld [vmem:[%s6889 + $0x178] sm:$0xff]
      %v6938 = vld [vmem:[%s6889 + $0x180] sm:$0xff]
      %v6939 = vld [vmem:[%s6889 + $0x188] sm:$0xff]
      %v6940 = vld [vmem:[%s6889 + $0x190] sm:$0xff]
      %v6941 = vld [vmem:[%s6889 + $0x198] sm:$0xff]
      %v6942 = vld [vmem:[%s6889 + $0x1a0] sm:$0xff]
      %v6943 = vld [vmem:[%s6889 + $0x1a8] sm:$0xff]
      %v6944 = vld [vmem:[%s6889 + $0x1b0] sm:$0xff]
      %v6945 = vld [vmem:[%s6889 + $0x1b8] sm:$0xff]
      %v6946 = vld [vmem:[%s6889 + $0x1c0] sm:$0xff]
      %v6947 = vld [vmem:[%s6889 + $0x1c8] sm:$0xff]
      %v6948 = vld [vmem:[%s6889 + $0x1d0] sm:$0xff]
      %v6949 = vld [vmem:[%s6889 + $0x1d8] sm:$0xff]
      %v6950 = vld [vmem:[%s6889 + $0x1e0] sm:$0xff]
      %v6951 = vld [vmem:[%s6889 + $0x1e8] sm:$0xff]
      %v6952 = vld [vmem:[%s6889 + $0x1f0] sm:$0xff]
      %v6953 = vld [vmem:[%s6889 + $0x1f8] sm:$0xff]
      %6954 = vmatpush.msra.mxu0 %v6920
      %6955 = vmatpush.msra.mxu0 %v6918
      %6956 = vmatpush.msra.mxu0 %v6916
      %6957 = vmatpush.msra.mxu0 %v6914
      %6958 = vmatpush.msra.mxu0 %v6912
      %6959 = vmatpush.msra.mxu0 %v6910
      %6960 = vmatpush.msra.mxu0 %v6908
      %6961 = vmatpush.msra.mxu0 %v6906
      %6962 = vmatpush.msra.mxu0 %v6904
      %6963 = vmatpush.msra.mxu0 %v6902
      %6964 = vmatpush.msra.mxu0 %v6900
      %6965 = vmatpush.msra.mxu0 %v6898
      %6966 = vmatpush.msra.mxu0 %v6896
      %6967 = vmatpush.msra.mxu0 %v6894
      %6968 = vmatpush.msra.mxu0 %v6892
      %6969 = vmatpush.msra.mxu0 %v6890
      %6970 = vmatmul.f32.gmra.mxu0 %v6861
      %v6971 = vpop.f32.mrf.mxu0
      %v6972 = vadd.f32 0.0, %v6971
      %6973 = vmatmul.f32.gmra.mxu0 %v6864
      %v6974 = vpop.f32.mrf.mxu0
      %v6975 = vadd.f32 0.0, %v6974
      %6976 = vdwg.mxu0
      %6977 = vmatpush.msra.mxu0 %v6952
      %6978 = vmatpush.msra.mxu0 %v6950
      %6979 = vmatpush.msra.mxu0 %v6948
      %6980 = vmatpush.msra.mxu0 %v6946
      %6981 = vmatpush.msra.mxu0 %v6944
      %6982 = vmatpush.msra.mxu0 %v6942
      %6983 = vmatpush.msra.mxu0 %v6940
      %6984 = vmatpush.msra.mxu0 %v6938
      %6985 = vmatpush.msra.mxu0 %v6936
      %6986 = vmatpush.msra.mxu0 %v6934
      %6987 = vmatpush.msra.mxu0 %v6932
      %6988 = vmatpush.msra.mxu0 %v6930
      %6989 = vmatpush.msra.mxu0 %v6928
      %6990 = vmatpush.msra.mxu0 %v6926
      %6991 = vmatpush.msra.mxu0 %v6924
      %6992 = vmatpush.msra.mxu0 %v6922
      %6993 = vmatmul.f32.gmra.mxu0 %v6884
      %v6994 = vpop.f32.mrf.mxu0
      %v6995 = vadd.f32 %v6972, %v6994
      %6996 = vmatmul.f32.gmra.mxu0 %v6887
      %v6997 = vpop.f32.mrf.mxu0
      %v6998 = vadd.f32 %v6975, %v6997
      %6999 = vdwg.mxu0
      %7000 = vmatpush.msra.mxu0 %v6921
      %7001 = vmatpush.msra.mxu0 %v6919
      %7002 = vmatpush.msra.mxu0 %v6917
      %7003 = vmatpush.msra.mxu0 %v6915
      %7004 = vmatpush.msra.mxu0 %v6913
      %7005 = vmatpush.msra.mxu0 %v6911
      %7006 = vmatpush.msra.mxu0 %v6909
      %7007 = vmatpush.msra.mxu0 %v6907
      %7008 = vmatpush.msra.mxu0 %v6905
      %7009 = vmatpush.msra.mxu0 %v6903
      %7010 = vmatpush.msra.mxu0 %v6901
      %7011 = vmatpush.msra.mxu0 %v6899
      %7012 = vmatpush.msra.mxu0 %v6897
      %7013 = vmatpush.msra.mxu0 %v6895
      %7014 = vmatpush.msra.mxu0 %v6893
      %7015 = vmatpush.msra.mxu0 %v6891
      %7016 = vmatmul.f32.gmra.mxu0 %v6861
      %v7017 = vpop.f32.mrf.mxu0
      %v7018 = vadd.f32 0.0, %v7017
      %7019 = vmatmul.f32.gmra.mxu0 %v6864
      %v7020 = vpop.f32.mrf.mxu0
      %v7021 = vadd.f32 0.0, %v7020
      %7022 = vdwg.mxu0
      %7023 = vmatpush.msra.mxu0 %v6953
      %7024 = vmatpush.msra.mxu0 %v6951
      %7025 = vmatpush.msra.mxu0 %v6949
      %7026 = vmatpush.msra.mxu0 %v6947
      %7027 = vmatpush.msra.mxu0 %v6945
      %7028 = vmatpush.msra.mxu0 %v6943
      %7029 = vmatpush.msra.mxu0 %v6941
      %7030 = vmatpush.msra.mxu0 %v6939
      %7031 = vmatpush.msra.mxu0 %v6937
      %7032 = vmatpush.msra.mxu0 %v6935
      %7033 = vmatpush.msra.mxu0 %v6933
      %7034 = vmatpush.msra.mxu0 %v6931
      %7035 = vmatpush.msra.mxu0 %v6929
      %7036 = vmatpush.msra.mxu0 %v6927
      %7037 = vmatpush.msra.mxu0 %v6925
      %7038 = vmatpush.msra.mxu0 %v6923
      %7039 = vmatmul.f32.gmra.mxu0 %v6884
      %v7040 = vpop.f32.mrf.mxu0
      %v7041 = vadd.f32 %v7018, %v7040
      %7042 = vmatmul.f32.gmra.mxu0 %v6887
      %v7043 = vpop.f32.mrf.mxu0
      %v7044 = vadd.f32 %v7021, %v7043
      %7045 = vdwg.mxu0
      %v7046 = vadd.f32 %v6830, %v6995
      %v7047 = vadd.f32 %v6831, %v7041
      %v7048 = vadd.f32 %v6832, %v6998
      %v7049 = vadd.f32 %v6833, %v7044
      %s7050 = scalar_lea.vmem %s9, 112
      %v7051 = vld [vmem:[%s7050] sm:$0xff]
      %v7052 = vld [vmem:[%s7050 + $0x8] sm:$0xff]
      %v7054 = vsel %vm5542, %v7051, 0
      %v7057 = vsel %vm5542, %v7052, 0
      %7059 = vmatpush.msra.mxu0 0.0
      %7060 = vmatpush.msra.mxu0 0.0
      %7061 = vmatpush.msra.mxu0 0.0
      %7062 = vmatpush.msra.mxu0 0.0
      %7063 = vmatpush.msra.mxu0 0.0
      %7064 = vmatpush.msra.mxu0 0.0
      %7065 = vmatpush.msra.mxu0 0.0
      %7066 = vmatpush.msra.mxu0 0.0
      %7067 = vmatpush.msra.mxu0 0.0
      %7068 = vmatpush.msra.mxu0 0.0
      %7069 = vmatpush.msra.mxu0 0.0
      %7070 = vmatpush.msra.mxu0 %v5551
      %7071 = vmatpush.msra.mxu0 %v5536
      %7072 = vmatpush.msra.mxu0 %v5534
      %7073 = vmatpush.msra.mxu0 %v5532
      %7074 = vmatpush.msra.mxu0 %v5530
      %7075 = vmatmul.f32.gmra.mxu0 %v7054
      %v7076 = vpop.f32.mrf.mxu0
      %v7077 = vadd.f32 0.0, %v7076
      %7078 = vmatmul.f32.gmra.mxu0 %v7057
      %v7079 = vpop.f32.mrf.mxu0
      %v7080 = vadd.f32 0.0, %v7079
      %7081 = vdwg.mxu0
      %7082 = vmatpush.msra.mxu0 0.0
      %7083 = vmatpush.msra.mxu0 0.0
      %7084 = vmatpush.msra.mxu0 0.0
      %7085 = vmatpush.msra.mxu0 0.0
      %7086 = vmatpush.msra.mxu0 0.0
      %7087 = vmatpush.msra.mxu0 0.0
      %7088 = vmatpush.msra.mxu0 0.0
      %7089 = vmatpush.msra.mxu0 0.0
      %7090 = vmatpush.msra.mxu0 0.0
      %7091 = vmatpush.msra.mxu0 0.0
      %7092 = vmatpush.msra.mxu0 0.0
      %7093 = vmatpush.msra.mxu0 %v5554
      %7094 = vmatpush.msra.mxu0 %v5537
      %7095 = vmatpush.msra.mxu0 %v5535
      %7096 = vmatpush.msra.mxu0 %v5533
      %7097 = vmatpush.msra.mxu0 %v5531
      %7098 = vmatmul.f32.gmra.mxu0 %v7054
      %v7099 = vpop.f32.mrf.mxu0
      %v7100 = vadd.f32 0.0, %v7099
      %7101 = vmatmul.f32.gmra.mxu0 %v7057
      %v7102 = vpop.f32.mrf.mxu0
      %v7103 = vadd.f32 0.0, %v7102
      %7104 = vdwg.mxu0
      %s7105 = scalar_lea.vmem %s7, 3584
      %v7106 = vld [vmem:[%s7105] sm:$0xff]
      %v7107 = vld [vmem:[%s7105 + $0x8] sm:$0xff]
      %v7108 = vld [vmem:[%s7105 + $0x10] sm:$0xff]
      %v7109 = vld [vmem:[%s7105 + $0x18] sm:$0xff]
      %v7110 = vld [vmem:[%s7105 + $0x20] sm:$0xff]
      %v7111 = vld [vmem:[%s7105 + $0x28] sm:$0xff]
      %v7112 = vld [vmem:[%s7105 + $0x30] sm:$0xff]
      %v7113 = vld [vmem:[%s7105 + $0x38] sm:$0xff]
      %v7114 = vld [vmem:[%s7105 + $0x40] sm:$0xff]
      %v7115 = vld [vmem:[%s7105 + $0x48] sm:$0xff]
      %v7116 = vld [vmem:[%s7105 + $0x50] sm:$0xff]
      %v7117 = vld [vmem:[%s7105 + $0x58] sm:$0xff]
      %v7118 = vld [vmem:[%s7105 + $0x60] sm:$0xff]
      %v7119 = vld [vmem:[%s7105 + $0x68] sm:$0xff]
      %v7120 = vld [vmem:[%s7105 + $0x70] sm:$0xff]
      %v7121 = vld [vmem:[%s7105 + $0x78] sm:$0xff]
      %v7122 = vld [vmem:[%s7105 + $0x80] sm:$0xff]
      %v7123 = vld [vmem:[%s7105 + $0x88] sm:$0xff]
      %v7124 = vld [vmem:[%s7105 + $0x90] sm:$0xff]
      %v7125 = vld [vmem:[%s7105 + $0x98] sm:$0xff]
      %v7126 = vld [vmem:[%s7105 + $0xa0] sm:$0xff]
      %v7127 = vld [vmem:[%s7105 + $0xa8] sm:$0xff]
      %v7128 = vld [vmem:[%s7105 + $0xb0] sm:$0xff]
      %v7129 = vld [vmem:[%s7105 + $0xb8] sm:$0xff]
      %v7130 = vld [vmem:[%s7105 + $0xc0] sm:$0xff]
      %v7131 = vld [vmem:[%s7105 + $0xc8] sm:$0xff]
      %v7132 = vld [vmem:[%s7105 + $0xd0] sm:$0xff]
      %v7133 = vld [vmem:[%s7105 + $0xd8] sm:$0xff]
      %v7134 = vld [vmem:[%s7105 + $0xe0] sm:$0xff]
      %v7135 = vld [vmem:[%s7105 + $0xe8] sm:$0xff]
      %v7136 = vld [vmem:[%s7105 + $0xf0] sm:$0xff]
      %v7137 = vld [vmem:[%s7105 + $0xf8] sm:$0xff]
      %v7138 = vld [vmem:[%s7105 + $0x100] sm:$0xff]
      %v7139 = vld [vmem:[%s7105 + $0x108] sm:$0xff]
      %v7140 = vld [vmem:[%s7105 + $0x110] sm:$0xff]
      %v7141 = vld [vmem:[%s7105 + $0x118] sm:$0xff]
      %v7142 = vld [vmem:[%s7105 + $0x120] sm:$0xff]
      %v7143 = vld [vmem:[%s7105 + $0x128] sm:$0xff]
      %v7144 = vld [vmem:[%s7105 + $0x130] sm:$0xff]
      %v7145 = vld [vmem:[%s7105 + $0x138] sm:$0xff]
      %v7146 = vld [vmem:[%s7105 + $0x140] sm:$0xff]
      %v7147 = vld [vmem:[%s7105 + $0x148] sm:$0xff]
      %v7148 = vld [vmem:[%s7105 + $0x150] sm:$0xff]
      %v7149 = vld [vmem:[%s7105 + $0x158] sm:$0xff]
      %v7150 = vld [vmem:[%s7105 + $0x160] sm:$0xff]
      %v7151 = vld [vmem:[%s7105 + $0x168] sm:$0xff]
      %v7152 = vld [vmem:[%s7105 + $0x170] sm:$0xff]
      %v7153 = vld [vmem:[%s7105 + $0x178] sm:$0xff]
      %v7154 = vld [vmem:[%s7105 + $0x180] sm:$0xff]
      %v7155 = vld [vmem:[%s7105 + $0x188] sm:$0xff]
      %v7156 = vld [vmem:[%s7105 + $0x190] sm:$0xff]
      %v7157 = vld [vmem:[%s7105 + $0x198] sm:$0xff]
      %v7158 = vld [vmem:[%s7105 + $0x1a0] sm:$0xff]
      %v7159 = vld [vmem:[%s7105 + $0x1a8] sm:$0xff]
      %v7160 = vld [vmem:[%s7105 + $0x1b0] sm:$0xff]
      %v7161 = vld [vmem:[%s7105 + $0x1b8] sm:$0xff]
      %v7162 = vld [vmem:[%s7105 + $0x1c0] sm:$0xff]
      %v7163 = vld [vmem:[%s7105 + $0x1c8] sm:$0xff]
      %v7164 = vld [vmem:[%s7105 + $0x1d0] sm:$0xff]
      %v7165 = vld [vmem:[%s7105 + $0x1d8] sm:$0xff]
      %v7166 = vld [vmem:[%s7105 + $0x1e0] sm:$0xff]
      %v7167 = vld [vmem:[%s7105 + $0x1e8] sm:$0xff]
      %v7168 = vld [vmem:[%s7105 + $0x1f0] sm:$0xff]
      %v7169 = vld [vmem:[%s7105 + $0x1f8] sm:$0xff]
      %7170 = vmatpush.msra.mxu0 %v7136
      %7171 = vmatpush.msra.mxu0 %v7134
      %7172 = vmatpush.msra.mxu0 %v7132
      %7173 = vmatpush.msra.mxu0 %v7130
      %7174 = vmatpush.msra.mxu0 %v7128
      %7175 = vmatpush.msra.mxu0 %v7126
      %7176 = vmatpush.msra.mxu0 %v7124
      %7177 = vmatpush.msra.mxu0 %v7122
      %7178 = vmatpush.msra.mxu0 %v7120
      %7179 = vmatpush.msra.mxu0 %v7118
      %7180 = vmatpush.msra.mxu0 %v7116
      %7181 = vmatpush.msra.mxu0 %v7114
      %7182 = vmatpush.msra.mxu0 %v7112
      %7183 = vmatpush.msra.mxu0 %v7110
      %7184 = vmatpush.msra.mxu0 %v7108
      %7185 = vmatpush.msra.mxu0 %v7106
      %7186 = vmatmul.f32.gmra.mxu0 %v7077
      %v7187 = vpop.f32.mrf.mxu0
      %v7188 = vadd.f32 0.0, %v7187
      %7189 = vmatmul.f32.gmra.mxu0 %v7080
      %v7190 = vpop.f32.mrf.mxu0
      %v7191 = vadd.f32 0.0, %v7190
      %7192 = vdwg.mxu0
      %7193 = vmatpush.msra.mxu0 %v7168
      %7194 = vmatpush.msra.mxu0 %v7166
      %7195 = vmatpush.msra.mxu0 %v7164
      %7196 = vmatpush.msra.mxu0 %v7162
      %7197 = vmatpush.msra.mxu0 %v7160
      %7198 = vmatpush.msra.mxu0 %v7158
      %7199 = vmatpush.msra.mxu0 %v7156
      %7200 = vmatpush.msra.mxu0 %v7154
      %7201 = vmatpush.msra.mxu0 %v7152
      %7202 = vmatpush.msra.mxu0 %v7150
      %7203 = vmatpush.msra.mxu0 %v7148
      %7204 = vmatpush.msra.mxu0 %v7146
      %7205 = vmatpush.msra.mxu0 %v7144
      %7206 = vmatpush.msra.mxu0 %v7142
      %7207 = vmatpush.msra.mxu0 %v7140
      %7208 = vmatpush.msra.mxu0 %v7138
      %7209 = vmatmul.f32.gmra.mxu0 %v7100
      %v7210 = vpop.f32.mrf.mxu0
      %v7211 = vadd.f32 %v7188, %v7210
      %7212 = vmatmul.f32.gmra.mxu0 %v7103
      %v7213 = vpop.f32.mrf.mxu0
      %v7214 = vadd.f32 %v7191, %v7213
      %7215 = vdwg.mxu0
      %7216 = vmatpush.msra.mxu0 %v7137
      %7217 = vmatpush.msra.mxu0 %v7135
      %7218 = vmatpush.msra.mxu0 %v7133
      %7219 = vmatpush.msra.mxu0 %v7131
      %7220 = vmatpush.msra.mxu0 %v7129
      %7221 = vmatpush.msra.mxu0 %v7127
      %7222 = vmatpush.msra.mxu0 %v7125
      %7223 = vmatpush.msra.mxu0 %v7123
      %7224 = vmatpush.msra.mxu0 %v7121
      %7225 = vmatpush.msra.mxu0 %v7119
      %7226 = vmatpush.msra.mxu0 %v7117
      %7227 = vmatpush.msra.mxu0 %v7115
      %7228 = vmatpush.msra.mxu0 %v7113
      %7229 = vmatpush.msra.mxu0 %v7111
      %7230 = vmatpush.msra.mxu0 %v7109
      %7231 = vmatpush.msra.mxu0 %v7107
      %7232 = vmatmul.f32.gmra.mxu0 %v7077
      %v7233 = vpop.f32.mrf.mxu0
      %v7234 = vadd.f32 0.0, %v7233
      %7235 = vmatmul.f32.gmra.mxu0 %v7080
      %v7236 = vpop.f32.mrf.mxu0
      %v7237 = vadd.f32 0.0, %v7236
      %7238 = vdwg.mxu0
      %7239 = vmatpush.msra.mxu0 %v7169
      %7240 = vmatpush.msra.mxu0 %v7167
      %7241 = vmatpush.msra.mxu0 %v7165
      %7242 = vmatpush.msra.mxu0 %v7163
      %7243 = vmatpush.msra.mxu0 %v7161
      %7244 = vmatpush.msra.mxu0 %v7159
      %7245 = vmatpush.msra.mxu0 %v7157
      %7246 = vmatpush.msra.mxu0 %v7155
      %7247 = vmatpush.msra.mxu0 %v7153
      %7248 = vmatpush.msra.mxu0 %v7151
      %7249 = vmatpush.msra.mxu0 %v7149
      %7250 = vmatpush.msra.mxu0 %v7147
      %7251 = vmatpush.msra.mxu0 %v7145
      %7252 = vmatpush.msra.mxu0 %v7143
      %7253 = vmatpush.msra.mxu0 %v7141
      %7254 = vmatpush.msra.mxu0 %v7139
      %7255 = vmatmul.f32.gmra.mxu0 %v7100
      %v7256 = vpop.f32.mrf.mxu0
      %v7257 = vadd.f32 %v7234, %v7256
      %7258 = vmatmul.f32.gmra.mxu0 %v7103
      %v7259 = vpop.f32.mrf.mxu0
      %v7260 = vadd.f32 %v7237, %v7259
      %7261 = vdwg.mxu0
      %v7262 = vadd.f32 %v7046, %v7211
      %v7263 = vadd.f32 %v7047, %v7257
      %v7264 = vadd.f32 %v7048, %v7214
      %v7265 = vadd.f32 %v7049, %v7260
      %s7266 = scalar_lea.vmem %s9, 128
      %v7267 = vld [vmem:[%s7266] sm:$0xff]
      %v7268 = vld [vmem:[%s7266 + $0x8] sm:$0xff]
      %v7270 = vsel %vm5542, %v7267, 0
      %v7273 = vsel %vm5542, %v7268, 0
      %7275 = vmatpush.msra.mxu0 0.0
      %7276 = vmatpush.msra.mxu0 0.0
      %7277 = vmatpush.msra.mxu0 0.0
      %7278 = vmatpush.msra.mxu0 0.0
      %7279 = vmatpush.msra.mxu0 0.0
      %7280 = vmatpush.msra.mxu0 0.0
      %7281 = vmatpush.msra.mxu0 0.0
      %7282 = vmatpush.msra.mxu0 0.0
      %7283 = vmatpush.msra.mxu0 0.0
      %7284 = vmatpush.msra.mxu0 0.0
      %7285 = vmatpush.msra.mxu0 0.0
      %7286 = vmatpush.msra.mxu0 %v5551
      %7287 = vmatpush.msra.mxu0 %v5536
      %7288 = vmatpush.msra.mxu0 %v5534
      %7289 = vmatpush.msra.mxu0 %v5532
      %7290 = vmatpush.msra.mxu0 %v5530
      %7291 = vmatmul.f32.gmra.mxu0 %v7270
      %v7292 = vpop.f32.mrf.mxu0
      %v7293 = vadd.f32 0.0, %v7292
      %7294 = vmatmul.f32.gmra.mxu0 %v7273
      %v7295 = vpop.f32.mrf.mxu0
      %v7296 = vadd.f32 0.0, %v7295
      %7297 = vdwg.mxu0
      %7298 = vmatpush.msra.mxu0 0.0
      %7299 = vmatpush.msra.mxu0 0.0
      %7300 = vmatpush.msra.mxu0 0.0
      %7301 = vmatpush.msra.mxu0 0.0
      %7302 = vmatpush.msra.mxu0 0.0
      %7303 = vmatpush.msra.mxu0 0.0
      %7304 = vmatpush.msra.mxu0 0.0
      %7305 = vmatpush.msra.mxu0 0.0
      %7306 = vmatpush.msra.mxu0 0.0
      %7307 = vmatpush.msra.mxu0 0.0
      %7308 = vmatpush.msra.mxu0 0.0
      %7309 = vmatpush.msra.mxu0 %v5554
      %7310 = vmatpush.msra.mxu0 %v5537
      %7311 = vmatpush.msra.mxu0 %v5535
      %7312 = vmatpush.msra.mxu0 %v5533
      %7313 = vmatpush.msra.mxu0 %v5531
      %7314 = vmatmul.f32.gmra.mxu0 %v7270
      %v7315 = vpop.f32.mrf.mxu0
      %v7316 = vadd.f32 0.0, %v7315
      %7317 = vmatmul.f32.gmra.mxu0 %v7273
      %v7318 = vpop.f32.mrf.mxu0
      %v7319 = vadd.f32 0.0, %v7318
      %7320 = vdwg.mxu0
      %s7321 = scalar_lea.vmem %s7, 4096
      %v7322 = vld [vmem:[%s7321] sm:$0xff]
      %v7323 = vld [vmem:[%s7321 + $0x8] sm:$0xff]
      %v7324 = vld [vmem:[%s7321 + $0x10] sm:$0xff]
      %v7325 = vld [vmem:[%s7321 + $0x18] sm:$0xff]
      %v7326 = vld [vmem:[%s7321 + $0x20] sm:$0xff]
      %v7327 = vld [vmem:[%s7321 + $0x28] sm:$0xff]
      %v7328 = vld [vmem:[%s7321 + $0x30] sm:$0xff]
      %v7329 = vld [vmem:[%s7321 + $0x38] sm:$0xff]
      %v7330 = vld [vmem:[%s7321 + $0x40] sm:$0xff]
      %v7331 = vld [vmem:[%s7321 + $0x48] sm:$0xff]
      %v7332 = vld [vmem:[%s7321 + $0x50] sm:$0xff]
      %v7333 = vld [vmem:[%s7321 + $0x58] sm:$0xff]
      %v7334 = vld [vmem:[%s7321 + $0x60] sm:$0xff]
      %v7335 = vld [vmem:[%s7321 + $0x68] sm:$0xff]
      %v7336 = vld [vmem:[%s7321 + $0x70] sm:$0xff]
      %v7337 = vld [vmem:[%s7321 + $0x78] sm:$0xff]
      %v7338 = vld [vmem:[%s7321 + $0x80] sm:$0xff]
      %v7339 = vld [vmem:[%s7321 + $0x88] sm:$0xff]
      %v7340 = vld [vmem:[%s7321 + $0x90] sm:$0xff]
      %v7341 = vld [vmem:[%s7321 + $0x98] sm:$0xff]
      %v7342 = vld [vmem:[%s7321 + $0xa0] sm:$0xff]
      %v7343 = vld [vmem:[%s7321 + $0xa8] sm:$0xff]
      %v7344 = vld [vmem:[%s7321 + $0xb0] sm:$0xff]
      %v7345 = vld [vmem:[%s7321 + $0xb8] sm:$0xff]
      %v7346 = vld [vmem:[%s7321 + $0xc0] sm:$0xff]
      %v7347 = vld [vmem:[%s7321 + $0xc8] sm:$0xff]
      %v7348 = vld [vmem:[%s7321 + $0xd0] sm:$0xff]
      %v7349 = vld [vmem:[%s7321 + $0xd8] sm:$0xff]
      %v7350 = vld [vmem:[%s7321 + $0xe0] sm:$0xff]
      %v7351 = vld [vmem:[%s7321 + $0xe8] sm:$0xff]
      %v7352 = vld [vmem:[%s7321 + $0xf0] sm:$0xff]
      %v7353 = vld [vmem:[%s7321 + $0xf8] sm:$0xff]
      %v7354 = vld [vmem:[%s7321 + $0x100] sm:$0xff]
      %v7355 = vld [vmem:[%s7321 + $0x108] sm:$0xff]
      %v7356 = vld [vmem:[%s7321 + $0x110] sm:$0xff]
      %v7357 = vld [vmem:[%s7321 + $0x118] sm:$0xff]
      %v7358 = vld [vmem:[%s7321 + $0x120] sm:$0xff]
      %v7359 = vld [vmem:[%s7321 + $0x128] sm:$0xff]
      %v7360 = vld [vmem:[%s7321 + $0x130] sm:$0xff]
      %v7361 = vld [vmem:[%s7321 + $0x138] sm:$0xff]
      %v7362 = vld [vmem:[%s7321 + $0x140] sm:$0xff]
      %v7363 = vld [vmem:[%s7321 + $0x148] sm:$0xff]
      %v7364 = vld [vmem:[%s7321 + $0x150] sm:$0xff]
      %v7365 = vld [vmem:[%s7321 + $0x158] sm:$0xff]
      %v7366 = vld [vmem:[%s7321 + $0x160] sm:$0xff]
      %v7367 = vld [vmem:[%s7321 + $0x168] sm:$0xff]
      %v7368 = vld [vmem:[%s7321 + $0x170] sm:$0xff]
      %v7369 = vld [vmem:[%s7321 + $0x178] sm:$0xff]
      %v7370 = vld [vmem:[%s7321 + $0x180] sm:$0xff]
      %v7371 = vld [vmem:[%s7321 + $0x188] sm:$0xff]
      %v7372 = vld [vmem:[%s7321 + $0x190] sm:$0xff]
      %v7373 = vld [vmem:[%s7321 + $0x198] sm:$0xff]
      %v7374 = vld [vmem:[%s7321 + $0x1a0] sm:$0xff]
      %v7375 = vld [vmem:[%s7321 + $0x1a8] sm:$0xff]
      %v7376 = vld [vmem:[%s7321 + $0x1b0] sm:$0xff]
      %v7377 = vld [vmem:[%s7321 + $0x1b8] sm:$0xff]
      %v7378 = vld [vmem:[%s7321 + $0x1c0] sm:$0xff]
      %v7379 = vld [vmem:[%s7321 + $0x1c8] sm:$0xff]
      %v7380 = vld [vmem:[%s7321 + $0x1d0] sm:$0xff]
      %v7381 = vld [vmem:[%s7321 + $0x1d8] sm:$0xff]
      %v7382 = vld [vmem:[%s7321 + $0x1e0] sm:$0xff]
      %v7383 = vld [vmem:[%s7321 + $0x1e8] sm:$0xff]
      %v7384 = vld [vmem:[%s7321 + $0x1f0] sm:$0xff]
      %v7385 = vld [vmem:[%s7321 + $0x1f8] sm:$0xff]
      %7386 = vmatpush.msra.mxu0 %v7352
      %7387 = vmatpush.msra.mxu0 %v7350
      %7388 = vmatpush.msra.mxu0 %v7348
      %7389 = vmatpush.msra.mxu0 %v7346
      %7390 = vmatpush.msra.mxu0 %v7344
      %7391 = vmatpush.msra.mxu0 %v7342
      %7392 = vmatpush.msra.mxu0 %v7340
      %7393 = vmatpush.msra.mxu0 %v7338
      %7394 = vmatpush.msra.mxu0 %v7336
      %7395 = vmatpush.msra.mxu0 %v7334
      %7396 = vmatpush.msra.mxu0 %v7332
      %7397 = vmatpush.msra.mxu0 %v7330
      %7398 = vmatpush.msra.mxu0 %v7328
      %7399 = vmatpush.msra.mxu0 %v7326
      %7400 = vmatpush.msra.mxu0 %v7324
      %7401 = vmatpush.msra.mxu0 %v7322
      %7402 = vmatmul.f32.gmra.mxu0 %v7293
      %v7403 = vpop.f32.mrf.mxu0
      %v7404 = vadd.f32 0.0, %v7403
      %7405 = vmatmul.f32.gmra.mxu0 %v7296
      %v7406 = vpop.f32.mrf.mxu0
      %v7407 = vadd.f32 0.0, %v7406
      %7408 = vdwg.mxu0
      %7409 = vmatpush.msra.mxu0 %v7384
      %7410 = vmatpush.msra.mxu0 %v7382
      %7411 = vmatpush.msra.mxu0 %v7380
      %7412 = vmatpush.msra.mxu0 %v7378
      %7413 = vmatpush.msra.mxu0 %v7376
      %7414 = vmatpush.msra.mxu0 %v7374
      %7415 = vmatpush.msra.mxu0 %v7372
      %7416 = vmatpush.msra.mxu0 %v7370
      %7417 = vmatpush.msra.mxu0 %v7368
      %7418 = vmatpush.msra.mxu0 %v7366
      %7419 = vmatpush.msra.mxu0 %v7364
      %7420 = vmatpush.msra.mxu0 %v7362
      %7421 = vmatpush.msra.mxu0 %v7360
      %7422 = vmatpush.msra.mxu0 %v7358
      %7423 = vmatpush.msra.mxu0 %v7356
      %7424 = vmatpush.msra.mxu0 %v7354
      %7425 = vmatmul.f32.gmra.mxu0 %v7316
      %v7426 = vpop.f32.mrf.mxu0
      %v7427 = vadd.f32 %v7404, %v7426
      %7428 = vmatmul.f32.gmra.mxu0 %v7319
      %v7429 = vpop.f32.mrf.mxu0
      %v7430 = vadd.f32 %v7407, %v7429
      %7431 = vdwg.mxu0
      %7432 = vmatpush.msra.mxu0 %v7353
      %7433 = vmatpush.msra.mxu0 %v7351
      %7434 = vmatpush.msra.mxu0 %v7349
      %7435 = vmatpush.msra.mxu0 %v7347
      %7436 = vmatpush.msra.mxu0 %v7345
      %7437 = vmatpush.msra.mxu0 %v7343
      %7438 = vmatpush.msra.mxu0 %v7341
      %7439 = vmatpush.msra.mxu0 %v7339
      %7440 = vmatpush.msra.mxu0 %v7337
      %7441 = vmatpush.msra.mxu0 %v7335
      %7442 = vmatpush.msra.mxu0 %v7333
      %7443 = vmatpush.msra.mxu0 %v7331
      %7444 = vmatpush.msra.mxu0 %v7329
      %7445 = vmatpush.msra.mxu0 %v7327
      %7446 = vmatpush.msra.mxu0 %v7325
      %7447 = vmatpush.msra.mxu0 %v7323
      %7448 = vmatmul.f32.gmra.mxu0 %v7293
      %v7449 = vpop.f32.mrf.mxu0
      %v7450 = vadd.f32 0.0, %v7449
      %7451 = vmatmul.f32.gmra.mxu0 %v7296
      %v7452 = vpop.f32.mrf.mxu0
      %v7453 = vadd.f32 0.0, %v7452
      %7454 = vdwg.mxu0
      %7455 = vmatpush.msra.mxu0 %v7385
      %7456 = vmatpush.msra.mxu0 %v7383
      %7457 = vmatpush.msra.mxu0 %v7381
      %7458 = vmatpush.msra.mxu0 %v7379
      %7459 = vmatpush.msra.mxu0 %v7377
      %7460 = vmatpush.msra.mxu0 %v7375
      %7461 = vmatpush.msra.mxu0 %v7373
      %7462 = vmatpush.msra.mxu0 %v7371
      %7463 = vmatpush.msra.mxu0 %v7369
      %7464 = vmatpush.msra.mxu0 %v7367
      %7465 = vmatpush.msra.mxu0 %v7365
      %7466 = vmatpush.msra.mxu0 %v7363
      %7467 = vmatpush.msra.mxu0 %v7361
      %7468 = vmatpush.msra.mxu0 %v7359
      %7469 = vmatpush.msra.mxu0 %v7357
      %7470 = vmatpush.msra.mxu0 %v7355
      %7471 = vmatmul.f32.gmra.mxu0 %v7316
      %v7472 = vpop.f32.mrf.mxu0
      %v7473 = vadd.f32 %v7450, %v7472
      %7474 = vmatmul.f32.gmra.mxu0 %v7319
      %v7475 = vpop.f32.mrf.mxu0
      %v7476 = vadd.f32 %v7453, %v7475
      %7477 = vdwg.mxu0
      %v7478 = vadd.f32 %v7262, %v7427
      %v7479 = vadd.f32 %v7263, %v7473
      %v7480 = vadd.f32 %v7264, %v7430
      %v7481 = vadd.f32 %v7265, %v7476
      %v7482 = vld [vmem:[%s8] sm:$0x3]
      %v7484 = vperm.slane %v7482, 0
      %v7485 = vperm.slane %v7482, 1
      %v7488 = vadd.f32 %v7478, %v7484
      %v7489 = vadd.f32 %v7479, %v7485
      %v7490 = vadd.f32 %v7480, %v7484
      %v7491 = vadd.f32 %v7481, %v7485
      %v7492 = vmax.f32 %v7488, 0.0
      %v7493 = vmax.f32 %v7489, 0.0
      %v7494 = vmax.f32 %v7490, 0.0
      %v7495 = vmax.f32 %v7491, 0.0
      %7496 = vst [vmem:[%s359] sm:$0xff] %v7492
      %7497 = vst [vmem:[%s359 + $0x8] sm:$0xff] %v7493
      %7498 = vst [vmem:[%s359 + $0x10] sm:$0xff] %v7494
      %7499 = vst [vmem:[%s359 + $0x18] sm:$0xff] %v7495
      %p7500 = scmp.lt.s32.totalorder %s21, 1
      %s7501 = scalar_select %p7500, %s21, 1
      %s7502 = smul.addr %s7501, 4
      %s7503 = smul.addr %s7502, 8
      %s7504 = scalar_lea.vmem %s10, %s7503
      // Predicated region
      $region61: #{nature_encoder_fused.1} parent=59 // pred_check
        %p7505 = pneg %p254
      $region62: #{nature_encoder_fused.1} parent=59 // pred_check_branch
        %7507 = sbr.rel (%p7505) target = $region64
      $region63: #{nature_encoder_fused.1} parent=59 // pred_region
        _
      $region64: #{nature_encoder_fused.1} parent=59 // pred_fallthru
        _
    $region60: #{nature_encoder_fused.1} parent=5 // pred_fallthru
      _
    %p7508 = scmp.le.s32.totalorder 2, %s16
    // Predicated region
    $region65: #{nature_encoder_fused.1} parent=5 // pred_check
      %p7509 = pneg %p7508
    $region66: #{nature_encoder_fused.1} parent=5 // pred_check_branch
      %7511 = sbr.rel (%p7509) target = $region68
    $region67: #{nature_encoder_fused.1} parent=5 // pred_region
      %s7512 = ssub.s32 %s16, 2
      // Predicated region
      $region69: #{nature_encoder_fused.1} parent=67 // pred_check
        %p7513 = pneg %p260
      $region70: #{nature_encoder_fused.1} parent=67 // pred_check_branch
        %7515 = sbr.rel (%p7513) target = $region72
      $region71: #{nature_encoder_fused.1} parent=67 // pred_region
        %p7516 = scmp.lt.s32.totalorder %s22, 1
        %s7517 = scalar_select %p7516, %s22, 1
        %s7518 = smul.addr %s7517, 4
        %s7519 = smul.addr %s7518, 8
        %s7520 = scalar_lea.vmem %s10, %s7519
      $region72: #{nature_encoder_fused.1} parent=67 // pred_fallthru
        _
    $region68: #{nature_encoder_fused.1} parent=5 // pred_fallthru
      _
  $region6: #{nature_encoder_fused.1} parent=0 // loop_footer
    %s20 = sadd.s32 1, %s16
  $region7: #{nature_encoder_fused.1} parent=0 // loop_footer_branch
    %15 = sbr.rel target = $region3
  $region8: #{nature_encoder_fused.1} parent=0 // loop_exit
    _

</llo_original>
